<compile_context>
chip_gen: v7x
topology: tpu7x:2x2x1
jax: 0.10.0
libtpu: 0.0.40
codegen_flags: <defaults>
</compile_context>

<pallas_src>
from functools import partial

import jax
import jax.numpy as jnp
from jax.experimental import pallas as pl
from jax.experimental.pallas import tpu as pltpu

# Full-f32 matmuls (keeps a tight tolerance vs the reference).
# TODO(synk): cast A/X/W to bf16 with f32 accumulation for ~2-4x MXU speedup
#   once a looser accuracy budget is acceptable.
_PREC = jax.lax.Precision.HIGHEST


def _round_up(v: int, m: int) -> int:
    return ((v + m - 1) // m) * m


def _activation(x, act: str):
    if act == 'relu':
        return jnp.maximum(x, 0.0)
    if act == 'lrelu':
        return jnp.where(x >= 0.0, x, 0.2 * x)
    if act == 'elu':
        # clamp the exp argument so the inactive branch never overflows
        return jnp.where(x > 0.0, x, jnp.exp(jnp.minimum(x, 0.0)) - 1.0)
    raise ValueError(f'{act} activation function is not supported!')


# ----------------------------------------------------------------------------
# Fused Pallas kernel: the whole GraphConv stack in one invocation
# ----------------------------------------------------------------------------
def _fused_graph_kernel(a_ref, x_ref, *refs, layer_cfg, act, c_pad):
    """refs = [w_cat_0, b_0, w_cat_1, b_1, ..., o_ref]."""
    o_ref = refs[-1]
    a = a_ref[...]          # (Np, Np) adjacency: loaded once, reused by all layers
    x = x_ref[...]          # (Np, Cp) node features: stay on-chip across layers
    for layer, (use_pre, apply_act) in enumerate(layer_cfg):
        w = refs[2 * layer][...]
        b = refs[2 * layer + 1][...]        # (1, Cp) bias, broadcast once per layer
        if use_pre:
            # C_out < C_in: project first, aggregate second  ->  A @ (X @ W).
            # w = [W_rel | W_root] with shape (Cp, 2*Cp); one merged small matmul.
            y = jnp.dot(x, w, preferred_element_type=jnp.float32, precision=_PREC)
            out = (jnp.dot(a, y[:, :c_pad],
                           preferred_element_type=jnp.float32, precision=_PREC)
                   + y[:, c_pad:] + b)
        else:
            # C_out >= C_in: aggregate first  ->  (A @ X) @ W.
            # Single merged matmul: concat([agg, x]) @ [W_rel ; W_root].
            agg = jnp.dot(a, x, preferred_element_type=jnp.float32, precision=_PREC)
            cat = jnp.concatenate([agg, x], axis=-1)
            out = jnp.dot(cat, w, preferred_element_type=jnp.float32,
                          precision=_PREC) + b
        if apply_act:
            out = _activation(out, act)
        x = out
    o_ref[...] = x          # single lane-dense (Np, Cp) store


# ----------------------------------------------------------------------------
# Host-side preparation (done once per model / per graph, not per forward)
# ----------------------------------------------------------------------------
def prepare_graph_params(params):
    """Pad + concatenate the per-layer weights once.

    params: list of (w_rel (ci,co), b_rel (1,co), w_root (ci,co)).
    Returns (flat_params tuple of arrays, meta) where meta is hashable/static.
    """
    dims = [w_rel.shape for (w_rel, _, _) in params]          # (ci, co) per layer
    c_pad = _round_up(max(max(ci, co) for ci, co in dims), 128)
    c_out_final = dims[-1][1]
    layers = len(params)

    flat, cfg = [], []
    for layer, (w_rel, b_rel, w_root) in enumerate(params):
        ci, co = w_rel.shape
        use_pre = co < ci
        if use_pre:
            # [W_rel | W_root] : (Cp, 2*Cp)
            w_cat = jnp.zeros((c_pad, 2 * c_pad), jnp.float32)
            w_cat = w_cat.at[:ci, :co].set(w_rel)
            w_cat = w_cat.at[:ci, c_pad:c_pad + co].set(w_root)
        else:
            # [W_rel ; W_root] : (2*Cp, Cp)
            w_cat = jnp.zeros((2 * c_pad, c_pad), jnp.float32)
            w_cat = w_cat.at[:ci, :co].set(w_rel)
            w_cat = w_cat.at[c_pad:c_pad + ci, :co].set(w_root)
        b_p = jnp.zeros((1, c_pad), jnp.float32).at[:, :co].set(b_rel)
        flat += [w_cat, b_p]
        cfg.append((use_pre, layer < layers - 1))

    meta = (tuple(cfg), c_pad, c_out_final)
    return tuple(flat), meta


def build_dense_adjacency(n, edge_index, edge_weight, n_pad=None):
    """A[i, j] = sum of edge weights over edges j -> i, built directly at the
       padded size (once per graph). Arbitrary scatter-add has no clean dense
       Pallas equivalent, so this stays in plain JAX/XLA."""
    n_pad = n if n_pad is None else n_pad
    src, dst = edge_index[0], edge_index[1]
    return jnp.zeros((n_pad, n_pad), jnp.float32).at[dst, src].add(edge_weight)


# ----------------------------------------------------------------------------
# Fused forward pass
# ----------------------------------------------------------------------------
@partial(jax.jit, static_argnames=('meta', 'act'))
def graph_forward(x, adj_p, flat_params, *, meta, act: str):
    """x: (N, C_in) f32, adj_p: (Np, Np) f32 pre-padded dense adjacency,
       flat_params/meta: output of prepare_graph_params."""
    layer_cfg, c_pad, c_out_final = meta
    n, c_in = x.shape
    n_pad = adj_p.shape[0]

    # Pad node features once (zero padding is preserved by every layer).
    x_p = jnp.zeros((n_pad, c_pad), jnp.float32).at[:n, :c_in].set(x)

    kernel = partial(_fused_graph_kernel, layer_cfg=layer_cfg, act=act,
                     c_pad=c_pad)

    def full_spec(shape):
        zeros = (0,) * len(shape)
        return pl.BlockSpec(shape, lambda i, _z=zeros: _z)

    # Advisory cost estimate for the XLA scheduler.
    n_layers = len(layer_cfg)
    flops = n_layers * (2 * n_pad * n_pad * c_pad            # aggregation matmul
                        + 2 * n_pad * (2 * c_pad) * c_pad)   # merged linear matmul
    transcendentals = 0
    if act == 'elu':
        transcendentals = sum(1 for (_u, a) in layer_cfg if a) * n_pad * c_pad
    bytes_accessed = 4 * (n_pad * n_pad                      # adjacency
                          + 2 * n_pad * c_pad                # x in + out
                          + sum(int(t.size) for t in flat_params))

    out_p = pl.pallas_call(
        kernel,
        out_shape=jax.ShapeDtypeStruct((n_pad, c_pad), jnp.float32),
        grid=(1,),
        in_specs=[full_spec(adj_p.shape), full_spec(x_p.shape)]
                 + [full_spec(t.shape) for t in flat_params],
        out_specs=full_spec((n_pad, c_pad)),
        compiler_params=pltpu.CompilerParams(
            dimension_semantics=("arbitrary",)),
        cost_estimate=pl.CostEstimate(flops=flops,
                                      transcendentals=transcendentals,
                                      bytes_accessed=bytes_accessed),
    )(adj_p, x_p, *flat_params)

    return out_p[:n, :c_out_final]


# ----------------------------------------------------------------------------
# Parameter init (plain JAX)
# ----------------------------------------------------------------------------
def init_graph_params(key, in_channels, hidden_channels, out_channels, layers):
    """Shapes match GraphConv(in, out): lin_rel weight (out,in)+bias (out,),
       lin_root weight (out,in). Stored pre-transposed as (in, out)."""
    dims = []
    for layer in range(layers):
        if layer == 0:
            dims.append((in_channels, hidden_channels))
        elif layer == layers - 1:
            dims.append((hidden_channels, out_channels))
        else:
            dims.append((hidden_channels, hidden_channels))
    params = []
    for (ci, co) in dims:
        key, k1, k2, k3 = jax.random.split(key, 4)
        scale = 1.0 / jnp.sqrt(ci)
        w_rel = jax.random.uniform(k1, (ci, co), jnp.float32, -scale, scale)
        b_rel = jax.random.uniform(k2, (1, co), jnp.float32, -scale, scale)
        w_root = jax.random.uniform(k3, (ci, co), jnp.float32, -scale, scale)
        params.append((w_rel, b_rel, w_root))
    return params


# ----------------------------------------------------------------------------
# Pure-JAX reference (torch_geometric GraphConv order of operations)
# ----------------------------------------------------------------------------
def graph_forward_ref(x, adj, params, *, act: str):
    layers = len(params)
    for layer, (w_rel, b_rel, w_root) in enumerate(params):
        agg = jnp.dot(adj, x, precision=_PREC)
        out = (jnp.dot(agg, w_rel, precision=_PREC) + b_rel
               + jnp.dot(x, w_root, precision=_PREC))
        if layer < layers - 1:
            out = _activation(out, act)
        x = out
    return x


if __name__ == "__main__":
    # Small synthetic graph: 32 nodes, 8-dim input features,
    # hidden=32, out=16, 3 GraphConv layers, ReLU activation.
    N, E = 32, 96
    in_channels, hidden_channels, out_channels, n_layers = 8, 32, 16, 3
    gnn_act = 'relu'

    key = jax.random.PRNGKey(0)
    kx, ks, kd, kw, kp = jax.random.split(key, 5)

    x = jax.random.normal(kx, (N, in_channels), jnp.float32)
    src = jax.random.randint(ks, (E,), 0, N, jnp.int32)
    dst = jax.random.randint(kd, (E,), 0, N, jnp.int32)
    edge_index = jnp.stack([src, dst], axis=0)            # (2, E)
    edge_weight = jax.random.uniform(kw, (E,), jnp.float32)

    params = init_graph_params(kp, in_channels, hidden_channels,
                               out_channels, n_layers)

    # One-time preparation (hoisted out of the forward pass).
    n_pad = _round_up(N, 128)
    adj_p = build_dense_adjacency(N, edge_index, edge_weight, n_pad=n_pad)
    flat_params, meta = prepare_graph_params(params)

    out = graph_forward(x, adj_p, flat_params, meta=meta, act=gnn_act)
    out = jax.block_until_ready(out)

    adj = adj_p[:N, :N]
    ref = graph_forward_ref(x, adj, params, act=gnn_act)
    assert out.shape == (N, out_channels)
    assert jnp.allclose(out, ref, atol=1e-3, rtol=1e-3), "mismatch vs reference"

    print("KERNEL_OK")
</pallas_src>

<mosaic_0001>
module attributes {stable_mosaic.version = 11 : i64} {
  func.func @_fused_graph_kernel(%arg0: i32, %arg1: memref<128x128xf32, #tpu.memory_space<vmem>>, %arg2: memref<128x128xf32, #tpu.memory_space<vmem>>, %arg3: memref<256x128xf32, #tpu.memory_space<vmem>>, %arg4: memref<1x128xf32, #tpu.memory_space<vmem>>, %arg5: memref<256x128xf32, #tpu.memory_space<vmem>>, %arg6: memref<1x128xf32, #tpu.memory_space<vmem>>, %arg7: memref<128x256xf32, #tpu.memory_space<vmem>>, %arg8: memref<1x128xf32, #tpu.memory_space<vmem>>, %arg9: memref<128x128xf32, #tpu.memory_space<vmem>>) attributes {dimension_semantics = [#tpu.dimension_semantics<arbitrary>], iteration_bounds = array<i64: 1>, scalar_prefetch = 0 : i64, scratch_operands = 0 : i64, tpu.core_type = #tpu.core_type<tc>, window_params = [{pipeline_mode = #tpu.pipeline_mode<synchronous>, transform_indices = @transform_0, window_bounds = array<i64: 128, 128>}, {pipeline_mode = #tpu.pipeline_mode<synchronous>, transform_indices = @transform_1, window_bounds = array<i64: 128, 128>}, {pipeline_mode = #tpu.pipeline_mode<synchronous>, transform_indices = @transform_2, window_bounds = array<i64: 256, 128>}, {pipeline_mode = #tpu.pipeline_mode<synchronous>, transform_indices = @transform_3, window_bounds = array<i64: 1, 128>}, {pipeline_mode = #tpu.pipeline_mode<synchronous>, transform_indices = @transform_4, window_bounds = array<i64: 256, 128>}, {pipeline_mode = #tpu.pipeline_mode<synchronous>, transform_indices = @transform_5, window_bounds = array<i64: 1, 128>}, {pipeline_mode = #tpu.pipeline_mode<synchronous>, transform_indices = @transform_6, window_bounds = array<i64: 128, 256>}, {pipeline_mode = #tpu.pipeline_mode<synchronous>, transform_indices = @transform_7, window_bounds = array<i64: 1, 128>}, {pipeline_mode = #tpu.pipeline_mode<synchronous>, transform_indices = @transform_8, window_bounds = array<i64: 128, 128>}]} {
    %c0 = arith.constant 0 : index
    %c0_0 = arith.constant 0 : index
    %0 = vector.load %arg1[%c0, %c0_0] : memref<128x128xf32, #tpu.memory_space<vmem>>, vector<128x128xf32>
    %c0_1 = arith.constant 0 : index
    %c0_2 = arith.constant 0 : index
    %1 = vector.load %arg2[%c0_1, %c0_2] : memref<128x128xf32, #tpu.memory_space<vmem>>, vector<128x128xf32>
    %c0_3 = arith.constant 0 : index
    %c0_4 = arith.constant 0 : index
    %2 = vector.load %arg3[%c0_3, %c0_4] : memref<256x128xf32, #tpu.memory_space<vmem>>, vector<256x128xf32>
    %c0_5 = arith.constant 0 : index
    %c0_6 = arith.constant 0 : index
    %3 = vector.load %arg4[%c0_5, %c0_6] : memref<1x128xf32, #tpu.memory_space<vmem>>, vector<1x128xf32>
    %cst = arith.constant dense<0.000000e+00> : vector<128x128xf32>
    %4 = tpu.matmul %0, %1, %cst {dimension_numbers = #tpu.dot_dimension_numbers<[1], [0], [0], [1], [0, 0, 1, 1], [], []>, precision = #tpu.contract_precision<fp32>} : vector<128x128xf32>, vector<128x128xf32>, vector<128x128xf32> -> vector<128x128xf32>
    %5 = tpu.concatenate %4, %1 in 1 : vector<128x128xf32>, vector<128x128xf32> -> vector<128x256xf32>
    %cst_7 = arith.constant dense<0.000000e+00> : vector<128x128xf32>
    %6 = tpu.matmul %5, %2, %cst_7 {dimension_numbers = #tpu.dot_dimension_numbers<[1], [0], [0], [1], [0, 0, 1, 1], [], []>, precision = #tpu.contract_precision<fp32>} : vector<128x256xf32>, vector<256x128xf32>, vector<128x128xf32> -> vector<128x128xf32>
    %7 = vector.broadcast %3 : vector<1x128xf32> to vector<128x128xf32>
    %8 = arith.addf %6, %7 : vector<128x128xf32>
    %cst_8 = arith.constant 0.000000e+00 : f32
    %9 = vector.broadcast %cst_8 : f32 to vector<128x128xf32>
    %10 = arith.maximumf %8, %9 : vector<128x128xf32>
    %c0_9 = arith.constant 0 : index
    %c0_10 = arith.constant 0 : index
    %11 = vector.load %arg5[%c0_9, %c0_10] : memref<256x128xf32, #tpu.memory_space<vmem>>, vector<256x128xf32>
    %c0_11 = arith.constant 0 : index
    %c0_12 = arith.constant 0 : index
    %12 = vector.load %arg6[%c0_11, %c0_12] : memref<1x128xf32, #tpu.memory_space<vmem>>, vector<1x128xf32>
    %cst_13 = arith.constant dense<0.000000e+00> : vector<128x128xf32>
    %13 = tpu.matmul %0, %10, %cst_13 {dimension_numbers = #tpu.dot_dimension_numbers<[1], [0], [0], [1], [0, 0, 1, 1], [], []>, precision = #tpu.contract_precision<fp32>} : vector<128x128xf32>, vector<128x128xf32>, vector<128x128xf32> -> vector<128x128xf32>
    %14 = tpu.concatenate %13, %10 in 1 : vector<128x128xf32>, vector<128x128xf32> -> vector<128x256xf32>
    %cst_14 = arith.constant dense<0.000000e+00> : vector<128x128xf32>
    %15 = tpu.matmul %14, %11, %cst_14 {dimension_numbers = #tpu.dot_dimension_numbers<[1], [0], [0], [1], [0, 0, 1, 1], [], []>, precision = #tpu.contract_precision<fp32>} : vector<128x256xf32>, vector<256x128xf32>, vector<128x128xf32> -> vector<128x128xf32>
    %16 = vector.broadcast %12 : vector<1x128xf32> to vector<128x128xf32>
    %17 = arith.addf %15, %16 : vector<128x128xf32>
    %cst_15 = arith.constant 0.000000e+00 : f32
    %18 = vector.broadcast %cst_15 : f32 to vector<128x128xf32>
    %19 = arith.maximumf %17, %18 : vector<128x128xf32>
    %c0_16 = arith.constant 0 : index
    %c0_17 = arith.constant 0 : index
    %20 = vector.load %arg7[%c0_16, %c0_17] : memref<128x256xf32, #tpu.memory_space<vmem>>, vector<128x256xf32>
    %c0_18 = arith.constant 0 : index
    %c0_19 = arith.constant 0 : index
    %21 = vector.load %arg8[%c0_18, %c0_19] : memref<1x128xf32, #tpu.memory_space<vmem>>, vector<1x128xf32>
    %cst_20 = arith.constant dense<0.000000e+00> : vector<128x256xf32>
    %22 = tpu.matmul %19, %20, %cst_20 {dimension_numbers = #tpu.dot_dimension_numbers<[1], [0], [0], [1], [0, 0, 1, 1], [], []>, precision = #tpu.contract_precision<fp32>} : vector<128x128xf32>, vector<128x256xf32>, vector<128x256xf32> -> vector<128x256xf32>
    %23 = vector.extract_strided_slice %22 {offsets = [0, 0], sizes = [128, 128], strides = [1, 1]} : vector<128x256xf32> to vector<128x128xf32>
    %cst_21 = arith.constant dense<0.000000e+00> : vector<128x128xf32>
    %24 = tpu.matmul %0, %23, %cst_21 {dimension_numbers = #tpu.dot_dimension_numbers<[1], [0], [0], [1], [0, 0, 1, 1], [], []>, precision = #tpu.contract_precision<fp32>} : vector<128x128xf32>, vector<128x128xf32>, vector<128x128xf32> -> vector<128x128xf32>
    %25 = vector.extract_strided_slice %22 {offsets = [0, 128], sizes = [128, 128], strides = [1, 1]} : vector<128x256xf32> to vector<128x128xf32>
    %26 = arith.addf %24, %25 : vector<128x128xf32>
    %27 = vector.broadcast %21 : vector<1x128xf32> to vector<128x128xf32>
    %28 = arith.addf %26, %27 : vector<128x128xf32>
    %c0_22 = arith.constant 0 : index
    %c0_23 = arith.constant 0 : index
    %29 = vector.load %arg9[%c0_22, %c0_23] : memref<128x128xf32, #tpu.memory_space<vmem>>, vector<128x128xf32>
    tpu.vector_store %arg9[%c0_22, %c0_23], %28 {strides = array<i32>} : memref<128x128xf32, #tpu.memory_space<vmem>>, vector<128x128xf32>,
    return
  }
  func.func @transform_0(%arg0: i32) -> (i32, i32) {
    %c0_i32 = arith.constant 0 : i32
    %c0_i32_0 = arith.constant 0 : i32
    %c0_i32_1 = arith.constant 0 : i32
    return %c0_i32, %c0_i32_0 : i32, i32
  }
  func.func @transform_1(%arg0: i32) -> (i32, i32) {
    %c0_i32 = arith.constant 0 : i32
    %c0_i32_0 = arith.constant 0 : i32
    %c0_i32_1 = arith.constant 0 : i32
    return %c0_i32, %c0_i32_0 : i32, i32
  }
  func.func @transform_2(%arg0: i32) -> (i32, i32) {
    %c0_i32 = arith.constant 0 : i32
    %c0_i32_0 = arith.constant 0 : i32
    %c0_i32_1 = arith.constant 0 : i32
    return %c0_i32, %c0_i32_0 : i32, i32
  }
  func.func @transform_3(%arg0: i32) -> (i32, i32) {
    %c0_i32 = arith.constant 0 : i32
    %c0_i32_0 = arith.constant 0 : i32
    %c0_i32_1 = arith.constant 0 : i32
    return %c0_i32, %c0_i32_0 : i32, i32
  }
  func.func @transform_4(%arg0: i32) -> (i32, i32) {
    %c0_i32 = arith.constant 0 : i32
    %c0_i32_0 = arith.constant 0 : i32
    %c0_i32_1 = arith.constant 0 : i32
    return %c0_i32, %c0_i32_0 : i32, i32
  }
  func.func @transform_5(%arg0: i32) -> (i32, i32) {
    %c0_i32 = arith.constant 0 : i32
    %c0_i32_0 = arith.constant 0 : i32
    %c0_i32_1 = arith.constant 0 : i32
    return %c0_i32, %c0_i32_0 : i32, i32
  }
  func.func @transform_6(%arg0: i32) -> (i32, i32) {
    %c0_i32 = arith.constant 0 : i32
    %c0_i32_0 = arith.constant 0 : i32
    %c0_i32_1 = arith.constant 0 : i32
    return %c0_i32, %c0_i32_0 : i32, i32
  }
  func.func @transform_7(%arg0: i32) -> (i32, i32) {
    %c0_i32 = arith.constant 0 : i32
    %c0_i32_0 = arith.constant 0 : i32
    %c0_i32_1 = arith.constant 0 : i32
    return %c0_i32, %c0_i32_0 : i32, i32
  }
  func.func @transform_8(%arg0: i32) -> (i32, i32) {
    %c0_i32 = arith.constant 0 : i32
    %c0_i32_0 = arith.constant 0 : i32
    %c0_i32_1 = arith.constant 0 : i32
    return %c0_i32, %c0_i32_0 : i32, i32
  }
}

</mosaic_0001>

<llo_original>
// kernel: graph_forward.1
$region0: #{graph_forward.1}
  #allocation0 [shape = 'u32[]', space=smem, size = 0x4, offset = 0x4, fixed_abs, tag = 'smem constant byte address 0x4 - core index']
  #allocation1 [shape = 'u32[144,128]{1,0:T(1,128)}', space=vmem, size = 0x12000, scoped, tag = 'internal scratch']
  %s0 = inlined_call_operand.vmem [shape: f32[128,128], index: 0, kind: input, shape index: {}]
  %s1 = inlined_call_operand.vmem [shape: f32[128,128], index: 1, kind: input, shape index: {}]
  %s2 = inlined_call_operand.hbm [shape: f32[256,128], index: 2, kind: input, shape index: {}]
  %s3 = inlined_call_operand.vmem [shape: f32[1,128], index: 3, kind: input, shape index: {}]
  %s4 = inlined_call_operand.hbm [shape: f32[256,128], index: 4, kind: input, shape index: {}]
  %s5 = inlined_call_operand.vmem [shape: f32[1,128], index: 5, kind: input, shape index: {}]
  %s6 = inlined_call_operand.hbm [shape: f32[128,256], index: 6, kind: input, shape index: {}]
  %s7 = inlined_call_operand.vmem [shape: f32[1,128], index: 7, kind: input, shape index: {}]
  %s8 = inlined_call_operand.vmem [shape: f32[128,128], index: 8, kind: output, shape index: {}]
  %s9 = sld [smem:[#allocation0]]
  $region54: #{graph_forward.1} parent=0
    _
  %s11 = ssub.s32 1, %s9
  %s12 = scalar_select 0, %s11, %s9
  $region1: #{graph_forward.1} parent=0
    #allocation2 [shape = 'u8[131072]{0}', space=vmem, size = 0x20000, scoped, tag = 'input window, operand 2, single buffered']
    #allocation3 [shape = 's32[1]{0}', space=sflag, size = 0x4, scoped, tag = 'scoped memory for graph_forward.1']
    #allocation4 [shape = 'u8[131072]{0}', space=vmem, size = 0x20000, scoped, tag = 'input window, operand 4, single buffered']
    #allocation5 [shape = 's32[1]{0}', space=sflag, size = 0x4, scoped, tag = 'scoped memory for graph_forward.1']
    #allocation6 [shape = 'u8[131072]{0}', space=vmem, size = 0x20000, scoped, tag = 'input window, operand 6, single buffered']
    %13 = vsyncpa [#allocation3], 0
    %14 = vsyncpa [#allocation5], 0
    // Predicated region
    $region2: #{graph_forward.1} parent=1 // pred_check
      _
    $region3: #{graph_forward.1} parent=1 // pred_check_branch
      %16 = sbr.rel (0) target = $region5
    $region4: #{graph_forward.1} parent=1 // pred_region
      _
    $region5: #{graph_forward.1} parent=1 // pred_fallthru
      _
    // Predicated region
    $region6: #{graph_forward.1} parent=1 // pred_check
      _
    $region7: #{graph_forward.1} parent=1 // pred_check_branch
      %18 = sbr.rel (0) target = $region9
    $region8: #{graph_forward.1} parent=1 // pred_region
      _
    $region9: #{graph_forward.1} parent=1 // pred_fallthru
      _
    // Predicated region
    $region10: #{graph_forward.1} parent=1 // pred_check
      _
    $region11: #{graph_forward.1} parent=1 // pred_check_branch
      %20 = sbr.rel (0) target = $region13
    $region12: #{graph_forward.1} parent=1 // pred_region
      %s22 = ssub.s32 4096, 4096
      %23 = vsyncadd [#allocation3], %s22
      %s24 = sshll.u32 [#allocation2], 4
      %s25 = int_to_ptr.vmem [resolvable:$true] %s24
      %30 = dma.hbm_to_vmem [thread:$0]  %s2, 4096, %s25, [#allocation3], 128, 128, 8
    $region13: #{graph_forward.1} parent=1 // pred_fallthru
      _
    // Predicated region
    $region14: #{graph_forward.1} parent=1 // pred_check
      _
    $region15: #{graph_forward.1} parent=1 // pred_check_branch
      %32 = sbr.rel (0) target = $region17
    $region16: #{graph_forward.1} parent=1 // pred_region
      _
    $region17: #{graph_forward.1} parent=1 // pred_fallthru
      _
    // Predicated region
    $region18: #{graph_forward.1} parent=1 // pred_check
      _
    $region19: #{graph_forward.1} parent=1 // pred_check_branch
      %34 = sbr.rel (0) target = $region21
    $region20: #{graph_forward.1} parent=1 // pred_region
      %s36 = ssub.s32 4096, 4096
      %37 = vsyncadd [#allocation5], %s36
      %s38 = sshll.u32 [#allocation4], 4
      %s39 = int_to_ptr.vmem [resolvable:$true] %s38
      %44 = dma.hbm_to_vmem [thread:$0]  %s4, 4096, %s39, [#allocation5], 128, 128, 8
    $region21: #{graph_forward.1} parent=1 // pred_fallthru
      _
    // Predicated region
    $region22: #{graph_forward.1} parent=1 // pred_check
      _
    $region23: #{graph_forward.1} parent=1 // pred_check_branch
      %46 = sbr.rel (0) target = $region25
    $region24: #{graph_forward.1} parent=1 // pred_region
      _
    $region25: #{graph_forward.1} parent=1 // pred_fallthru
      _
    // Predicated region
    $region26: #{graph_forward.1} parent=1 // pred_check
      _
    $region27: #{graph_forward.1} parent=1 // pred_check_branch
      %48 = sbr.rel (0) target = $region29
    $region28: #{graph_forward.1} parent=1 // pred_region
      %s50 = ssub.s32 4096, 4096
      %51 = vsyncadd [#allocation5], %s50
      %s52 = sshll.u32 [#allocation6], 4
      %s53 = int_to_ptr.vmem [resolvable:$true] %s52
      %58 = dma.hbm_to_vmem [thread:$0]  %s6, 4096, %s53, [#allocation5], 256, 256, 16
    $region29: #{graph_forward.1} parent=1 // pred_fallthru
      _
    // Predicated region
    $region30: #{graph_forward.1} parent=1 // pred_check
      _
    $region31: #{graph_forward.1} parent=1 // pred_check_branch
      %60 = sbr.rel (0) target = $region33
    $region32: #{graph_forward.1} parent=1 // pred_region
      _
    $region33: #{graph_forward.1} parent=1 // pred_fallthru
      _
    // Predicated region
    $region34: #{graph_forward.1} parent=1 // pred_check
      _
    $region35: #{graph_forward.1} parent=1 // pred_check_branch
      %62 = sbr.rel (0) target = $region37
    $region36: #{graph_forward.1} parent=1 // pred_region
      %63 = dma.done [#allocation3], 4096
    $region37: #{graph_forward.1} parent=1 // pred_fallthru
      _
    // Predicated region
    $region38: #{graph_forward.1} parent=1 // pred_check
      _
    $region39: #{graph_forward.1} parent=1 // pred_check_branch
      %65 = sbr.rel (0) target = $region41
    $region40: #{graph_forward.1} parent=1 // pred_region
      %66 = dma.done [#allocation5], 4096
    $region41: #{graph_forward.1} parent=1 // pred_fallthru
      _
    // Predicated region
    $region42: #{graph_forward.1} parent=1 // pred_check
      _
    $region43: #{graph_forward.1} parent=1 // pred_check_branch
      %68 = sbr.rel (0) target = $region45
    $region44: #{graph_forward.1} parent=1 // pred_region
      %69 = dma.done [#allocation5], 4096
    $region45: #{graph_forward.1} parent=1 // pred_fallthru
      _
    %v70 = vld [vmem:[%s0] sm:$0xff]
    %v71 = vld [vmem:[%s0 + $0x8] sm:$0xff]
    %v72 = vld [vmem:[%s0 + $0x10] sm:$0xff]
    %v73 = vld [vmem:[%s0 + $0x18] sm:$0xff]
    %v74 = vld [vmem:[%s0 + $0x20] sm:$0xff]
    %v75 = vld [vmem:[%s0 + $0x28] sm:$0xff]
    %v76 = vld [vmem:[%s0 + $0x30] sm:$0xff]
    %v77 = vld [vmem:[%s0 + $0x38] sm:$0xff]
    %v78 = vld [vmem:[%s0 + $0x40] sm:$0xff]
    %v79 = vld [vmem:[%s0 + $0x48] sm:$0xff]
    %v80 = vld [vmem:[%s0 + $0x50] sm:$0xff]
    %v81 = vld [vmem:[%s0 + $0x58] sm:$0xff]
    %v82 = vld [vmem:[%s0 + $0x60] sm:$0xff]
    %v83 = vld [vmem:[%s0 + $0x68] sm:$0xff]
    %v84 = vld [vmem:[%s0 + $0x70] sm:$0xff]
    %v85 = vld [vmem:[%s0 + $0x78] sm:$0xff]
    %v86 = vld [vmem:[%s1] sm:$0xff]
    %v87 = vld [vmem:[%s1 + $0x8] sm:$0xff]
    %v88 = vld [vmem:[%s1 + $0x10] sm:$0xff]
    %v89 = vld [vmem:[%s1 + $0x18] sm:$0xff]
    %v90 = vld [vmem:[%s1 + $0x20] sm:$0xff]
    %v91 = vld [vmem:[%s1 + $0x28] sm:$0xff]
    %v92 = vld [vmem:[%s1 + $0x30] sm:$0xff]
    %v93 = vld [vmem:[%s1 + $0x38] sm:$0xff]
    %v94 = vld [vmem:[%s1 + $0x40] sm:$0xff]
    %v95 = vld [vmem:[%s1 + $0x48] sm:$0xff]
    %v96 = vld [vmem:[%s1 + $0x50] sm:$0xff]
    %v97 = vld [vmem:[%s1 + $0x58] sm:$0xff]
    %v98 = vld [vmem:[%s1 + $0x60] sm:$0xff]
    %v99 = vld [vmem:[%s1 + $0x68] sm:$0xff]
    %v100 = vld [vmem:[%s1 + $0x70] sm:$0xff]
    %v101 = vld [vmem:[%s1 + $0x78] sm:$0xff]
    %v102 = vld [vmem:[#allocation2] sm:$0xff]
    %v103 = vld [vmem:[#allocation2 + $0x8] sm:$0xff]
    %v104 = vld [vmem:[#allocation2 + $0x10] sm:$0xff]
    %v105 = vld [vmem:[#allocation2 + $0x18] sm:$0xff]
    %v106 = vld [vmem:[#allocation2 + $0x20] sm:$0xff]
    %v107 = vld [vmem:[#allocation2 + $0x28] sm:$0xff]
    %v108 = vld [vmem:[#allocation2 + $0x30] sm:$0xff]
    %v109 = vld [vmem:[#allocation2 + $0x38] sm:$0xff]
    %v110 = vld [vmem:[#allocation2 + $0x40] sm:$0xff]
    %v111 = vld [vmem:[#allocation2 + $0x48] sm:$0xff]
    %v112 = vld [vmem:[#allocation2 + $0x50] sm:$0xff]
    %v113 = vld [vmem:[#allocation2 + $0x58] sm:$0xff]
    %v114 = vld [vmem:[#allocation2 + $0x60] sm:$0xff]
    %v115 = vld [vmem:[#allocation2 + $0x68] sm:$0xff]
    %v116 = vld [vmem:[#allocation2 + $0x70] sm:$0xff]
    %v117 = vld [vmem:[#allocation2 + $0x78] sm:$0xff]
    %v118 = vld [vmem:[#allocation2 + $0x80] sm:$0xff]
    %v119 = vld [vmem:[#allocation2 + $0x88] sm:$0xff]
    %v120 = vld [vmem:[#allocation2 + $0x90] sm:$0xff]
    %v121 = vld [vmem:[#allocation2 + $0x98] sm:$0xff]
    %v122 = vld [vmem:[#allocation2 + $0xa0] sm:$0xff]
    %v123 = vld [vmem:[#allocation2 + $0xa8] sm:$0xff]
    %v124 = vld [vmem:[#allocation2 + $0xb0] sm:$0xff]
    %v125 = vld [vmem:[#allocation2 + $0xb8] sm:$0xff]
    %v126 = vld [vmem:[#allocation2 + $0xc0] sm:$0xff]
    %v127 = vld [vmem:[#allocation2 + $0xc8] sm:$0xff]
    %v128 = vld [vmem:[#allocation2 + $0xd0] sm:$0xff]
    %v129 = vld [vmem:[#allocation2 + $0xd8] sm:$0xff]
    %v130 = vld [vmem:[#allocation2 + $0xe0] sm:$0xff]
    %v131 = vld [vmem:[#allocation2 + $0xe8] sm:$0xff]
    %v132 = vld [vmem:[#allocation2 + $0xf0] sm:$0xff]
    %v133 = vld [vmem:[#allocation2 + $0xf8] sm:$0xff]
    %v134 = vld [vmem:[%s3] sm:$0x1]
    %135 = vmatprep.subr.mxu0 0.0
    %v136 = vand.u32 %v86, 4294901760
    %137 = vmatpush1.msra.mxu0 %v136
    %138 = vmatprep.subr.mxu0 0.0
    %v139 = vand.u32 %v87, 4294901760
    %140 = vmatpush1.msra.mxu0 %v139
    %141 = vmatprep.subr.mxu0 0.0
    %v142 = vand.u32 %v88, 4294901760
    %143 = vmatpush1.msra.mxu0 %v142
    %144 = vmatprep.subr.mxu0 0.0
    %v145 = vand.u32 %v89, 4294901760
    %146 = vmatpush1.msra.mxu0 %v145
    %147 = vmatprep.subr.mxu0 0.0
    %v148 = vand.u32 %v90, 4294901760
    %149 = vmatpush1.msra.mxu0 %v148
    %150 = vmatprep.subr.mxu0 0.0
    %v151 = vand.u32 %v91, 4294901760
    %152 = vmatpush1.msra.mxu0 %v151
    %153 = vmatprep.subr.mxu0 0.0
    %v154 = vand.u32 %v92, 4294901760
    %155 = vmatpush1.msra.mxu0 %v154
    %156 = vmatprep.subr.mxu0 0.0
    %v157 = vand.u32 %v93, 4294901760
    %158 = vmatpush1.msra.mxu0 %v157
    %159 = vmatprep.subr.mxu0 0.0
    %v160 = vand.u32 %v94, 4294901760
    %161 = vmatpush1.msra.mxu0 %v160
    %162 = vmatprep.subr.mxu0 0.0
    %v163 = vand.u32 %v95, 4294901760
    %164 = vmatpush1.msra.mxu0 %v163
    %165 = vmatprep.subr.mxu0 0.0
    %v166 = vand.u32 %v96, 4294901760
    %167 = vmatpush1.msra.mxu0 %v166
    %168 = vmatprep.subr.mxu0 0.0
    %v169 = vand.u32 %v97, 4294901760
    %170 = vmatpush1.msra.mxu0 %v169
    %171 = vmatprep.subr.mxu0 0.0
    %v172 = vand.u32 %v98, 4294901760
    %173 = vmatpush1.msra.mxu0 %v172
    %174 = vmatprep.subr.mxu0 0.0
    %v175 = vand.u32 %v99, 4294901760
    %176 = vmatpush1.msra.mxu0 %v175
    %177 = vmatprep.subr.mxu0 0.0
    %v178 = vand.u32 %v100, 4294901760
    %179 = vmatpush1.msra.mxu0 %v178
    %180 = vmatprep.subr.mxu0 0.0
    %v181 = vand.u32 %v101, 4294901760
    %182 = vmatpush1.msra.mxu0 %v181
    %183 = vmatprep.subr.mxu0 0.0
    %184 = vmatpush1.msra.mxu0 0.0
    %185 = vmatprep.subr.mxu0 0.0
    %186 = vmatpush1.msra.mxu0 0.0
    %187 = vmatprep.subr.mxu0 0.0
    %188 = vmatpush1.msra.mxu0 0.0
    %189 = vmatprep.subr.mxu0 0.0
    %190 = vmatpush1.msra.mxu0 0.0
    %191 = vmatprep.subr.mxu0 0.0
    %192 = vmatpush1.msra.mxu0 0.0
    %193 = vmatprep.subr.mxu0 0.0
    %194 = vmatpush1.msra.mxu0 0.0
    %195 = vmatprep.subr.mxu0 0.0
    %196 = vmatpush1.msra.mxu0 0.0
    %197 = vmatprep.subr.mxu0 0.0
    %198 = vmatpush1.msra.mxu0 0.0
    %199 = vmatprep.subr.mxu0 0.0
    %200 = vmatpush1.msra.mxu0 0.0
    %201 = vmatprep.subr.mxu0 0.0
    %202 = vmatpush1.msra.mxu0 0.0
    %203 = vmatprep.subr.mxu0 0.0
    %204 = vmatpush1.msra.mxu0 0.0
    %205 = vmatprep.subr.mxu0 0.0
    %206 = vmatpush1.msra.mxu0 0.0
    %207 = vmatprep.subr.mxu0 0.0
    %208 = vmatpush1.msra.mxu0 0.0
    %209 = vmatprep.subr.mxu0 0.0
    %210 = vmatpush1.msra.mxu0 0.0
    %211 = vmatprep.subr.mxu0 0.0
    %212 = vmatpush1.msra.mxu0 0.0
    %213 = vmatprep.subr.mxu0 0.0
    %214 = vmatpush1.msra.mxu0 0.0
    %215 = vmatprep.mubr.f32.mxu0 0.0
    %v216 = vand.u32 %v70, 4294901760
    %v217 = vsub.f32 %v70, %v216
    %v218 = vand.u32 %v217, 4294901760
    %v219 = vsub.f32 %v217, %v218
    %v220 = vand.u32 %v219, 4294901760
    %221 = vmatmul.mubr.f32.gmra.mrb[0].mxu0 %v220
    %v222 = vpop.f32.mrb[0].mxu0
    %v223 = vadd.f32 0.0, %v222
    %v224 = vpop.f32.mrb[0].mxu0
    %225 = vmatprep.mubr.f32.mxu0 0.0
    %v226 = vand.u32 %v71, 4294901760
    %v227 = vsub.f32 %v71, %v226
    %v228 = vand.u32 %v227, 4294901760
    %v229 = vsub.f32 %v227, %v228
    %v230 = vand.u32 %v229, 4294901760
    %231 = vmatmul.mubr.f32.gmra.mrb[0].mxu0 %v230
    %v232 = vpop.f32.mrb[0].mxu0
    %v233 = vadd.f32 0.0, %v232
    %v234 = vpop.f32.mrb[0].mxu0
    %235 = vmatprep.mubr.f32.mxu0 0.0
    %v236 = vand.u32 %v72, 4294901760
    %v237 = vsub.f32 %v72, %v236
    %v238 = vand.u32 %v237, 4294901760
    %v239 = vsub.f32 %v237, %v238
    %v240 = vand.u32 %v239, 4294901760
    %241 = vmatmul.mubr.f32.gmra.mrb[0].mxu0 %v240
    %v242 = vpop.f32.mrb[0].mxu0
    %v243 = vadd.f32 0.0, %v242
    %v244 = vpop.f32.mrb[0].mxu0
    %245 = vmatprep.mubr.f32.mxu0 0.0
    %v246 = vand.u32 %v73, 4294901760
    %v247 = vsub.f32 %v73, %v246
    %v248 = vand.u32 %v247, 4294901760
    %v249 = vsub.f32 %v247, %v248
    %v250 = vand.u32 %v249, 4294901760
    %251 = vmatmul.mubr.f32.gmra.mrb[0].mxu0 %v250
    %v252 = vpop.f32.mrb[0].mxu0
    %v253 = vadd.f32 0.0, %v252
    %v254 = vpop.f32.mrb[0].mxu0
    %255 = vmatprep.mubr.f32.mxu0 0.0
    %v256 = vand.u32 %v74, 4294901760
    %v257 = vsub.f32 %v74, %v256
    %v258 = vand.u32 %v257, 4294901760
    %v259 = vsub.f32 %v257, %v258
    %v260 = vand.u32 %v259, 4294901760
    %261 = vmatmul.mubr.f32.gmra.mrb[0].mxu0 %v260
    %v262 = vpop.f32.mrb[0].mxu0
    %v263 = vadd.f32 0.0, %v262
    %v264 = vpop.f32.mrb[0].mxu0
    %265 = vmatprep.mubr.f32.mxu0 0.0
    %v266 = vand.u32 %v75, 4294901760
    %v267 = vsub.f32 %v75, %v266
    %v268 = vand.u32 %v267, 4294901760
    %v269 = vsub.f32 %v267, %v268
    %v270 = vand.u32 %v269, 4294901760
    %271 = vmatmul.mubr.f32.gmra.mrb[0].mxu0 %v270
    %v272 = vpop.f32.mrb[0].mxu0
    %v273 = vadd.f32 0.0, %v272
    %v274 = vpop.f32.mrb[0].mxu0
    %275 = vmatprep.mubr.f32.mxu0 0.0
    %v276 = vand.u32 %v76, 4294901760
    %v277 = vsub.f32 %v76, %v276
    %v278 = vand.u32 %v277, 4294901760
    %v279 = vsub.f32 %v277, %v278
    %v280 = vand.u32 %v279, 4294901760
    %281 = vmatmul.mubr.f32.gmra.mrb[0].mxu0 %v280
    %v282 = vpop.f32.mrb[0].mxu0
    %v283 = vadd.f32 0.0, %v282
    %v284 = vpop.f32.mrb[0].mxu0
    %285 = vmatprep.mubr.f32.mxu0 0.0
    %v286 = vand.u32 %v77, 4294901760
    %v287 = vsub.f32 %v77, %v286
    %v288 = vand.u32 %v287, 4294901760
    %v289 = vsub.f32 %v287, %v288
    %v290 = vand.u32 %v289, 4294901760
    %291 = vmatmul.mubr.f32.gmra.mrb[0].mxu0 %v290
    %v292 = vpop.f32.mrb[0].mxu0
    %v293 = vadd.f32 0.0, %v292
    %v294 = vpop.f32.mrb[0].mxu0
    %295 = vmatprep.mubr.f32.mxu0 0.0
    %v296 = vand.u32 %v78, 4294901760
    %v297 = vsub.f32 %v78, %v296
    %v298 = vand.u32 %v297, 4294901760
    %v299 = vsub.f32 %v297, %v298
    %v300 = vand.u32 %v299, 4294901760
    %301 = vmatmul.mubr.f32.gmra.mrb[0].mxu0 %v300
    %v302 = vpop.f32.mrb[0].mxu0
    %v303 = vadd.f32 0.0, %v302
    %v304 = vpop.f32.mrb[0].mxu0
    %305 = vmatprep.mubr.f32.mxu0 0.0
    %v306 = vand.u32 %v79, 4294901760
    %v307 = vsub.f32 %v79, %v306
    %v308 = vand.u32 %v307, 4294901760
    %v309 = vsub.f32 %v307, %v308
    %v310 = vand.u32 %v309, 4294901760
    %311 = vmatmul.mubr.f32.gmra.mrb[0].mxu0 %v310
    %v312 = vpop.f32.mrb[0].mxu0
    %v313 = vadd.f32 0.0, %v312
    %v314 = vpop.f32.mrb[0].mxu0
    %315 = vmatprep.mubr.f32.mxu0 0.0
    %v316 = vand.u32 %v80, 4294901760
    %v317 = vsub.f32 %v80, %v316
    %v318 = vand.u32 %v317, 4294901760
    %v319 = vsub.f32 %v317, %v318
    %v320 = vand.u32 %v319, 4294901760
    %321 = vmatmul.mubr.f32.gmra.mrb[0].mxu0 %v320
    %v322 = vpop.f32.mrb[0].mxu0
    %v323 = vadd.f32 0.0, %v322
    %v324 = vpop.f32.mrb[0].mxu0
    %325 = vmatprep.mubr.f32.mxu0 0.0
    %v326 = vand.u32 %v81, 4294901760
    %v327 = vsub.f32 %v81, %v326
    %v328 = vand.u32 %v327, 4294901760
    %v329 = vsub.f32 %v327, %v328
    %v330 = vand.u32 %v329, 4294901760
    %331 = vmatmul.mubr.f32.gmra.mrb[0].mxu0 %v330
    %v332 = vpop.f32.mrb[0].mxu0
    %v333 = vadd.f32 0.0, %v332
    %v334 = vpop.f32.mrb[0].mxu0
    %335 = vmatprep.mubr.f32.mxu0 0.0
    %v336 = vand.u32 %v82, 4294901760
    %v337 = vsub.f32 %v82, %v336
    %v338 = vand.u32 %v337, 4294901760
    %v339 = vsub.f32 %v337, %v338
    %v340 = vand.u32 %v339, 4294901760
    %341 = vmatmul.mubr.f32.gmra.mrb[0].mxu0 %v340
    %v342 = vpop.f32.mrb[0].mxu0
    %v343 = vadd.f32 0.0, %v342
    %v344 = vpop.f32.mrb[0].mxu0
    %345 = vmatprep.mubr.f32.mxu0 0.0
    %v346 = vand.u32 %v83, 4294901760
    %v347 = vsub.f32 %v83, %v346
    %v348 = vand.u32 %v347, 4294901760
    %v349 = vsub.f32 %v347, %v348
    %v350 = vand.u32 %v349, 4294901760
    %351 = vmatmul.mubr.f32.gmra.mrb[0].mxu0 %v350
    %v352 = vpop.f32.mrb[0].mxu0
    %v353 = vadd.f32 0.0, %v352
    %v354 = vpop.f32.mrb[0].mxu0
    %355 = vmatprep.mubr.f32.mxu0 0.0
    %v356 = vand.u32 %v84, 4294901760
    %v357 = vsub.f32 %v84, %v356
    %v358 = vand.u32 %v357, 4294901760
    %v359 = vsub.f32 %v357, %v358
    %v360 = vand.u32 %v359, 4294901760
    %361 = vmatmul.mubr.f32.gmra.mrb[0].mxu0 %v360
    %v362 = vpop.f32.mrb[0].mxu0
    %v363 = vadd.f32 0.0, %v362
    %v364 = vpop.f32.mrb[0].mxu0
    %365 = vmatprep.mubr.f32.mxu0 0.0
    %v366 = vand.u32 %v85, 4294901760
    %v367 = vsub.f32 %v85, %v366
    %v368 = vand.u32 %v367, 4294901760
    %v369 = vsub.f32 %v367, %v368
    %v370 = vand.u32 %v369, 4294901760
    %371 = vmatmul.mubr.f32.gmra.mrb[0].mxu0 %v370
    %v372 = vpop.f32.mrb[0].mxu0
    %v373 = vadd.f32 0.0, %v372
    %v374 = vpop.f32.mrb[0].mxu0
    %375 = vdwg.mxu0
    %376 = vmatprep.subr.mxu0 0.0
    %v377 = vand.u32 %v86, 4294901760
    %v378 = vsub.f32 %v86, %v377
    %v379 = vand.u32 %v378, 4294901760
    %v380 = vsub.f32 %v378, %v379
    %v381 = vand.u32 %v380, 4294901760
    %382 = vmatpush1.msra.mxu0 %v381
    %383 = vmatprep.subr.mxu0 0.0
    %v384 = vand.u32 %v87, 4294901760
    %v385 = vsub.f32 %v87, %v384
    %v386 = vand.u32 %v385, 4294901760
    %v387 = vsub.f32 %v385, %v386
    %v388 = vand.u32 %v387, 4294901760
    %389 = vmatpush1.msra.mxu0 %v388
    %390 = vmatprep.subr.mxu0 0.0
    %v391 = vand.u32 %v88, 4294901760
    %v392 = vsub.f32 %v88, %v391
    %v393 = vand.u32 %v392, 4294901760
    %v394 = vsub.f32 %v392, %v393
    %v395 = vand.u32 %v394, 4294901760
    %396 = vmatpush1.msra.mxu0 %v395
    %397 = vmatprep.subr.mxu0 0.0
    %v398 = vand.u32 %v89, 4294901760
    %v399 = vsub.f32 %v89, %v398
    %v400 = vand.u32 %v399, 4294901760
    %v401 = vsub.f32 %v399, %v400
    %v402 = vand.u32 %v401, 4294901760
    %403 = vmatpush1.msra.mxu0 %v402
    %404 = vmatprep.subr.mxu0 0.0
    %v405 = vand.u32 %v90, 4294901760
    %v406 = vsub.f32 %v90, %v405
    %v407 = vand.u32 %v406, 4294901760
    %v408 = vsub.f32 %v406, %v407
    %v409 = vand.u32 %v408, 4294901760
    %410 = vmatpush1.msra.mxu0 %v409
    %411 = vmatprep.subr.mxu0 0.0
    %v412 = vand.u32 %v91, 4294901760
    %v413 = vsub.f32 %v91, %v412
    %v414 = vand.u32 %v413, 4294901760
    %v415 = vsub.f32 %v413, %v414
    %v416 = vand.u32 %v415, 4294901760
    %417 = vmatpush1.msra.mxu0 %v416
    %418 = vmatprep.subr.mxu0 0.0
    %v419 = vand.u32 %v92, 4294901760
    %v420 = vsub.f32 %v92, %v419
    %v421 = vand.u32 %v420, 4294901760
    %v422 = vsub.f32 %v420, %v421
    %v423 = vand.u32 %v422, 4294901760
    %424 = vmatpush1.msra.mxu0 %v423
    %425 = vmatprep.subr.mxu0 0.0
    %v426 = vand.u32 %v93, 4294901760
    %v427 = vsub.f32 %v93, %v426
    %v428 = vand.u32 %v427, 4294901760
    %v429 = vsub.f32 %v427, %v428
    %v430 = vand.u32 %v429, 4294901760
    %431 = vmatpush1.msra.mxu0 %v430
    %432 = vmatprep.subr.mxu0 0.0
    %v433 = vand.u32 %v94, 4294901760
    %v434 = vsub.f32 %v94, %v433
    %v435 = vand.u32 %v434, 4294901760
    %v436 = vsub.f32 %v434, %v435
    %v437 = vand.u32 %v436, 4294901760
    %438 = vmatpush1.msra.mxu0 %v437
    %439 = vmatprep.subr.mxu0 0.0
    %v440 = vand.u32 %v95, 4294901760
    %v441 = vsub.f32 %v95, %v440
    %v442 = vand.u32 %v441, 4294901760
    %v443 = vsub.f32 %v441, %v442
    %v444 = vand.u32 %v443, 4294901760
    %445 = vmatpush1.msra.mxu0 %v444
    %446 = vmatprep.subr.mxu0 0.0
    %v447 = vand.u32 %v96, 4294901760
    %v448 = vsub.f32 %v96, %v447
    %v449 = vand.u32 %v448, 4294901760
    %v450 = vsub.f32 %v448, %v449
    %v451 = vand.u32 %v450, 4294901760
    %452 = vmatpush1.msra.mxu0 %v451
    %453 = vmatprep.subr.mxu0 0.0
    %v454 = vand.u32 %v97, 4294901760
    %v455 = vsub.f32 %v97, %v454
    %v456 = vand.u32 %v455, 4294901760
    %v457 = vsub.f32 %v455, %v456
    %v458 = vand.u32 %v457, 4294901760
    %459 = vmatpush1.msra.mxu0 %v458
    %460 = vmatprep.subr.mxu0 0.0
    %v461 = vand.u32 %v98, 4294901760
    %v462 = vsub.f32 %v98, %v461
    %v463 = vand.u32 %v462, 4294901760
    %v464 = vsub.f32 %v462, %v463
    %v465 = vand.u32 %v464, 4294901760
    %466 = vmatpush1.msra.mxu0 %v465
    %467 = vmatprep.subr.mxu0 0.0
    %v468 = vand.u32 %v99, 4294901760
    %v469 = vsub.f32 %v99, %v468
    %v470 = vand.u32 %v469, 4294901760
    %v471 = vsub.f32 %v469, %v470
    %v472 = vand.u32 %v471, 4294901760
    %473 = vmatpush1.msra.mxu0 %v472
    %474 = vmatprep.subr.mxu0 0.0
    %v475 = vand.u32 %v100, 4294901760
    %v476 = vsub.f32 %v100, %v475
    %v477 = vand.u32 %v476, 4294901760
    %v478 = vsub.f32 %v476, %v477
    %v479 = vand.u32 %v478, 4294901760
    %480 = vmatpush1.msra.mxu0 %v479
    %481 = vmatprep.subr.mxu0 0.0
    %v482 = vand.u32 %v101, 4294901760
    %v483 = vsub.f32 %v101, %v482
    %v484 = vand.u32 %v483, 4294901760
    %v485 = vsub.f32 %v483, %v484
    %v486 = vand.u32 %v485, 4294901760
    %487 = vmatpush1.msra.mxu0 %v486
    %488 = vmatprep.subr.mxu0 0.0
    %489 = vmatpush1.msra.mxu0 0.0
    %490 = vmatprep.subr.mxu0 0.0
    %491 = vmatpush1.msra.mxu0 0.0
    %492 = vmatprep.subr.mxu0 0.0
    %493 = vmatpush1.msra.mxu0 0.0
    %494 = vmatprep.subr.mxu0 0.0
    %495 = vmatpush1.msra.mxu0 0.0
    %496 = vmatprep.subr.mxu0 0.0
    %497 = vmatpush1.msra.mxu0 0.0
    %498 = vmatprep.subr.mxu0 0.0
    %499 = vmatpush1.msra.mxu0 0.0
    %500 = vmatprep.subr.mxu0 0.0
    %501 = vmatpush1.msra.mxu0 0.0
    %502 = vmatprep.subr.mxu0 0.0
    %503 = vmatpush1.msra.mxu0 0.0
    %504 = vmatprep.subr.mxu0 0.0
    %505 = vmatpush1.msra.mxu0 0.0
    %506 = vmatprep.subr.mxu0 0.0
    %507 = vmatpush1.msra.mxu0 0.0
    %508 = vmatprep.subr.mxu0 0.0
    %509 = vmatpush1.msra.mxu0 0.0
    %510 = vmatprep.subr.mxu0 0.0
    %511 = vmatpush1.msra.mxu0 0.0
    %512 = vmatprep.subr.mxu0 0.0
    %513 = vmatpush1.msra.mxu0 0.0
    %514 = vmatprep.subr.mxu0 0.0
    %515 = vmatpush1.msra.mxu0 0.0
    %516 = vmatprep.subr.mxu0 0.0
    %517 = vmatpush1.msra.mxu0 0.0
    %518 = vmatprep.subr.mxu0 0.0
    %519 = vmatpush1.msra.mxu0 0.0
    %520 = vmatprep.mubr.f32.mxu0 0.0
    %v521 = vand.u32 %v70, 4294901760
    %522 = vmatmul.mubr.f32.gmra.mrb[0].mxu0 %v521
    %v523 = vpop.f32.mrb[0].mxu0
    %v524 = vadd.f32 %v223, %v523
    %v525 = vpop.f32.mrb[0].mxu0
    %526 = vmatprep.mubr.f32.mxu0 0.0
    %v527 = vand.u32 %v71, 4294901760
    %528 = vmatmul.mubr.f32.gmra.mrb[0].mxu0 %v527
    %v529 = vpop.f32.mrb[0].mxu0
    %v530 = vadd.f32 %v233, %v529
    %v531 = vpop.f32.mrb[0].mxu0
    %532 = vmatprep.mubr.f32.mxu0 0.0
    %v533 = vand.u32 %v72, 4294901760
    %534 = vmatmul.mubr.f32.gmra.mrb[0].mxu0 %v533
    %v535 = vpop.f32.mrb[0].mxu0
    %v536 = vadd.f32 %v243, %v535
    %v537 = vpop.f32.mrb[0].mxu0
    %538 = vmatprep.mubr.f32.mxu0 0.0
    %v539 = vand.u32 %v73, 4294901760
    %540 = vmatmul.mubr.f32.gmra.mrb[0].mxu0 %v539
    %v541 = vpop.f32.mrb[0].mxu0
    %v542 = vadd.f32 %v253, %v541
    %v543 = vpop.f32.mrb[0].mxu0
    %544 = vmatprep.mubr.f32.mxu0 0.0
    %v545 = vand.u32 %v74, 4294901760
    %546 = vmatmul.mubr.f32.gmra.mrb[0].mxu0 %v545
    %v547 = vpop.f32.mrb[0].mxu0
    %v548 = vadd.f32 %v263, %v547
    %v549 = vpop.f32.mrb[0].mxu0
    %550 = vmatprep.mubr.f32.mxu0 0.0
    %v551 = vand.u32 %v75, 4294901760
    %552 = vmatmul.mubr.f32.gmra.mrb[0].mxu0 %v551
    %v553 = vpop.f32.mrb[0].mxu0
    %v554 = vadd.f32 %v273, %v553
    %v555 = vpop.f32.mrb[0].mxu0
    %556 = vmatprep.mubr.f32.mxu0 0.0
    %v557 = vand.u32 %v76, 4294901760
    %558 = vmatmul.mubr.f32.gmra.mrb[0].mxu0 %v557
    %v559 = vpop.f32.mrb[0].mxu0
    %v560 = vadd.f32 %v283, %v559
    %v561 = vpop.f32.mrb[0].mxu0
    %562 = vmatprep.mubr.f32.mxu0 0.0
    %v563 = vand.u32 %v77, 4294901760
    %564 = vmatmul.mubr.f32.gmra.mrb[0].mxu0 %v563
    %v565 = vpop.f32.mrb[0].mxu0
    %v566 = vadd.f32 %v293, %v565
    %v567 = vpop.f32.mrb[0].mxu0
    %568 = vmatprep.mubr.f32.mxu0 0.0
    %v569 = vand.u32 %v78, 4294901760
    %570 = vmatmul.mubr.f32.gmra.mrb[0].mxu0 %v569
    %v571 = vpop.f32.mrb[0].mxu0
    %v572 = vadd.f32 %v303, %v571
    %v573 = vpop.f32.mrb[0].mxu0
    %574 = vmatprep.mubr.f32.mxu0 0.0
    %v575 = vand.u32 %v79, 4294901760
    %576 = vmatmul.mubr.f32.gmra.mrb[0].mxu0 %v575
    %v577 = vpop.f32.mrb[0].mxu0
    %v578 = vadd.f32 %v313, %v577
    %v579 = vpop.f32.mrb[0].mxu0
    %580 = vmatprep.mubr.f32.mxu0 0.0
    %v581 = vand.u32 %v80, 4294901760
    %582 = vmatmul.mubr.f32.gmra.mrb[0].mxu0 %v581
    %v583 = vpop.f32.mrb[0].mxu0
    %v584 = vadd.f32 %v323, %v583
    %v585 = vpop.f32.mrb[0].mxu0
    %586 = vmatprep.mubr.f32.mxu0 0.0
    %v587 = vand.u32 %v81, 4294901760
    %588 = vmatmul.mubr.f32.gmra.mrb[0].mxu0 %v587
    %v589 = vpop.f32.mrb[0].mxu0
    %v590 = vadd.f32 %v333, %v589
    %v591 = vpop.f32.mrb[0].mxu0
    %592 = vmatprep.mubr.f32.mxu0 0.0
    %v593 = vand.u32 %v82, 4294901760
    %594 = vmatmul.mubr.f32.gmra.mrb[0].mxu0 %v593
    %v595 = vpop.f32.mrb[0].mxu0
    %v596 = vadd.f32 %v343, %v595
    %v597 = vpop.f32.mrb[0].mxu0
    %598 = vmatprep.mubr.f32.mxu0 0.0
    %v599 = vand.u32 %v83, 4294901760
    %600 = vmatmul.mubr.f32.gmra.mrb[0].mxu0 %v599
    %v601 = vpop.f32.mrb[0].mxu0
    %v602 = vadd.f32 %v353, %v601
    %v603 = vpop.f32.mrb[0].mxu0
    %604 = vmatprep.mubr.f32.mxu0 0.0
    %v605 = vand.u32 %v84, 4294901760
    %606 = vmatmul.mubr.f32.gmra.mrb[0].mxu0 %v605
    %v607 = vpop.f32.mrb[0].mxu0
    %v608 = vadd.f32 %v363, %v607
    %v609 = vpop.f32.mrb[0].mxu0
    %610 = vmatprep.mubr.f32.mxu0 0.0
    %v611 = vand.u32 %v85, 4294901760
    %612 = vmatmul.mubr.f32.gmra.mrb[0].mxu0 %v611
    %v613 = vpop.f32.mrb[0].mxu0
    %v614 = vadd.f32 %v373, %v613
    %v615 = vpop.f32.mrb[0].mxu0
    %616 = vdwg.mxu0
    %617 = vmatprep.subr.mxu0 0.0
    %v618 = vand.u32 %v86, 4294901760
    %v619 = vsub.f32 %v86, %v618
    %620 = vmatpush1.msra.mxu0 %v619
    %621 = vmatprep.subr.mxu0 0.0
    %v622 = vand.u32 %v87, 4294901760
    %v623 = vsub.f32 %v87, %v622
    %624 = vmatpush1.msra.mxu0 %v623
    %625 = vmatprep.subr.mxu0 0.0
    %v626 = vand.u32 %v88, 4294901760
    %v627 = vsub.f32 %v88, %v626
    %628 = vmatpush1.msra.mxu0 %v627
    %629 = vmatprep.subr.mxu0 0.0
    %v630 = vand.u32 %v89, 4294901760
    %v631 = vsub.f32 %v89, %v630
    %632 = vmatpush1.msra.mxu0 %v631
    %633 = vmatprep.subr.mxu0 0.0
    %v634 = vand.u32 %v90, 4294901760
    %v635 = vsub.f32 %v90, %v634
    %636 = vmatpush1.msra.mxu0 %v635
    %637 = vmatprep.subr.mxu0 0.0
    %v638 = vand.u32 %v91, 4294901760
    %v639 = vsub.f32 %v91, %v638
    %640 = vmatpush1.msra.mxu0 %v639
    %641 = vmatprep.subr.mxu0 0.0
    %v642 = vand.u32 %v92, 4294901760
    %v643 = vsub.f32 %v92, %v642
    %644 = vmatpush1.msra.mxu0 %v643
    %645 = vmatprep.subr.mxu0 0.0
    %v646 = vand.u32 %v93, 4294901760
    %v647 = vsub.f32 %v93, %v646
    %648 = vmatpush1.msra.mxu0 %v647
    %649 = vmatprep.subr.mxu0 0.0
    %v650 = vand.u32 %v94, 4294901760
    %v651 = vsub.f32 %v94, %v650
    %652 = vmatpush1.msra.mxu0 %v651
    %653 = vmatprep.subr.mxu0 0.0
    %v654 = vand.u32 %v95, 4294901760
    %v655 = vsub.f32 %v95, %v654
    %656 = vmatpush1.msra.mxu0 %v655
    %657 = vmatprep.subr.mxu0 0.0
    %v658 = vand.u32 %v96, 4294901760
    %v659 = vsub.f32 %v96, %v658
    %660 = vmatpush1.msra.mxu0 %v659
    %661 = vmatprep.subr.mxu0 0.0
    %v662 = vand.u32 %v97, 4294901760
    %v663 = vsub.f32 %v97, %v662
    %664 = vmatpush1.msra.mxu0 %v663
    %665 = vmatprep.subr.mxu0 0.0
    %v666 = vand.u32 %v98, 4294901760
    %v667 = vsub.f32 %v98, %v666
    %668 = vmatpush1.msra.mxu0 %v667
    %669 = vmatprep.subr.mxu0 0.0
    %v670 = vand.u32 %v99, 4294901760
    %v671 = vsub.f32 %v99, %v670
    %672 = vmatpush1.msra.mxu0 %v671
    %673 = vmatprep.subr.mxu0 0.0
    %v674 = vand.u32 %v100, 4294901760
    %v675 = vsub.f32 %v100, %v674
    %676 = vmatpush1.msra.mxu0 %v675
    %677 = vmatprep.subr.mxu0 0.0
    %v678 = vand.u32 %v101, 4294901760
    %v679 = vsub.f32 %v101, %v678
    %680 = vmatpush1.msra.mxu0 %v679
    %681 = vmatprep.subr.mxu0 0.0
    %682 = vmatpush1.msra.mxu0 0.0
    %683 = vmatprep.subr.mxu0 0.0
    %684 = vmatpush1.msra.mxu0 0.0
    %685 = vmatprep.subr.mxu0 0.0
    %686 = vmatpush1.msra.mxu0 0.0
    %687 = vmatprep.subr.mxu0 0.0
    %688 = vmatpush1.msra.mxu0 0.0
    %689 = vmatprep.subr.mxu0 0.0
    %690 = vmatpush1.msra.mxu0 0.0
    %691 = vmatprep.subr.mxu0 0.0
    %692 = vmatpush1.msra.mxu0 0.0
    %693 = vmatprep.subr.mxu0 0.0
    %694 = vmatpush1.msra.mxu0 0.0
    %695 = vmatprep.subr.mxu0 0.0
    %696 = vmatpush1.msra.mxu0 0.0
    %697 = vmatprep.subr.mxu0 0.0
    %698 = vmatpush1.msra.mxu0 0.0
    %699 = vmatprep.subr.mxu0 0.0
    %700 = vmatpush1.msra.mxu0 0.0
    %701 = vmatprep.subr.mxu0 0.0
    %702 = vmatpush1.msra.mxu0 0.0
    %703 = vmatprep.subr.mxu0 0.0
    %704 = vmatpush1.msra.mxu0 0.0
    %705 = vmatprep.subr.mxu0 0.0
    %706 = vmatpush1.msra.mxu0 0.0
    %707 = vmatprep.subr.mxu0 0.0
    %708 = vmatpush1.msra.mxu0 0.0
    %709 = vmatprep.subr.mxu0 0.0
    %710 = vmatpush1.msra.mxu0 0.0
    %711 = vmatprep.subr.mxu0 0.0
    %712 = vmatpush1.msra.mxu0 0.0
    %713 = vmatprep.mubr.f32.mxu0 0.0
    %v714 = vand.u32 %v70, 4294901760
    %v715 = vsub.f32 %v70, %v714
    %716 = vmatmul.mubr.f32.gmra.mrb[0].mxu0 %v715
    %v717 = vpop.f32.mrb[0].mxu0
    %v718 = vadd.f32 %v524, %v717
    %v719 = vpop.f32.mrb[0].mxu0
    %720 = vmatprep.mubr.f32.mxu0 0.0
    %v721 = vand.u32 %v71, 4294901760
    %v722 = vsub.f32 %v71, %v721
    %723 = vmatmul.mubr.f32.gmra.mrb[0].mxu0 %v722
    %v724 = vpop.f32.mrb[0].mxu0
    %v725 = vadd.f32 %v530, %v724
    %v726 = vpop.f32.mrb[0].mxu0
    %727 = vmatprep.mubr.f32.mxu0 0.0
    %v728 = vand.u32 %v72, 4294901760
    %v729 = vsub.f32 %v72, %v728
    %730 = vmatmul.mubr.f32.gmra.mrb[0].mxu0 %v729
    %v731 = vpop.f32.mrb[0].mxu0
    %v732 = vadd.f32 %v536, %v731
    %v733 = vpop.f32.mrb[0].mxu0
    %734 = vmatprep.mubr.f32.mxu0 0.0
    %v735 = vand.u32 %v73, 4294901760
    %v736 = vsub.f32 %v73, %v735
    %737 = vmatmul.mubr.f32.gmra.mrb[0].mxu0 %v736
    %v738 = vpop.f32.mrb[0].mxu0
    %v739 = vadd.f32 %v542, %v738
    %v740 = vpop.f32.mrb[0].mxu0
    %741 = vmatprep.mubr.f32.mxu0 0.0
    %v742 = vand.u32 %v74, 4294901760
    %v743 = vsub.f32 %v74, %v742
    %744 = vmatmul.mubr.f32.gmra.mrb[0].mxu0 %v743
    %v745 = vpop.f32.mrb[0].mxu0
    %v746 = vadd.f32 %v548, %v745
    %v747 = vpop.f32.mrb[0].mxu0
    %748 = vmatprep.mubr.f32.mxu0 0.0
    %v749 = vand.u32 %v75, 4294901760
    %v750 = vsub.f32 %v75, %v749
    %751 = vmatmul.mubr.f32.gmra.mrb[0].mxu0 %v750
    %v752 = vpop.f32.mrb[0].mxu0
    %v753 = vadd.f32 %v554, %v752
    %v754 = vpop.f32.mrb[0].mxu0
    %755 = vmatprep.mubr.f32.mxu0 0.0
    %v756 = vand.u32 %v76, 4294901760
    %v757 = vsub.f32 %v76, %v756
    %758 = vmatmul.mubr.f32.gmra.mrb[0].mxu0 %v757
    %v759 = vpop.f32.mrb[0].mxu0
    %v760 = vadd.f32 %v560, %v759
    %v761 = vpop.f32.mrb[0].mxu0
    %762 = vmatprep.mubr.f32.mxu0 0.0
    %v763 = vand.u32 %v77, 4294901760
    %v764 = vsub.f32 %v77, %v763
    %765 = vmatmul.mubr.f32.gmra.mrb[0].mxu0 %v764
    %v766 = vpop.f32.mrb[0].mxu0
    %v767 = vadd.f32 %v566, %v766
    %v768 = vpop.f32.mrb[0].mxu0
    %769 = vmatprep.mubr.f32.mxu0 0.0
    %v770 = vand.u32 %v78, 4294901760
    %v771 = vsub.f32 %v78, %v770
    %772 = vmatmul.mubr.f32.gmra.mrb[0].mxu0 %v771
    %v773 = vpop.f32.mrb[0].mxu0
    %v774 = vadd.f32 %v572, %v773
    %v775 = vpop.f32.mrb[0].mxu0
    %776 = vmatprep.mubr.f32.mxu0 0.0
    %v777 = vand.u32 %v79, 4294901760
    %v778 = vsub.f32 %v79, %v777
    %779 = vmatmul.mubr.f32.gmra.mrb[0].mxu0 %v778
    %v780 = vpop.f32.mrb[0].mxu0
    %v781 = vadd.f32 %v578, %v780
    %v782 = vpop.f32.mrb[0].mxu0
    %783 = vmatprep.mubr.f32.mxu0 0.0
    %v784 = vand.u32 %v80, 4294901760
    %v785 = vsub.f32 %v80, %v784
    %786 = vmatmul.mubr.f32.gmra.mrb[0].mxu0 %v785
    %v787 = vpop.f32.mrb[0].mxu0
    %v788 = vadd.f32 %v584, %v787
    %v789 = vpop.f32.mrb[0].mxu0
    %790 = vmatprep.mubr.f32.mxu0 0.0
    %v791 = vand.u32 %v81, 4294901760
    %v792 = vsub.f32 %v81, %v791
    %793 = vmatmul.mubr.f32.gmra.mrb[0].mxu0 %v792
    %v794 = vpop.f32.mrb[0].mxu0
    %v795 = vadd.f32 %v590, %v794
    %v796 = vpop.f32.mrb[0].mxu0
    %797 = vmatprep.mubr.f32.mxu0 0.0
    %v798 = vand.u32 %v82, 4294901760
    %v799 = vsub.f32 %v82, %v798
    %800 = vmatmul.mubr.f32.gmra.mrb[0].mxu0 %v799
    %v801 = vpop.f32.mrb[0].mxu0
    %v802 = vadd.f32 %v596, %v801
    %v803 = vpop.f32.mrb[0].mxu0
    %804 = vmatprep.mubr.f32.mxu0 0.0
    %v805 = vand.u32 %v83, 4294901760
    %v806 = vsub.f32 %v83, %v805
    %807 = vmatmul.mubr.f32.gmra.mrb[0].mxu0 %v806
    %v808 = vpop.f32.mrb[0].mxu0
    %v809 = vadd.f32 %v602, %v808
    %v810 = vpop.f32.mrb[0].mxu0
    %811 = vmatprep.mubr.f32.mxu0 0.0
    %v812 = vand.u32 %v84, 4294901760
    %v813 = vsub.f32 %v84, %v812
    %814 = vmatmul.mubr.f32.gmra.mrb[0].mxu0 %v813
    %v815 = vpop.f32.mrb[0].mxu0
    %v816 = vadd.f32 %v608, %v815
    %v817 = vpop.f32.mrb[0].mxu0
    %818 = vmatprep.mubr.f32.mxu0 0.0
    %v819 = vand.u32 %v85, 4294901760
    %v820 = vsub.f32 %v85, %v819
    %821 = vmatmul.mubr.f32.gmra.mrb[0].mxu0 %v820
    %v822 = vpop.f32.mrb[0].mxu0
    %v823 = vadd.f32 %v614, %v822
    %v824 = vpop.f32.mrb[0].mxu0
    %825 = vdwg.mxu0
    %826 = vmatprep.subr.mxu0 0.0
    %v827 = vand.u32 %v86, 4294901760
    %828 = vmatpush1.msra.mxu0 %v827
    %829 = vmatprep.subr.mxu0 0.0
    %v830 = vand.u32 %v87, 4294901760
    %831 = vmatpush1.msra.mxu0 %v830
    %832 = vmatprep.subr.mxu0 0.0
    %v833 = vand.u32 %v88, 4294901760
    %834 = vmatpush1.msra.mxu0 %v833
    %835 = vmatprep.subr.mxu0 0.0
    %v836 = vand.u32 %v89, 4294901760
    %837 = vmatpush1.msra.mxu0 %v836
    %838 = vmatprep.subr.mxu0 0.0
    %v839 = vand.u32 %v90, 4294901760
    %840 = vmatpush1.msra.mxu0 %v839
    %841 = vmatprep.subr.mxu0 0.0
    %v842 = vand.u32 %v91, 4294901760
    %843 = vmatpush1.msra.mxu0 %v842
    %844 = vmatprep.subr.mxu0 0.0
    %v845 = vand.u32 %v92, 4294901760
    %846 = vmatpush1.msra.mxu0 %v845
    %847 = vmatprep.subr.mxu0 0.0
    %v848 = vand.u32 %v93, 4294901760
    %849 = vmatpush1.msra.mxu0 %v848
    %850 = vmatprep.subr.mxu0 0.0
    %v851 = vand.u32 %v94, 4294901760
    %852 = vmatpush1.msra.mxu0 %v851
    %853 = vmatprep.subr.mxu0 0.0
    %v854 = vand.u32 %v95, 4294901760
    %855 = vmatpush1.msra.mxu0 %v854
    %856 = vmatprep.subr.mxu0 0.0
    %v857 = vand.u32 %v96, 4294901760
    %858 = vmatpush1.msra.mxu0 %v857
    %859 = vmatprep.subr.mxu0 0.0
    %v860 = vand.u32 %v97, 4294901760
    %861 = vmatpush1.msra.mxu0 %v860
    %862 = vmatprep.subr.mxu0 0.0
    %v863 = vand.u32 %v98, 4294901760
    %864 = vmatpush1.msra.mxu0 %v863
    %865 = vmatprep.subr.mxu0 0.0
    %v866 = vand.u32 %v99, 4294901760
    %867 = vmatpush1.msra.mxu0 %v866
    %868 = vmatprep.subr.mxu0 0.0
    %v869 = vand.u32 %v100, 4294901760
    %870 = vmatpush1.msra.mxu0 %v869
    %871 = vmatprep.subr.mxu0 0.0
    %v872 = vand.u32 %v101, 4294901760
    %873 = vmatpush1.msra.mxu0 %v872
    %874 = vmatprep.subr.mxu0 0.0
    %875 = vmatpush1.msra.mxu0 0.0
    %876 = vmatprep.subr.mxu0 0.0
    %877 = vmatpush1.msra.mxu0 0.0
    %878 = vmatprep.subr.mxu0 0.0
    %879 = vmatpush1.msra.mxu0 0.0
    %880 = vmatprep.subr.mxu0 0.0
    %881 = vmatpush1.msra.mxu0 0.0
    %882 = vmatprep.subr.mxu0 0.0
    %883 = vmatpush1.msra.mxu0 0.0
    %884 = vmatprep.subr.mxu0 0.0
    %885 = vmatpush1.msra.mxu0 0.0
    %886 = vmatprep.subr.mxu0 0.0
    %887 = vmatpush1.msra.mxu0 0.0
    %888 = vmatprep.subr.mxu0 0.0
    %889 = vmatpush1.msra.mxu0 0.0
    %890 = vmatprep.subr.mxu0 0.0
    %891 = vmatpush1.msra.mxu0 0.0
    %892 = vmatprep.subr.mxu0 0.0
    %893 = vmatpush1.msra.mxu0 0.0
    %894 = vmatprep.subr.mxu0 0.0
    %895 = vmatpush1.msra.mxu0 0.0
    %896 = vmatprep.subr.mxu0 0.0
    %897 = vmatpush1.msra.mxu0 0.0
    %898 = vmatprep.subr.mxu0 0.0
    %899 = vmatpush1.msra.mxu0 0.0
    %900 = vmatprep.subr.mxu0 0.0
    %901 = vmatpush1.msra.mxu0 0.0
    %902 = vmatprep.subr.mxu0 0.0
    %903 = vmatpush1.msra.mxu0 0.0
    %904 = vmatprep.subr.mxu0 0.0
    %905 = vmatpush1.msra.mxu0 0.0
    %906 = vmatprep.mubr.f32.mxu0 0.0
    %v907 = vand.u32 %v70, 4294901760
    %v908 = vsub.f32 %v70, %v907
    %v909 = vand.u32 %v908, 4294901760
    %910 = vmatmul.mubr.f32.gmra.mrb[0].mxu0 %v909
    %v911 = vpop.f32.mrb[0].mxu0
    %v912 = vadd.f32 %v718, %v911
    %v913 = vpop.f32.mrb[0].mxu0
    %914 = vmatprep.mubr.f32.mxu0 0.0
    %v915 = vand.u32 %v71, 4294901760
    %v916 = vsub.f32 %v71, %v915
    %v917 = vand.u32 %v916, 4294901760
    %918 = vmatmul.mubr.f32.gmra.mrb[0].mxu0 %v917
    %v919 = vpop.f32.mrb[0].mxu0
    %v920 = vadd.f32 %v725, %v919
    %v921 = vpop.f32.mrb[0].mxu0
    %922 = vmatprep.mubr.f32.mxu0 0.0
    %v923 = vand.u32 %v72, 4294901760
    %v924 = vsub.f32 %v72, %v923
    %v925 = vand.u32 %v924, 4294901760
    %926 = vmatmul.mubr.f32.gmra.mrb[0].mxu0 %v925
    %v927 = vpop.f32.mrb[0].mxu0
    %v928 = vadd.f32 %v732, %v927
    %v929 = vpop.f32.mrb[0].mxu0
    %930 = vmatprep.mubr.f32.mxu0 0.0
    %v931 = vand.u32 %v73, 4294901760
    %v932 = vsub.f32 %v73, %v931
    %v933 = vand.u32 %v932, 4294901760
    %934 = vmatmul.mubr.f32.gmra.mrb[0].mxu0 %v933
    %v935 = vpop.f32.mrb[0].mxu0
    %v936 = vadd.f32 %v739, %v935
    %v937 = vpop.f32.mrb[0].mxu0
    %938 = vmatprep.mubr.f32.mxu0 0.0
    %v939 = vand.u32 %v74, 4294901760
    %v940 = vsub.f32 %v74, %v939
    %v941 = vand.u32 %v940, 4294901760
    %942 = vmatmul.mubr.f32.gmra.mrb[0].mxu0 %v941
    %v943 = vpop.f32.mrb[0].mxu0
    %v944 = vadd.f32 %v746, %v943
    %v945 = vpop.f32.mrb[0].mxu0
    %946 = vmatprep.mubr.f32.mxu0 0.0
    %v947 = vand.u32 %v75, 4294901760
    %v948 = vsub.f32 %v75, %v947
    %v949 = vand.u32 %v948, 4294901760
    %950 = vmatmul.mubr.f32.gmra.mrb[0].mxu0 %v949
    %v951 = vpop.f32.mrb[0].mxu0
    %v952 = vadd.f32 %v753, %v951
    %v953 = vpop.f32.mrb[0].mxu0
    %954 = vmatprep.mubr.f32.mxu0 0.0
    %v955 = vand.u32 %v76, 4294901760
    %v956 = vsub.f32 %v76, %v955
    %v957 = vand.u32 %v956, 4294901760
    %958 = vmatmul.mubr.f32.gmra.mrb[0].mxu0 %v957
    %v959 = vpop.f32.mrb[0].mxu0
    %v960 = vadd.f32 %v760, %v959
    %v961 = vpop.f32.mrb[0].mxu0
    %962 = vmatprep.mubr.f32.mxu0 0.0
    %v963 = vand.u32 %v77, 4294901760
    %v964 = vsub.f32 %v77, %v963
    %v965 = vand.u32 %v964, 4294901760
    %966 = vmatmul.mubr.f32.gmra.mrb[0].mxu0 %v965
    %v967 = vpop.f32.mrb[0].mxu0
    %v968 = vadd.f32 %v767, %v967
    %v969 = vpop.f32.mrb[0].mxu0
    %970 = vmatprep.mubr.f32.mxu0 0.0
    %v971 = vand.u32 %v78, 4294901760
    %v972 = vsub.f32 %v78, %v971
    %v973 = vand.u32 %v972, 4294901760
    %974 = vmatmul.mubr.f32.gmra.mrb[0].mxu0 %v973
    %v975 = vpop.f32.mrb[0].mxu0
    %v976 = vadd.f32 %v774, %v975
    %v977 = vpop.f32.mrb[0].mxu0
    %978 = vmatprep.mubr.f32.mxu0 0.0
    %v979 = vand.u32 %v79, 4294901760
    %v980 = vsub.f32 %v79, %v979
    %v981 = vand.u32 %v980, 4294901760
    %982 = vmatmul.mubr.f32.gmra.mrb[0].mxu0 %v981
    %v983 = vpop.f32.mrb[0].mxu0
    %v984 = vadd.f32 %v781, %v983
    %v985 = vpop.f32.mrb[0].mxu0
    %986 = vmatprep.mubr.f32.mxu0 0.0
    %v987 = vand.u32 %v80, 4294901760
    %v988 = vsub.f32 %v80, %v987
    %v989 = vand.u32 %v988, 4294901760
    %990 = vmatmul.mubr.f32.gmra.mrb[0].mxu0 %v989
    %v991 = vpop.f32.mrb[0].mxu0
    %v992 = vadd.f32 %v788, %v991
    %v993 = vpop.f32.mrb[0].mxu0
    %994 = vmatprep.mubr.f32.mxu0 0.0
    %v995 = vand.u32 %v81, 4294901760
    %v996 = vsub.f32 %v81, %v995
    %v997 = vand.u32 %v996, 4294901760
    %998 = vmatmul.mubr.f32.gmra.mrb[0].mxu0 %v997
    %v999 = vpop.f32.mrb[0].mxu0
    %v1000 = vadd.f32 %v795, %v999
    %v1001 = vpop.f32.mrb[0].mxu0
    %1002 = vmatprep.mubr.f32.mxu0 0.0
    %v1003 = vand.u32 %v82, 4294901760
    %v1004 = vsub.f32 %v82, %v1003
    %v1005 = vand.u32 %v1004, 4294901760
    %1006 = vmatmul.mubr.f32.gmra.mrb[0].mxu0 %v1005
    %v1007 = vpop.f32.mrb[0].mxu0
    %v1008 = vadd.f32 %v802, %v1007
    %v1009 = vpop.f32.mrb[0].mxu0
    %1010 = vmatprep.mubr.f32.mxu0 0.0
    %v1011 = vand.u32 %v83, 4294901760
    %v1012 = vsub.f32 %v83, %v1011
    %v1013 = vand.u32 %v1012, 4294901760
    %1014 = vmatmul.mubr.f32.gmra.mrb[0].mxu0 %v1013
    %v1015 = vpop.f32.mrb[0].mxu0
    %v1016 = vadd.f32 %v809, %v1015
    %v1017 = vpop.f32.mrb[0].mxu0
    %1018 = vmatprep.mubr.f32.mxu0 0.0
    %v1019 = vand.u32 %v84, 4294901760
    %v1020 = vsub.f32 %v84, %v1019
    %v1021 = vand.u32 %v1020, 4294901760
    %1022 = vmatmul.mubr.f32.gmra.mrb[0].mxu0 %v1021
    %v1023 = vpop.f32.mrb[0].mxu0
    %v1024 = vadd.f32 %v816, %v1023
    %v1025 = vpop.f32.mrb[0].mxu0
    %1026 = vmatprep.mubr.f32.mxu0 0.0
    %v1027 = vand.u32 %v85, 4294901760
    %v1028 = vsub.f32 %v85, %v1027
    %v1029 = vand.u32 %v1028, 4294901760
    %1030 = vmatmul.mubr.f32.gmra.mrb[0].mxu0 %v1029
    %v1031 = vpop.f32.mrb[0].mxu0
    %v1032 = vadd.f32 %v823, %v1031
    %v1033 = vpop.f32.mrb[0].mxu0
    %1034 = vdwg.mxu0
    %1035 = vmatprep.subr.mxu0 0.0
    %v1036 = vand.u32 %v86, 4294901760
    %v1037 = vsub.f32 %v86, %v1036
    %v1038 = vand.u32 %v1037, 4294901760
    %1039 = vmatpush1.msra.mxu0 %v1038
    %1040 = vmatprep.subr.mxu0 0.0
    %v1041 = vand.u32 %v87, 4294901760
    %v1042 = vsub.f32 %v87, %v1041
    %v1043 = vand.u32 %v1042, 4294901760
    %1044 = vmatpush1.msra.mxu0 %v1043
    %1045 = vmatprep.subr.mxu0 0.0
    %v1046 = vand.u32 %v88, 4294901760
    %v1047 = vsub.f32 %v88, %v1046
    %v1048 = vand.u32 %v1047, 4294901760
    %1049 = vmatpush1.msra.mxu0 %v1048
    %1050 = vmatprep.subr.mxu0 0.0
    %v1051 = vand.u32 %v89, 4294901760
    %v1052 = vsub.f32 %v89, %v1051
    %v1053 = vand.u32 %v1052, 4294901760
    %1054 = vmatpush1.msra.mxu0 %v1053
    %1055 = vmatprep.subr.mxu0 0.0
    %v1056 = vand.u32 %v90, 4294901760
    %v1057 = vsub.f32 %v90, %v1056
    %v1058 = vand.u32 %v1057, 4294901760
    %1059 = vmatpush1.msra.mxu0 %v1058
    %1060 = vmatprep.subr.mxu0 0.0
    %v1061 = vand.u32 %v91, 4294901760
    %v1062 = vsub.f32 %v91, %v1061
    %v1063 = vand.u32 %v1062, 4294901760
    %1064 = vmatpush1.msra.mxu0 %v1063
    %1065 = vmatprep.subr.mxu0 0.0
    %v1066 = vand.u32 %v92, 4294901760
    %v1067 = vsub.f32 %v92, %v1066
    %v1068 = vand.u32 %v1067, 4294901760
    %1069 = vmatpush1.msra.mxu0 %v1068
    %1070 = vmatprep.subr.mxu0 0.0
    %v1071 = vand.u32 %v93, 4294901760
    %v1072 = vsub.f32 %v93, %v1071
    %v1073 = vand.u32 %v1072, 4294901760
    %1074 = vmatpush1.msra.mxu0 %v1073
    %1075 = vmatprep.subr.mxu0 0.0
    %v1076 = vand.u32 %v94, 4294901760
    %v1077 = vsub.f32 %v94, %v1076
    %v1078 = vand.u32 %v1077, 4294901760
    %1079 = vmatpush1.msra.mxu0 %v1078
    %1080 = vmatprep.subr.mxu0 0.0
    %v1081 = vand.u32 %v95, 4294901760
    %v1082 = vsub.f32 %v95, %v1081
    %v1083 = vand.u32 %v1082, 4294901760
    %1084 = vmatpush1.msra.mxu0 %v1083
    %1085 = vmatprep.subr.mxu0 0.0
    %v1086 = vand.u32 %v96, 4294901760
    %v1087 = vsub.f32 %v96, %v1086
    %v1088 = vand.u32 %v1087, 4294901760
    %1089 = vmatpush1.msra.mxu0 %v1088
    %1090 = vmatprep.subr.mxu0 0.0
    %v1091 = vand.u32 %v97, 4294901760
    %v1092 = vsub.f32 %v97, %v1091
    %v1093 = vand.u32 %v1092, 4294901760
    %1094 = vmatpush1.msra.mxu0 %v1093
    %1095 = vmatprep.subr.mxu0 0.0
    %v1096 = vand.u32 %v98, 4294901760
    %v1097 = vsub.f32 %v98, %v1096
    %v1098 = vand.u32 %v1097, 4294901760
    %1099 = vmatpush1.msra.mxu0 %v1098
    %1100 = vmatprep.subr.mxu0 0.0
    %v1101 = vand.u32 %v99, 4294901760
    %v1102 = vsub.f32 %v99, %v1101
    %v1103 = vand.u32 %v1102, 4294901760
    %1104 = vmatpush1.msra.mxu0 %v1103
    %1105 = vmatprep.subr.mxu0 0.0
    %v1106 = vand.u32 %v100, 4294901760
    %v1107 = vsub.f32 %v100, %v1106
    %v1108 = vand.u32 %v1107, 4294901760
    %1109 = vmatpush1.msra.mxu0 %v1108
    %1110 = vmatprep.subr.mxu0 0.0
    %v1111 = vand.u32 %v101, 4294901760
    %v1112 = vsub.f32 %v101, %v1111
    %v1113 = vand.u32 %v1112, 4294901760
    %1114 = vmatpush1.msra.mxu0 %v1113
    %1115 = vmatprep.subr.mxu0 0.0
    %1116 = vmatpush1.msra.mxu0 0.0
    %1117 = vmatprep.subr.mxu0 0.0
    %1118 = vmatpush1.msra.mxu0 0.0
    %1119 = vmatprep.subr.mxu0 0.0
    %1120 = vmatpush1.msra.mxu0 0.0
    %1121 = vmatprep.subr.mxu0 0.0
    %1122 = vmatpush1.msra.mxu0 0.0
    %1123 = vmatprep.subr.mxu0 0.0
    %1124 = vmatpush1.msra.mxu0 0.0
    %1125 = vmatprep.subr.mxu0 0.0
    %1126 = vmatpush1.msra.mxu0 0.0
    %1127 = vmatprep.subr.mxu0 0.0
    %1128 = vmatpush1.msra.mxu0 0.0
    %1129 = vmatprep.subr.mxu0 0.0
    %1130 = vmatpush1.msra.mxu0 0.0
    %1131 = vmatprep.subr.mxu0 0.0
    %1132 = vmatpush1.msra.mxu0 0.0
    %1133 = vmatprep.subr.mxu0 0.0
    %1134 = vmatpush1.msra.mxu0 0.0
    %1135 = vmatprep.subr.mxu0 0.0
    %1136 = vmatpush1.msra.mxu0 0.0
    %1137 = vmatprep.subr.mxu0 0.0
    %1138 = vmatpush1.msra.mxu0 0.0
    %1139 = vmatprep.subr.mxu0 0.0
    %1140 = vmatpush1.msra.mxu0 0.0
    %1141 = vmatprep.subr.mxu0 0.0
    %1142 = vmatpush1.msra.mxu0 0.0
    %1143 = vmatprep.subr.mxu0 0.0
    %1144 = vmatpush1.msra.mxu0 0.0
    %1145 = vmatprep.subr.mxu0 0.0
    %1146 = vmatpush1.msra.mxu0 0.0
    %1147 = vmatprep.mubr.f32.mxu0 0.0
    %v1148 = vand.u32 %v70, 4294901760
    %1149 = vmatmul.mubr.f32.gmra.mrb[0].mxu0 %v1148
    %v1150 = vpop.f32.mrb[0].mxu0
    %v1151 = vadd.f32 %v912, %v1150
    %v1152 = vpop.f32.mrb[0].mxu0
    %1153 = vmatprep.mubr.f32.mxu0 0.0
    %v1154 = vand.u32 %v71, 4294901760
    %1155 = vmatmul.mubr.f32.gmra.mrb[0].mxu0 %v1154
    %v1156 = vpop.f32.mrb[0].mxu0
    %v1157 = vadd.f32 %v920, %v1156
    %v1158 = vpop.f32.mrb[0].mxu0
    %1159 = vmatprep.mubr.f32.mxu0 0.0
    %v1160 = vand.u32 %v72, 4294901760
    %1161 = vmatmul.mubr.f32.gmra.mrb[0].mxu0 %v1160
    %v1162 = vpop.f32.mrb[0].mxu0
    %v1163 = vadd.f32 %v928, %v1162
    %v1164 = vpop.f32.mrb[0].mxu0
    %1165 = vmatprep.mubr.f32.mxu0 0.0
    %v1166 = vand.u32 %v73, 4294901760
    %1167 = vmatmul.mubr.f32.gmra.mrb[0].mxu0 %v1166
    %v1168 = vpop.f32.mrb[0].mxu0
    %v1169 = vadd.f32 %v936, %v1168
    %v1170 = vpop.f32.mrb[0].mxu0
    %1171 = vmatprep.mubr.f32.mxu0 0.0
    %v1172 = vand.u32 %v74, 4294901760
    %1173 = vmatmul.mubr.f32.gmra.mrb[0].mxu0 %v1172
    %v1174 = vpop.f32.mrb[0].mxu0
    %v1175 = vadd.f32 %v944, %v1174
    %v1176 = vpop.f32.mrb[0].mxu0
    %1177 = vmatprep.mubr.f32.mxu0 0.0
    %v1178 = vand.u32 %v75, 4294901760
    %1179 = vmatmul.mubr.f32.gmra.mrb[0].mxu0 %v1178
    %v1180 = vpop.f32.mrb[0].mxu0
    %v1181 = vadd.f32 %v952, %v1180
    %v1182 = vpop.f32.mrb[0].mxu0
    %1183 = vmatprep.mubr.f32.mxu0 0.0
    %v1184 = vand.u32 %v76, 4294901760
    %1185 = vmatmul.mubr.f32.gmra.mrb[0].mxu0 %v1184
    %v1186 = vpop.f32.mrb[0].mxu0
    %v1187 = vadd.f32 %v960, %v1186
    %v1188 = vpop.f32.mrb[0].mxu0
    %1189 = vmatprep.mubr.f32.mxu0 0.0
    %v1190 = vand.u32 %v77, 4294901760
    %1191 = vmatmul.mubr.f32.gmra.mrb[0].mxu0 %v1190
    %v1192 = vpop.f32.mrb[0].mxu0
    %v1193 = vadd.f32 %v968, %v1192
    %v1194 = vpop.f32.mrb[0].mxu0
    %1195 = vmatprep.mubr.f32.mxu0 0.0
    %v1196 = vand.u32 %v78, 4294901760
    %1197 = vmatmul.mubr.f32.gmra.mrb[0].mxu0 %v1196
    %v1198 = vpop.f32.mrb[0].mxu0
    %v1199 = vadd.f32 %v976, %v1198
    %v1200 = vpop.f32.mrb[0].mxu0
    %1201 = vmatprep.mubr.f32.mxu0 0.0
    %v1202 = vand.u32 %v79, 4294901760
    %1203 = vmatmul.mubr.f32.gmra.mrb[0].mxu0 %v1202
    %v1204 = vpop.f32.mrb[0].mxu0
    %v1205 = vadd.f32 %v984, %v1204
    %v1206 = vpop.f32.mrb[0].mxu0
    %1207 = vmatprep.mubr.f32.mxu0 0.0
    %v1208 = vand.u32 %v80, 4294901760
    %1209 = vmatmul.mubr.f32.gmra.mrb[0].mxu0 %v1208
    %v1210 = vpop.f32.mrb[0].mxu0
    %v1211 = vadd.f32 %v992, %v1210
    %v1212 = vpop.f32.mrb[0].mxu0
    %1213 = vmatprep.mubr.f32.mxu0 0.0
    %v1214 = vand.u32 %v81, 4294901760
    %1215 = vmatmul.mubr.f32.gmra.mrb[0].mxu0 %v1214
    %v1216 = vpop.f32.mrb[0].mxu0
    %v1217 = vadd.f32 %v1000, %v1216
    %v1218 = vpop.f32.mrb[0].mxu0
    %1219 = vmatprep.mubr.f32.mxu0 0.0
    %v1220 = vand.u32 %v82, 4294901760
    %1221 = vmatmul.mubr.f32.gmra.mrb[0].mxu0 %v1220
    %v1222 = vpop.f32.mrb[0].mxu0
    %v1223 = vadd.f32 %v1008, %v1222
    %v1224 = vpop.f32.mrb[0].mxu0
    %1225 = vmatprep.mubr.f32.mxu0 0.0
    %v1226 = vand.u32 %v83, 4294901760
    %1227 = vmatmul.mubr.f32.gmra.mrb[0].mxu0 %v1226
    %v1228 = vpop.f32.mrb[0].mxu0
    %v1229 = vadd.f32 %v1016, %v1228
    %v1230 = vpop.f32.mrb[0].mxu0
    %1231 = vmatprep.mubr.f32.mxu0 0.0
    %v1232 = vand.u32 %v84, 4294901760
    %1233 = vmatmul.mubr.f32.gmra.mrb[0].mxu0 %v1232
    %v1234 = vpop.f32.mrb[0].mxu0
    %v1235 = vadd.f32 %v1024, %v1234
    %v1236 = vpop.f32.mrb[0].mxu0
    %1237 = vmatprep.mubr.f32.mxu0 0.0
    %v1238 = vand.u32 %v85, 4294901760
    %1239 = vmatmul.mubr.f32.gmra.mrb[0].mxu0 %v1238
    %v1240 = vpop.f32.mrb[0].mxu0
    %v1241 = vadd.f32 %v1032, %v1240
    %v1242 = vpop.f32.mrb[0].mxu0
    %1243 = vdwg.mxu0
    %1244 = vmatprep.subr.mxu0 0.0
    %v1245 = vand.u32 %v86, 4294901760
    %1246 = vmatpush1.msra.mxu0 %v1245
    %1247 = vmatprep.subr.mxu0 0.0
    %v1248 = vand.u32 %v87, 4294901760
    %1249 = vmatpush1.msra.mxu0 %v1248
    %1250 = vmatprep.subr.mxu0 0.0
    %v1251 = vand.u32 %v88, 4294901760
    %1252 = vmatpush1.msra.mxu0 %v1251
    %1253 = vmatprep.subr.mxu0 0.0
    %v1254 = vand.u32 %v89, 4294901760
    %1255 = vmatpush1.msra.mxu0 %v1254
    %1256 = vmatprep.subr.mxu0 0.0
    %v1257 = vand.u32 %v90, 4294901760
    %1258 = vmatpush1.msra.mxu0 %v1257
    %1259 = vmatprep.subr.mxu0 0.0
    %v1260 = vand.u32 %v91, 4294901760
    %1261 = vmatpush1.msra.mxu0 %v1260
    %1262 = vmatprep.subr.mxu0 0.0
    %v1263 = vand.u32 %v92, 4294901760
    %1264 = vmatpush1.msra.mxu0 %v1263
    %1265 = vmatprep.subr.mxu0 0.0
    %v1266 = vand.u32 %v93, 4294901760
    %1267 = vmatpush1.msra.mxu0 %v1266
    %1268 = vmatprep.subr.mxu0 0.0
    %v1269 = vand.u32 %v94, 4294901760
    %1270 = vmatpush1.msra.mxu0 %v1269
    %1271 = vmatprep.subr.mxu0 0.0
    %v1272 = vand.u32 %v95, 4294901760
    %1273 = vmatpush1.msra.mxu0 %v1272
    %1274 = vmatprep.subr.mxu0 0.0
    %v1275 = vand.u32 %v96, 4294901760
    %1276 = vmatpush1.msra.mxu0 %v1275
    %1277 = vmatprep.subr.mxu0 0.0
    %v1278 = vand.u32 %v97, 4294901760
    %1279 = vmatpush1.msra.mxu0 %v1278
    %1280 = vmatprep.subr.mxu0 0.0
    %v1281 = vand.u32 %v98, 4294901760
    %1282 = vmatpush1.msra.mxu0 %v1281
    %1283 = vmatprep.subr.mxu0 0.0
    %v1284 = vand.u32 %v99, 4294901760
    %1285 = vmatpush1.msra.mxu0 %v1284
    %1286 = vmatprep.subr.mxu0 0.0
    %v1287 = vand.u32 %v100, 4294901760
    %1288 = vmatpush1.msra.mxu0 %v1287
    %1289 = vmatprep.subr.mxu0 0.0
    %v1290 = vand.u32 %v101, 4294901760
    %1291 = vmatpush1.msra.mxu0 %v1290
    %1292 = vmatprep.subr.mxu0 0.0
    %1293 = vmatpush1.msra.mxu0 0.0
    %1294 = vmatprep.subr.mxu0 0.0
    %1295 = vmatpush1.msra.mxu0 0.0
    %1296 = vmatprep.subr.mxu0 0.0
    %1297 = vmatpush1.msra.mxu0 0.0
    %1298 = vmatprep.subr.mxu0 0.0
    %1299 = vmatpush1.msra.mxu0 0.0
    %1300 = vmatprep.subr.mxu0 0.0
    %1301 = vmatpush1.msra.mxu0 0.0
    %1302 = vmatprep.subr.mxu0 0.0
    %1303 = vmatpush1.msra.mxu0 0.0
    %1304 = vmatprep.subr.mxu0 0.0
    %1305 = vmatpush1.msra.mxu0 0.0
    %1306 = vmatprep.subr.mxu0 0.0
    %1307 = vmatpush1.msra.mxu0 0.0
    %1308 = vmatprep.subr.mxu0 0.0
    %1309 = vmatpush1.msra.mxu0 0.0
    %1310 = vmatprep.subr.mxu0 0.0
    %1311 = vmatpush1.msra.mxu0 0.0
    %1312 = vmatprep.subr.mxu0 0.0
    %1313 = vmatpush1.msra.mxu0 0.0
    %1314 = vmatprep.subr.mxu0 0.0
    %1315 = vmatpush1.msra.mxu0 0.0
    %1316 = vmatprep.subr.mxu0 0.0
    %1317 = vmatpush1.msra.mxu0 0.0
    %1318 = vmatprep.subr.mxu0 0.0
    %1319 = vmatpush1.msra.mxu0 0.0
    %1320 = vmatprep.subr.mxu0 0.0
    %1321 = vmatpush1.msra.mxu0 0.0
    %1322 = vmatprep.subr.mxu0 0.0
    %1323 = vmatpush1.msra.mxu0 0.0
    %1324 = vmatprep.mubr.f32.mxu0 0.0
    %v1325 = vand.u32 %v70, 4294901760
    %1326 = vmatmul.mubr.f32.gmra.mrb[0].mxu0 %v1325
    %v1327 = vpop.f32.mrb[0].mxu0
    %v1328 = vadd.f32 %v1151, %v1327
    %v1329 = vpop.f32.mrb[0].mxu0
    %1330 = vmatprep.mubr.f32.mxu0 0.0
    %v1331 = vand.u32 %v71, 4294901760
    %1332 = vmatmul.mubr.f32.gmra.mrb[0].mxu0 %v1331
    %v1333 = vpop.f32.mrb[0].mxu0
    %v1334 = vadd.f32 %v1157, %v1333
    %v1335 = vpop.f32.mrb[0].mxu0
    %1336 = vmatprep.mubr.f32.mxu0 0.0
    %v1337 = vand.u32 %v72, 4294901760
    %1338 = vmatmul.mubr.f32.gmra.mrb[0].mxu0 %v1337
    %v1339 = vpop.f32.mrb[0].mxu0
    %v1340 = vadd.f32 %v1163, %v1339
    %v1341 = vpop.f32.mrb[0].mxu0
    %1342 = vmatprep.mubr.f32.mxu0 0.0
    %v1343 = vand.u32 %v73, 4294901760
    %1344 = vmatmul.mubr.f32.gmra.mrb[0].mxu0 %v1343
    %v1345 = vpop.f32.mrb[0].mxu0
    %v1346 = vadd.f32 %v1169, %v1345
    %v1347 = vpop.f32.mrb[0].mxu0
    %1348 = vmatprep.mubr.f32.mxu0 0.0
    %v1349 = vand.u32 %v74, 4294901760
    %1350 = vmatmul.mubr.f32.gmra.mrb[0].mxu0 %v1349
    %v1351 = vpop.f32.mrb[0].mxu0
    %v1352 = vadd.f32 %v1175, %v1351
    %v1353 = vpop.f32.mrb[0].mxu0
    %1354 = vmatprep.mubr.f32.mxu0 0.0
    %v1355 = vand.u32 %v75, 4294901760
    %1356 = vmatmul.mubr.f32.gmra.mrb[0].mxu0 %v1355
    %v1357 = vpop.f32.mrb[0].mxu0
    %v1358 = vadd.f32 %v1181, %v1357
    %v1359 = vpop.f32.mrb[0].mxu0
    %1360 = vmatprep.mubr.f32.mxu0 0.0
    %v1361 = vand.u32 %v76, 4294901760
    %1362 = vmatmul.mubr.f32.gmra.mrb[0].mxu0 %v1361
    %v1363 = vpop.f32.mrb[0].mxu0
    %v1364 = vadd.f32 %v1187, %v1363
    %v1365 = vpop.f32.mrb[0].mxu0
    %1366 = vmatprep.mubr.f32.mxu0 0.0
    %v1367 = vand.u32 %v77, 4294901760
    %1368 = vmatmul.mubr.f32.gmra.mrb[0].mxu0 %v1367
    %v1369 = vpop.f32.mrb[0].mxu0
    %v1370 = vadd.f32 %v1193, %v1369
    %v1371 = vpop.f32.mrb[0].mxu0
    %1372 = vmatprep.mubr.f32.mxu0 0.0
    %v1373 = vand.u32 %v78, 4294901760
    %1374 = vmatmul.mubr.f32.gmra.mrb[0].mxu0 %v1373
    %v1375 = vpop.f32.mrb[0].mxu0
    %v1376 = vadd.f32 %v1199, %v1375
    %v1377 = vpop.f32.mrb[0].mxu0
    %1378 = vmatprep.mubr.f32.mxu0 0.0
    %v1379 = vand.u32 %v79, 4294901760
    %1380 = vmatmul.mubr.f32.gmra.mrb[0].mxu0 %v1379
    %v1381 = vpop.f32.mrb[0].mxu0
    %v1382 = vadd.f32 %v1205, %v1381
    %v1383 = vpop.f32.mrb[0].mxu0
    %1384 = vmatprep.mubr.f32.mxu0 0.0
    %v1385 = vand.u32 %v80, 4294901760
    %1386 = vmatmul.mubr.f32.gmra.mrb[0].mxu0 %v1385
    %v1387 = vpop.f32.mrb[0].mxu0
    %v1388 = vadd.f32 %v1211, %v1387
    %v1389 = vpop.f32.mrb[0].mxu0
    %1390 = vmatprep.mubr.f32.mxu0 0.0
    %v1391 = vand.u32 %v81, 4294901760
    %1392 = vmatmul.mubr.f32.gmra.mrb[0].mxu0 %v1391
    %v1393 = vpop.f32.mrb[0].mxu0
    %v1394 = vadd.f32 %v1217, %v1393
    %v1395 = vpop.f32.mrb[0].mxu0
    %1396 = vmatprep.mubr.f32.mxu0 0.0
    %v1397 = vand.u32 %v82, 4294901760
    %1398 = vmatmul.mubr.f32.gmra.mrb[0].mxu0 %v1397
    %v1399 = vpop.f32.mrb[0].mxu0
    %v1400 = vadd.f32 %v1223, %v1399
    %v1401 = vpop.f32.mrb[0].mxu0
    %1402 = vmatprep.mubr.f32.mxu0 0.0
    %v1403 = vand.u32 %v83, 4294901760
    %1404 = vmatmul.mubr.f32.gmra.mrb[0].mxu0 %v1403
    %v1405 = vpop.f32.mrb[0].mxu0
    %v1406 = vadd.f32 %v1229, %v1405
    %v1407 = vpop.f32.mrb[0].mxu0
    %1408 = vmatprep.mubr.f32.mxu0 0.0
    %v1409 = vand.u32 %v84, 4294901760
    %1410 = vmatmul.mubr.f32.gmra.mrb[0].mxu0 %v1409
    %v1411 = vpop.f32.mrb[0].mxu0
    %v1412 = vadd.f32 %v1235, %v1411
    %v1413 = vpop.f32.mrb[0].mxu0
    %1414 = vmatprep.mubr.f32.mxu0 0.0
    %v1415 = vand.u32 %v85, 4294901760
    %1416 = vmatmul.mubr.f32.gmra.mrb[0].mxu0 %v1415
    %v1417 = vpop.f32.mrb[0].mxu0
    %v1418 = vadd.f32 %v1241, %v1417
    %v1419 = vpop.f32.mrb[0].mxu0
    %1420 = vdwg.mxu0
    %v1422 = vlaneseq
    %v1423 = vshrl.u32 %v1422, 7
    %v1424 = vsub.s32 0, %v1423
    %v1425 = vrot.slane %v134, %v1424
    %1427 = vmatprep.subr.mxu0 0.0
    %v1428 = vand.u32 %v102, 4294901760
    %1429 = vmatpush1.msra.mxu0 %v1428
    %1430 = vmatprep.subr.mxu0 0.0
    %v1431 = vand.u32 %v103, 4294901760
    %1432 = vmatpush1.msra.mxu0 %v1431
    %1433 = vmatprep.subr.mxu0 0.0
    %v1434 = vand.u32 %v104, 4294901760
    %1435 = vmatpush1.msra.mxu0 %v1434
    %1436 = vmatprep.subr.mxu0 0.0
    %v1437 = vand.u32 %v105, 4294901760
    %1438 = vmatpush1.msra.mxu0 %v1437
    %1439 = vmatprep.subr.mxu0 0.0
    %v1440 = vand.u32 %v106, 4294901760
    %1441 = vmatpush1.msra.mxu0 %v1440
    %1442 = vmatprep.subr.mxu0 0.0
    %v1443 = vand.u32 %v107, 4294901760
    %1444 = vmatpush1.msra.mxu0 %v1443
    %1445 = vmatprep.subr.mxu0 0.0
    %v1446 = vand.u32 %v108, 4294901760
    %1447 = vmatpush1.msra.mxu0 %v1446
    %1448 = vmatprep.subr.mxu0 0.0
    %v1449 = vand.u32 %v109, 4294901760
    %1450 = vmatpush1.msra.mxu0 %v1449
    %1451 = vmatprep.subr.mxu0 0.0
    %v1452 = vand.u32 %v110, 4294901760
    %1453 = vmatpush1.msra.mxu0 %v1452
    %1454 = vmatprep.subr.mxu0 0.0
    %v1455 = vand.u32 %v111, 4294901760
    %1456 = vmatpush1.msra.mxu0 %v1455
    %1457 = vmatprep.subr.mxu0 0.0
    %v1458 = vand.u32 %v112, 4294901760
    %1459 = vmatpush1.msra.mxu0 %v1458
    %1460 = vmatprep.subr.mxu0 0.0
    %v1461 = vand.u32 %v113, 4294901760
    %1462 = vmatpush1.msra.mxu0 %v1461
    %1463 = vmatprep.subr.mxu0 0.0
    %v1464 = vand.u32 %v114, 4294901760
    %1465 = vmatpush1.msra.mxu0 %v1464
    %1466 = vmatprep.subr.mxu0 0.0
    %v1467 = vand.u32 %v115, 4294901760
    %1468 = vmatpush1.msra.mxu0 %v1467
    %1469 = vmatprep.subr.mxu0 0.0
    %v1470 = vand.u32 %v116, 4294901760
    %1471 = vmatpush1.msra.mxu0 %v1470
    %1472 = vmatprep.subr.mxu0 0.0
    %v1473 = vand.u32 %v117, 4294901760
    %1474 = vmatpush1.msra.mxu0 %v1473
    %1475 = vmatprep.subr.mxu0 0.0
    %v1476 = vand.u32 %v118, 4294901760
    %1477 = vmatpush1.msra.mxu0 %v1476
    %1478 = vmatprep.subr.mxu0 0.0
    %v1479 = vand.u32 %v119, 4294901760
    %1480 = vmatpush1.msra.mxu0 %v1479
    %1481 = vmatprep.subr.mxu0 0.0
    %v1482 = vand.u32 %v120, 4294901760
    %1483 = vmatpush1.msra.mxu0 %v1482
    %1484 = vmatprep.subr.mxu0 0.0
    %v1485 = vand.u32 %v121, 4294901760
    %1486 = vmatpush1.msra.mxu0 %v1485
    %1487 = vmatprep.subr.mxu0 0.0
    %v1488 = vand.u32 %v122, 4294901760
    %1489 = vmatpush1.msra.mxu0 %v1488
    %1490 = vmatprep.subr.mxu0 0.0
    %v1491 = vand.u32 %v123, 4294901760
    %1492 = vmatpush1.msra.mxu0 %v1491
    %1493 = vmatprep.subr.mxu0 0.0
    %v1494 = vand.u32 %v124, 4294901760
    %1495 = vmatpush1.msra.mxu0 %v1494
    %1496 = vmatprep.subr.mxu0 0.0
    %v1497 = vand.u32 %v125, 4294901760
    %1498 = vmatpush1.msra.mxu0 %v1497
    %1499 = vmatprep.subr.mxu0 0.0
    %v1500 = vand.u32 %v126, 4294901760
    %1501 = vmatpush1.msra.mxu0 %v1500
    %1502 = vmatprep.subr.mxu0 0.0
    %v1503 = vand.u32 %v127, 4294901760
    %1504 = vmatpush1.msra.mxu0 %v1503
    %1505 = vmatprep.subr.mxu0 0.0
    %v1506 = vand.u32 %v128, 4294901760
    %1507 = vmatpush1.msra.mxu0 %v1506
    %1508 = vmatprep.subr.mxu0 0.0
    %v1509 = vand.u32 %v129, 4294901760
    %1510 = vmatpush1.msra.mxu0 %v1509
    %1511 = vmatprep.subr.mxu0 0.0
    %v1512 = vand.u32 %v130, 4294901760
    %1513 = vmatpush1.msra.mxu0 %v1512
    %1514 = vmatprep.subr.mxu0 0.0
    %v1515 = vand.u32 %v131, 4294901760
    %1516 = vmatpush1.msra.mxu0 %v1515
    %1517 = vmatprep.subr.mxu0 0.0
    %v1518 = vand.u32 %v132, 4294901760
    %1519 = vmatpush1.msra.mxu0 %v1518
    %1520 = vmatprep.subr.mxu0 0.0
    %v1521 = vand.u32 %v133, 4294901760
    %1522 = vmatpush1.msra.mxu0 %v1521
    %v1523 = vand.u32 %v86, 4294901760
    %v1524 = vsub.f32 %v86, %v1523
    %v1525 = vand.u32 %v1524, 4294901760
    %v1526 = vsub.f32 %v1524, %v1525
    %v1527 = vand.u32 %v1526, 4294901760
    %1528 = vmatprep.mubr.f32.mxu0 %v1527
    %v1529 = vand.u32 %v1328, 4294901760
    %v1530 = vsub.f32 %v1328, %v1529
    %v1531 = vand.u32 %v1530, 4294901760
    %v1532 = vsub.f32 %v1530, %v1531
    %v1533 = vand.u32 %v1532, 4294901760
    %1534 = vmatmul.mubr.f32.gmra.mrb[0].mxu0 %v1533
    %v1535 = vpop.f32.mrb[0].mxu0
    %v1536 = vadd.f32 %v1425, %v1535
    %v1537 = vpop.f32.mrb[0].mxu0
    %v1538 = vand.u32 %v87, 4294901760
    %v1539 = vsub.f32 %v87, %v1538
    %v1540 = vand.u32 %v1539, 4294901760
    %v1541 = vsub.f32 %v1539, %v1540
    %v1542 = vand.u32 %v1541, 4294901760
    %1543 = vmatprep.mubr.f32.mxu0 %v1542
    %v1544 = vand.u32 %v1334, 4294901760
    %v1545 = vsub.f32 %v1334, %v1544
    %v1546 = vand.u32 %v1545, 4294901760
    %v1547 = vsub.f32 %v1545, %v1546
    %v1548 = vand.u32 %v1547, 4294901760
    %1549 = vmatmul.mubr.f32.gmra.mrb[0].mxu0 %v1548
    %v1550 = vpop.f32.mrb[0].mxu0
    %v1551 = vadd.f32 %v1425, %v1550
    %v1552 = vpop.f32.mrb[0].mxu0
    %v1553 = vand.u32 %v88, 4294901760
    %v1554 = vsub.f32 %v88, %v1553
    %v1555 = vand.u32 %v1554, 4294901760
    %v1556 = vsub.f32 %v1554, %v1555
    %v1557 = vand.u32 %v1556, 4294901760
    %1558 = vmatprep.mubr.f32.mxu0 %v1557
    %v1559 = vand.u32 %v1340, 4294901760
    %v1560 = vsub.f32 %v1340, %v1559
    %v1561 = vand.u32 %v1560, 4294901760
    %v1562 = vsub.f32 %v1560, %v1561
    %v1563 = vand.u32 %v1562, 4294901760
    %1564 = vmatmul.mubr.f32.gmra.mrb[0].mxu0 %v1563
    %v1565 = vpop.f32.mrb[0].mxu0
    %v1566 = vadd.f32 %v1425, %v1565
    %v1567 = vpop.f32.mrb[0].mxu0
    %v1568 = vand.u32 %v89, 4294901760
    %v1569 = vsub.f32 %v89, %v1568
    %v1570 = vand.u32 %v1569, 4294901760
    %v1571 = vsub.f32 %v1569, %v1570
    %v1572 = vand.u32 %v1571, 4294901760
    %1573 = vmatprep.mubr.f32.mxu0 %v1572
    %v1574 = vand.u32 %v1346, 4294901760
    %v1575 = vsub.f32 %v1346, %v1574
    %v1576 = vand.u32 %v1575, 4294901760
    %v1577 = vsub.f32 %v1575, %v1576
    %v1578 = vand.u32 %v1577, 4294901760
    %1579 = vmatmul.mubr.f32.gmra.mrb[0].mxu0 %v1578
    %v1580 = vpop.f32.mrb[0].mxu0
    %v1581 = vadd.f32 %v1425, %v1580
    %v1582 = vpop.f32.mrb[0].mxu0
    %v1583 = vand.u32 %v90, 4294901760
    %v1584 = vsub.f32 %v90, %v1583
    %v1585 = vand.u32 %v1584, 4294901760
    %v1586 = vsub.f32 %v1584, %v1585
    %v1587 = vand.u32 %v1586, 4294901760
    %1588 = vmatprep.mubr.f32.mxu0 %v1587
    %v1589 = vand.u32 %v1352, 4294901760
    %v1590 = vsub.f32 %v1352, %v1589
    %v1591 = vand.u32 %v1590, 4294901760
    %v1592 = vsub.f32 %v1590, %v1591
    %v1593 = vand.u32 %v1592, 4294901760
    %1594 = vmatmul.mubr.f32.gmra.mrb[0].mxu0 %v1593
    %v1595 = vpop.f32.mrb[0].mxu0
    %v1596 = vadd.f32 %v1425, %v1595
    %v1597 = vpop.f32.mrb[0].mxu0
    %v1598 = vand.u32 %v91, 4294901760
    %v1599 = vsub.f32 %v91, %v1598
    %v1600 = vand.u32 %v1599, 4294901760
    %v1601 = vsub.f32 %v1599, %v1600
    %v1602 = vand.u32 %v1601, 4294901760
    %1603 = vmatprep.mubr.f32.mxu0 %v1602
    %v1604 = vand.u32 %v1358, 4294901760
    %v1605 = vsub.f32 %v1358, %v1604
    %v1606 = vand.u32 %v1605, 4294901760
    %v1607 = vsub.f32 %v1605, %v1606
    %v1608 = vand.u32 %v1607, 4294901760
    %1609 = vmatmul.mubr.f32.gmra.mrb[0].mxu0 %v1608
    %v1610 = vpop.f32.mrb[0].mxu0
    %v1611 = vadd.f32 %v1425, %v1610
    %v1612 = vpop.f32.mrb[0].mxu0
    %v1613 = vand.u32 %v92, 4294901760
    %v1614 = vsub.f32 %v92, %v1613
    %v1615 = vand.u32 %v1614, 4294901760
    %v1616 = vsub.f32 %v1614, %v1615
    %v1617 = vand.u32 %v1616, 4294901760
    %1618 = vmatprep.mubr.f32.mxu0 %v1617
    %v1619 = vand.u32 %v1364, 4294901760
    %v1620 = vsub.f32 %v1364, %v1619
    %v1621 = vand.u32 %v1620, 4294901760
    %v1622 = vsub.f32 %v1620, %v1621
    %v1623 = vand.u32 %v1622, 4294901760
    %1624 = vmatmul.mubr.f32.gmra.mrb[0].mxu0 %v1623
    %v1625 = vpop.f32.mrb[0].mxu0
    %v1626 = vadd.f32 %v1425, %v1625
    %v1627 = vpop.f32.mrb[0].mxu0
    %v1628 = vand.u32 %v93, 4294901760
    %v1629 = vsub.f32 %v93, %v1628
    %v1630 = vand.u32 %v1629, 4294901760
    %v1631 = vsub.f32 %v1629, %v1630
    %v1632 = vand.u32 %v1631, 4294901760
    %1633 = vmatprep.mubr.f32.mxu0 %v1632
    %v1634 = vand.u32 %v1370, 4294901760
    %v1635 = vsub.f32 %v1370, %v1634
    %v1636 = vand.u32 %v1635, 4294901760
    %v1637 = vsub.f32 %v1635, %v1636
    %v1638 = vand.u32 %v1637, 4294901760
    %1639 = vmatmul.mubr.f32.gmra.mrb[0].mxu0 %v1638
    %v1640 = vpop.f32.mrb[0].mxu0
    %v1641 = vadd.f32 %v1425, %v1640
    %v1642 = vpop.f32.mrb[0].mxu0
    %v1643 = vand.u32 %v94, 4294901760
    %v1644 = vsub.f32 %v94, %v1643
    %v1645 = vand.u32 %v1644, 4294901760
    %v1646 = vsub.f32 %v1644, %v1645
    %v1647 = vand.u32 %v1646, 4294901760
    %1648 = vmatprep.mubr.f32.mxu0 %v1647
    %v1649 = vand.u32 %v1376, 4294901760
    %v1650 = vsub.f32 %v1376, %v1649
    %v1651 = vand.u32 %v1650, 4294901760
    %v1652 = vsub.f32 %v1650, %v1651
    %v1653 = vand.u32 %v1652, 4294901760
    %1654 = vmatmul.mubr.f32.gmra.mrb[0].mxu0 %v1653
    %v1655 = vpop.f32.mrb[0].mxu0
    %v1656 = vadd.f32 %v1425, %v1655
    %v1657 = vpop.f32.mrb[0].mxu0
    %v1658 = vand.u32 %v95, 4294901760
    %v1659 = vsub.f32 %v95, %v1658
    %v1660 = vand.u32 %v1659, 4294901760
    %v1661 = vsub.f32 %v1659, %v1660
    %v1662 = vand.u32 %v1661, 4294901760
    %1663 = vmatprep.mubr.f32.mxu0 %v1662
    %v1664 = vand.u32 %v1382, 4294901760
    %v1665 = vsub.f32 %v1382, %v1664
    %v1666 = vand.u32 %v1665, 4294901760
    %v1667 = vsub.f32 %v1665, %v1666
    %v1668 = vand.u32 %v1667, 4294901760
    %1669 = vmatmul.mubr.f32.gmra.mrb[0].mxu0 %v1668
    %v1670 = vpop.f32.mrb[0].mxu0
    %v1671 = vadd.f32 %v1425, %v1670
    %v1672 = vpop.f32.mrb[0].mxu0
    %v1673 = vand.u32 %v96, 4294901760
    %v1674 = vsub.f32 %v96, %v1673
    %v1675 = vand.u32 %v1674, 4294901760
    %v1676 = vsub.f32 %v1674, %v1675
    %v1677 = vand.u32 %v1676, 4294901760
    %1678 = vmatprep.mubr.f32.mxu0 %v1677
    %v1679 = vand.u32 %v1388, 4294901760
    %v1680 = vsub.f32 %v1388, %v1679
    %v1681 = vand.u32 %v1680, 4294901760
    %v1682 = vsub.f32 %v1680, %v1681
    %v1683 = vand.u32 %v1682, 4294901760
    %1684 = vmatmul.mubr.f32.gmra.mrb[0].mxu0 %v1683
    %v1685 = vpop.f32.mrb[0].mxu0
    %v1686 = vadd.f32 %v1425, %v1685
    %v1687 = vpop.f32.mrb[0].mxu0
    %v1688 = vand.u32 %v97, 4294901760
    %v1689 = vsub.f32 %v97, %v1688
    %v1690 = vand.u32 %v1689, 4294901760
    %v1691 = vsub.f32 %v1689, %v1690
    %v1692 = vand.u32 %v1691, 4294901760
    %1693 = vmatprep.mubr.f32.mxu0 %v1692
    %v1694 = vand.u32 %v1394, 4294901760
    %v1695 = vsub.f32 %v1394, %v1694
    %v1696 = vand.u32 %v1695, 4294901760
    %v1697 = vsub.f32 %v1695, %v1696
    %v1698 = vand.u32 %v1697, 4294901760
    %1699 = vmatmul.mubr.f32.gmra.mrb[0].mxu0 %v1698
    %v1700 = vpop.f32.mrb[0].mxu0
    %v1701 = vadd.f32 %v1425, %v1700
    %v1702 = vpop.f32.mrb[0].mxu0
    %v1703 = vand.u32 %v98, 4294901760
    %v1704 = vsub.f32 %v98, %v1703
    %v1705 = vand.u32 %v1704, 4294901760
    %v1706 = vsub.f32 %v1704, %v1705
    %v1707 = vand.u32 %v1706, 4294901760
    %1708 = vmatprep.mubr.f32.mxu0 %v1707
    %v1709 = vand.u32 %v1400, 4294901760
    %v1710 = vsub.f32 %v1400, %v1709
    %v1711 = vand.u32 %v1710, 4294901760
    %v1712 = vsub.f32 %v1710, %v1711
    %v1713 = vand.u32 %v1712, 4294901760
    %1714 = vmatmul.mubr.f32.gmra.mrb[0].mxu0 %v1713
    %v1715 = vpop.f32.mrb[0].mxu0
    %v1716 = vadd.f32 %v1425, %v1715
    %v1717 = vpop.f32.mrb[0].mxu0
    %v1718 = vand.u32 %v99, 4294901760
    %v1719 = vsub.f32 %v99, %v1718
    %v1720 = vand.u32 %v1719, 4294901760
    %v1721 = vsub.f32 %v1719, %v1720
    %v1722 = vand.u32 %v1721, 4294901760
    %1723 = vmatprep.mubr.f32.mxu0 %v1722
    %v1724 = vand.u32 %v1406, 4294901760
    %v1725 = vsub.f32 %v1406, %v1724
    %v1726 = vand.u32 %v1725, 4294901760
    %v1727 = vsub.f32 %v1725, %v1726
    %v1728 = vand.u32 %v1727, 4294901760
    %1729 = vmatmul.mubr.f32.gmra.mrb[0].mxu0 %v1728
    %v1730 = vpop.f32.mrb[0].mxu0
    %v1731 = vadd.f32 %v1425, %v1730
    %v1732 = vpop.f32.mrb[0].mxu0
    %v1733 = vand.u32 %v100, 4294901760
    %v1734 = vsub.f32 %v100, %v1733
    %v1735 = vand.u32 %v1734, 4294901760
    %v1736 = vsub.f32 %v1734, %v1735
    %v1737 = vand.u32 %v1736, 4294901760
    %1738 = vmatprep.mubr.f32.mxu0 %v1737
    %v1739 = vand.u32 %v1412, 4294901760
    %v1740 = vsub.f32 %v1412, %v1739
    %v1741 = vand.u32 %v1740, 4294901760
    %v1742 = vsub.f32 %v1740, %v1741
    %v1743 = vand.u32 %v1742, 4294901760
    %1744 = vmatmul.mubr.f32.gmra.mrb[0].mxu0 %v1743
    %v1745 = vpop.f32.mrb[0].mxu0
    %v1746 = vadd.f32 %v1425, %v1745
    %v1747 = vpop.f32.mrb[0].mxu0
    %v1748 = vand.u32 %v101, 4294901760
    %v1749 = vsub.f32 %v101, %v1748
    %v1750 = vand.u32 %v1749, 4294901760
    %v1751 = vsub.f32 %v1749, %v1750
    %v1752 = vand.u32 %v1751, 4294901760
    %1753 = vmatprep.mubr.f32.mxu0 %v1752
    %v1754 = vand.u32 %v1418, 4294901760
    %v1755 = vsub.f32 %v1418, %v1754
    %v1756 = vand.u32 %v1755, 4294901760
    %v1757 = vsub.f32 %v1755, %v1756
    %v1758 = vand.u32 %v1757, 4294901760
    %1759 = vmatmul.mubr.f32.gmra.mrb[0].mxu0 %v1758
    %v1760 = vpop.f32.mrb[0].mxu0
    %v1761 = vadd.f32 %v1425, %v1760
    %v1762 = vpop.f32.mrb[0].mxu0
    %1763 = vdwg.mxu0
    %1764 = vmatprep.subr.mxu0 0.0
    %v1765 = vand.u32 %v102, 4294901760
    %v1766 = vsub.f32 %v102, %v1765
    %v1767 = vand.u32 %v1766, 4294901760
    %v1768 = vsub.f32 %v1766, %v1767
    %v1769 = vand.u32 %v1768, 4294901760
    %1770 = vmatpush1.msra.mxu0 %v1769
    %1771 = vmatprep.subr.mxu0 0.0
    %v1772 = vand.u32 %v103, 4294901760
    %v1773 = vsub.f32 %v103, %v1772
    %v1774 = vand.u32 %v1773, 4294901760
    %v1775 = vsub.f32 %v1773, %v1774
    %v1776 = vand.u32 %v1775, 4294901760
    %1777 = vmatpush1.msra.mxu0 %v1776
    %1778 = vmatprep.subr.mxu0 0.0
    %v1779 = vand.u32 %v104, 4294901760
    %v1780 = vsub.f32 %v104, %v1779
    %v1781 = vand.u32 %v1780, 4294901760
    %v1782 = vsub.f32 %v1780, %v1781
    %v1783 = vand.u32 %v1782, 4294901760
    %1784 = vmatpush1.msra.mxu0 %v1783
    %1785 = vmatprep.subr.mxu0 0.0
    %v1786 = vand.u32 %v105, 4294901760
    %v1787 = vsub.f32 %v105, %v1786
    %v1788 = vand.u32 %v1787, 4294901760
    %v1789 = vsub.f32 %v1787, %v1788
    %v1790 = vand.u32 %v1789, 4294901760
    %1791 = vmatpush1.msra.mxu0 %v1790
    %1792 = vmatprep.subr.mxu0 0.0
    %v1793 = vand.u32 %v106, 4294901760
    %v1794 = vsub.f32 %v106, %v1793
    %v1795 = vand.u32 %v1794, 4294901760
    %v1796 = vsub.f32 %v1794, %v1795
    %v1797 = vand.u32 %v1796, 4294901760
    %1798 = vmatpush1.msra.mxu0 %v1797
    %1799 = vmatprep.subr.mxu0 0.0
    %v1800 = vand.u32 %v107, 4294901760
    %v1801 = vsub.f32 %v107, %v1800
    %v1802 = vand.u32 %v1801, 4294901760
    %v1803 = vsub.f32 %v1801, %v1802
    %v1804 = vand.u32 %v1803, 4294901760
    %1805 = vmatpush1.msra.mxu0 %v1804
    %1806 = vmatprep.subr.mxu0 0.0
    %v1807 = vand.u32 %v108, 4294901760
    %v1808 = vsub.f32 %v108, %v1807
    %v1809 = vand.u32 %v1808, 4294901760
    %v1810 = vsub.f32 %v1808, %v1809
    %v1811 = vand.u32 %v1810, 4294901760
    %1812 = vmatpush1.msra.mxu0 %v1811
    %1813 = vmatprep.subr.mxu0 0.0
    %v1814 = vand.u32 %v109, 4294901760
    %v1815 = vsub.f32 %v109, %v1814
    %v1816 = vand.u32 %v1815, 4294901760
    %v1817 = vsub.f32 %v1815, %v1816
    %v1818 = vand.u32 %v1817, 4294901760
    %1819 = vmatpush1.msra.mxu0 %v1818
    %1820 = vmatprep.subr.mxu0 0.0
    %v1821 = vand.u32 %v110, 4294901760
    %v1822 = vsub.f32 %v110, %v1821
    %v1823 = vand.u32 %v1822, 4294901760
    %v1824 = vsub.f32 %v1822, %v1823
    %v1825 = vand.u32 %v1824, 4294901760
    %1826 = vmatpush1.msra.mxu0 %v1825
    %1827 = vmatprep.subr.mxu0 0.0
    %v1828 = vand.u32 %v111, 4294901760
    %v1829 = vsub.f32 %v111, %v1828
    %v1830 = vand.u32 %v1829, 4294901760
    %v1831 = vsub.f32 %v1829, %v1830
    %v1832 = vand.u32 %v1831, 4294901760
    %1833 = vmatpush1.msra.mxu0 %v1832
    %1834 = vmatprep.subr.mxu0 0.0
    %v1835 = vand.u32 %v112, 4294901760
    %v1836 = vsub.f32 %v112, %v1835
    %v1837 = vand.u32 %v1836, 4294901760
    %v1838 = vsub.f32 %v1836, %v1837
    %v1839 = vand.u32 %v1838, 4294901760
    %1840 = vmatpush1.msra.mxu0 %v1839
    %1841 = vmatprep.subr.mxu0 0.0
    %v1842 = vand.u32 %v113, 4294901760
    %v1843 = vsub.f32 %v113, %v1842
    %v1844 = vand.u32 %v1843, 4294901760
    %v1845 = vsub.f32 %v1843, %v1844
    %v1846 = vand.u32 %v1845, 4294901760
    %1847 = vmatpush1.msra.mxu0 %v1846
    %1848 = vmatprep.subr.mxu0 0.0
    %v1849 = vand.u32 %v114, 4294901760
    %v1850 = vsub.f32 %v114, %v1849
    %v1851 = vand.u32 %v1850, 4294901760
    %v1852 = vsub.f32 %v1850, %v1851
    %v1853 = vand.u32 %v1852, 4294901760
    %1854 = vmatpush1.msra.mxu0 %v1853
    %1855 = vmatprep.subr.mxu0 0.0
    %v1856 = vand.u32 %v115, 4294901760
    %v1857 = vsub.f32 %v115, %v1856
    %v1858 = vand.u32 %v1857, 4294901760
    %v1859 = vsub.f32 %v1857, %v1858
    %v1860 = vand.u32 %v1859, 4294901760
    %1861 = vmatpush1.msra.mxu0 %v1860
    %1862 = vmatprep.subr.mxu0 0.0
    %v1863 = vand.u32 %v116, 4294901760
    %v1864 = vsub.f32 %v116, %v1863
    %v1865 = vand.u32 %v1864, 4294901760
    %v1866 = vsub.f32 %v1864, %v1865
    %v1867 = vand.u32 %v1866, 4294901760
    %1868 = vmatpush1.msra.mxu0 %v1867
    %1869 = vmatprep.subr.mxu0 0.0
    %v1870 = vand.u32 %v117, 4294901760
    %v1871 = vsub.f32 %v117, %v1870
    %v1872 = vand.u32 %v1871, 4294901760
    %v1873 = vsub.f32 %v1871, %v1872
    %v1874 = vand.u32 %v1873, 4294901760
    %1875 = vmatpush1.msra.mxu0 %v1874
    %1876 = vmatprep.subr.mxu0 0.0
    %v1877 = vand.u32 %v118, 4294901760
    %v1878 = vsub.f32 %v118, %v1877
    %v1879 = vand.u32 %v1878, 4294901760
    %v1880 = vsub.f32 %v1878, %v1879
    %v1881 = vand.u32 %v1880, 4294901760
    %1882 = vmatpush1.msra.mxu0 %v1881
    %1883 = vmatprep.subr.mxu0 0.0
    %v1884 = vand.u32 %v119, 4294901760
    %v1885 = vsub.f32 %v119, %v1884
    %v1886 = vand.u32 %v1885, 4294901760
    %v1887 = vsub.f32 %v1885, %v1886
    %v1888 = vand.u32 %v1887, 4294901760
    %1889 = vmatpush1.msra.mxu0 %v1888
    %1890 = vmatprep.subr.mxu0 0.0
    %v1891 = vand.u32 %v120, 4294901760
    %v1892 = vsub.f32 %v120, %v1891
    %v1893 = vand.u32 %v1892, 4294901760
    %v1894 = vsub.f32 %v1892, %v1893
    %v1895 = vand.u32 %v1894, 4294901760
    %1896 = vmatpush1.msra.mxu0 %v1895
    %1897 = vmatprep.subr.mxu0 0.0
    %v1898 = vand.u32 %v121, 4294901760
    %v1899 = vsub.f32 %v121, %v1898
    %v1900 = vand.u32 %v1899, 4294901760
    %v1901 = vsub.f32 %v1899, %v1900
    %v1902 = vand.u32 %v1901, 4294901760
    %1903 = vmatpush1.msra.mxu0 %v1902
    %1904 = vmatprep.subr.mxu0 0.0
    %v1905 = vand.u32 %v122, 4294901760
    %v1906 = vsub.f32 %v122, %v1905
    %v1907 = vand.u32 %v1906, 4294901760
    %v1908 = vsub.f32 %v1906, %v1907
    %v1909 = vand.u32 %v1908, 4294901760
    %1910 = vmatpush1.msra.mxu0 %v1909
    %1911 = vmatprep.subr.mxu0 0.0
    %v1912 = vand.u32 %v123, 4294901760
    %v1913 = vsub.f32 %v123, %v1912
    %v1914 = vand.u32 %v1913, 4294901760
    %v1915 = vsub.f32 %v1913, %v1914
    %v1916 = vand.u32 %v1915, 4294901760
    %1917 = vmatpush1.msra.mxu0 %v1916
    %1918 = vmatprep.subr.mxu0 0.0
    %v1919 = vand.u32 %v124, 4294901760
    %v1920 = vsub.f32 %v124, %v1919
    %v1921 = vand.u32 %v1920, 4294901760
    %v1922 = vsub.f32 %v1920, %v1921
    %v1923 = vand.u32 %v1922, 4294901760
    %1924 = vmatpush1.msra.mxu0 %v1923
    %1925 = vmatprep.subr.mxu0 0.0
    %v1926 = vand.u32 %v125, 4294901760
    %v1927 = vsub.f32 %v125, %v1926
    %v1928 = vand.u32 %v1927, 4294901760
    %v1929 = vsub.f32 %v1927, %v1928
    %v1930 = vand.u32 %v1929, 4294901760
    %1931 = vmatpush1.msra.mxu0 %v1930
    %1932 = vmatprep.subr.mxu0 0.0
    %v1933 = vand.u32 %v126, 4294901760
    %v1934 = vsub.f32 %v126, %v1933
    %v1935 = vand.u32 %v1934, 4294901760
    %v1936 = vsub.f32 %v1934, %v1935
    %v1937 = vand.u32 %v1936, 4294901760
    %1938 = vmatpush1.msra.mxu0 %v1937
    %1939 = vmatprep.subr.mxu0 0.0
    %v1940 = vand.u32 %v127, 4294901760
    %v1941 = vsub.f32 %v127, %v1940
    %v1942 = vand.u32 %v1941, 4294901760
    %v1943 = vsub.f32 %v1941, %v1942
    %v1944 = vand.u32 %v1943, 4294901760
    %1945 = vmatpush1.msra.mxu0 %v1944
    %1946 = vmatprep.subr.mxu0 0.0
    %v1947 = vand.u32 %v128, 4294901760
    %v1948 = vsub.f32 %v128, %v1947
    %v1949 = vand.u32 %v1948, 4294901760
    %v1950 = vsub.f32 %v1948, %v1949
    %v1951 = vand.u32 %v1950, 4294901760
    %1952 = vmatpush1.msra.mxu0 %v1951
    %1953 = vmatprep.subr.mxu0 0.0
    %v1954 = vand.u32 %v129, 4294901760
    %v1955 = vsub.f32 %v129, %v1954
    %v1956 = vand.u32 %v1955, 4294901760
    %v1957 = vsub.f32 %v1955, %v1956
    %v1958 = vand.u32 %v1957, 4294901760
    %1959 = vmatpush1.msra.mxu0 %v1958
    %1960 = vmatprep.subr.mxu0 0.0
    %v1961 = vand.u32 %v130, 4294901760
    %v1962 = vsub.f32 %v130, %v1961
    %v1963 = vand.u32 %v1962, 4294901760
    %v1964 = vsub.f32 %v1962, %v1963
    %v1965 = vand.u32 %v1964, 4294901760
    %1966 = vmatpush1.msra.mxu0 %v1965
    %1967 = vmatprep.subr.mxu0 0.0
    %v1968 = vand.u32 %v131, 4294901760
    %v1969 = vsub.f32 %v131, %v1968
    %v1970 = vand.u32 %v1969, 4294901760
    %v1971 = vsub.f32 %v1969, %v1970
    %v1972 = vand.u32 %v1971, 4294901760
    %1973 = vmatpush1.msra.mxu0 %v1972
    %1974 = vmatprep.subr.mxu0 0.0
    %v1975 = vand.u32 %v132, 4294901760
    %v1976 = vsub.f32 %v132, %v1975
    %v1977 = vand.u32 %v1976, 4294901760
    %v1978 = vsub.f32 %v1976, %v1977
    %v1979 = vand.u32 %v1978, 4294901760
    %1980 = vmatpush1.msra.mxu0 %v1979
    %1981 = vmatprep.subr.mxu0 0.0
    %v1982 = vand.u32 %v133, 4294901760
    %v1983 = vsub.f32 %v133, %v1982
    %v1984 = vand.u32 %v1983, 4294901760
    %v1985 = vsub.f32 %v1983, %v1984
    %v1986 = vand.u32 %v1985, 4294901760
    %1987 = vmatpush1.msra.mxu0 %v1986
    %v1988 = vand.u32 %v86, 4294901760
    %1989 = vmatprep.mubr.f32.mxu0 %v1988
    %v1990 = vand.u32 %v1328, 4294901760
    %1991 = vmatmul.mubr.f32.gmra.mrb[0].mxu0 %v1990
    %v1992 = vpop.f32.mrb[0].mxu0
    %v1993 = vadd.f32 %v1536, %v1992
    %v1994 = vpop.f32.mrb[0].mxu0
    %v1995 = vand.u32 %v87, 4294901760
    %1996 = vmatprep.mubr.f32.mxu0 %v1995
    %v1997 = vand.u32 %v1334, 4294901760
    %1998 = vmatmul.mubr.f32.gmra.mrb[0].mxu0 %v1997
    %v1999 = vpop.f32.mrb[0].mxu0
    %v2000 = vadd.f32 %v1551, %v1999
    %v2001 = vpop.f32.mrb[0].mxu0
    %v2002 = vand.u32 %v88, 4294901760
    %2003 = vmatprep.mubr.f32.mxu0 %v2002
    %v2004 = vand.u32 %v1340, 4294901760
    %2005 = vmatmul.mubr.f32.gmra.mrb[0].mxu0 %v2004
    %v2006 = vpop.f32.mrb[0].mxu0
    %v2007 = vadd.f32 %v1566, %v2006
    %v2008 = vpop.f32.mrb[0].mxu0
    %v2009 = vand.u32 %v89, 4294901760
    %2010 = vmatprep.mubr.f32.mxu0 %v2009
    %v2011 = vand.u32 %v1346, 4294901760
    %2012 = vmatmul.mubr.f32.gmra.mrb[0].mxu0 %v2011
    %v2013 = vpop.f32.mrb[0].mxu0
    %v2014 = vadd.f32 %v1581, %v2013
    %v2015 = vpop.f32.mrb[0].mxu0
    %v2016 = vand.u32 %v90, 4294901760
    %2017 = vmatprep.mubr.f32.mxu0 %v2016
    %v2018 = vand.u32 %v1352, 4294901760
    %2019 = vmatmul.mubr.f32.gmra.mrb[0].mxu0 %v2018
    %v2020 = vpop.f32.mrb[0].mxu0
    %v2021 = vadd.f32 %v1596, %v2020
    %v2022 = vpop.f32.mrb[0].mxu0
    %v2023 = vand.u32 %v91, 4294901760
    %2024 = vmatprep.mubr.f32.mxu0 %v2023
    %v2025 = vand.u32 %v1358, 4294901760
    %2026 = vmatmul.mubr.f32.gmra.mrb[0].mxu0 %v2025
    %v2027 = vpop.f32.mrb[0].mxu0
    %v2028 = vadd.f32 %v1611, %v2027
    %v2029 = vpop.f32.mrb[0].mxu0
    %v2030 = vand.u32 %v92, 4294901760
    %2031 = vmatprep.mubr.f32.mxu0 %v2030
    %v2032 = vand.u32 %v1364, 4294901760
    %2033 = vmatmul.mubr.f32.gmra.mrb[0].mxu0 %v2032
    %v2034 = vpop.f32.mrb[0].mxu0
    %v2035 = vadd.f32 %v1626, %v2034
    %v2036 = vpop.f32.mrb[0].mxu0
    %v2037 = vand.u32 %v93, 4294901760
    %2038 = vmatprep.mubr.f32.mxu0 %v2037
    %v2039 = vand.u32 %v1370, 4294901760
    %2040 = vmatmul.mubr.f32.gmra.mrb[0].mxu0 %v2039
    %v2041 = vpop.f32.mrb[0].mxu0
    %v2042 = vadd.f32 %v1641, %v2041
    %v2043 = vpop.f32.mrb[0].mxu0
    %v2044 = vand.u32 %v94, 4294901760
    %2045 = vmatprep.mubr.f32.mxu0 %v2044
    %v2046 = vand.u32 %v1376, 4294901760
    %2047 = vmatmul.mubr.f32.gmra.mrb[0].mxu0 %v2046
    %v2048 = vpop.f32.mrb[0].mxu0
    %v2049 = vadd.f32 %v1656, %v2048
    %v2050 = vpop.f32.mrb[0].mxu0
    %v2051 = vand.u32 %v95, 4294901760
    %2052 = vmatprep.mubr.f32.mxu0 %v2051
    %v2053 = vand.u32 %v1382, 4294901760
    %2054 = vmatmul.mubr.f32.gmra.mrb[0].mxu0 %v2053
    %v2055 = vpop.f32.mrb[0].mxu0
    %v2056 = vadd.f32 %v1671, %v2055
    %v2057 = vpop.f32.mrb[0].mxu0
    %v2058 = vand.u32 %v96, 4294901760
    %2059 = vmatprep.mubr.f32.mxu0 %v2058
    %v2060 = vand.u32 %v1388, 4294901760
    %2061 = vmatmul.mubr.f32.gmra.mrb[0].mxu0 %v2060
    %v2062 = vpop.f32.mrb[0].mxu0
    %v2063 = vadd.f32 %v1686, %v2062
    %v2064 = vpop.f32.mrb[0].mxu0
    %v2065 = vand.u32 %v97, 4294901760
    %2066 = vmatprep.mubr.f32.mxu0 %v2065
    %v2067 = vand.u32 %v1394, 4294901760
    %2068 = vmatmul.mubr.f32.gmra.mrb[0].mxu0 %v2067
    %v2069 = vpop.f32.mrb[0].mxu0
    %v2070 = vadd.f32 %v1701, %v2069
    %v2071 = vpop.f32.mrb[0].mxu0
    %v2072 = vand.u32 %v98, 4294901760
    %2073 = vmatprep.mubr.f32.mxu0 %v2072
    %v2074 = vand.u32 %v1400, 4294901760
    %2075 = vmatmul.mubr.f32.gmra.mrb[0].mxu0 %v2074
    %v2076 = vpop.f32.mrb[0].mxu0
    %v2077 = vadd.f32 %v1716, %v2076
    %v2078 = vpop.f32.mrb[0].mxu0
    %v2079 = vand.u32 %v99, 4294901760
    %2080 = vmatprep.mubr.f32.mxu0 %v2079
    %v2081 = vand.u32 %v1406, 4294901760
    %2082 = vmatmul.mubr.f32.gmra.mrb[0].mxu0 %v2081
    %v2083 = vpop.f32.mrb[0].mxu0
    %v2084 = vadd.f32 %v1731, %v2083
    %v2085 = vpop.f32.mrb[0].mxu0
    %v2086 = vand.u32 %v100, 4294901760
    %2087 = vmatprep.mubr.f32.mxu0 %v2086
    %v2088 = vand.u32 %v1412, 4294901760
    %2089 = vmatmul.mubr.f32.gmra.mrb[0].mxu0 %v2088
    %v2090 = vpop.f32.mrb[0].mxu0
    %v2091 = vadd.f32 %v1746, %v2090
    %v2092 = vpop.f32.mrb[0].mxu0
    %v2093 = vand.u32 %v101, 4294901760
    %2094 = vmatprep.mubr.f32.mxu0 %v2093
    %v2095 = vand.u32 %v1418, 4294901760
    %2096 = vmatmul.mubr.f32.gmra.mrb[0].mxu0 %v2095
    %v2097 = vpop.f32.mrb[0].mxu0
    %v2098 = vadd.f32 %v1761, %v2097
    %v2099 = vpop.f32.mrb[0].mxu0
    %2100 = vdwg.mxu0
    %2101 = vmatprep.subr.mxu0 0.0
    %v2102 = vand.u32 %v102, 4294901760
    %v2103 = vsub.f32 %v102, %v2102
    %2104 = vmatpush1.msra.mxu0 %v2103
    %2105 = vmatprep.subr.mxu0 0.0
    %v2106 = vand.u32 %v103, 4294901760
    %v2107 = vsub.f32 %v103, %v2106
    %2108 = vmatpush1.msra.mxu0 %v2107
    %2109 = vmatprep.subr.mxu0 0.0
    %v2110 = vand.u32 %v104, 4294901760
    %v2111 = vsub.f32 %v104, %v2110
    %2112 = vmatpush1.msra.mxu0 %v2111
    %2113 = vmatprep.subr.mxu0 0.0
    %v2114 = vand.u32 %v105, 4294901760
    %v2115 = vsub.f32 %v105, %v2114
    %2116 = vmatpush1.msra.mxu0 %v2115
    %2117 = vmatprep.subr.mxu0 0.0
    %v2118 = vand.u32 %v106, 4294901760
    %v2119 = vsub.f32 %v106, %v2118
    %2120 = vmatpush1.msra.mxu0 %v2119
    %2121 = vmatprep.subr.mxu0 0.0
    %v2122 = vand.u32 %v107, 4294901760
    %v2123 = vsub.f32 %v107, %v2122
    %2124 = vmatpush1.msra.mxu0 %v2123
    %2125 = vmatprep.subr.mxu0 0.0
    %v2126 = vand.u32 %v108, 4294901760
    %v2127 = vsub.f32 %v108, %v2126
    %2128 = vmatpush1.msra.mxu0 %v2127
    %2129 = vmatprep.subr.mxu0 0.0
    %v2130 = vand.u32 %v109, 4294901760
    %v2131 = vsub.f32 %v109, %v2130
    %2132 = vmatpush1.msra.mxu0 %v2131
    %2133 = vmatprep.subr.mxu0 0.0
    %v2134 = vand.u32 %v110, 4294901760
    %v2135 = vsub.f32 %v110, %v2134
    %2136 = vmatpush1.msra.mxu0 %v2135
    %2137 = vmatprep.subr.mxu0 0.0
    %v2138 = vand.u32 %v111, 4294901760
    %v2139 = vsub.f32 %v111, %v2138
    %2140 = vmatpush1.msra.mxu0 %v2139
    %2141 = vmatprep.subr.mxu0 0.0
    %v2142 = vand.u32 %v112, 4294901760
    %v2143 = vsub.f32 %v112, %v2142
    %2144 = vmatpush1.msra.mxu0 %v2143
    %2145 = vmatprep.subr.mxu0 0.0
    %v2146 = vand.u32 %v113, 4294901760
    %v2147 = vsub.f32 %v113, %v2146
    %2148 = vmatpush1.msra.mxu0 %v2147
    %2149 = vmatprep.subr.mxu0 0.0
    %v2150 = vand.u32 %v114, 4294901760
    %v2151 = vsub.f32 %v114, %v2150
    %2152 = vmatpush1.msra.mxu0 %v2151
    %2153 = vmatprep.subr.mxu0 0.0
    %v2154 = vand.u32 %v115, 4294901760
    %v2155 = vsub.f32 %v115, %v2154
    %2156 = vmatpush1.msra.mxu0 %v2155
    %2157 = vmatprep.subr.mxu0 0.0
    %v2158 = vand.u32 %v116, 4294901760
    %v2159 = vsub.f32 %v116, %v2158
    %2160 = vmatpush1.msra.mxu0 %v2159
    %2161 = vmatprep.subr.mxu0 0.0
    %v2162 = vand.u32 %v117, 4294901760
    %v2163 = vsub.f32 %v117, %v2162
    %2164 = vmatpush1.msra.mxu0 %v2163
    %2165 = vmatprep.subr.mxu0 0.0
    %v2166 = vand.u32 %v118, 4294901760
    %v2167 = vsub.f32 %v118, %v2166
    %2168 = vmatpush1.msra.mxu0 %v2167
    %2169 = vmatprep.subr.mxu0 0.0
    %v2170 = vand.u32 %v119, 4294901760
    %v2171 = vsub.f32 %v119, %v2170
    %2172 = vmatpush1.msra.mxu0 %v2171
    %2173 = vmatprep.subr.mxu0 0.0
    %v2174 = vand.u32 %v120, 4294901760
    %v2175 = vsub.f32 %v120, %v2174
    %2176 = vmatpush1.msra.mxu0 %v2175
    %2177 = vmatprep.subr.mxu0 0.0
    %v2178 = vand.u32 %v121, 4294901760
    %v2179 = vsub.f32 %v121, %v2178
    %2180 = vmatpush1.msra.mxu0 %v2179
    %2181 = vmatprep.subr.mxu0 0.0
    %v2182 = vand.u32 %v122, 4294901760
    %v2183 = vsub.f32 %v122, %v2182
    %2184 = vmatpush1.msra.mxu0 %v2183
    %2185 = vmatprep.subr.mxu0 0.0
    %v2186 = vand.u32 %v123, 4294901760
    %v2187 = vsub.f32 %v123, %v2186
    %2188 = vmatpush1.msra.mxu0 %v2187
    %2189 = vmatprep.subr.mxu0 0.0
    %v2190 = vand.u32 %v124, 4294901760
    %v2191 = vsub.f32 %v124, %v2190
    %2192 = vmatpush1.msra.mxu0 %v2191
    %2193 = vmatprep.subr.mxu0 0.0
    %v2194 = vand.u32 %v125, 4294901760
    %v2195 = vsub.f32 %v125, %v2194
    %2196 = vmatpush1.msra.mxu0 %v2195
    %2197 = vmatprep.subr.mxu0 0.0
    %v2198 = vand.u32 %v126, 4294901760
    %v2199 = vsub.f32 %v126, %v2198
    %2200 = vmatpush1.msra.mxu0 %v2199
    %2201 = vmatprep.subr.mxu0 0.0
    %v2202 = vand.u32 %v127, 4294901760
    %v2203 = vsub.f32 %v127, %v2202
    %2204 = vmatpush1.msra.mxu0 %v2203
    %2205 = vmatprep.subr.mxu0 0.0
    %v2206 = vand.u32 %v128, 4294901760
    %v2207 = vsub.f32 %v128, %v2206
    %2208 = vmatpush1.msra.mxu0 %v2207
    %2209 = vmatprep.subr.mxu0 0.0
    %v2210 = vand.u32 %v129, 4294901760
    %v2211 = vsub.f32 %v129, %v2210
    %2212 = vmatpush1.msra.mxu0 %v2211
    %2213 = vmatprep.subr.mxu0 0.0
    %v2214 = vand.u32 %v130, 4294901760
    %v2215 = vsub.f32 %v130, %v2214
    %2216 = vmatpush1.msra.mxu0 %v2215
    %2217 = vmatprep.subr.mxu0 0.0
    %v2218 = vand.u32 %v131, 4294901760
    %v2219 = vsub.f32 %v131, %v2218
    %2220 = vmatpush1.msra.mxu0 %v2219
    %2221 = vmatprep.subr.mxu0 0.0
    %v2222 = vand.u32 %v132, 4294901760
    %v2223 = vsub.f32 %v132, %v2222
    %2224 = vmatpush1.msra.mxu0 %v2223
    %2225 = vmatprep.subr.mxu0 0.0
    %v2226 = vand.u32 %v133, 4294901760
    %v2227 = vsub.f32 %v133, %v2226
    %2228 = vmatpush1.msra.mxu0 %v2227
    %v2229 = vand.u32 %v86, 4294901760
    %v2230 = vsub.f32 %v86, %v2229
    %2231 = vmatprep.mubr.f32.mxu0 %v2230
    %v2232 = vand.u32 %v1328, 4294901760
    %v2233 = vsub.f32 %v1328, %v2232
    %2234 = vmatmul.mubr.f32.gmra.mrb[0].mxu0 %v2233
    %v2235 = vpop.f32.mrb[0].mxu0
    %v2236 = vadd.f32 %v1993, %v2235
    %v2237 = vpop.f32.mrb[0].mxu0
    %v2238 = vand.u32 %v87, 4294901760
    %v2239 = vsub.f32 %v87, %v2238
    %2240 = vmatprep.mubr.f32.mxu0 %v2239
    %v2241 = vand.u32 %v1334, 4294901760
    %v2242 = vsub.f32 %v1334, %v2241
    %2243 = vmatmul.mubr.f32.gmra.mrb[0].mxu0 %v2242
    %v2244 = vpop.f32.mrb[0].mxu0
    %v2245 = vadd.f32 %v2000, %v2244
    %v2246 = vpop.f32.mrb[0].mxu0
    %v2247 = vand.u32 %v88, 4294901760
    %v2248 = vsub.f32 %v88, %v2247
    %2249 = vmatprep.mubr.f32.mxu0 %v2248
    %v2250 = vand.u32 %v1340, 4294901760
    %v2251 = vsub.f32 %v1340, %v2250
    %2252 = vmatmul.mubr.f32.gmra.mrb[0].mxu0 %v2251
    %v2253 = vpop.f32.mrb[0].mxu0
    %v2254 = vadd.f32 %v2007, %v2253
    %v2255 = vpop.f32.mrb[0].mxu0
    %v2256 = vand.u32 %v89, 4294901760
    %v2257 = vsub.f32 %v89, %v2256
    %2258 = vmatprep.mubr.f32.mxu0 %v2257
    %v2259 = vand.u32 %v1346, 4294901760
    %v2260 = vsub.f32 %v1346, %v2259
    %2261 = vmatmul.mubr.f32.gmra.mrb[0].mxu0 %v2260
    %v2262 = vpop.f32.mrb[0].mxu0
    %v2263 = vadd.f32 %v2014, %v2262
    %v2264 = vpop.f32.mrb[0].mxu0
    %v2265 = vand.u32 %v90, 4294901760
    %v2266 = vsub.f32 %v90, %v2265
    %2267 = vmatprep.mubr.f32.mxu0 %v2266
    %v2268 = vand.u32 %v1352, 4294901760
    %v2269 = vsub.f32 %v1352, %v2268
    %2270 = vmatmul.mubr.f32.gmra.mrb[0].mxu0 %v2269
    %v2271 = vpop.f32.mrb[0].mxu0
    %v2272 = vadd.f32 %v2021, %v2271
    %v2273 = vpop.f32.mrb[0].mxu0
    %v2274 = vand.u32 %v91, 4294901760
    %v2275 = vsub.f32 %v91, %v2274
    %2276 = vmatprep.mubr.f32.mxu0 %v2275
    %v2277 = vand.u32 %v1358, 4294901760
    %v2278 = vsub.f32 %v1358, %v2277
    %2279 = vmatmul.mubr.f32.gmra.mrb[0].mxu0 %v2278
    %v2280 = vpop.f32.mrb[0].mxu0
    %v2281 = vadd.f32 %v2028, %v2280
    %v2282 = vpop.f32.mrb[0].mxu0
    %v2283 = vand.u32 %v92, 4294901760
    %v2284 = vsub.f32 %v92, %v2283
    %2285 = vmatprep.mubr.f32.mxu0 %v2284
    %v2286 = vand.u32 %v1364, 4294901760
    %v2287 = vsub.f32 %v1364, %v2286
    %2288 = vmatmul.mubr.f32.gmra.mrb[0].mxu0 %v2287
    %v2289 = vpop.f32.mrb[0].mxu0
    %v2290 = vadd.f32 %v2035, %v2289
    %v2291 = vpop.f32.mrb[0].mxu0
    %v2292 = vand.u32 %v93, 4294901760
    %v2293 = vsub.f32 %v93, %v2292
    %2294 = vmatprep.mubr.f32.mxu0 %v2293
    %v2295 = vand.u32 %v1370, 4294901760
    %v2296 = vsub.f32 %v1370, %v2295
    %2297 = vmatmul.mubr.f32.gmra.mrb[0].mxu0 %v2296
    %v2298 = vpop.f32.mrb[0].mxu0
    %v2299 = vadd.f32 %v2042, %v2298
    %v2300 = vpop.f32.mrb[0].mxu0
    %v2301 = vand.u32 %v94, 4294901760
    %v2302 = vsub.f32 %v94, %v2301
    %2303 = vmatprep.mubr.f32.mxu0 %v2302
    %v2304 = vand.u32 %v1376, 4294901760
    %v2305 = vsub.f32 %v1376, %v2304
    %2306 = vmatmul.mubr.f32.gmra.mrb[0].mxu0 %v2305
    %v2307 = vpop.f32.mrb[0].mxu0
    %v2308 = vadd.f32 %v2049, %v2307
    %v2309 = vpop.f32.mrb[0].mxu0
    %v2310 = vand.u32 %v95, 4294901760
    %v2311 = vsub.f32 %v95, %v2310
    %2312 = vmatprep.mubr.f32.mxu0 %v2311
    %v2313 = vand.u32 %v1382, 4294901760
    %v2314 = vsub.f32 %v1382, %v2313
    %2315 = vmatmul.mubr.f32.gmra.mrb[0].mxu0 %v2314
    %v2316 = vpop.f32.mrb[0].mxu0
    %v2317 = vadd.f32 %v2056, %v2316
    %v2318 = vpop.f32.mrb[0].mxu0
    %v2319 = vand.u32 %v96, 4294901760
    %v2320 = vsub.f32 %v96, %v2319
    %2321 = vmatprep.mubr.f32.mxu0 %v2320
    %v2322 = vand.u32 %v1388, 4294901760
    %v2323 = vsub.f32 %v1388, %v2322
    %2324 = vmatmul.mubr.f32.gmra.mrb[0].mxu0 %v2323
    %v2325 = vpop.f32.mrb[0].mxu0
    %v2326 = vadd.f32 %v2063, %v2325
    %v2327 = vpop.f32.mrb[0].mxu0
    %v2328 = vand.u32 %v97, 4294901760
    %v2329 = vsub.f32 %v97, %v2328
    %2330 = vmatprep.mubr.f32.mxu0 %v2329
    %v2331 = vand.u32 %v1394, 4294901760
    %v2332 = vsub.f32 %v1394, %v2331
    %2333 = vmatmul.mubr.f32.gmra.mrb[0].mxu0 %v2332
    %v2334 = vpop.f32.mrb[0].mxu0
    %v2335 = vadd.f32 %v2070, %v2334
    %v2336 = vpop.f32.mrb[0].mxu0
    %v2337 = vand.u32 %v98, 4294901760
    %v2338 = vsub.f32 %v98, %v2337
    %2339 = vmatprep.mubr.f32.mxu0 %v2338
    %v2340 = vand.u32 %v1400, 4294901760
    %v2341 = vsub.f32 %v1400, %v2340
    %2342 = vmatmul.mubr.f32.gmra.mrb[0].mxu0 %v2341
    %v2343 = vpop.f32.mrb[0].mxu0
    %v2344 = vadd.f32 %v2077, %v2343
    %v2345 = vpop.f32.mrb[0].mxu0
    %v2346 = vand.u32 %v99, 4294901760
    %v2347 = vsub.f32 %v99, %v2346
    %2348 = vmatprep.mubr.f32.mxu0 %v2347
    %v2349 = vand.u32 %v1406, 4294901760
    %v2350 = vsub.f32 %v1406, %v2349
    %2351 = vmatmul.mubr.f32.gmra.mrb[0].mxu0 %v2350
    %v2352 = vpop.f32.mrb[0].mxu0
    %v2353 = vadd.f32 %v2084, %v2352
    %v2354 = vpop.f32.mrb[0].mxu0
    %v2355 = vand.u32 %v100, 4294901760
    %v2356 = vsub.f32 %v100, %v2355
    %2357 = vmatprep.mubr.f32.mxu0 %v2356
    %v2358 = vand.u32 %v1412, 4294901760
    %v2359 = vsub.f32 %v1412, %v2358
    %2360 = vmatmul.mubr.f32.gmra.mrb[0].mxu0 %v2359
    %v2361 = vpop.f32.mrb[0].mxu0
    %v2362 = vadd.f32 %v2091, %v2361
    %v2363 = vpop.f32.mrb[0].mxu0
    %v2364 = vand.u32 %v101, 4294901760
    %v2365 = vsub.f32 %v101, %v2364
    %2366 = vmatprep.mubr.f32.mxu0 %v2365
    %v2367 = vand.u32 %v1418, 4294901760
    %v2368 = vsub.f32 %v1418, %v2367
    %2369 = vmatmul.mubr.f32.gmra.mrb[0].mxu0 %v2368
    %v2370 = vpop.f32.mrb[0].mxu0
    %v2371 = vadd.f32 %v2098, %v2370
    %v2372 = vpop.f32.mrb[0].mxu0
    %2373 = vdwg.mxu0
    %2374 = vmatprep.subr.mxu0 0.0
    %v2375 = vand.u32 %v102, 4294901760
    %2376 = vmatpush1.msra.mxu0 %v2375
    %2377 = vmatprep.subr.mxu0 0.0
    %v2378 = vand.u32 %v103, 4294901760
    %2379 = vmatpush1.msra.mxu0 %v2378
    %2380 = vmatprep.subr.mxu0 0.0
    %v2381 = vand.u32 %v104, 4294901760
    %2382 = vmatpush1.msra.mxu0 %v2381
    %2383 = vmatprep.subr.mxu0 0.0
    %v2384 = vand.u32 %v105, 4294901760
    %2385 = vmatpush1.msra.mxu0 %v2384
    %2386 = vmatprep.subr.mxu0 0.0
    %v2387 = vand.u32 %v106, 4294901760
    %2388 = vmatpush1.msra.mxu0 %v2387
    %2389 = vmatprep.subr.mxu0 0.0
    %v2390 = vand.u32 %v107, 4294901760
    %2391 = vmatpush1.msra.mxu0 %v2390
    %2392 = vmatprep.subr.mxu0 0.0
    %v2393 = vand.u32 %v108, 4294901760
    %2394 = vmatpush1.msra.mxu0 %v2393
    %2395 = vmatprep.subr.mxu0 0.0
    %v2396 = vand.u32 %v109, 4294901760
    %2397 = vmatpush1.msra.mxu0 %v2396
    %2398 = vmatprep.subr.mxu0 0.0
    %v2399 = vand.u32 %v110, 4294901760
    %2400 = vmatpush1.msra.mxu0 %v2399
    %2401 = vmatprep.subr.mxu0 0.0
    %v2402 = vand.u32 %v111, 4294901760
    %2403 = vmatpush1.msra.mxu0 %v2402
    %2404 = vmatprep.subr.mxu0 0.0
    %v2405 = vand.u32 %v112, 4294901760
    %2406 = vmatpush1.msra.mxu0 %v2405
    %2407 = vmatprep.subr.mxu0 0.0
    %v2408 = vand.u32 %v113, 4294901760
    %2409 = vmatpush1.msra.mxu0 %v2408
    %2410 = vmatprep.subr.mxu0 0.0
    %v2411 = vand.u32 %v114, 4294901760
    %2412 = vmatpush1.msra.mxu0 %v2411
    %2413 = vmatprep.subr.mxu0 0.0
    %v2414 = vand.u32 %v115, 4294901760
    %2415 = vmatpush1.msra.mxu0 %v2414
    %2416 = vmatprep.subr.mxu0 0.0
    %v2417 = vand.u32 %v116, 4294901760
    %2418 = vmatpush1.msra.mxu0 %v2417
    %2419 = vmatprep.subr.mxu0 0.0
    %v2420 = vand.u32 %v117, 4294901760
    %2421 = vmatpush1.msra.mxu0 %v2420
    %2422 = vmatprep.subr.mxu0 0.0
    %v2423 = vand.u32 %v118, 4294901760
    %2424 = vmatpush1.msra.mxu0 %v2423
    %2425 = vmatprep.subr.mxu0 0.0
    %v2426 = vand.u32 %v119, 4294901760
    %2427 = vmatpush1.msra.mxu0 %v2426
    %2428 = vmatprep.subr.mxu0 0.0
    %v2429 = vand.u32 %v120, 4294901760
    %2430 = vmatpush1.msra.mxu0 %v2429
    %2431 = vmatprep.subr.mxu0 0.0
    %v2432 = vand.u32 %v121, 4294901760
    %2433 = vmatpush1.msra.mxu0 %v2432
    %2434 = vmatprep.subr.mxu0 0.0
    %v2435 = vand.u32 %v122, 4294901760
    %2436 = vmatpush1.msra.mxu0 %v2435
    %2437 = vmatprep.subr.mxu0 0.0
    %v2438 = vand.u32 %v123, 4294901760
    %2439 = vmatpush1.msra.mxu0 %v2438
    %2440 = vmatprep.subr.mxu0 0.0
    %v2441 = vand.u32 %v124, 4294901760
    %2442 = vmatpush1.msra.mxu0 %v2441
    %2443 = vmatprep.subr.mxu0 0.0
    %v2444 = vand.u32 %v125, 4294901760
    %2445 = vmatpush1.msra.mxu0 %v2444
    %2446 = vmatprep.subr.mxu0 0.0
    %v2447 = vand.u32 %v126, 4294901760
    %2448 = vmatpush1.msra.mxu0 %v2447
    %2449 = vmatprep.subr.mxu0 0.0
    %v2450 = vand.u32 %v127, 4294901760
    %2451 = vmatpush1.msra.mxu0 %v2450
    %2452 = vmatprep.subr.mxu0 0.0
    %v2453 = vand.u32 %v128, 4294901760
    %2454 = vmatpush1.msra.mxu0 %v2453
    %2455 = vmatprep.subr.mxu0 0.0
    %v2456 = vand.u32 %v129, 4294901760
    %2457 = vmatpush1.msra.mxu0 %v2456
    %2458 = vmatprep.subr.mxu0 0.0
    %v2459 = vand.u32 %v130, 4294901760
    %2460 = vmatpush1.msra.mxu0 %v2459
    %2461 = vmatprep.subr.mxu0 0.0
    %v2462 = vand.u32 %v131, 4294901760
    %2463 = vmatpush1.msra.mxu0 %v2462
    %2464 = vmatprep.subr.mxu0 0.0
    %v2465 = vand.u32 %v132, 4294901760
    %2466 = vmatpush1.msra.mxu0 %v2465
    %2467 = vmatprep.subr.mxu0 0.0
    %v2468 = vand.u32 %v133, 4294901760
    %2469 = vmatpush1.msra.mxu0 %v2468
    %v2470 = vand.u32 %v86, 4294901760
    %v2471 = vsub.f32 %v86, %v2470
    %v2472 = vand.u32 %v2471, 4294901760
    %2473 = vmatprep.mubr.f32.mxu0 %v2472
    %v2474 = vand.u32 %v1328, 4294901760
    %v2475 = vsub.f32 %v1328, %v2474
    %v2476 = vand.u32 %v2475, 4294901760
    %2477 = vmatmul.mubr.f32.gmra.mrb[0].mxu0 %v2476
    %v2478 = vpop.f32.mrb[0].mxu0
    %v2479 = vadd.f32 %v2236, %v2478
    %v2480 = vpop.f32.mrb[0].mxu0
    %v2481 = vand.u32 %v87, 4294901760
    %v2482 = vsub.f32 %v87, %v2481
    %v2483 = vand.u32 %v2482, 4294901760
    %2484 = vmatprep.mubr.f32.mxu0 %v2483
    %v2485 = vand.u32 %v1334, 4294901760
    %v2486 = vsub.f32 %v1334, %v2485
    %v2487 = vand.u32 %v2486, 4294901760
    %2488 = vmatmul.mubr.f32.gmra.mrb[0].mxu0 %v2487
    %v2489 = vpop.f32.mrb[0].mxu0
    %v2490 = vadd.f32 %v2245, %v2489
    %v2491 = vpop.f32.mrb[0].mxu0
    %v2492 = vand.u32 %v88, 4294901760
    %v2493 = vsub.f32 %v88, %v2492
    %v2494 = vand.u32 %v2493, 4294901760
    %2495 = vmatprep.mubr.f32.mxu0 %v2494
    %v2496 = vand.u32 %v1340, 4294901760
    %v2497 = vsub.f32 %v1340, %v2496
    %v2498 = vand.u32 %v2497, 4294901760
    %2499 = vmatmul.mubr.f32.gmra.mrb[0].mxu0 %v2498
    %v2500 = vpop.f32.mrb[0].mxu0
    %v2501 = vadd.f32 %v2254, %v2500
    %v2502 = vpop.f32.mrb[0].mxu0
    %v2503 = vand.u32 %v89, 4294901760
    %v2504 = vsub.f32 %v89, %v2503
    %v2505 = vand.u32 %v2504, 4294901760
    %2506 = vmatprep.mubr.f32.mxu0 %v2505
    %v2507 = vand.u32 %v1346, 4294901760
    %v2508 = vsub.f32 %v1346, %v2507
    %v2509 = vand.u32 %v2508, 4294901760
    %2510 = vmatmul.mubr.f32.gmra.mrb[0].mxu0 %v2509
    %v2511 = vpop.f32.mrb[0].mxu0
    %v2512 = vadd.f32 %v2263, %v2511
    %v2513 = vpop.f32.mrb[0].mxu0
    %v2514 = vand.u32 %v90, 4294901760
    %v2515 = vsub.f32 %v90, %v2514
    %v2516 = vand.u32 %v2515, 4294901760
    %2517 = vmatprep.mubr.f32.mxu0 %v2516
    %v2518 = vand.u32 %v1352, 4294901760
    %v2519 = vsub.f32 %v1352, %v2518
    %v2520 = vand.u32 %v2519, 4294901760
    %2521 = vmatmul.mubr.f32.gmra.mrb[0].mxu0 %v2520
    %v2522 = vpop.f32.mrb[0].mxu0
    %v2523 = vadd.f32 %v2272, %v2522
    %v2524 = vpop.f32.mrb[0].mxu0
    %v2525 = vand.u32 %v91, 4294901760
    %v2526 = vsub.f32 %v91, %v2525
    %v2527 = vand.u32 %v2526, 4294901760
    %2528 = vmatprep.mubr.f32.mxu0 %v2527
    %v2529 = vand.u32 %v1358, 4294901760
    %v2530 = vsub.f32 %v1358, %v2529
    %v2531 = vand.u32 %v2530, 4294901760
    %2532 = vmatmul.mubr.f32.gmra.mrb[0].mxu0 %v2531
    %v2533 = vpop.f32.mrb[0].mxu0
    %v2534 = vadd.f32 %v2281, %v2533
    %v2535 = vpop.f32.mrb[0].mxu0
    %v2536 = vand.u32 %v92, 4294901760
    %v2537 = vsub.f32 %v92, %v2536
    %v2538 = vand.u32 %v2537, 4294901760
    %2539 = vmatprep.mubr.f32.mxu0 %v2538
    %v2540 = vand.u32 %v1364, 4294901760
    %v2541 = vsub.f32 %v1364, %v2540
    %v2542 = vand.u32 %v2541, 4294901760
    %2543 = vmatmul.mubr.f32.gmra.mrb[0].mxu0 %v2542
    %v2544 = vpop.f32.mrb[0].mxu0
    %v2545 = vadd.f32 %v2290, %v2544
    %v2546 = vpop.f32.mrb[0].mxu0
    %v2547 = vand.u32 %v93, 4294901760
    %v2548 = vsub.f32 %v93, %v2547
    %v2549 = vand.u32 %v2548, 4294901760
    %2550 = vmatprep.mubr.f32.mxu0 %v2549
    %v2551 = vand.u32 %v1370, 4294901760
    %v2552 = vsub.f32 %v1370, %v2551
    %v2553 = vand.u32 %v2552, 4294901760
    %2554 = vmatmul.mubr.f32.gmra.mrb[0].mxu0 %v2553
    %v2555 = vpop.f32.mrb[0].mxu0
    %v2556 = vadd.f32 %v2299, %v2555
    %v2557 = vpop.f32.mrb[0].mxu0
    %v2558 = vand.u32 %v94, 4294901760
    %v2559 = vsub.f32 %v94, %v2558
    %v2560 = vand.u32 %v2559, 4294901760
    %2561 = vmatprep.mubr.f32.mxu0 %v2560
    %v2562 = vand.u32 %v1376, 4294901760
    %v2563 = vsub.f32 %v1376, %v2562
    %v2564 = vand.u32 %v2563, 4294901760
    %2565 = vmatmul.mubr.f32.gmra.mrb[0].mxu0 %v2564
    %v2566 = vpop.f32.mrb[0].mxu0
    %v2567 = vadd.f32 %v2308, %v2566
    %v2568 = vpop.f32.mrb[0].mxu0
    %v2569 = vand.u32 %v95, 4294901760
    %v2570 = vsub.f32 %v95, %v2569
    %v2571 = vand.u32 %v2570, 4294901760
    %2572 = vmatprep.mubr.f32.mxu0 %v2571
    %v2573 = vand.u32 %v1382, 4294901760
    %v2574 = vsub.f32 %v1382, %v2573
    %v2575 = vand.u32 %v2574, 4294901760
    %2576 = vmatmul.mubr.f32.gmra.mrb[0].mxu0 %v2575
    %v2577 = vpop.f32.mrb[0].mxu0
    %v2578 = vadd.f32 %v2317, %v2577
    %v2579 = vpop.f32.mrb[0].mxu0
    %v2580 = vand.u32 %v96, 4294901760
    %v2581 = vsub.f32 %v96, %v2580
    %v2582 = vand.u32 %v2581, 4294901760
    %2583 = vmatprep.mubr.f32.mxu0 %v2582
    %v2584 = vand.u32 %v1388, 4294901760
    %v2585 = vsub.f32 %v1388, %v2584
    %v2586 = vand.u32 %v2585, 4294901760
    %2587 = vmatmul.mubr.f32.gmra.mrb[0].mxu0 %v2586
    %v2588 = vpop.f32.mrb[0].mxu0
    %v2589 = vadd.f32 %v2326, %v2588
    %v2590 = vpop.f32.mrb[0].mxu0
    %v2591 = vand.u32 %v97, 4294901760
    %v2592 = vsub.f32 %v97, %v2591
    %v2593 = vand.u32 %v2592, 4294901760
    %2594 = vmatprep.mubr.f32.mxu0 %v2593
    %v2595 = vand.u32 %v1394, 4294901760
    %v2596 = vsub.f32 %v1394, %v2595
    %v2597 = vand.u32 %v2596, 4294901760
    %2598 = vmatmul.mubr.f32.gmra.mrb[0].mxu0 %v2597
    %v2599 = vpop.f32.mrb[0].mxu0
    %v2600 = vadd.f32 %v2335, %v2599
    %v2601 = vpop.f32.mrb[0].mxu0
    %v2602 = vand.u32 %v98, 4294901760
    %v2603 = vsub.f32 %v98, %v2602
    %v2604 = vand.u32 %v2603, 4294901760
    %2605 = vmatprep.mubr.f32.mxu0 %v2604
    %v2606 = vand.u32 %v1400, 4294901760
    %v2607 = vsub.f32 %v1400, %v2606
    %v2608 = vand.u32 %v2607, 4294901760
    %2609 = vmatmul.mubr.f32.gmra.mrb[0].mxu0 %v2608
    %v2610 = vpop.f32.mrb[0].mxu0
    %v2611 = vadd.f32 %v2344, %v2610
    %v2612 = vpop.f32.mrb[0].mxu0
    %v2613 = vand.u32 %v99, 4294901760
    %v2614 = vsub.f32 %v99, %v2613
    %v2615 = vand.u32 %v2614, 4294901760
    %2616 = vmatprep.mubr.f32.mxu0 %v2615
    %v2617 = vand.u32 %v1406, 4294901760
    %v2618 = vsub.f32 %v1406, %v2617
    %v2619 = vand.u32 %v2618, 4294901760
    %2620 = vmatmul.mubr.f32.gmra.mrb[0].mxu0 %v2619
    %v2621 = vpop.f32.mrb[0].mxu0
    %v2622 = vadd.f32 %v2353, %v2621
    %v2623 = vpop.f32.mrb[0].mxu0
    %v2624 = vand.u32 %v100, 4294901760
    %v2625 = vsub.f32 %v100, %v2624
    %v2626 = vand.u32 %v2625, 4294901760
    %2627 = vmatprep.mubr.f32.mxu0 %v2626
    %v2628 = vand.u32 %v1412, 4294901760
    %v2629 = vsub.f32 %v1412, %v2628
    %v2630 = vand.u32 %v2629, 4294901760
    %2631 = vmatmul.mubr.f32.gmra.mrb[0].mxu0 %v2630
    %v2632 = vpop.f32.mrb[0].mxu0
    %v2633 = vadd.f32 %v2362, %v2632
    %v2634 = vpop.f32.mrb[0].mxu0
    %v2635 = vand.u32 %v101, 4294901760
    %v2636 = vsub.f32 %v101, %v2635
    %v2637 = vand.u32 %v2636, 4294901760
    %2638 = vmatprep.mubr.f32.mxu0 %v2637
    %v2639 = vand.u32 %v1418, 4294901760
    %v2640 = vsub.f32 %v1418, %v2639
    %v2641 = vand.u32 %v2640, 4294901760
    %2642 = vmatmul.mubr.f32.gmra.mrb[0].mxu0 %v2641
    %v2643 = vpop.f32.mrb[0].mxu0
    %v2644 = vadd.f32 %v2371, %v2643
    %v2645 = vpop.f32.mrb[0].mxu0
    %2646 = vdwg.mxu0
    %2647 = vmatprep.subr.mxu0 0.0
    %v2648 = vand.u32 %v102, 4294901760
    %v2649 = vsub.f32 %v102, %v2648
    %v2650 = vand.u32 %v2649, 4294901760
    %2651 = vmatpush1.msra.mxu0 %v2650
    %2652 = vmatprep.subr.mxu0 0.0
    %v2653 = vand.u32 %v103, 4294901760
    %v2654 = vsub.f32 %v103, %v2653
    %v2655 = vand.u32 %v2654, 4294901760
    %2656 = vmatpush1.msra.mxu0 %v2655
    %2657 = vmatprep.subr.mxu0 0.0
    %v2658 = vand.u32 %v104, 4294901760
    %v2659 = vsub.f32 %v104, %v2658
    %v2660 = vand.u32 %v2659, 4294901760
    %2661 = vmatpush1.msra.mxu0 %v2660
    %2662 = vmatprep.subr.mxu0 0.0
    %v2663 = vand.u32 %v105, 4294901760
    %v2664 = vsub.f32 %v105, %v2663
    %v2665 = vand.u32 %v2664, 4294901760
    %2666 = vmatpush1.msra.mxu0 %v2665
    %2667 = vmatprep.subr.mxu0 0.0
    %v2668 = vand.u32 %v106, 4294901760
    %v2669 = vsub.f32 %v106, %v2668
    %v2670 = vand.u32 %v2669, 4294901760
    %2671 = vmatpush1.msra.mxu0 %v2670
    %2672 = vmatprep.subr.mxu0 0.0
    %v2673 = vand.u32 %v107, 4294901760
    %v2674 = vsub.f32 %v107, %v2673
    %v2675 = vand.u32 %v2674, 4294901760
    %2676 = vmatpush1.msra.mxu0 %v2675
    %2677 = vmatprep.subr.mxu0 0.0
    %v2678 = vand.u32 %v108, 4294901760
    %v2679 = vsub.f32 %v108, %v2678
    %v2680 = vand.u32 %v2679, 4294901760
    %2681 = vmatpush1.msra.mxu0 %v2680
    %2682 = vmatprep.subr.mxu0 0.0
    %v2683 = vand.u32 %v109, 4294901760
    %v2684 = vsub.f32 %v109, %v2683
    %v2685 = vand.u32 %v2684, 4294901760
    %2686 = vmatpush1.msra.mxu0 %v2685
    %2687 = vmatprep.subr.mxu0 0.0
    %v2688 = vand.u32 %v110, 4294901760
    %v2689 = vsub.f32 %v110, %v2688
    %v2690 = vand.u32 %v2689, 4294901760
    %2691 = vmatpush1.msra.mxu0 %v2690
    %2692 = vmatprep.subr.mxu0 0.0
    %v2693 = vand.u32 %v111, 4294901760
    %v2694 = vsub.f32 %v111, %v2693
    %v2695 = vand.u32 %v2694, 4294901760
    %2696 = vmatpush1.msra.mxu0 %v2695
    %2697 = vmatprep.subr.mxu0 0.0
    %v2698 = vand.u32 %v112, 4294901760
    %v2699 = vsub.f32 %v112, %v2698
    %v2700 = vand.u32 %v2699, 4294901760
    %2701 = vmatpush1.msra.mxu0 %v2700
    %2702 = vmatprep.subr.mxu0 0.0
    %v2703 = vand.u32 %v113, 4294901760
    %v2704 = vsub.f32 %v113, %v2703
    %v2705 = vand.u32 %v2704, 4294901760
    %2706 = vmatpush1.msra.mxu0 %v2705
    %2707 = vmatprep.subr.mxu0 0.0
    %v2708 = vand.u32 %v114, 4294901760
    %v2709 = vsub.f32 %v114, %v2708
    %v2710 = vand.u32 %v2709, 4294901760
    %2711 = vmatpush1.msra.mxu0 %v2710
    %2712 = vmatprep.subr.mxu0 0.0
    %v2713 = vand.u32 %v115, 4294901760
    %v2714 = vsub.f32 %v115, %v2713
    %v2715 = vand.u32 %v2714, 4294901760
    %2716 = vmatpush1.msra.mxu0 %v2715
    %2717 = vmatprep.subr.mxu0 0.0
    %v2718 = vand.u32 %v116, 4294901760
    %v2719 = vsub.f32 %v116, %v2718
    %v2720 = vand.u32 %v2719, 4294901760
    %2721 = vmatpush1.msra.mxu0 %v2720
    %2722 = vmatprep.subr.mxu0 0.0
    %v2723 = vand.u32 %v117, 4294901760
    %v2724 = vsub.f32 %v117, %v2723
    %v2725 = vand.u32 %v2724, 4294901760
    %2726 = vmatpush1.msra.mxu0 %v2725
    %2727 = vmatprep.subr.mxu0 0.0
    %v2728 = vand.u32 %v118, 4294901760
    %v2729 = vsub.f32 %v118, %v2728
    %v2730 = vand.u32 %v2729, 4294901760
    %2731 = vmatpush1.msra.mxu0 %v2730
    %2732 = vmatprep.subr.mxu0 0.0
    %v2733 = vand.u32 %v119, 4294901760
    %v2734 = vsub.f32 %v119, %v2733
    %v2735 = vand.u32 %v2734, 4294901760
    %2736 = vmatpush1.msra.mxu0 %v2735
    %2737 = vmatprep.subr.mxu0 0.0
    %v2738 = vand.u32 %v120, 4294901760
    %v2739 = vsub.f32 %v120, %v2738
    %v2740 = vand.u32 %v2739, 4294901760
    %2741 = vmatpush1.msra.mxu0 %v2740
    %2742 = vmatprep.subr.mxu0 0.0
    %v2743 = vand.u32 %v121, 4294901760
    %v2744 = vsub.f32 %v121, %v2743
    %v2745 = vand.u32 %v2744, 4294901760
    %2746 = vmatpush1.msra.mxu0 %v2745
    %2747 = vmatprep.subr.mxu0 0.0
    %v2748 = vand.u32 %v122, 4294901760
    %v2749 = vsub.f32 %v122, %v2748
    %v2750 = vand.u32 %v2749, 4294901760
    %2751 = vmatpush1.msra.mxu0 %v2750
    %2752 = vmatprep.subr.mxu0 0.0
    %v2753 = vand.u32 %v123, 4294901760
    %v2754 = vsub.f32 %v123, %v2753
    %v2755 = vand.u32 %v2754, 4294901760
    %2756 = vmatpush1.msra.mxu0 %v2755
    %2757 = vmatprep.subr.mxu0 0.0
    %v2758 = vand.u32 %v124, 4294901760
    %v2759 = vsub.f32 %v124, %v2758
    %v2760 = vand.u32 %v2759, 4294901760
    %2761 = vmatpush1.msra.mxu0 %v2760
    %2762 = vmatprep.subr.mxu0 0.0
    %v2763 = vand.u32 %v125, 4294901760
    %v2764 = vsub.f32 %v125, %v2763
    %v2765 = vand.u32 %v2764, 4294901760
    %2766 = vmatpush1.msra.mxu0 %v2765
    %2767 = vmatprep.subr.mxu0 0.0
    %v2768 = vand.u32 %v126, 4294901760
    %v2769 = vsub.f32 %v126, %v2768
    %v2770 = vand.u32 %v2769, 4294901760
    %2771 = vmatpush1.msra.mxu0 %v2770
    %2772 = vmatprep.subr.mxu0 0.0
    %v2773 = vand.u32 %v127, 4294901760
    %v2774 = vsub.f32 %v127, %v2773
    %v2775 = vand.u32 %v2774, 4294901760
    %2776 = vmatpush1.msra.mxu0 %v2775
    %2777 = vmatprep.subr.mxu0 0.0
    %v2778 = vand.u32 %v128, 4294901760
    %v2779 = vsub.f32 %v128, %v2778
    %v2780 = vand.u32 %v2779, 4294901760
    %2781 = vmatpush1.msra.mxu0 %v2780
    %2782 = vmatprep.subr.mxu0 0.0
    %v2783 = vand.u32 %v129, 4294901760
    %v2784 = vsub.f32 %v129, %v2783
    %v2785 = vand.u32 %v2784, 4294901760
    %2786 = vmatpush1.msra.mxu0 %v2785
    %2787 = vmatprep.subr.mxu0 0.0
    %v2788 = vand.u32 %v130, 4294901760
    %v2789 = vsub.f32 %v130, %v2788
    %v2790 = vand.u32 %v2789, 4294901760
    %2791 = vmatpush1.msra.mxu0 %v2790
    %2792 = vmatprep.subr.mxu0 0.0
    %v2793 = vand.u32 %v131, 4294901760
    %v2794 = vsub.f32 %v131, %v2793
    %v2795 = vand.u32 %v2794, 4294901760
    %2796 = vmatpush1.msra.mxu0 %v2795
    %2797 = vmatprep.subr.mxu0 0.0
    %v2798 = vand.u32 %v132, 4294901760
    %v2799 = vsub.f32 %v132, %v2798
    %v2800 = vand.u32 %v2799, 4294901760
    %2801 = vmatpush1.msra.mxu0 %v2800
    %2802 = vmatprep.subr.mxu0 0.0
    %v2803 = vand.u32 %v133, 4294901760
    %v2804 = vsub.f32 %v133, %v2803
    %v2805 = vand.u32 %v2804, 4294901760
    %2806 = vmatpush1.msra.mxu0 %v2805
    %v2807 = vand.u32 %v86, 4294901760
    %2808 = vmatprep.mubr.f32.mxu0 %v2807
    %v2809 = vand.u32 %v1328, 4294901760
    %2810 = vmatmul.mubr.f32.gmra.mrb[0].mxu0 %v2809
    %v2811 = vpop.f32.mrb[0].mxu0
    %v2812 = vadd.f32 %v2479, %v2811
    %v2813 = vpop.f32.mrb[0].mxu0
    %v2814 = vand.u32 %v87, 4294901760
    %2815 = vmatprep.mubr.f32.mxu0 %v2814
    %v2816 = vand.u32 %v1334, 4294901760
    %2817 = vmatmul.mubr.f32.gmra.mrb[0].mxu0 %v2816
    %v2818 = vpop.f32.mrb[0].mxu0
    %v2819 = vadd.f32 %v2490, %v2818
    %v2820 = vpop.f32.mrb[0].mxu0
    %v2821 = vand.u32 %v88, 4294901760
    %2822 = vmatprep.mubr.f32.mxu0 %v2821
    %v2823 = vand.u32 %v1340, 4294901760
    %2824 = vmatmul.mubr.f32.gmra.mrb[0].mxu0 %v2823
    %v2825 = vpop.f32.mrb[0].mxu0
    %v2826 = vadd.f32 %v2501, %v2825
    %v2827 = vpop.f32.mrb[0].mxu0
    %v2828 = vand.u32 %v89, 4294901760
    %2829 = vmatprep.mubr.f32.mxu0 %v2828
    %v2830 = vand.u32 %v1346, 4294901760
    %2831 = vmatmul.mubr.f32.gmra.mrb[0].mxu0 %v2830
    %v2832 = vpop.f32.mrb[0].mxu0
    %v2833 = vadd.f32 %v2512, %v2832
    %v2834 = vpop.f32.mrb[0].mxu0
    %v2835 = vand.u32 %v90, 4294901760
    %2836 = vmatprep.mubr.f32.mxu0 %v2835
    %v2837 = vand.u32 %v1352, 4294901760
    %2838 = vmatmul.mubr.f32.gmra.mrb[0].mxu0 %v2837
    %v2839 = vpop.f32.mrb[0].mxu0
    %v2840 = vadd.f32 %v2523, %v2839
    %v2841 = vpop.f32.mrb[0].mxu0
    %v2842 = vand.u32 %v91, 4294901760
    %2843 = vmatprep.mubr.f32.mxu0 %v2842
    %v2844 = vand.u32 %v1358, 4294901760
    %2845 = vmatmul.mubr.f32.gmra.mrb[0].mxu0 %v2844
    %v2846 = vpop.f32.mrb[0].mxu0
    %v2847 = vadd.f32 %v2534, %v2846
    %v2848 = vpop.f32.mrb[0].mxu0
    %v2849 = vand.u32 %v92, 4294901760
    %2850 = vmatprep.mubr.f32.mxu0 %v2849
    %v2851 = vand.u32 %v1364, 4294901760
    %2852 = vmatmul.mubr.f32.gmra.mrb[0].mxu0 %v2851
    %v2853 = vpop.f32.mrb[0].mxu0
    %v2854 = vadd.f32 %v2545, %v2853
    %v2855 = vpop.f32.mrb[0].mxu0
    %v2856 = vand.u32 %v93, 4294901760
    %2857 = vmatprep.mubr.f32.mxu0 %v2856
    %v2858 = vand.u32 %v1370, 4294901760
    %2859 = vmatmul.mubr.f32.gmra.mrb[0].mxu0 %v2858
    %v2860 = vpop.f32.mrb[0].mxu0
    %v2861 = vadd.f32 %v2556, %v2860
    %v2862 = vpop.f32.mrb[0].mxu0
    %v2863 = vand.u32 %v94, 4294901760
    %2864 = vmatprep.mubr.f32.mxu0 %v2863
    %v2865 = vand.u32 %v1376, 4294901760
    %2866 = vmatmul.mubr.f32.gmra.mrb[0].mxu0 %v2865
    %v2867 = vpop.f32.mrb[0].mxu0
    %v2868 = vadd.f32 %v2567, %v2867
    %v2869 = vpop.f32.mrb[0].mxu0
    %v2870 = vand.u32 %v95, 4294901760
    %2871 = vmatprep.mubr.f32.mxu0 %v2870
    %v2872 = vand.u32 %v1382, 4294901760
    %2873 = vmatmul.mubr.f32.gmra.mrb[0].mxu0 %v2872
    %v2874 = vpop.f32.mrb[0].mxu0
    %v2875 = vadd.f32 %v2578, %v2874
    %v2876 = vpop.f32.mrb[0].mxu0
    %v2877 = vand.u32 %v96, 4294901760
    %2878 = vmatprep.mubr.f32.mxu0 %v2877
    %v2879 = vand.u32 %v1388, 4294901760
    %2880 = vmatmul.mubr.f32.gmra.mrb[0].mxu0 %v2879
    %v2881 = vpop.f32.mrb[0].mxu0
    %v2882 = vadd.f32 %v2589, %v2881
    %v2883 = vpop.f32.mrb[0].mxu0
    %v2884 = vand.u32 %v97, 4294901760
    %2885 = vmatprep.mubr.f32.mxu0 %v2884
    %v2886 = vand.u32 %v1394, 4294901760
    %2887 = vmatmul.mubr.f32.gmra.mrb[0].mxu0 %v2886
    %v2888 = vpop.f32.mrb[0].mxu0
    %v2889 = vadd.f32 %v2600, %v2888
    %v2890 = vpop.f32.mrb[0].mxu0
    %v2891 = vand.u32 %v98, 4294901760
    %2892 = vmatprep.mubr.f32.mxu0 %v2891
    %v2893 = vand.u32 %v1400, 4294901760
    %2894 = vmatmul.mubr.f32.gmra.mrb[0].mxu0 %v2893
    %v2895 = vpop.f32.mrb[0].mxu0
    %v2896 = vadd.f32 %v2611, %v2895
    %v2897 = vpop.f32.mrb[0].mxu0
    %v2898 = vand.u32 %v99, 4294901760
    %2899 = vmatprep.mubr.f32.mxu0 %v2898
    %v2900 = vand.u32 %v1406, 4294901760
    %2901 = vmatmul.mubr.f32.gmra.mrb[0].mxu0 %v2900
    %v2902 = vpop.f32.mrb[0].mxu0
    %v2903 = vadd.f32 %v2622, %v2902
    %v2904 = vpop.f32.mrb[0].mxu0
    %v2905 = vand.u32 %v100, 4294901760
    %2906 = vmatprep.mubr.f32.mxu0 %v2905
    %v2907 = vand.u32 %v1412, 4294901760
    %2908 = vmatmul.mubr.f32.gmra.mrb[0].mxu0 %v2907
    %v2909 = vpop.f32.mrb[0].mxu0
    %v2910 = vadd.f32 %v2633, %v2909
    %v2911 = vpop.f32.mrb[0].mxu0
    %v2912 = vand.u32 %v101, 4294901760
    %2913 = vmatprep.mubr.f32.mxu0 %v2912
    %v2914 = vand.u32 %v1418, 4294901760
    %2915 = vmatmul.mubr.f32.gmra.mrb[0].mxu0 %v2914
    %v2916 = vpop.f32.mrb[0].mxu0
    %v2917 = vadd.f32 %v2644, %v2916
    %v2918 = vpop.f32.mrb[0].mxu0
    %2919 = vdwg.mxu0
    %2920 = vmatprep.subr.mxu0 0.0
    %v2921 = vand.u32 %v102, 4294901760
    %2922 = vmatpush1.msra.mxu0 %v2921
    %2923 = vmatprep.subr.mxu0 0.0
    %v2924 = vand.u32 %v103, 4294901760
    %2925 = vmatpush1.msra.mxu0 %v2924
    %2926 = vmatprep.subr.mxu0 0.0
    %v2927 = vand.u32 %v104, 4294901760
    %2928 = vmatpush1.msra.mxu0 %v2927
    %2929 = vmatprep.subr.mxu0 0.0
    %v2930 = vand.u32 %v105, 4294901760
    %2931 = vmatpush1.msra.mxu0 %v2930
    %2932 = vmatprep.subr.mxu0 0.0
    %v2933 = vand.u32 %v106, 4294901760
    %2934 = vmatpush1.msra.mxu0 %v2933
    %2935 = vmatprep.subr.mxu0 0.0
    %v2936 = vand.u32 %v107, 4294901760
    %2937 = vmatpush1.msra.mxu0 %v2936
    %2938 = vmatprep.subr.mxu0 0.0
    %v2939 = vand.u32 %v108, 4294901760
    %2940 = vmatpush1.msra.mxu0 %v2939
    %2941 = vmatprep.subr.mxu0 0.0
    %v2942 = vand.u32 %v109, 4294901760
    %2943 = vmatpush1.msra.mxu0 %v2942
    %2944 = vmatprep.subr.mxu0 0.0
    %v2945 = vand.u32 %v110, 4294901760
    %2946 = vmatpush1.msra.mxu0 %v2945
    %2947 = vmatprep.subr.mxu0 0.0
    %v2948 = vand.u32 %v111, 4294901760
    %2949 = vmatpush1.msra.mxu0 %v2948
    %2950 = vmatprep.subr.mxu0 0.0
    %v2951 = vand.u32 %v112, 4294901760
    %2952 = vmatpush1.msra.mxu0 %v2951
    %2953 = vmatprep.subr.mxu0 0.0
    %v2954 = vand.u32 %v113, 4294901760
    %2955 = vmatpush1.msra.mxu0 %v2954
    %2956 = vmatprep.subr.mxu0 0.0
    %v2957 = vand.u32 %v114, 4294901760
    %2958 = vmatpush1.msra.mxu0 %v2957
    %2959 = vmatprep.subr.mxu0 0.0
    %v2960 = vand.u32 %v115, 4294901760
    %2961 = vmatpush1.msra.mxu0 %v2960
    %2962 = vmatprep.subr.mxu0 0.0
    %v2963 = vand.u32 %v116, 4294901760
    %2964 = vmatpush1.msra.mxu0 %v2963
    %2965 = vmatprep.subr.mxu0 0.0
    %v2966 = vand.u32 %v117, 4294901760
    %2967 = vmatpush1.msra.mxu0 %v2966
    %2968 = vmatprep.subr.mxu0 0.0
    %v2969 = vand.u32 %v118, 4294901760
    %2970 = vmatpush1.msra.mxu0 %v2969
    %2971 = vmatprep.subr.mxu0 0.0
    %v2972 = vand.u32 %v119, 4294901760
    %2973 = vmatpush1.msra.mxu0 %v2972
    %2974 = vmatprep.subr.mxu0 0.0
    %v2975 = vand.u32 %v120, 4294901760
    %2976 = vmatpush1.msra.mxu0 %v2975
    %2977 = vmatprep.subr.mxu0 0.0
    %v2978 = vand.u32 %v121, 4294901760
    %2979 = vmatpush1.msra.mxu0 %v2978
    %2980 = vmatprep.subr.mxu0 0.0
    %v2981 = vand.u32 %v122, 4294901760
    %2982 = vmatpush1.msra.mxu0 %v2981
    %2983 = vmatprep.subr.mxu0 0.0
    %v2984 = vand.u32 %v123, 4294901760
    %2985 = vmatpush1.msra.mxu0 %v2984
    %2986 = vmatprep.subr.mxu0 0.0
    %v2987 = vand.u32 %v124, 4294901760
    %2988 = vmatpush1.msra.mxu0 %v2987
    %2989 = vmatprep.subr.mxu0 0.0
    %v2990 = vand.u32 %v125, 4294901760
    %2991 = vmatpush1.msra.mxu0 %v2990
    %2992 = vmatprep.subr.mxu0 0.0
    %v2993 = vand.u32 %v126, 4294901760
    %2994 = vmatpush1.msra.mxu0 %v2993
    %2995 = vmatprep.subr.mxu0 0.0
    %v2996 = vand.u32 %v127, 4294901760
    %2997 = vmatpush1.msra.mxu0 %v2996
    %2998 = vmatprep.subr.mxu0 0.0
    %v2999 = vand.u32 %v128, 4294901760
    %3000 = vmatpush1.msra.mxu0 %v2999
    %3001 = vmatprep.subr.mxu0 0.0
    %v3002 = vand.u32 %v129, 4294901760
    %3003 = vmatpush1.msra.mxu0 %v3002
    %3004 = vmatprep.subr.mxu0 0.0
    %v3005 = vand.u32 %v130, 4294901760
    %3006 = vmatpush1.msra.mxu0 %v3005
    %3007 = vmatprep.subr.mxu0 0.0
    %v3008 = vand.u32 %v131, 4294901760
    %3009 = vmatpush1.msra.mxu0 %v3008
    %3010 = vmatprep.subr.mxu0 0.0
    %v3011 = vand.u32 %v132, 4294901760
    %3012 = vmatpush1.msra.mxu0 %v3011
    %3013 = vmatprep.subr.mxu0 0.0
    %v3014 = vand.u32 %v133, 4294901760
    %3015 = vmatpush1.msra.mxu0 %v3014
    %v3016 = vand.u32 %v86, 4294901760
    %3017 = vmatprep.mubr.f32.mxu0 %v3016
    %v3018 = vand.u32 %v1328, 4294901760
    %3019 = vmatmul.mubr.f32.gmra.mrb[0].mxu0 %v3018
    %v3020 = vpop.f32.mrb[0].mxu0
    %v3021 = vadd.f32 %v2812, %v3020
    %v3022 = vpop.f32.mrb[0].mxu0
    %v3023 = vand.u32 %v87, 4294901760
    %3024 = vmatprep.mubr.f32.mxu0 %v3023
    %v3025 = vand.u32 %v1334, 4294901760
    %3026 = vmatmul.mubr.f32.gmra.mrb[0].mxu0 %v3025
    %v3027 = vpop.f32.mrb[0].mxu0
    %v3028 = vadd.f32 %v2819, %v3027
    %v3029 = vpop.f32.mrb[0].mxu0
    %v3030 = vand.u32 %v88, 4294901760
    %3031 = vmatprep.mubr.f32.mxu0 %v3030
    %v3032 = vand.u32 %v1340, 4294901760
    %3033 = vmatmul.mubr.f32.gmra.mrb[0].mxu0 %v3032
    %v3034 = vpop.f32.mrb[0].mxu0
    %v3035 = vadd.f32 %v2826, %v3034
    %v3036 = vpop.f32.mrb[0].mxu0
    %v3037 = vand.u32 %v89, 4294901760
    %3038 = vmatprep.mubr.f32.mxu0 %v3037
    %v3039 = vand.u32 %v1346, 4294901760
    %3040 = vmatmul.mubr.f32.gmra.mrb[0].mxu0 %v3039
    %v3041 = vpop.f32.mrb[0].mxu0
    %v3042 = vadd.f32 %v2833, %v3041
    %v3043 = vpop.f32.mrb[0].mxu0
    %v3044 = vand.u32 %v90, 4294901760
    %3045 = vmatprep.mubr.f32.mxu0 %v3044
    %v3046 = vand.u32 %v1352, 4294901760
    %3047 = vmatmul.mubr.f32.gmra.mrb[0].mxu0 %v3046
    %v3048 = vpop.f32.mrb[0].mxu0
    %v3049 = vadd.f32 %v2840, %v3048
    %v3050 = vpop.f32.mrb[0].mxu0
    %v3051 = vand.u32 %v91, 4294901760
    %3052 = vmatprep.mubr.f32.mxu0 %v3051
    %v3053 = vand.u32 %v1358, 4294901760
    %3054 = vmatmul.mubr.f32.gmra.mrb[0].mxu0 %v3053
    %v3055 = vpop.f32.mrb[0].mxu0
    %v3056 = vadd.f32 %v2847, %v3055
    %v3057 = vpop.f32.mrb[0].mxu0
    %v3058 = vand.u32 %v92, 4294901760
    %3059 = vmatprep.mubr.f32.mxu0 %v3058
    %v3060 = vand.u32 %v1364, 4294901760
    %3061 = vmatmul.mubr.f32.gmra.mrb[0].mxu0 %v3060
    %v3062 = vpop.f32.mrb[0].mxu0
    %v3063 = vadd.f32 %v2854, %v3062
    %v3064 = vpop.f32.mrb[0].mxu0
    %v3065 = vand.u32 %v93, 4294901760
    %3066 = vmatprep.mubr.f32.mxu0 %v3065
    %v3067 = vand.u32 %v1370, 4294901760
    %3068 = vmatmul.mubr.f32.gmra.mrb[0].mxu0 %v3067
    %v3069 = vpop.f32.mrb[0].mxu0
    %v3070 = vadd.f32 %v2861, %v3069
    %v3071 = vpop.f32.mrb[0].mxu0
    %v3072 = vand.u32 %v94, 4294901760
    %3073 = vmatprep.mubr.f32.mxu0 %v3072
    %v3074 = vand.u32 %v1376, 4294901760
    %3075 = vmatmul.mubr.f32.gmra.mrb[0].mxu0 %v3074
    %v3076 = vpop.f32.mrb[0].mxu0
    %v3077 = vadd.f32 %v2868, %v3076
    %v3078 = vpop.f32.mrb[0].mxu0
    %v3079 = vand.u32 %v95, 4294901760
    %3080 = vmatprep.mubr.f32.mxu0 %v3079
    %v3081 = vand.u32 %v1382, 4294901760
    %3082 = vmatmul.mubr.f32.gmra.mrb[0].mxu0 %v3081
    %v3083 = vpop.f32.mrb[0].mxu0
    %v3084 = vadd.f32 %v2875, %v3083
    %v3085 = vpop.f32.mrb[0].mxu0
    %v3086 = vand.u32 %v96, 4294901760
    %3087 = vmatprep.mubr.f32.mxu0 %v3086
    %v3088 = vand.u32 %v1388, 4294901760
    %3089 = vmatmul.mubr.f32.gmra.mrb[0].mxu0 %v3088
    %v3090 = vpop.f32.mrb[0].mxu0
    %v3091 = vadd.f32 %v2882, %v3090
    %v3092 = vpop.f32.mrb[0].mxu0
    %v3093 = vand.u32 %v97, 4294901760
    %3094 = vmatprep.mubr.f32.mxu0 %v3093
    %v3095 = vand.u32 %v1394, 4294901760
    %3096 = vmatmul.mubr.f32.gmra.mrb[0].mxu0 %v3095
    %v3097 = vpop.f32.mrb[0].mxu0
    %v3098 = vadd.f32 %v2889, %v3097
    %v3099 = vpop.f32.mrb[0].mxu0
    %v3100 = vand.u32 %v98, 4294901760
    %3101 = vmatprep.mubr.f32.mxu0 %v3100
    %v3102 = vand.u32 %v1400, 4294901760
    %3103 = vmatmul.mubr.f32.gmra.mrb[0].mxu0 %v3102
    %v3104 = vpop.f32.mrb[0].mxu0
    %v3105 = vadd.f32 %v2896, %v3104
    %v3106 = vpop.f32.mrb[0].mxu0
    %v3107 = vand.u32 %v99, 4294901760
    %3108 = vmatprep.mubr.f32.mxu0 %v3107
    %v3109 = vand.u32 %v1406, 4294901760
    %3110 = vmatmul.mubr.f32.gmra.mrb[0].mxu0 %v3109
    %v3111 = vpop.f32.mrb[0].mxu0
    %v3112 = vadd.f32 %v2903, %v3111
    %v3113 = vpop.f32.mrb[0].mxu0
    %v3114 = vand.u32 %v100, 4294901760
    %3115 = vmatprep.mubr.f32.mxu0 %v3114
    %v3116 = vand.u32 %v1412, 4294901760
    %3117 = vmatmul.mubr.f32.gmra.mrb[0].mxu0 %v3116
    %v3118 = vpop.f32.mrb[0].mxu0
    %v3119 = vadd.f32 %v2910, %v3118
    %v3120 = vpop.f32.mrb[0].mxu0
    %v3121 = vand.u32 %v101, 4294901760
    %3122 = vmatprep.mubr.f32.mxu0 %v3121
    %v3123 = vand.u32 %v1418, 4294901760
    %3124 = vmatmul.mubr.f32.gmra.mrb[0].mxu0 %v3123
    %v3125 = vpop.f32.mrb[0].mxu0
    %v3126 = vadd.f32 %v2917, %v3125
    %v3127 = vpop.f32.mrb[0].mxu0
    %3128 = vdwg.mxu0
    %v3129 = vmax.f32 %v3021, 0.0
    %v3130 = vmax.f32 %v3028, 0.0
    %v3131 = vmax.f32 %v3035, 0.0
    %v3132 = vmax.f32 %v3042, 0.0
    %v3133 = vmax.f32 %v3049, 0.0
    %v3134 = vmax.f32 %v3056, 0.0
    %v3135 = vmax.f32 %v3063, 0.0
    %v3136 = vmax.f32 %v3070, 0.0
    %v3137 = vmax.f32 %v3077, 0.0
    %v3138 = vmax.f32 %v3084, 0.0
    %v3139 = vmax.f32 %v3091, 0.0
    %v3140 = vmax.f32 %v3098, 0.0
    %v3141 = vmax.f32 %v3105, 0.0
    %v3142 = vmax.f32 %v3112, 0.0
    %v3143 = vmax.f32 %v3119, 0.0
    %v3144 = vmax.f32 %v3126, 0.0
    %v3145 = vld [vmem:[#allocation4] sm:$0xff]
    %v3146 = vld [vmem:[#allocation4 + $0x8] sm:$0xff]
    %v3147 = vld [vmem:[#allocation4 + $0x10] sm:$0xff]
    %v3148 = vld [vmem:[#allocation4 + $0x18] sm:$0xff]
    %v3149 = vld [vmem:[#allocation4 + $0x20] sm:$0xff]
    %v3150 = vld [vmem:[#allocation4 + $0x28] sm:$0xff]
    %v3151 = vld [vmem:[#allocation4 + $0x30] sm:$0xff]
    %v3152 = vld [vmem:[#allocation4 + $0x38] sm:$0xff]
    %v3153 = vld [vmem:[#allocation4 + $0x40] sm:$0xff]
    %v3154 = vld [vmem:[#allocation4 + $0x48] sm:$0xff]
    %v3155 = vld [vmem:[#allocation4 + $0x50] sm:$0xff]
    %v3156 = vld [vmem:[#allocation4 + $0x58] sm:$0xff]
    %v3157 = vld [vmem:[#allocation4 + $0x60] sm:$0xff]
    %v3158 = vld [vmem:[#allocation4 + $0x68] sm:$0xff]
    %v3159 = vld [vmem:[#allocation4 + $0x70] sm:$0xff]
    %v3160 = vld [vmem:[#allocation4 + $0x78] sm:$0xff]
    %v3161 = vld [vmem:[#allocation4 + $0x80] sm:$0xff]
    %v3162 = vld [vmem:[#allocation4 + $0x88] sm:$0xff]
    %v3163 = vld [vmem:[#allocation4 + $0x90] sm:$0xff]
    %v3164 = vld [vmem:[#allocation4 + $0x98] sm:$0xff]
    %v3165 = vld [vmem:[#allocation4 + $0xa0] sm:$0xff]
    %v3166 = vld [vmem:[#allocation4 + $0xa8] sm:$0xff]
    %v3167 = vld [vmem:[#allocation4 + $0xb0] sm:$0xff]
    %v3168 = vld [vmem:[#allocation4 + $0xb8] sm:$0xff]
    %v3169 = vld [vmem:[#allocation4 + $0xc0] sm:$0xff]
    %v3170 = vld [vmem:[#allocation4 + $0xc8] sm:$0xff]
    %v3171 = vld [vmem:[#allocation4 + $0xd0] sm:$0xff]
    %v3172 = vld [vmem:[#allocation4 + $0xd8] sm:$0xff]
    %v3173 = vld [vmem:[#allocation4 + $0xe0] sm:$0xff]
    %v3174 = vld [vmem:[#allocation4 + $0xe8] sm:$0xff]
    %v3175 = vld [vmem:[#allocation4 + $0xf0] sm:$0xff]
    %v3176 = vld [vmem:[#allocation4 + $0xf8] sm:$0xff]
    %v3177 = vld [vmem:[%s5] sm:$0x1]
    %3178 = vmatprep.subr.mxu0 0.0
    %v3179 = vand.u32 %v3129, 4294901760
    %3180 = vmatpush1.msra.mxu0 %v3179
    %3181 = vmatprep.subr.mxu0 0.0
    %v3182 = vand.u32 %v3130, 4294901760
    %3183 = vmatpush1.msra.mxu0 %v3182
    %3184 = vmatprep.subr.mxu0 0.0
    %v3185 = vand.u32 %v3131, 4294901760
    %3186 = vmatpush1.msra.mxu0 %v3185
    %3187 = vmatprep.subr.mxu0 0.0
    %v3188 = vand.u32 %v3132, 4294901760
    %3189 = vmatpush1.msra.mxu0 %v3188
    %3190 = vmatprep.subr.mxu0 0.0
    %v3191 = vand.u32 %v3133, 4294901760
    %3192 = vmatpush1.msra.mxu0 %v3191
    %3193 = vmatprep.subr.mxu0 0.0
    %v3194 = vand.u32 %v3134, 4294901760
    %3195 = vmatpush1.msra.mxu0 %v3194
    %3196 = vmatprep.subr.mxu0 0.0
    %v3197 = vand.u32 %v3135, 4294901760
    %3198 = vmatpush1.msra.mxu0 %v3197
    %3199 = vmatprep.subr.mxu0 0.0
    %v3200 = vand.u32 %v3136, 4294901760
    %3201 = vmatpush1.msra.mxu0 %v3200
    %3202 = vmatprep.subr.mxu0 0.0
    %v3203 = vand.u32 %v3137, 4294901760
    %3204 = vmatpush1.msra.mxu0 %v3203
    %3205 = vmatprep.subr.mxu0 0.0
    %v3206 = vand.u32 %v3138, 4294901760
    %3207 = vmatpush1.msra.mxu0 %v3206
    %3208 = vmatprep.subr.mxu0 0.0
    %v3209 = vand.u32 %v3139, 4294901760
    %3210 = vmatpush1.msra.mxu0 %v3209
    %3211 = vmatprep.subr.mxu0 0.0
    %v3212 = vand.u32 %v3140, 4294901760
    %3213 = vmatpush1.msra.mxu0 %v3212
    %3214 = vmatprep.subr.mxu0 0.0
    %v3215 = vand.u32 %v3141, 4294901760
    %3216 = vmatpush1.msra.mxu0 %v3215
    %3217 = vmatprep.subr.mxu0 0.0
    %v3218 = vand.u32 %v3142, 4294901760
    %3219 = vmatpush1.msra.mxu0 %v3218
    %3220 = vmatprep.subr.mxu0 0.0
    %v3221 = vand.u32 %v3143, 4294901760
    %3222 = vmatpush1.msra.mxu0 %v3221
    %3223 = vmatprep.subr.mxu0 0.0
    %v3224 = vand.u32 %v3144, 4294901760
    %3225 = vmatpush1.msra.mxu0 %v3224
    %3226 = vmatprep.subr.mxu0 0.0
    %3227 = vmatpush1.msra.mxu0 0.0
    %3228 = vmatprep.subr.mxu0 0.0
    %3229 = vmatpush1.msra.mxu0 0.0
    %3230 = vmatprep.subr.mxu0 0.0
    %3231 = vmatpush1.msra.mxu0 0.0
    %3232 = vmatprep.subr.mxu0 0.0
    %3233 = vmatpush1.msra.mxu0 0.0
    %3234 = vmatprep.subr.mxu0 0.0
    %3235 = vmatpush1.msra.mxu0 0.0
    %3236 = vmatprep.subr.mxu0 0.0
    %3237 = vmatpush1.msra.mxu0 0.0
    %3238 = vmatprep.subr.mxu0 0.0
    %3239 = vmatpush1.msra.mxu0 0.0
    %3240 = vmatprep.subr.mxu0 0.0
    %3241 = vmatpush1.msra.mxu0 0.0
    %3242 = vmatprep.subr.mxu0 0.0
    %3243 = vmatpush1.msra.mxu0 0.0
    %3244 = vmatprep.subr.mxu0 0.0
    %3245 = vmatpush1.msra.mxu0 0.0
    %3246 = vmatprep.subr.mxu0 0.0
    %3247 = vmatpush1.msra.mxu0 0.0
    %3248 = vmatprep.subr.mxu0 0.0
    %3249 = vmatpush1.msra.mxu0 0.0
    %3250 = vmatprep.subr.mxu0 0.0
    %3251 = vmatpush1.msra.mxu0 0.0
    %3252 = vmatprep.subr.mxu0 0.0
    %3253 = vmatpush1.msra.mxu0 0.0
    %3254 = vmatprep.subr.mxu0 0.0
    %3255 = vmatpush1.msra.mxu0 0.0
    %3256 = vmatprep.subr.mxu0 0.0
    %3257 = vmatpush1.msra.mxu0 0.0
    %3258 = vmatprep.mubr.f32.mxu0 0.0
    %v3259 = vand.u32 %v70, 4294901760
    %v3260 = vsub.f32 %v70, %v3259
    %v3261 = vand.u32 %v3260, 4294901760
    %v3262 = vsub.f32 %v3260, %v3261
    %v3263 = vand.u32 %v3262, 4294901760
    %3264 = vmatmul.mubr.f32.gmra.mrb[0].mxu0 %v3263
    %v3265 = vpop.f32.mrb[0].mxu0
    %v3266 = vadd.f32 0.0, %v3265
    %v3267 = vpop.f32.mrb[0].mxu0
    %3268 = vmatprep.mubr.f32.mxu0 0.0
    %v3269 = vand.u32 %v71, 4294901760
    %v3270 = vsub.f32 %v71, %v3269
    %v3271 = vand.u32 %v3270, 4294901760
    %v3272 = vsub.f32 %v3270, %v3271
    %v3273 = vand.u32 %v3272, 4294901760
    %3274 = vmatmul.mubr.f32.gmra.mrb[0].mxu0 %v3273
    %v3275 = vpop.f32.mrb[0].mxu0
    %v3276 = vadd.f32 0.0, %v3275
    %v3277 = vpop.f32.mrb[0].mxu0
    %3278 = vmatprep.mubr.f32.mxu0 0.0
    %v3279 = vand.u32 %v72, 4294901760
    %v3280 = vsub.f32 %v72, %v3279
    %v3281 = vand.u32 %v3280, 4294901760
    %v3282 = vsub.f32 %v3280, %v3281
    %v3283 = vand.u32 %v3282, 4294901760
    %3284 = vmatmul.mubr.f32.gmra.mrb[0].mxu0 %v3283
    %v3285 = vpop.f32.mrb[0].mxu0
    %v3286 = vadd.f32 0.0, %v3285
    %v3287 = vpop.f32.mrb[0].mxu0
    %3288 = vmatprep.mubr.f32.mxu0 0.0
    %v3289 = vand.u32 %v73, 4294901760
    %v3290 = vsub.f32 %v73, %v3289
    %v3291 = vand.u32 %v3290, 4294901760
    %v3292 = vsub.f32 %v3290, %v3291
    %v3293 = vand.u32 %v3292, 4294901760
    %3294 = vmatmul.mubr.f32.gmra.mrb[0].mxu0 %v3293
    %v3295 = vpop.f32.mrb[0].mxu0
    %v3296 = vadd.f32 0.0, %v3295
    %v3297 = vpop.f32.mrb[0].mxu0
    %3298 = vmatprep.mubr.f32.mxu0 0.0
    %v3299 = vand.u32 %v74, 4294901760
    %v3300 = vsub.f32 %v74, %v3299
    %v3301 = vand.u32 %v3300, 4294901760
    %v3302 = vsub.f32 %v3300, %v3301
    %v3303 = vand.u32 %v3302, 4294901760
    %3304 = vmatmul.mubr.f32.gmra.mrb[0].mxu0 %v3303
    %v3305 = vpop.f32.mrb[0].mxu0
    %v3306 = vadd.f32 0.0, %v3305
    %v3307 = vpop.f32.mrb[0].mxu0
    %3308 = vmatprep.mubr.f32.mxu0 0.0
    %v3309 = vand.u32 %v75, 4294901760
    %v3310 = vsub.f32 %v75, %v3309
    %v3311 = vand.u32 %v3310, 4294901760
    %v3312 = vsub.f32 %v3310, %v3311
    %v3313 = vand.u32 %v3312, 4294901760
    %3314 = vmatmul.mubr.f32.gmra.mrb[0].mxu0 %v3313
    %v3315 = vpop.f32.mrb[0].mxu0
    %v3316 = vadd.f32 0.0, %v3315
    %v3317 = vpop.f32.mrb[0].mxu0
    %3318 = vmatprep.mubr.f32.mxu0 0.0
    %v3319 = vand.u32 %v76, 4294901760
    %v3320 = vsub.f32 %v76, %v3319
    %v3321 = vand.u32 %v3320, 4294901760
    %v3322 = vsub.f32 %v3320, %v3321
    %v3323 = vand.u32 %v3322, 4294901760
    %3324 = vmatmul.mubr.f32.gmra.mrb[0].mxu0 %v3323
    %v3325 = vpop.f32.mrb[0].mxu0
    %v3326 = vadd.f32 0.0, %v3325
    %v3327 = vpop.f32.mrb[0].mxu0
    %3328 = vmatprep.mubr.f32.mxu0 0.0
    %v3329 = vand.u32 %v77, 4294901760
    %v3330 = vsub.f32 %v77, %v3329
    %v3331 = vand.u32 %v3330, 4294901760
    %v3332 = vsub.f32 %v3330, %v3331
    %v3333 = vand.u32 %v3332, 4294901760
    %3334 = vmatmul.mubr.f32.gmra.mrb[0].mxu0 %v3333
    %v3335 = vpop.f32.mrb[0].mxu0
    %v3336 = vadd.f32 0.0, %v3335
    %v3337 = vpop.f32.mrb[0].mxu0
    %3338 = vmatprep.mubr.f32.mxu0 0.0
    %v3339 = vand.u32 %v78, 4294901760
    %v3340 = vsub.f32 %v78, %v3339
    %v3341 = vand.u32 %v3340, 4294901760
    %v3342 = vsub.f32 %v3340, %v3341
    %v3343 = vand.u32 %v3342, 4294901760
    %3344 = vmatmul.mubr.f32.gmra.mrb[0].mxu0 %v3343
    %v3345 = vpop.f32.mrb[0].mxu0
    %v3346 = vadd.f32 0.0, %v3345
    %v3347 = vpop.f32.mrb[0].mxu0
    %3348 = vmatprep.mubr.f32.mxu0 0.0
    %v3349 = vand.u32 %v79, 4294901760
    %v3350 = vsub.f32 %v79, %v3349
    %v3351 = vand.u32 %v3350, 4294901760
    %v3352 = vsub.f32 %v3350, %v3351
    %v3353 = vand.u32 %v3352, 4294901760
    %3354 = vmatmul.mubr.f32.gmra.mrb[0].mxu0 %v3353
    %v3355 = vpop.f32.mrb[0].mxu0
    %v3356 = vadd.f32 0.0, %v3355
    %v3357 = vpop.f32.mrb[0].mxu0
    %3358 = vmatprep.mubr.f32.mxu0 0.0
    %v3359 = vand.u32 %v80, 4294901760
    %v3360 = vsub.f32 %v80, %v3359
    %v3361 = vand.u32 %v3360, 4294901760
    %v3362 = vsub.f32 %v3360, %v3361
    %v3363 = vand.u32 %v3362, 4294901760
    %3364 = vmatmul.mubr.f32.gmra.mrb[0].mxu0 %v3363
    %v3365 = vpop.f32.mrb[0].mxu0
    %v3366 = vadd.f32 0.0, %v3365
    %v3367 = vpop.f32.mrb[0].mxu0
    %3368 = vmatprep.mubr.f32.mxu0 0.0
    %v3369 = vand.u32 %v81, 4294901760
    %v3370 = vsub.f32 %v81, %v3369
    %v3371 = vand.u32 %v3370, 4294901760
    %v3372 = vsub.f32 %v3370, %v3371
    %v3373 = vand.u32 %v3372, 4294901760
    %3374 = vmatmul.mubr.f32.gmra.mrb[0].mxu0 %v3373
    %v3375 = vpop.f32.mrb[0].mxu0
    %v3376 = vadd.f32 0.0, %v3375
    %v3377 = vpop.f32.mrb[0].mxu0
    %3378 = vmatprep.mubr.f32.mxu0 0.0
    %v3379 = vand.u32 %v82, 4294901760
    %v3380 = vsub.f32 %v82, %v3379
    %v3381 = vand.u32 %v3380, 4294901760
    %v3382 = vsub.f32 %v3380, %v3381
    %v3383 = vand.u32 %v3382, 4294901760
    %3384 = vmatmul.mubr.f32.gmra.mrb[0].mxu0 %v3383
    %v3385 = vpop.f32.mrb[0].mxu0
    %v3386 = vadd.f32 0.0, %v3385
    %v3387 = vpop.f32.mrb[0].mxu0
    %3388 = vmatprep.mubr.f32.mxu0 0.0
    %v3389 = vand.u32 %v83, 4294901760
    %v3390 = vsub.f32 %v83, %v3389
    %v3391 = vand.u32 %v3390, 4294901760
    %v3392 = vsub.f32 %v3390, %v3391
    %v3393 = vand.u32 %v3392, 4294901760
    %3394 = vmatmul.mubr.f32.gmra.mrb[0].mxu0 %v3393
    %v3395 = vpop.f32.mrb[0].mxu0
    %v3396 = vadd.f32 0.0, %v3395
    %v3397 = vpop.f32.mrb[0].mxu0
    %3398 = vmatprep.mubr.f32.mxu0 0.0
    %v3399 = vand.u32 %v84, 4294901760
    %v3400 = vsub.f32 %v84, %v3399
    %v3401 = vand.u32 %v3400, 4294901760
    %v3402 = vsub.f32 %v3400, %v3401
    %v3403 = vand.u32 %v3402, 4294901760
    %3404 = vmatmul.mubr.f32.gmra.mrb[0].mxu0 %v3403
    %v3405 = vpop.f32.mrb[0].mxu0
    %v3406 = vadd.f32 0.0, %v3405
    %v3407 = vpop.f32.mrb[0].mxu0
    %3408 = vmatprep.mubr.f32.mxu0 0.0
    %v3409 = vand.u32 %v85, 4294901760
    %v3410 = vsub.f32 %v85, %v3409
    %v3411 = vand.u32 %v3410, 4294901760
    %v3412 = vsub.f32 %v3410, %v3411
    %v3413 = vand.u32 %v3412, 4294901760
    %3414 = vmatmul.mubr.f32.gmra.mrb[0].mxu0 %v3413
    %v3415 = vpop.f32.mrb[0].mxu0
    %v3416 = vadd.f32 0.0, %v3415
    %v3417 = vpop.f32.mrb[0].mxu0
    %3418 = vdwg.mxu0
    %3419 = vmatprep.subr.mxu0 0.0
    %v3420 = vand.u32 %v3129, 4294901760
    %v3421 = vsub.f32 %v3129, %v3420
    %v3422 = vand.u32 %v3421, 4294901760
    %v3423 = vsub.f32 %v3421, %v3422
    %v3424 = vand.u32 %v3423, 4294901760
    %3425 = vmatpush1.msra.mxu0 %v3424
    %3426 = vmatprep.subr.mxu0 0.0
    %v3427 = vand.u32 %v3130, 4294901760
    %v3428 = vsub.f32 %v3130, %v3427
    %v3429 = vand.u32 %v3428, 4294901760
    %v3430 = vsub.f32 %v3428, %v3429
    %v3431 = vand.u32 %v3430, 4294901760
    %3432 = vmatpush1.msra.mxu0 %v3431
    %3433 = vmatprep.subr.mxu0 0.0
    %v3434 = vand.u32 %v3131, 4294901760
    %v3435 = vsub.f32 %v3131, %v3434
    %v3436 = vand.u32 %v3435, 4294901760
    %v3437 = vsub.f32 %v3435, %v3436
    %v3438 = vand.u32 %v3437, 4294901760
    %3439 = vmatpush1.msra.mxu0 %v3438
    %3440 = vmatprep.subr.mxu0 0.0
    %v3441 = vand.u32 %v3132, 4294901760
    %v3442 = vsub.f32 %v3132, %v3441
    %v3443 = vand.u32 %v3442, 4294901760
    %v3444 = vsub.f32 %v3442, %v3443
    %v3445 = vand.u32 %v3444, 4294901760
    %3446 = vmatpush1.msra.mxu0 %v3445
    %3447 = vmatprep.subr.mxu0 0.0
    %v3448 = vand.u32 %v3133, 4294901760
    %v3449 = vsub.f32 %v3133, %v3448
    %v3450 = vand.u32 %v3449, 4294901760
    %v3451 = vsub.f32 %v3449, %v3450
    %v3452 = vand.u32 %v3451, 4294901760
    %3453 = vmatpush1.msra.mxu0 %v3452
    %3454 = vmatprep.subr.mxu0 0.0
    %v3455 = vand.u32 %v3134, 4294901760
    %v3456 = vsub.f32 %v3134, %v3455
    %v3457 = vand.u32 %v3456, 4294901760
    %v3458 = vsub.f32 %v3456, %v3457
    %v3459 = vand.u32 %v3458, 4294901760
    %3460 = vmatpush1.msra.mxu0 %v3459
    %3461 = vmatprep.subr.mxu0 0.0
    %v3462 = vand.u32 %v3135, 4294901760
    %v3463 = vsub.f32 %v3135, %v3462
    %v3464 = vand.u32 %v3463, 4294901760
    %v3465 = vsub.f32 %v3463, %v3464
    %v3466 = vand.u32 %v3465, 4294901760
    %3467 = vmatpush1.msra.mxu0 %v3466
    %3468 = vmatprep.subr.mxu0 0.0
    %v3469 = vand.u32 %v3136, 4294901760
    %v3470 = vsub.f32 %v3136, %v3469
    %v3471 = vand.u32 %v3470, 4294901760
    %v3472 = vsub.f32 %v3470, %v3471
    %v3473 = vand.u32 %v3472, 4294901760
    %3474 = vmatpush1.msra.mxu0 %v3473
    %3475 = vmatprep.subr.mxu0 0.0
    %v3476 = vand.u32 %v3137, 4294901760
    %v3477 = vsub.f32 %v3137, %v3476
    %v3478 = vand.u32 %v3477, 4294901760
    %v3479 = vsub.f32 %v3477, %v3478
    %v3480 = vand.u32 %v3479, 4294901760
    %3481 = vmatpush1.msra.mxu0 %v3480
    %3482 = vmatprep.subr.mxu0 0.0
    %v3483 = vand.u32 %v3138, 4294901760
    %v3484 = vsub.f32 %v3138, %v3483
    %v3485 = vand.u32 %v3484, 4294901760
    %v3486 = vsub.f32 %v3484, %v3485
    %v3487 = vand.u32 %v3486, 4294901760
    %3488 = vmatpush1.msra.mxu0 %v3487
    %3489 = vmatprep.subr.mxu0 0.0
    %v3490 = vand.u32 %v3139, 4294901760
    %v3491 = vsub.f32 %v3139, %v3490
    %v3492 = vand.u32 %v3491, 4294901760
    %v3493 = vsub.f32 %v3491, %v3492
    %v3494 = vand.u32 %v3493, 4294901760
    %3495 = vmatpush1.msra.mxu0 %v3494
    %3496 = vmatprep.subr.mxu0 0.0
    %v3497 = vand.u32 %v3140, 4294901760
    %v3498 = vsub.f32 %v3140, %v3497
    %v3499 = vand.u32 %v3498, 4294901760
    %v3500 = vsub.f32 %v3498, %v3499
    %v3501 = vand.u32 %v3500, 4294901760
    %3502 = vmatpush1.msra.mxu0 %v3501
    %3503 = vmatprep.subr.mxu0 0.0
    %v3504 = vand.u32 %v3141, 4294901760
    %v3505 = vsub.f32 %v3141, %v3504
    %v3506 = vand.u32 %v3505, 4294901760
    %v3507 = vsub.f32 %v3505, %v3506
    %v3508 = vand.u32 %v3507, 4294901760
    %3509 = vmatpush1.msra.mxu0 %v3508
    %3510 = vmatprep.subr.mxu0 0.0
    %v3511 = vand.u32 %v3142, 4294901760
    %v3512 = vsub.f32 %v3142, %v3511
    %v3513 = vand.u32 %v3512, 4294901760
    %v3514 = vsub.f32 %v3512, %v3513
    %v3515 = vand.u32 %v3514, 4294901760
    %3516 = vmatpush1.msra.mxu0 %v3515
    %3517 = vmatprep.subr.mxu0 0.0
    %v3518 = vand.u32 %v3143, 4294901760
    %v3519 = vsub.f32 %v3143, %v3518
    %v3520 = vand.u32 %v3519, 4294901760
    %v3521 = vsub.f32 %v3519, %v3520
    %v3522 = vand.u32 %v3521, 4294901760
    %3523 = vmatpush1.msra.mxu0 %v3522
    %3524 = vmatprep.subr.mxu0 0.0
    %v3525 = vand.u32 %v3144, 4294901760
    %v3526 = vsub.f32 %v3144, %v3525
    %v3527 = vand.u32 %v3526, 4294901760
    %v3528 = vsub.f32 %v3526, %v3527
    %v3529 = vand.u32 %v3528, 4294901760
    %3530 = vmatpush1.msra.mxu0 %v3529
    %3531 = vmatprep.subr.mxu0 0.0
    %3532 = vmatpush1.msra.mxu0 0.0
    %3533 = vmatprep.subr.mxu0 0.0
    %3534 = vmatpush1.msra.mxu0 0.0
    %3535 = vmatprep.subr.mxu0 0.0
    %3536 = vmatpush1.msra.mxu0 0.0
    %3537 = vmatprep.subr.mxu0 0.0
    %3538 = vmatpush1.msra.mxu0 0.0
    %3539 = vmatprep.subr.mxu0 0.0
    %3540 = vmatpush1.msra.mxu0 0.0
    %3541 = vmatprep.subr.mxu0 0.0
    %3542 = vmatpush1.msra.mxu0 0.0
    %3543 = vmatprep.subr.mxu0 0.0
    %3544 = vmatpush1.msra.mxu0 0.0
    %3545 = vmatprep.subr.mxu0 0.0
    %3546 = vmatpush1.msra.mxu0 0.0
    %3547 = vmatprep.subr.mxu0 0.0
    %3548 = vmatpush1.msra.mxu0 0.0
    %3549 = vmatprep.subr.mxu0 0.0
    %3550 = vmatpush1.msra.mxu0 0.0
    %3551 = vmatprep.subr.mxu0 0.0
    %3552 = vmatpush1.msra.mxu0 0.0
    %3553 = vmatprep.subr.mxu0 0.0
    %3554 = vmatpush1.msra.mxu0 0.0
    %3555 = vmatprep.subr.mxu0 0.0
    %3556 = vmatpush1.msra.mxu0 0.0
    %3557 = vmatprep.subr.mxu0 0.0
    %3558 = vmatpush1.msra.mxu0 0.0
    %3559 = vmatprep.subr.mxu0 0.0
    %3560 = vmatpush1.msra.mxu0 0.0
    %3561 = vmatprep.subr.mxu0 0.0
    %3562 = vmatpush1.msra.mxu0 0.0
    %3563 = vmatprep.mubr.f32.mxu0 0.0
    %v3564 = vand.u32 %v70, 4294901760
    %3565 = vmatmul.mubr.f32.gmra.mrb[0].mxu0 %v3564
    %v3566 = vpop.f32.mrb[0].mxu0
    %v3567 = vadd.f32 %v3266, %v3566
    %v3568 = vpop.f32.mrb[0].mxu0
    %3569 = vmatprep.mubr.f32.mxu0 0.0
    %v3570 = vand.u32 %v71, 4294901760
    %3571 = vmatmul.mubr.f32.gmra.mrb[0].mxu0 %v3570
    %v3572 = vpop.f32.mrb[0].mxu0
    %v3573 = vadd.f32 %v3276, %v3572
    %v3574 = vpop.f32.mrb[0].mxu0
    %3575 = vmatprep.mubr.f32.mxu0 0.0
    %v3576 = vand.u32 %v72, 4294901760
    %3577 = vmatmul.mubr.f32.gmra.mrb[0].mxu0 %v3576
    %v3578 = vpop.f32.mrb[0].mxu0
    %v3579 = vadd.f32 %v3286, %v3578
    %v3580 = vpop.f32.mrb[0].mxu0
    %3581 = vmatprep.mubr.f32.mxu0 0.0
    %v3582 = vand.u32 %v73, 4294901760
    %3583 = vmatmul.mubr.f32.gmra.mrb[0].mxu0 %v3582
    %v3584 = vpop.f32.mrb[0].mxu0
    %v3585 = vadd.f32 %v3296, %v3584
    %v3586 = vpop.f32.mrb[0].mxu0
    %3587 = vmatprep.mubr.f32.mxu0 0.0
    %v3588 = vand.u32 %v74, 4294901760
    %3589 = vmatmul.mubr.f32.gmra.mrb[0].mxu0 %v3588
    %v3590 = vpop.f32.mrb[0].mxu0
    %v3591 = vadd.f32 %v3306, %v3590
    %v3592 = vpop.f32.mrb[0].mxu0
    %3593 = vmatprep.mubr.f32.mxu0 0.0
    %v3594 = vand.u32 %v75, 4294901760
    %3595 = vmatmul.mubr.f32.gmra.mrb[0].mxu0 %v3594
    %v3596 = vpop.f32.mrb[0].mxu0
    %v3597 = vadd.f32 %v3316, %v3596
    %v3598 = vpop.f32.mrb[0].mxu0
    %3599 = vmatprep.mubr.f32.mxu0 0.0
    %v3600 = vand.u32 %v76, 4294901760
    %3601 = vmatmul.mubr.f32.gmra.mrb[0].mxu0 %v3600
    %v3602 = vpop.f32.mrb[0].mxu0
    %v3603 = vadd.f32 %v3326, %v3602
    %v3604 = vpop.f32.mrb[0].mxu0
    %3605 = vmatprep.mubr.f32.mxu0 0.0
    %v3606 = vand.u32 %v77, 4294901760
    %3607 = vmatmul.mubr.f32.gmra.mrb[0].mxu0 %v3606
    %v3608 = vpop.f32.mrb[0].mxu0
    %v3609 = vadd.f32 %v3336, %v3608
    %v3610 = vpop.f32.mrb[0].mxu0
    %3611 = vmatprep.mubr.f32.mxu0 0.0
    %v3612 = vand.u32 %v78, 4294901760
    %3613 = vmatmul.mubr.f32.gmra.mrb[0].mxu0 %v3612
    %v3614 = vpop.f32.mrb[0].mxu0
    %v3615 = vadd.f32 %v3346, %v3614
    %v3616 = vpop.f32.mrb[0].mxu0
    %3617 = vmatprep.mubr.f32.mxu0 0.0
    %v3618 = vand.u32 %v79, 4294901760
    %3619 = vmatmul.mubr.f32.gmra.mrb[0].mxu0 %v3618
    %v3620 = vpop.f32.mrb[0].mxu0
    %v3621 = vadd.f32 %v3356, %v3620
    %v3622 = vpop.f32.mrb[0].mxu0
    %3623 = vmatprep.mubr.f32.mxu0 0.0
    %v3624 = vand.u32 %v80, 4294901760
    %3625 = vmatmul.mubr.f32.gmra.mrb[0].mxu0 %v3624
    %v3626 = vpop.f32.mrb[0].mxu0
    %v3627 = vadd.f32 %v3366, %v3626
    %v3628 = vpop.f32.mrb[0].mxu0
    %3629 = vmatprep.mubr.f32.mxu0 0.0
    %v3630 = vand.u32 %v81, 4294901760
    %3631 = vmatmul.mubr.f32.gmra.mrb[0].mxu0 %v3630
    %v3632 = vpop.f32.mrb[0].mxu0
    %v3633 = vadd.f32 %v3376, %v3632
    %v3634 = vpop.f32.mrb[0].mxu0
    %3635 = vmatprep.mubr.f32.mxu0 0.0
    %v3636 = vand.u32 %v82, 4294901760
    %3637 = vmatmul.mubr.f32.gmra.mrb[0].mxu0 %v3636
    %v3638 = vpop.f32.mrb[0].mxu0
    %v3639 = vadd.f32 %v3386, %v3638
    %v3640 = vpop.f32.mrb[0].mxu0
    %3641 = vmatprep.mubr.f32.mxu0 0.0
    %v3642 = vand.u32 %v83, 4294901760
    %3643 = vmatmul.mubr.f32.gmra.mrb[0].mxu0 %v3642
    %v3644 = vpop.f32.mrb[0].mxu0
    %v3645 = vadd.f32 %v3396, %v3644
    %v3646 = vpop.f32.mrb[0].mxu0
    %3647 = vmatprep.mubr.f32.mxu0 0.0
    %v3648 = vand.u32 %v84, 4294901760
    %3649 = vmatmul.mubr.f32.gmra.mrb[0].mxu0 %v3648
    %v3650 = vpop.f32.mrb[0].mxu0
    %v3651 = vadd.f32 %v3406, %v3650
    %v3652 = vpop.f32.mrb[0].mxu0
    %3653 = vmatprep.mubr.f32.mxu0 0.0
    %v3654 = vand.u32 %v85, 4294901760
    %3655 = vmatmul.mubr.f32.gmra.mrb[0].mxu0 %v3654
    %v3656 = vpop.f32.mrb[0].mxu0
    %v3657 = vadd.f32 %v3416, %v3656
    %v3658 = vpop.f32.mrb[0].mxu0
    %3659 = vdwg.mxu0
    %3660 = vmatprep.subr.mxu0 0.0
    %v3661 = vand.u32 %v3129, 4294901760
    %v3662 = vsub.f32 %v3129, %v3661
    %3663 = vmatpush1.msra.mxu0 %v3662
    %3664 = vmatprep.subr.mxu0 0.0
    %v3665 = vand.u32 %v3130, 4294901760
    %v3666 = vsub.f32 %v3130, %v3665
    %3667 = vmatpush1.msra.mxu0 %v3666
    %3668 = vmatprep.subr.mxu0 0.0
    %v3669 = vand.u32 %v3131, 4294901760
    %v3670 = vsub.f32 %v3131, %v3669
    %3671 = vmatpush1.msra.mxu0 %v3670
    %3672 = vmatprep.subr.mxu0 0.0
    %v3673 = vand.u32 %v3132, 4294901760
    %v3674 = vsub.f32 %v3132, %v3673
    %3675 = vmatpush1.msra.mxu0 %v3674
    %3676 = vmatprep.subr.mxu0 0.0
    %v3677 = vand.u32 %v3133, 4294901760
    %v3678 = vsub.f32 %v3133, %v3677
    %3679 = vmatpush1.msra.mxu0 %v3678
    %3680 = vmatprep.subr.mxu0 0.0
    %v3681 = vand.u32 %v3134, 4294901760
    %v3682 = vsub.f32 %v3134, %v3681
    %3683 = vmatpush1.msra.mxu0 %v3682
    %3684 = vmatprep.subr.mxu0 0.0
    %v3685 = vand.u32 %v3135, 4294901760
    %v3686 = vsub.f32 %v3135, %v3685
    %3687 = vmatpush1.msra.mxu0 %v3686
    %3688 = vmatprep.subr.mxu0 0.0
    %v3689 = vand.u32 %v3136, 4294901760
    %v3690 = vsub.f32 %v3136, %v3689
    %3691 = vmatpush1.msra.mxu0 %v3690
    %3692 = vmatprep.subr.mxu0 0.0
    %v3693 = vand.u32 %v3137, 4294901760
    %v3694 = vsub.f32 %v3137, %v3693
    %3695 = vmatpush1.msra.mxu0 %v3694
    %3696 = vmatprep.subr.mxu0 0.0
    %v3697 = vand.u32 %v3138, 4294901760
    %v3698 = vsub.f32 %v3138, %v3697
    %3699 = vmatpush1.msra.mxu0 %v3698
    %3700 = vmatprep.subr.mxu0 0.0
    %v3701 = vand.u32 %v3139, 4294901760
    %v3702 = vsub.f32 %v3139, %v3701
    %3703 = vmatpush1.msra.mxu0 %v3702
    %3704 = vmatprep.subr.mxu0 0.0
    %v3705 = vand.u32 %v3140, 4294901760
    %v3706 = vsub.f32 %v3140, %v3705
    %3707 = vmatpush1.msra.mxu0 %v3706
    %3708 = vmatprep.subr.mxu0 0.0
    %v3709 = vand.u32 %v3141, 4294901760
    %v3710 = vsub.f32 %v3141, %v3709
    %3711 = vmatpush1.msra.mxu0 %v3710
    %3712 = vmatprep.subr.mxu0 0.0
    %v3713 = vand.u32 %v3142, 4294901760
    %v3714 = vsub.f32 %v3142, %v3713
    %3715 = vmatpush1.msra.mxu0 %v3714
    %3716 = vmatprep.subr.mxu0 0.0
    %v3717 = vand.u32 %v3143, 4294901760
    %v3718 = vsub.f32 %v3143, %v3717
    %3719 = vmatpush1.msra.mxu0 %v3718
    %3720 = vmatprep.subr.mxu0 0.0
    %v3721 = vand.u32 %v3144, 4294901760
    %v3722 = vsub.f32 %v3144, %v3721
    %3723 = vmatpush1.msra.mxu0 %v3722
    %3724 = vmatprep.subr.mxu0 0.0
    %3725 = vmatpush1.msra.mxu0 0.0
    %3726 = vmatprep.subr.mxu0 0.0
    %3727 = vmatpush1.msra.mxu0 0.0
    %3728 = vmatprep.subr.mxu0 0.0
    %3729 = vmatpush1.msra.mxu0 0.0
    %3730 = vmatprep.subr.mxu0 0.0
    %3731 = vmatpush1.msra.mxu0 0.0
    %3732 = vmatprep.subr.mxu0 0.0
    %3733 = vmatpush1.msra.mxu0 0.0
    %3734 = vmatprep.subr.mxu0 0.0
    %3735 = vmatpush1.msra.mxu0 0.0
    %3736 = vmatprep.subr.mxu0 0.0
    %3737 = vmatpush1.msra.mxu0 0.0
    %3738 = vmatprep.subr.mxu0 0.0
    %3739 = vmatpush1.msra.mxu0 0.0
    %3740 = vmatprep.subr.mxu0 0.0
    %3741 = vmatpush1.msra.mxu0 0.0
    %3742 = vmatprep.subr.mxu0 0.0
    %3743 = vmatpush1.msra.mxu0 0.0
    %3744 = vmatprep.subr.mxu0 0.0
    %3745 = vmatpush1.msra.mxu0 0.0
    %3746 = vmatprep.subr.mxu0 0.0
    %3747 = vmatpush1.msra.mxu0 0.0
    %3748 = vmatprep.subr.mxu0 0.0
    %3749 = vmatpush1.msra.mxu0 0.0
    %3750 = vmatprep.subr.mxu0 0.0
    %3751 = vmatpush1.msra.mxu0 0.0
    %3752 = vmatprep.subr.mxu0 0.0
    %3753 = vmatpush1.msra.mxu0 0.0
    %3754 = vmatprep.subr.mxu0 0.0
    %3755 = vmatpush1.msra.mxu0 0.0
    %3756 = vmatprep.mubr.f32.mxu0 0.0
    %v3757 = vand.u32 %v70, 4294901760
    %v3758 = vsub.f32 %v70, %v3757
    %3759 = vmatmul.mubr.f32.gmra.mrb[0].mxu0 %v3758
    %v3760 = vpop.f32.mrb[0].mxu0
    %v3761 = vadd.f32 %v3567, %v3760
    %v3762 = vpop.f32.mrb[0].mxu0
    %3763 = vmatprep.mubr.f32.mxu0 0.0
    %v3764 = vand.u32 %v71, 4294901760
    %v3765 = vsub.f32 %v71, %v3764
    %3766 = vmatmul.mubr.f32.gmra.mrb[0].mxu0 %v3765
    %v3767 = vpop.f32.mrb[0].mxu0
    %v3768 = vadd.f32 %v3573, %v3767
    %v3769 = vpop.f32.mrb[0].mxu0
    %3770 = vmatprep.mubr.f32.mxu0 0.0
    %v3771 = vand.u32 %v72, 4294901760
    %v3772 = vsub.f32 %v72, %v3771
    %3773 = vmatmul.mubr.f32.gmra.mrb[0].mxu0 %v3772
    %v3774 = vpop.f32.mrb[0].mxu0
    %v3775 = vadd.f32 %v3579, %v3774
    %v3776 = vpop.f32.mrb[0].mxu0
    %3777 = vmatprep.mubr.f32.mxu0 0.0
    %v3778 = vand.u32 %v73, 4294901760
    %v3779 = vsub.f32 %v73, %v3778
    %3780 = vmatmul.mubr.f32.gmra.mrb[0].mxu0 %v3779
    %v3781 = vpop.f32.mrb[0].mxu0
    %v3782 = vadd.f32 %v3585, %v3781
    %v3783 = vpop.f32.mrb[0].mxu0
    %3784 = vmatprep.mubr.f32.mxu0 0.0
    %v3785 = vand.u32 %v74, 4294901760
    %v3786 = vsub.f32 %v74, %v3785
    %3787 = vmatmul.mubr.f32.gmra.mrb[0].mxu0 %v3786
    %v3788 = vpop.f32.mrb[0].mxu0
    %v3789 = vadd.f32 %v3591, %v3788
    %v3790 = vpop.f32.mrb[0].mxu0
    %3791 = vmatprep.mubr.f32.mxu0 0.0
    %v3792 = vand.u32 %v75, 4294901760
    %v3793 = vsub.f32 %v75, %v3792
    %3794 = vmatmul.mubr.f32.gmra.mrb[0].mxu0 %v3793
    %v3795 = vpop.f32.mrb[0].mxu0
    %v3796 = vadd.f32 %v3597, %v3795
    %v3797 = vpop.f32.mrb[0].mxu0
    %3798 = vmatprep.mubr.f32.mxu0 0.0
    %v3799 = vand.u32 %v76, 4294901760
    %v3800 = vsub.f32 %v76, %v3799
    %3801 = vmatmul.mubr.f32.gmra.mrb[0].mxu0 %v3800
    %v3802 = vpop.f32.mrb[0].mxu0
    %v3803 = vadd.f32 %v3603, %v3802
    %v3804 = vpop.f32.mrb[0].mxu0
    %3805 = vmatprep.mubr.f32.mxu0 0.0
    %v3806 = vand.u32 %v77, 4294901760
    %v3807 = vsub.f32 %v77, %v3806
    %3808 = vmatmul.mubr.f32.gmra.mrb[0].mxu0 %v3807
    %v3809 = vpop.f32.mrb[0].mxu0
    %v3810 = vadd.f32 %v3609, %v3809
    %v3811 = vpop.f32.mrb[0].mxu0
    %3812 = vmatprep.mubr.f32.mxu0 0.0
    %v3813 = vand.u32 %v78, 4294901760
    %v3814 = vsub.f32 %v78, %v3813
    %3815 = vmatmul.mubr.f32.gmra.mrb[0].mxu0 %v3814
    %v3816 = vpop.f32.mrb[0].mxu0
    %v3817 = vadd.f32 %v3615, %v3816
    %v3818 = vpop.f32.mrb[0].mxu0
    %3819 = vmatprep.mubr.f32.mxu0 0.0
    %v3820 = vand.u32 %v79, 4294901760
    %v3821 = vsub.f32 %v79, %v3820
    %3822 = vmatmul.mubr.f32.gmra.mrb[0].mxu0 %v3821
    %v3823 = vpop.f32.mrb[0].mxu0
    %v3824 = vadd.f32 %v3621, %v3823
    %v3825 = vpop.f32.mrb[0].mxu0
    %3826 = vmatprep.mubr.f32.mxu0 0.0
    %v3827 = vand.u32 %v80, 4294901760
    %v3828 = vsub.f32 %v80, %v3827
    %3829 = vmatmul.mubr.f32.gmra.mrb[0].mxu0 %v3828
    %v3830 = vpop.f32.mrb[0].mxu0
    %v3831 = vadd.f32 %v3627, %v3830
    %v3832 = vpop.f32.mrb[0].mxu0
    %3833 = vmatprep.mubr.f32.mxu0 0.0
    %v3834 = vand.u32 %v81, 4294901760
    %v3835 = vsub.f32 %v81, %v3834
    %3836 = vmatmul.mubr.f32.gmra.mrb[0].mxu0 %v3835
    %v3837 = vpop.f32.mrb[0].mxu0
    %v3838 = vadd.f32 %v3633, %v3837
    %v3839 = vpop.f32.mrb[0].mxu0
    %3840 = vmatprep.mubr.f32.mxu0 0.0
    %v3841 = vand.u32 %v82, 4294901760
    %v3842 = vsub.f32 %v82, %v3841
    %3843 = vmatmul.mubr.f32.gmra.mrb[0].mxu0 %v3842
    %v3844 = vpop.f32.mrb[0].mxu0
    %v3845 = vadd.f32 %v3639, %v3844
    %v3846 = vpop.f32.mrb[0].mxu0
    %3847 = vmatprep.mubr.f32.mxu0 0.0
    %v3848 = vand.u32 %v83, 4294901760
    %v3849 = vsub.f32 %v83, %v3848
    %3850 = vmatmul.mubr.f32.gmra.mrb[0].mxu0 %v3849
    %v3851 = vpop.f32.mrb[0].mxu0
    %v3852 = vadd.f32 %v3645, %v3851
    %v3853 = vpop.f32.mrb[0].mxu0
    %3854 = vmatprep.mubr.f32.mxu0 0.0
    %v3855 = vand.u32 %v84, 4294901760
    %v3856 = vsub.f32 %v84, %v3855
    %3857 = vmatmul.mubr.f32.gmra.mrb[0].mxu0 %v3856
    %v3858 = vpop.f32.mrb[0].mxu0
    %v3859 = vadd.f32 %v3651, %v3858
    %v3860 = vpop.f32.mrb[0].mxu0
    %3861 = vmatprep.mubr.f32.mxu0 0.0
    %v3862 = vand.u32 %v85, 4294901760
    %v3863 = vsub.f32 %v85, %v3862
    %3864 = vmatmul.mubr.f32.gmra.mrb[0].mxu0 %v3863
    %v3865 = vpop.f32.mrb[0].mxu0
    %v3866 = vadd.f32 %v3657, %v3865
    %v3867 = vpop.f32.mrb[0].mxu0
    %3868 = vdwg.mxu0
    %3869 = vmatprep.subr.mxu0 0.0
    %v3870 = vand.u32 %v3129, 4294901760
    %3871 = vmatpush1.msra.mxu0 %v3870
    %3872 = vmatprep.subr.mxu0 0.0
    %v3873 = vand.u32 %v3130, 4294901760
    %3874 = vmatpush1.msra.mxu0 %v3873
    %3875 = vmatprep.subr.mxu0 0.0
    %v3876 = vand.u32 %v3131, 4294901760
    %3877 = vmatpush1.msra.mxu0 %v3876
    %3878 = vmatprep.subr.mxu0 0.0
    %v3879 = vand.u32 %v3132, 4294901760
    %3880 = vmatpush1.msra.mxu0 %v3879
    %3881 = vmatprep.subr.mxu0 0.0
    %v3882 = vand.u32 %v3133, 4294901760
    %3883 = vmatpush1.msra.mxu0 %v3882
    %3884 = vmatprep.subr.mxu0 0.0
    %v3885 = vand.u32 %v3134, 4294901760
    %3886 = vmatpush1.msra.mxu0 %v3885
    %3887 = vmatprep.subr.mxu0 0.0
    %v3888 = vand.u32 %v3135, 4294901760
    %3889 = vmatpush1.msra.mxu0 %v3888
    %3890 = vmatprep.subr.mxu0 0.0
    %v3891 = vand.u32 %v3136, 4294901760
    %3892 = vmatpush1.msra.mxu0 %v3891
    %3893 = vmatprep.subr.mxu0 0.0
    %v3894 = vand.u32 %v3137, 4294901760
    %3895 = vmatpush1.msra.mxu0 %v3894
    %3896 = vmatprep.subr.mxu0 0.0
    %v3897 = vand.u32 %v3138, 4294901760
    %3898 = vmatpush1.msra.mxu0 %v3897
    %3899 = vmatprep.subr.mxu0 0.0
    %v3900 = vand.u32 %v3139, 4294901760
    %3901 = vmatpush1.msra.mxu0 %v3900
    %3902 = vmatprep.subr.mxu0 0.0
    %v3903 = vand.u32 %v3140, 4294901760
    %3904 = vmatpush1.msra.mxu0 %v3903
    %3905 = vmatprep.subr.mxu0 0.0
    %v3906 = vand.u32 %v3141, 4294901760
    %3907 = vmatpush1.msra.mxu0 %v3906
    %3908 = vmatprep.subr.mxu0 0.0
    %v3909 = vand.u32 %v3142, 4294901760
    %3910 = vmatpush1.msra.mxu0 %v3909
    %3911 = vmatprep.subr.mxu0 0.0
    %v3912 = vand.u32 %v3143, 4294901760
    %3913 = vmatpush1.msra.mxu0 %v3912
    %3914 = vmatprep.subr.mxu0 0.0
    %v3915 = vand.u32 %v3144, 4294901760
    %3916 = vmatpush1.msra.mxu0 %v3915
    %3917 = vmatprep.subr.mxu0 0.0
    %3918 = vmatpush1.msra.mxu0 0.0
    %3919 = vmatprep.subr.mxu0 0.0
    %3920 = vmatpush1.msra.mxu0 0.0
    %3921 = vmatprep.subr.mxu0 0.0
    %3922 = vmatpush1.msra.mxu0 0.0
    %3923 = vmatprep.subr.mxu0 0.0
    %3924 = vmatpush1.msra.mxu0 0.0
    %3925 = vmatprep.subr.mxu0 0.0
    %3926 = vmatpush1.msra.mxu0 0.0
    %3927 = vmatprep.subr.mxu0 0.0
    %3928 = vmatpush1.msra.mxu0 0.0
    %3929 = vmatprep.subr.mxu0 0.0
    %3930 = vmatpush1.msra.mxu0 0.0
    %3931 = vmatprep.subr.mxu0 0.0
    %3932 = vmatpush1.msra.mxu0 0.0
    %3933 = vmatprep.subr.mxu0 0.0
    %3934 = vmatpush1.msra.mxu0 0.0
    %3935 = vmatprep.subr.mxu0 0.0
    %3936 = vmatpush1.msra.mxu0 0.0
    %3937 = vmatprep.subr.mxu0 0.0
    %3938 = vmatpush1.msra.mxu0 0.0
    %3939 = vmatprep.subr.mxu0 0.0
    %3940 = vmatpush1.msra.mxu0 0.0
    %3941 = vmatprep.subr.mxu0 0.0
    %3942 = vmatpush1.msra.mxu0 0.0
    %3943 = vmatprep.subr.mxu0 0.0
    %3944 = vmatpush1.msra.mxu0 0.0
    %3945 = vmatprep.subr.mxu0 0.0
    %3946 = vmatpush1.msra.mxu0 0.0
    %3947 = vmatprep.subr.mxu0 0.0
    %3948 = vmatpush1.msra.mxu0 0.0
    %3949 = vmatprep.mubr.f32.mxu0 0.0
    %v3950 = vand.u32 %v70, 4294901760
    %v3951 = vsub.f32 %v70, %v3950
    %v3952 = vand.u32 %v3951, 4294901760
    %3953 = vmatmul.mubr.f32.gmra.mrb[0].mxu0 %v3952
    %v3954 = vpop.f32.mrb[0].mxu0
    %v3955 = vadd.f32 %v3761, %v3954
    %v3956 = vpop.f32.mrb[0].mxu0
    %3957 = vmatprep.mubr.f32.mxu0 0.0
    %v3958 = vand.u32 %v71, 4294901760
    %v3959 = vsub.f32 %v71, %v3958
    %v3960 = vand.u32 %v3959, 4294901760
    %3961 = vmatmul.mubr.f32.gmra.mrb[0].mxu0 %v3960
    %v3962 = vpop.f32.mrb[0].mxu0
    %v3963 = vadd.f32 %v3768, %v3962
    %v3964 = vpop.f32.mrb[0].mxu0
    %3965 = vmatprep.mubr.f32.mxu0 0.0
    %v3966 = vand.u32 %v72, 4294901760
    %v3967 = vsub.f32 %v72, %v3966
    %v3968 = vand.u32 %v3967, 4294901760
    %3969 = vmatmul.mubr.f32.gmra.mrb[0].mxu0 %v3968
    %v3970 = vpop.f32.mrb[0].mxu0
    %v3971 = vadd.f32 %v3775, %v3970
    %v3972 = vpop.f32.mrb[0].mxu0
    %3973 = vmatprep.mubr.f32.mxu0 0.0
    %v3974 = vand.u32 %v73, 4294901760
    %v3975 = vsub.f32 %v73, %v3974
    %v3976 = vand.u32 %v3975, 4294901760
    %3977 = vmatmul.mubr.f32.gmra.mrb[0].mxu0 %v3976
    %v3978 = vpop.f32.mrb[0].mxu0
    %v3979 = vadd.f32 %v3782, %v3978
    %v3980 = vpop.f32.mrb[0].mxu0
    %3981 = vmatprep.mubr.f32.mxu0 0.0
    %v3982 = vand.u32 %v74, 4294901760
    %v3983 = vsub.f32 %v74, %v3982
    %v3984 = vand.u32 %v3983, 4294901760
    %3985 = vmatmul.mubr.f32.gmra.mrb[0].mxu0 %v3984
    %v3986 = vpop.f32.mrb[0].mxu0
    %v3987 = vadd.f32 %v3789, %v3986
    %v3988 = vpop.f32.mrb[0].mxu0
    %3989 = vmatprep.mubr.f32.mxu0 0.0
    %v3990 = vand.u32 %v75, 4294901760
    %v3991 = vsub.f32 %v75, %v3990
    %v3992 = vand.u32 %v3991, 4294901760
    %3993 = vmatmul.mubr.f32.gmra.mrb[0].mxu0 %v3992
    %v3994 = vpop.f32.mrb[0].mxu0
    %v3995 = vadd.f32 %v3796, %v3994
    %v3996 = vpop.f32.mrb[0].mxu0
    %3997 = vmatprep.mubr.f32.mxu0 0.0
    %v3998 = vand.u32 %v76, 4294901760
    %v3999 = vsub.f32 %v76, %v3998
    %v4000 = vand.u32 %v3999, 4294901760
    %4001 = vmatmul.mubr.f32.gmra.mrb[0].mxu0 %v4000
    %v4002 = vpop.f32.mrb[0].mxu0
    %v4003 = vadd.f32 %v3803, %v4002
    %v4004 = vpop.f32.mrb[0].mxu0
    %4005 = vmatprep.mubr.f32.mxu0 0.0
    %v4006 = vand.u32 %v77, 4294901760
    %v4007 = vsub.f32 %v77, %v4006
    %v4008 = vand.u32 %v4007, 4294901760
    %4009 = vmatmul.mubr.f32.gmra.mrb[0].mxu0 %v4008
    %v4010 = vpop.f32.mrb[0].mxu0
    %v4011 = vadd.f32 %v3810, %v4010
    %v4012 = vpop.f32.mrb[0].mxu0
    %4013 = vmatprep.mubr.f32.mxu0 0.0
    %v4014 = vand.u32 %v78, 4294901760
    %v4015 = vsub.f32 %v78, %v4014
    %v4016 = vand.u32 %v4015, 4294901760
    %4017 = vmatmul.mubr.f32.gmra.mrb[0].mxu0 %v4016
    %v4018 = vpop.f32.mrb[0].mxu0
    %v4019 = vadd.f32 %v3817, %v4018
    %v4020 = vpop.f32.mrb[0].mxu0
    %4021 = vmatprep.mubr.f32.mxu0 0.0
    %v4022 = vand.u32 %v79, 4294901760
    %v4023 = vsub.f32 %v79, %v4022
    %v4024 = vand.u32 %v4023, 4294901760
    %4025 = vmatmul.mubr.f32.gmra.mrb[0].mxu0 %v4024
    %v4026 = vpop.f32.mrb[0].mxu0
    %v4027 = vadd.f32 %v3824, %v4026
    %v4028 = vpop.f32.mrb[0].mxu0
    %4029 = vmatprep.mubr.f32.mxu0 0.0
    %v4030 = vand.u32 %v80, 4294901760
    %v4031 = vsub.f32 %v80, %v4030
    %v4032 = vand.u32 %v4031, 4294901760
    %4033 = vmatmul.mubr.f32.gmra.mrb[0].mxu0 %v4032
    %v4034 = vpop.f32.mrb[0].mxu0
    %v4035 = vadd.f32 %v3831, %v4034
    %v4036 = vpop.f32.mrb[0].mxu0
    %4037 = vmatprep.mubr.f32.mxu0 0.0
    %v4038 = vand.u32 %v81, 4294901760
    %v4039 = vsub.f32 %v81, %v4038
    %v4040 = vand.u32 %v4039, 4294901760
    %4041 = vmatmul.mubr.f32.gmra.mrb[0].mxu0 %v4040
    %v4042 = vpop.f32.mrb[0].mxu0
    %v4043 = vadd.f32 %v3838, %v4042
    %v4044 = vpop.f32.mrb[0].mxu0
    %4045 = vmatprep.mubr.f32.mxu0 0.0
    %v4046 = vand.u32 %v82, 4294901760
    %v4047 = vsub.f32 %v82, %v4046
    %v4048 = vand.u32 %v4047, 4294901760
    %4049 = vmatmul.mubr.f32.gmra.mrb[0].mxu0 %v4048
    %v4050 = vpop.f32.mrb[0].mxu0
    %v4051 = vadd.f32 %v3845, %v4050
    %v4052 = vpop.f32.mrb[0].mxu0
    %4053 = vmatprep.mubr.f32.mxu0 0.0
    %v4054 = vand.u32 %v83, 4294901760
    %v4055 = vsub.f32 %v83, %v4054
    %v4056 = vand.u32 %v4055, 4294901760
    %4057 = vmatmul.mubr.f32.gmra.mrb[0].mxu0 %v4056
    %v4058 = vpop.f32.mrb[0].mxu0
    %v4059 = vadd.f32 %v3852, %v4058
    %v4060 = vpop.f32.mrb[0].mxu0
    %4061 = vmatprep.mubr.f32.mxu0 0.0
    %v4062 = vand.u32 %v84, 4294901760
    %v4063 = vsub.f32 %v84, %v4062
    %v4064 = vand.u32 %v4063, 4294901760
    %4065 = vmatmul.mubr.f32.gmra.mrb[0].mxu0 %v4064
    %v4066 = vpop.f32.mrb[0].mxu0
    %v4067 = vadd.f32 %v3859, %v4066
    %v4068 = vpop.f32.mrb[0].mxu0
    %4069 = vmatprep.mubr.f32.mxu0 0.0
    %v4070 = vand.u32 %v85, 4294901760
    %v4071 = vsub.f32 %v85, %v4070
    %v4072 = vand.u32 %v4071, 4294901760
    %4073 = vmatmul.mubr.f32.gmra.mrb[0].mxu0 %v4072
    %v4074 = vpop.f32.mrb[0].mxu0
    %v4075 = vadd.f32 %v3866, %v4074
    %v4076 = vpop.f32.mrb[0].mxu0
    %4077 = vdwg.mxu0
    %4078 = vmatprep.subr.mxu0 0.0
    %v4079 = vand.u32 %v3129, 4294901760
    %v4080 = vsub.f32 %v3129, %v4079
    %v4081 = vand.u32 %v4080, 4294901760
    %4082 = vmatpush1.msra.mxu0 %v4081
    %4083 = vmatprep.subr.mxu0 0.0
    %v4084 = vand.u32 %v3130, 4294901760
    %v4085 = vsub.f32 %v3130, %v4084
    %v4086 = vand.u32 %v4085, 4294901760
    %4087 = vmatpush1.msra.mxu0 %v4086
    %4088 = vmatprep.subr.mxu0 0.0
    %v4089 = vand.u32 %v3131, 4294901760
    %v4090 = vsub.f32 %v3131, %v4089
    %v4091 = vand.u32 %v4090, 4294901760
    %4092 = vmatpush1.msra.mxu0 %v4091
    %4093 = vmatprep.subr.mxu0 0.0
    %v4094 = vand.u32 %v3132, 4294901760
    %v4095 = vsub.f32 %v3132, %v4094
    %v4096 = vand.u32 %v4095, 4294901760
    %4097 = vmatpush1.msra.mxu0 %v4096
    %4098 = vmatprep.subr.mxu0 0.0
    %v4099 = vand.u32 %v3133, 4294901760
    %v4100 = vsub.f32 %v3133, %v4099
    %v4101 = vand.u32 %v4100, 4294901760
    %4102 = vmatpush1.msra.mxu0 %v4101
    %4103 = vmatprep.subr.mxu0 0.0
    %v4104 = vand.u32 %v3134, 4294901760
    %v4105 = vsub.f32 %v3134, %v4104
    %v4106 = vand.u32 %v4105, 4294901760
    %4107 = vmatpush1.msra.mxu0 %v4106
    %4108 = vmatprep.subr.mxu0 0.0
    %v4109 = vand.u32 %v3135, 4294901760
    %v4110 = vsub.f32 %v3135, %v4109
    %v4111 = vand.u32 %v4110, 4294901760
    %4112 = vmatpush1.msra.mxu0 %v4111
    %4113 = vmatprep.subr.mxu0 0.0
    %v4114 = vand.u32 %v3136, 4294901760
    %v4115 = vsub.f32 %v3136, %v4114
    %v4116 = vand.u32 %v4115, 4294901760
    %4117 = vmatpush1.msra.mxu0 %v4116
    %4118 = vmatprep.subr.mxu0 0.0
    %v4119 = vand.u32 %v3137, 4294901760
    %v4120 = vsub.f32 %v3137, %v4119
    %v4121 = vand.u32 %v4120, 4294901760
    %4122 = vmatpush1.msra.mxu0 %v4121
    %4123 = vmatprep.subr.mxu0 0.0
    %v4124 = vand.u32 %v3138, 4294901760
    %v4125 = vsub.f32 %v3138, %v4124
    %v4126 = vand.u32 %v4125, 4294901760
    %4127 = vmatpush1.msra.mxu0 %v4126
    %4128 = vmatprep.subr.mxu0 0.0
    %v4129 = vand.u32 %v3139, 4294901760
    %v4130 = vsub.f32 %v3139, %v4129
    %v4131 = vand.u32 %v4130, 4294901760
    %4132 = vmatpush1.msra.mxu0 %v4131
    %4133 = vmatprep.subr.mxu0 0.0
    %v4134 = vand.u32 %v3140, 4294901760
    %v4135 = vsub.f32 %v3140, %v4134
    %v4136 = vand.u32 %v4135, 4294901760
    %4137 = vmatpush1.msra.mxu0 %v4136
    %4138 = vmatprep.subr.mxu0 0.0
    %v4139 = vand.u32 %v3141, 4294901760
    %v4140 = vsub.f32 %v3141, %v4139
    %v4141 = vand.u32 %v4140, 4294901760
    %4142 = vmatpush1.msra.mxu0 %v4141
    %4143 = vmatprep.subr.mxu0 0.0
    %v4144 = vand.u32 %v3142, 4294901760
    %v4145 = vsub.f32 %v3142, %v4144
    %v4146 = vand.u32 %v4145, 4294901760
    %4147 = vmatpush1.msra.mxu0 %v4146
    %4148 = vmatprep.subr.mxu0 0.0
    %v4149 = vand.u32 %v3143, 4294901760
    %v4150 = vsub.f32 %v3143, %v4149
    %v4151 = vand.u32 %v4150, 4294901760
    %4152 = vmatpush1.msra.mxu0 %v4151
    %4153 = vmatprep.subr.mxu0 0.0
    %v4154 = vand.u32 %v3144, 4294901760
    %v4155 = vsub.f32 %v3144, %v4154
    %v4156 = vand.u32 %v4155, 4294901760
    %4157 = vmatpush1.msra.mxu0 %v4156
    %4158 = vmatprep.subr.mxu0 0.0
    %4159 = vmatpush1.msra.mxu0 0.0
    %4160 = vmatprep.subr.mxu0 0.0
    %4161 = vmatpush1.msra.mxu0 0.0
    %4162 = vmatprep.subr.mxu0 0.0
    %4163 = vmatpush1.msra.mxu0 0.0
    %4164 = vmatprep.subr.mxu0 0.0
    %4165 = vmatpush1.msra.mxu0 0.0
    %4166 = vmatprep.subr.mxu0 0.0
    %4167 = vmatpush1.msra.mxu0 0.0
    %4168 = vmatprep.subr.mxu0 0.0
    %4169 = vmatpush1.msra.mxu0 0.0
    %4170 = vmatprep.subr.mxu0 0.0
    %4171 = vmatpush1.msra.mxu0 0.0
    %4172 = vmatprep.subr.mxu0 0.0
    %4173 = vmatpush1.msra.mxu0 0.0
    %4174 = vmatprep.subr.mxu0 0.0
    %4175 = vmatpush1.msra.mxu0 0.0
    %4176 = vmatprep.subr.mxu0 0.0
    %4177 = vmatpush1.msra.mxu0 0.0
    %4178 = vmatprep.subr.mxu0 0.0
    %4179 = vmatpush1.msra.mxu0 0.0
    %4180 = vmatprep.subr.mxu0 0.0
    %4181 = vmatpush1.msra.mxu0 0.0
    %4182 = vmatprep.subr.mxu0 0.0
    %4183 = vmatpush1.msra.mxu0 0.0
    %4184 = vmatprep.subr.mxu0 0.0
    %4185 = vmatpush1.msra.mxu0 0.0
    %4186 = vmatprep.subr.mxu0 0.0
    %4187 = vmatpush1.msra.mxu0 0.0
    %4188 = vmatprep.subr.mxu0 0.0
    %4189 = vmatpush1.msra.mxu0 0.0
    %4190 = vmatprep.mubr.f32.mxu0 0.0
    %v4191 = vand.u32 %v70, 4294901760
    %4192 = vmatmul.mubr.f32.gmra.mrb[0].mxu0 %v4191
    %v4193 = vpop.f32.mrb[0].mxu0
    %v4194 = vadd.f32 %v3955, %v4193
    %v4195 = vpop.f32.mrb[0].mxu0
    %4196 = vmatprep.mubr.f32.mxu0 0.0
    %v4197 = vand.u32 %v71, 4294901760
    %4198 = vmatmul.mubr.f32.gmra.mrb[0].mxu0 %v4197
    %v4199 = vpop.f32.mrb[0].mxu0
    %v4200 = vadd.f32 %v3963, %v4199
    %v4201 = vpop.f32.mrb[0].mxu0
    %4202 = vmatprep.mubr.f32.mxu0 0.0
    %v4203 = vand.u32 %v72, 4294901760
    %4204 = vmatmul.mubr.f32.gmra.mrb[0].mxu0 %v4203
    %v4205 = vpop.f32.mrb[0].mxu0
    %v4206 = vadd.f32 %v3971, %v4205
    %v4207 = vpop.f32.mrb[0].mxu0
    %4208 = vmatprep.mubr.f32.mxu0 0.0
    %v4209 = vand.u32 %v73, 4294901760
    %4210 = vmatmul.mubr.f32.gmra.mrb[0].mxu0 %v4209
    %v4211 = vpop.f32.mrb[0].mxu0
    %v4212 = vadd.f32 %v3979, %v4211
    %v4213 = vpop.f32.mrb[0].mxu0
    %4214 = vmatprep.mubr.f32.mxu0 0.0
    %v4215 = vand.u32 %v74, 4294901760
    %4216 = vmatmul.mubr.f32.gmra.mrb[0].mxu0 %v4215
    %v4217 = vpop.f32.mrb[0].mxu0
    %v4218 = vadd.f32 %v3987, %v4217
    %v4219 = vpop.f32.mrb[0].mxu0
    %4220 = vmatprep.mubr.f32.mxu0 0.0
    %v4221 = vand.u32 %v75, 4294901760
    %4222 = vmatmul.mubr.f32.gmra.mrb[0].mxu0 %v4221
    %v4223 = vpop.f32.mrb[0].mxu0
    %v4224 = vadd.f32 %v3995, %v4223
    %v4225 = vpop.f32.mrb[0].mxu0
    %4226 = vmatprep.mubr.f32.mxu0 0.0
    %v4227 = vand.u32 %v76, 4294901760
    %4228 = vmatmul.mubr.f32.gmra.mrb[0].mxu0 %v4227
    %v4229 = vpop.f32.mrb[0].mxu0
    %v4230 = vadd.f32 %v4003, %v4229
    %v4231 = vpop.f32.mrb[0].mxu0
    %4232 = vmatprep.mubr.f32.mxu0 0.0
    %v4233 = vand.u32 %v77, 4294901760
    %4234 = vmatmul.mubr.f32.gmra.mrb[0].mxu0 %v4233
    %v4235 = vpop.f32.mrb[0].mxu0
    %v4236 = vadd.f32 %v4011, %v4235
    %v4237 = vpop.f32.mrb[0].mxu0
    %4238 = vmatprep.mubr.f32.mxu0 0.0
    %v4239 = vand.u32 %v78, 4294901760
    %4240 = vmatmul.mubr.f32.gmra.mrb[0].mxu0 %v4239
    %v4241 = vpop.f32.mrb[0].mxu0
    %v4242 = vadd.f32 %v4019, %v4241
    %v4243 = vpop.f32.mrb[0].mxu0
    %4244 = vmatprep.mubr.f32.mxu0 0.0
    %v4245 = vand.u32 %v79, 4294901760
    %4246 = vmatmul.mubr.f32.gmra.mrb[0].mxu0 %v4245
    %v4247 = vpop.f32.mrb[0].mxu0
    %v4248 = vadd.f32 %v4027, %v4247
    %v4249 = vpop.f32.mrb[0].mxu0
    %4250 = vmatprep.mubr.f32.mxu0 0.0
    %v4251 = vand.u32 %v80, 4294901760
    %4252 = vmatmul.mubr.f32.gmra.mrb[0].mxu0 %v4251
    %v4253 = vpop.f32.mrb[0].mxu0
    %v4254 = vadd.f32 %v4035, %v4253
    %v4255 = vpop.f32.mrb[0].mxu0
    %4256 = vmatprep.mubr.f32.mxu0 0.0
    %v4257 = vand.u32 %v81, 4294901760
    %4258 = vmatmul.mubr.f32.gmra.mrb[0].mxu0 %v4257
    %v4259 = vpop.f32.mrb[0].mxu0
    %v4260 = vadd.f32 %v4043, %v4259
    %v4261 = vpop.f32.mrb[0].mxu0
    %4262 = vmatprep.mubr.f32.mxu0 0.0
    %v4263 = vand.u32 %v82, 4294901760
    %4264 = vmatmul.mubr.f32.gmra.mrb[0].mxu0 %v4263
    %v4265 = vpop.f32.mrb[0].mxu0
    %v4266 = vadd.f32 %v4051, %v4265
    %v4267 = vpop.f32.mrb[0].mxu0
    %4268 = vmatprep.mubr.f32.mxu0 0.0
    %v4269 = vand.u32 %v83, 4294901760
    %4270 = vmatmul.mubr.f32.gmra.mrb[0].mxu0 %v4269
    %v4271 = vpop.f32.mrb[0].mxu0
    %v4272 = vadd.f32 %v4059, %v4271
    %v4273 = vpop.f32.mrb[0].mxu0
    %4274 = vmatprep.mubr.f32.mxu0 0.0
    %v4275 = vand.u32 %v84, 4294901760
    %4276 = vmatmul.mubr.f32.gmra.mrb[0].mxu0 %v4275
    %v4277 = vpop.f32.mrb[0].mxu0
    %v4278 = vadd.f32 %v4067, %v4277
    %v4279 = vpop.f32.mrb[0].mxu0
    %4280 = vmatprep.mubr.f32.mxu0 0.0
    %v4281 = vand.u32 %v85, 4294901760
    %4282 = vmatmul.mubr.f32.gmra.mrb[0].mxu0 %v4281
    %v4283 = vpop.f32.mrb[0].mxu0
    %v4284 = vadd.f32 %v4075, %v4283
    %v4285 = vpop.f32.mrb[0].mxu0
    %4286 = vdwg.mxu0
    %4287 = vmatprep.subr.mxu0 0.0
    %v4288 = vand.u32 %v3129, 4294901760
    %4289 = vmatpush1.msra.mxu0 %v4288
    %4290 = vmatprep.subr.mxu0 0.0
    %v4291 = vand.u32 %v3130, 4294901760
    %4292 = vmatpush1.msra.mxu0 %v4291
    %4293 = vmatprep.subr.mxu0 0.0
    %v4294 = vand.u32 %v3131, 4294901760
    %4295 = vmatpush1.msra.mxu0 %v4294
    %4296 = vmatprep.subr.mxu0 0.0
    %v4297 = vand.u32 %v3132, 4294901760
    %4298 = vmatpush1.msra.mxu0 %v4297
    %4299 = vmatprep.subr.mxu0 0.0
    %v4300 = vand.u32 %v3133, 4294901760
    %4301 = vmatpush1.msra.mxu0 %v4300
    %4302 = vmatprep.subr.mxu0 0.0
    %v4303 = vand.u32 %v3134, 4294901760
    %4304 = vmatpush1.msra.mxu0 %v4303
    %4305 = vmatprep.subr.mxu0 0.0
    %v4306 = vand.u32 %v3135, 4294901760
    %4307 = vmatpush1.msra.mxu0 %v4306
    %4308 = vmatprep.subr.mxu0 0.0
    %v4309 = vand.u32 %v3136, 4294901760
    %4310 = vmatpush1.msra.mxu0 %v4309
    %4311 = vmatprep.subr.mxu0 0.0
    %v4312 = vand.u32 %v3137, 4294901760
    %4313 = vmatpush1.msra.mxu0 %v4312
    %4314 = vmatprep.subr.mxu0 0.0
    %v4315 = vand.u32 %v3138, 4294901760
    %4316 = vmatpush1.msra.mxu0 %v4315
    %4317 = vmatprep.subr.mxu0 0.0
    %v4318 = vand.u32 %v3139, 4294901760
    %4319 = vmatpush1.msra.mxu0 %v4318
    %4320 = vmatprep.subr.mxu0 0.0
    %v4321 = vand.u32 %v3140, 4294901760
    %4322 = vmatpush1.msra.mxu0 %v4321
    %4323 = vmatprep.subr.mxu0 0.0
    %v4324 = vand.u32 %v3141, 4294901760
    %4325 = vmatpush1.msra.mxu0 %v4324
    %4326 = vmatprep.subr.mxu0 0.0
    %v4327 = vand.u32 %v3142, 4294901760
    %4328 = vmatpush1.msra.mxu0 %v4327
    %4329 = vmatprep.subr.mxu0 0.0
    %v4330 = vand.u32 %v3143, 4294901760
    %4331 = vmatpush1.msra.mxu0 %v4330
    %4332 = vmatprep.subr.mxu0 0.0
    %v4333 = vand.u32 %v3144, 4294901760
    %4334 = vmatpush1.msra.mxu0 %v4333
    %4335 = vmatprep.subr.mxu0 0.0
    %4336 = vmatpush1.msra.mxu0 0.0
    %4337 = vmatprep.subr.mxu0 0.0
    %4338 = vmatpush1.msra.mxu0 0.0
    %4339 = vmatprep.subr.mxu0 0.0
    %4340 = vmatpush1.msra.mxu0 0.0
    %4341 = vmatprep.subr.mxu0 0.0
    %4342 = vmatpush1.msra.mxu0 0.0
    %4343 = vmatprep.subr.mxu0 0.0
    %4344 = vmatpush1.msra.mxu0 0.0
    %4345 = vmatprep.subr.mxu0 0.0
    %4346 = vmatpush1.msra.mxu0 0.0
    %4347 = vmatprep.subr.mxu0 0.0
    %4348 = vmatpush1.msra.mxu0 0.0
    %4349 = vmatprep.subr.mxu0 0.0
    %4350 = vmatpush1.msra.mxu0 0.0
    %4351 = vmatprep.subr.mxu0 0.0
    %4352 = vmatpush1.msra.mxu0 0.0
    %4353 = vmatprep.subr.mxu0 0.0
    %4354 = vmatpush1.msra.mxu0 0.0
    %4355 = vmatprep.subr.mxu0 0.0
    %4356 = vmatpush1.msra.mxu0 0.0
    %4357 = vmatprep.subr.mxu0 0.0
    %4358 = vmatpush1.msra.mxu0 0.0
    %4359 = vmatprep.subr.mxu0 0.0
    %4360 = vmatpush1.msra.mxu0 0.0
    %4361 = vmatprep.subr.mxu0 0.0
    %4362 = vmatpush1.msra.mxu0 0.0
    %4363 = vmatprep.subr.mxu0 0.0
    %4364 = vmatpush1.msra.mxu0 0.0
    %4365 = vmatprep.subr.mxu0 0.0
    %4366 = vmatpush1.msra.mxu0 0.0
    %4367 = vmatprep.mubr.f32.mxu0 0.0
    %v4368 = vand.u32 %v70, 4294901760
    %4369 = vmatmul.mubr.f32.gmra.mrb[0].mxu0 %v4368
    %v4370 = vpop.f32.mrb[0].mxu0
    %v4371 = vadd.f32 %v4194, %v4370
    %v4372 = vpop.f32.mrb[0].mxu0
    %4373 = vmatprep.mubr.f32.mxu0 0.0
    %v4374 = vand.u32 %v71, 4294901760
    %4375 = vmatmul.mubr.f32.gmra.mrb[0].mxu0 %v4374
    %v4376 = vpop.f32.mrb[0].mxu0
    %v4377 = vadd.f32 %v4200, %v4376
    %v4378 = vpop.f32.mrb[0].mxu0
    %4379 = vmatprep.mubr.f32.mxu0 0.0
    %v4380 = vand.u32 %v72, 4294901760
    %4381 = vmatmul.mubr.f32.gmra.mrb[0].mxu0 %v4380
    %v4382 = vpop.f32.mrb[0].mxu0
    %v4383 = vadd.f32 %v4206, %v4382
    %v4384 = vpop.f32.mrb[0].mxu0
    %4385 = vmatprep.mubr.f32.mxu0 0.0
    %v4386 = vand.u32 %v73, 4294901760
    %4387 = vmatmul.mubr.f32.gmra.mrb[0].mxu0 %v4386
    %v4388 = vpop.f32.mrb[0].mxu0
    %v4389 = vadd.f32 %v4212, %v4388
    %v4390 = vpop.f32.mrb[0].mxu0
    %4391 = vmatprep.mubr.f32.mxu0 0.0
    %v4392 = vand.u32 %v74, 4294901760
    %4393 = vmatmul.mubr.f32.gmra.mrb[0].mxu0 %v4392
    %v4394 = vpop.f32.mrb[0].mxu0
    %v4395 = vadd.f32 %v4218, %v4394
    %v4396 = vpop.f32.mrb[0].mxu0
    %4397 = vmatprep.mubr.f32.mxu0 0.0
    %v4398 = vand.u32 %v75, 4294901760
    %4399 = vmatmul.mubr.f32.gmra.mrb[0].mxu0 %v4398
    %v4400 = vpop.f32.mrb[0].mxu0
    %v4401 = vadd.f32 %v4224, %v4400
    %v4402 = vpop.f32.mrb[0].mxu0
    %4403 = vmatprep.mubr.f32.mxu0 0.0
    %v4404 = vand.u32 %v76, 4294901760
    %4405 = vmatmul.mubr.f32.gmra.mrb[0].mxu0 %v4404
    %v4406 = vpop.f32.mrb[0].mxu0
    %v4407 = vadd.f32 %v4230, %v4406
    %v4408 = vpop.f32.mrb[0].mxu0
    %4409 = vmatprep.mubr.f32.mxu0 0.0
    %v4410 = vand.u32 %v77, 4294901760
    %4411 = vmatmul.mubr.f32.gmra.mrb[0].mxu0 %v4410
    %v4412 = vpop.f32.mrb[0].mxu0
    %v4413 = vadd.f32 %v4236, %v4412
    %v4414 = vpop.f32.mrb[0].mxu0
    %4415 = vmatprep.mubr.f32.mxu0 0.0
    %v4416 = vand.u32 %v78, 4294901760
    %4417 = vmatmul.mubr.f32.gmra.mrb[0].mxu0 %v4416
    %v4418 = vpop.f32.mrb[0].mxu0
    %v4419 = vadd.f32 %v4242, %v4418
    %v4420 = vpop.f32.mrb[0].mxu0
    %4421 = vmatprep.mubr.f32.mxu0 0.0
    %v4422 = vand.u32 %v79, 4294901760
    %4423 = vmatmul.mubr.f32.gmra.mrb[0].mxu0 %v4422
    %v4424 = vpop.f32.mrb[0].mxu0
    %v4425 = vadd.f32 %v4248, %v4424
    %v4426 = vpop.f32.mrb[0].mxu0
    %4427 = vmatprep.mubr.f32.mxu0 0.0
    %v4428 = vand.u32 %v80, 4294901760
    %4429 = vmatmul.mubr.f32.gmra.mrb[0].mxu0 %v4428
    %v4430 = vpop.f32.mrb[0].mxu0
    %v4431 = vadd.f32 %v4254, %v4430
    %v4432 = vpop.f32.mrb[0].mxu0
    %4433 = vmatprep.mubr.f32.mxu0 0.0
    %v4434 = vand.u32 %v81, 4294901760
    %4435 = vmatmul.mubr.f32.gmra.mrb[0].mxu0 %v4434
    %v4436 = vpop.f32.mrb[0].mxu0
    %v4437 = vadd.f32 %v4260, %v4436
    %v4438 = vpop.f32.mrb[0].mxu0
    %4439 = vmatprep.mubr.f32.mxu0 0.0
    %v4440 = vand.u32 %v82, 4294901760
    %4441 = vmatmul.mubr.f32.gmra.mrb[0].mxu0 %v4440
    %v4442 = vpop.f32.mrb[0].mxu0
    %v4443 = vadd.f32 %v4266, %v4442
    %v4444 = vpop.f32.mrb[0].mxu0
    %4445 = vmatprep.mubr.f32.mxu0 0.0
    %v4446 = vand.u32 %v83, 4294901760
    %4447 = vmatmul.mubr.f32.gmra.mrb[0].mxu0 %v4446
    %v4448 = vpop.f32.mrb[0].mxu0
    %v4449 = vadd.f32 %v4272, %v4448
    %v4450 = vpop.f32.mrb[0].mxu0
    %4451 = vmatprep.mubr.f32.mxu0 0.0
    %v4452 = vand.u32 %v84, 4294901760
    %4453 = vmatmul.mubr.f32.gmra.mrb[0].mxu0 %v4452
    %v4454 = vpop.f32.mrb[0].mxu0
    %v4455 = vadd.f32 %v4278, %v4454
    %v4456 = vpop.f32.mrb[0].mxu0
    %4457 = vmatprep.mubr.f32.mxu0 0.0
    %v4458 = vand.u32 %v85, 4294901760
    %4459 = vmatmul.mubr.f32.gmra.mrb[0].mxu0 %v4458
    %v4460 = vpop.f32.mrb[0].mxu0
    %v4461 = vadd.f32 %v4284, %v4460
    %v4462 = vpop.f32.mrb[0].mxu0
    %4463 = vdwg.mxu0
    %v4465 = vlaneseq
    %v4466 = vshrl.u32 %v4465, 7
    %v4467 = vsub.s32 0, %v4466
    %v4468 = vrot.slane %v3177, %v4467
    %4470 = vmatprep.subr.mxu0 0.0
    %v4471 = vand.u32 %v3145, 4294901760
    %4472 = vmatpush1.msra.mxu0 %v4471
    %4473 = vmatprep.subr.mxu0 0.0
    %v4474 = vand.u32 %v3146, 4294901760
    %4475 = vmatpush1.msra.mxu0 %v4474
    %4476 = vmatprep.subr.mxu0 0.0
    %v4477 = vand.u32 %v3147, 4294901760
    %4478 = vmatpush1.msra.mxu0 %v4477
    %4479 = vmatprep.subr.mxu0 0.0
    %v4480 = vand.u32 %v3148, 4294901760
    %4481 = vmatpush1.msra.mxu0 %v4480
    %4482 = vmatprep.subr.mxu0 0.0
    %v4483 = vand.u32 %v3149, 4294901760
    %4484 = vmatpush1.msra.mxu0 %v4483
    %4485 = vmatprep.subr.mxu0 0.0
    %v4486 = vand.u32 %v3150, 4294901760
    %4487 = vmatpush1.msra.mxu0 %v4486
    %4488 = vmatprep.subr.mxu0 0.0
    %v4489 = vand.u32 %v3151, 4294901760
    %4490 = vmatpush1.msra.mxu0 %v4489
    %4491 = vmatprep.subr.mxu0 0.0
    %v4492 = vand.u32 %v3152, 4294901760
    %4493 = vmatpush1.msra.mxu0 %v4492
    %4494 = vmatprep.subr.mxu0 0.0
    %v4495 = vand.u32 %v3153, 4294901760
    %4496 = vmatpush1.msra.mxu0 %v4495
    %4497 = vmatprep.subr.mxu0 0.0
    %v4498 = vand.u32 %v3154, 4294901760
    %4499 = vmatpush1.msra.mxu0 %v4498
    %4500 = vmatprep.subr.mxu0 0.0
    %v4501 = vand.u32 %v3155, 4294901760
    %4502 = vmatpush1.msra.mxu0 %v4501
    %4503 = vmatprep.subr.mxu0 0.0
    %v4504 = vand.u32 %v3156, 4294901760
    %4505 = vmatpush1.msra.mxu0 %v4504
    %4506 = vmatprep.subr.mxu0 0.0
    %v4507 = vand.u32 %v3157, 4294901760
    %4508 = vmatpush1.msra.mxu0 %v4507
    %4509 = vmatprep.subr.mxu0 0.0
    %v4510 = vand.u32 %v3158, 4294901760
    %4511 = vmatpush1.msra.mxu0 %v4510
    %4512 = vmatprep.subr.mxu0 0.0
    %v4513 = vand.u32 %v3159, 4294901760
    %4514 = vmatpush1.msra.mxu0 %v4513
    %4515 = vmatprep.subr.mxu0 0.0
    %v4516 = vand.u32 %v3160, 4294901760
    %4517 = vmatpush1.msra.mxu0 %v4516
    %4518 = vmatprep.subr.mxu0 0.0
    %v4519 = vand.u32 %v3161, 4294901760
    %4520 = vmatpush1.msra.mxu0 %v4519
    %4521 = vmatprep.subr.mxu0 0.0
    %v4522 = vand.u32 %v3162, 4294901760
    %4523 = vmatpush1.msra.mxu0 %v4522
    %4524 = vmatprep.subr.mxu0 0.0
    %v4525 = vand.u32 %v3163, 4294901760
    %4526 = vmatpush1.msra.mxu0 %v4525
    %4527 = vmatprep.subr.mxu0 0.0
    %v4528 = vand.u32 %v3164, 4294901760
    %4529 = vmatpush1.msra.mxu0 %v4528
    %4530 = vmatprep.subr.mxu0 0.0
    %v4531 = vand.u32 %v3165, 4294901760
    %4532 = vmatpush1.msra.mxu0 %v4531
    %4533 = vmatprep.subr.mxu0 0.0
    %v4534 = vand.u32 %v3166, 4294901760
    %4535 = vmatpush1.msra.mxu0 %v4534
    %4536 = vmatprep.subr.mxu0 0.0
    %v4537 = vand.u32 %v3167, 4294901760
    %4538 = vmatpush1.msra.mxu0 %v4537
    %4539 = vmatprep.subr.mxu0 0.0
    %v4540 = vand.u32 %v3168, 4294901760
    %4541 = vmatpush1.msra.mxu0 %v4540
    %4542 = vmatprep.subr.mxu0 0.0
    %v4543 = vand.u32 %v3169, 4294901760
    %4544 = vmatpush1.msra.mxu0 %v4543
    %4545 = vmatprep.subr.mxu0 0.0
    %v4546 = vand.u32 %v3170, 4294901760
    %4547 = vmatpush1.msra.mxu0 %v4546
    %4548 = vmatprep.subr.mxu0 0.0
    %v4549 = vand.u32 %v3171, 4294901760
    %4550 = vmatpush1.msra.mxu0 %v4549
    %4551 = vmatprep.subr.mxu0 0.0
    %v4552 = vand.u32 %v3172, 4294901760
    %4553 = vmatpush1.msra.mxu0 %v4552
    %4554 = vmatprep.subr.mxu0 0.0
    %v4555 = vand.u32 %v3173, 4294901760
    %4556 = vmatpush1.msra.mxu0 %v4555
    %4557 = vmatprep.subr.mxu0 0.0
    %v4558 = vand.u32 %v3174, 4294901760
    %4559 = vmatpush1.msra.mxu0 %v4558
    %4560 = vmatprep.subr.mxu0 0.0
    %v4561 = vand.u32 %v3175, 4294901760
    %4562 = vmatpush1.msra.mxu0 %v4561
    %4563 = vmatprep.subr.mxu0 0.0
    %v4564 = vand.u32 %v3176, 4294901760
    %4565 = vmatpush1.msra.mxu0 %v4564
    %v4566 = vand.u32 %v3129, 4294901760
    %v4567 = vsub.f32 %v3129, %v4566
    %v4568 = vand.u32 %v4567, 4294901760
    %v4569 = vsub.f32 %v4567, %v4568
    %v4570 = vand.u32 %v4569, 4294901760
    %4571 = vmatprep.mubr.f32.mxu0 %v4570
    %v4572 = vand.u32 %v4371, 4294901760
    %v4573 = vsub.f32 %v4371, %v4572
    %v4574 = vand.u32 %v4573, 4294901760
    %v4575 = vsub.f32 %v4573, %v4574
    %v4576 = vand.u32 %v4575, 4294901760
    %4577 = vmatmul.mubr.f32.gmra.mrb[0].mxu0 %v4576
    %v4578 = vpop.f32.mrb[0].mxu0
    %v4579 = vadd.f32 %v4468, %v4578
    %v4580 = vpop.f32.mrb[0].mxu0
    %v4581 = vand.u32 %v3130, 4294901760
    %v4582 = vsub.f32 %v3130, %v4581
    %v4583 = vand.u32 %v4582, 4294901760
    %v4584 = vsub.f32 %v4582, %v4583
    %v4585 = vand.u32 %v4584, 4294901760
    %4586 = vmatprep.mubr.f32.mxu0 %v4585
    %v4587 = vand.u32 %v4377, 4294901760
    %v4588 = vsub.f32 %v4377, %v4587
    %v4589 = vand.u32 %v4588, 4294901760
    %v4590 = vsub.f32 %v4588, %v4589
    %v4591 = vand.u32 %v4590, 4294901760
    %4592 = vmatmul.mubr.f32.gmra.mrb[0].mxu0 %v4591
    %v4593 = vpop.f32.mrb[0].mxu0
    %v4594 = vadd.f32 %v4468, %v4593
    %v4595 = vpop.f32.mrb[0].mxu0
    %v4596 = vand.u32 %v3131, 4294901760
    %v4597 = vsub.f32 %v3131, %v4596
    %v4598 = vand.u32 %v4597, 4294901760
    %v4599 = vsub.f32 %v4597, %v4598
    %v4600 = vand.u32 %v4599, 4294901760
    %4601 = vmatprep.mubr.f32.mxu0 %v4600
    %v4602 = vand.u32 %v4383, 4294901760
    %v4603 = vsub.f32 %v4383, %v4602
    %v4604 = vand.u32 %v4603, 4294901760
    %v4605 = vsub.f32 %v4603, %v4604
    %v4606 = vand.u32 %v4605, 4294901760
    %4607 = vmatmul.mubr.f32.gmra.mrb[0].mxu0 %v4606
    %v4608 = vpop.f32.mrb[0].mxu0
    %v4609 = vadd.f32 %v4468, %v4608
    %v4610 = vpop.f32.mrb[0].mxu0
    %v4611 = vand.u32 %v3132, 4294901760
    %v4612 = vsub.f32 %v3132, %v4611
    %v4613 = vand.u32 %v4612, 4294901760
    %v4614 = vsub.f32 %v4612, %v4613
    %v4615 = vand.u32 %v4614, 4294901760
    %4616 = vmatprep.mubr.f32.mxu0 %v4615
    %v4617 = vand.u32 %v4389, 4294901760
    %v4618 = vsub.f32 %v4389, %v4617
    %v4619 = vand.u32 %v4618, 4294901760
    %v4620 = vsub.f32 %v4618, %v4619
    %v4621 = vand.u32 %v4620, 4294901760
    %4622 = vmatmul.mubr.f32.gmra.mrb[0].mxu0 %v4621
    %v4623 = vpop.f32.mrb[0].mxu0
    %v4624 = vadd.f32 %v4468, %v4623
    %v4625 = vpop.f32.mrb[0].mxu0
    %v4626 = vand.u32 %v3133, 4294901760
    %v4627 = vsub.f32 %v3133, %v4626
    %v4628 = vand.u32 %v4627, 4294901760
    %v4629 = vsub.f32 %v4627, %v4628
    %v4630 = vand.u32 %v4629, 4294901760
    %4631 = vmatprep.mubr.f32.mxu0 %v4630
    %v4632 = vand.u32 %v4395, 4294901760
    %v4633 = vsub.f32 %v4395, %v4632
    %v4634 = vand.u32 %v4633, 4294901760
    %v4635 = vsub.f32 %v4633, %v4634
    %v4636 = vand.u32 %v4635, 4294901760
    %4637 = vmatmul.mubr.f32.gmra.mrb[0].mxu0 %v4636
    %v4638 = vpop.f32.mrb[0].mxu0
    %v4639 = vadd.f32 %v4468, %v4638
    %v4640 = vpop.f32.mrb[0].mxu0
    %v4641 = vand.u32 %v3134, 4294901760
    %v4642 = vsub.f32 %v3134, %v4641
    %v4643 = vand.u32 %v4642, 4294901760
    %v4644 = vsub.f32 %v4642, %v4643
    %v4645 = vand.u32 %v4644, 4294901760
    %4646 = vmatprep.mubr.f32.mxu0 %v4645
    %v4647 = vand.u32 %v4401, 4294901760
    %v4648 = vsub.f32 %v4401, %v4647
    %v4649 = vand.u32 %v4648, 4294901760
    %v4650 = vsub.f32 %v4648, %v4649
    %v4651 = vand.u32 %v4650, 4294901760
    %4652 = vmatmul.mubr.f32.gmra.mrb[0].mxu0 %v4651
    %v4653 = vpop.f32.mrb[0].mxu0
    %v4654 = vadd.f32 %v4468, %v4653
    %v4655 = vpop.f32.mrb[0].mxu0
    %v4656 = vand.u32 %v3135, 4294901760
    %v4657 = vsub.f32 %v3135, %v4656
    %v4658 = vand.u32 %v4657, 4294901760
    %v4659 = vsub.f32 %v4657, %v4658
    %v4660 = vand.u32 %v4659, 4294901760
    %4661 = vmatprep.mubr.f32.mxu0 %v4660
    %v4662 = vand.u32 %v4407, 4294901760
    %v4663 = vsub.f32 %v4407, %v4662
    %v4664 = vand.u32 %v4663, 4294901760
    %v4665 = vsub.f32 %v4663, %v4664
    %v4666 = vand.u32 %v4665, 4294901760
    %4667 = vmatmul.mubr.f32.gmra.mrb[0].mxu0 %v4666
    %v4668 = vpop.f32.mrb[0].mxu0
    %v4669 = vadd.f32 %v4468, %v4668
    %v4670 = vpop.f32.mrb[0].mxu0
    %v4671 = vand.u32 %v3136, 4294901760
    %v4672 = vsub.f32 %v3136, %v4671
    %v4673 = vand.u32 %v4672, 4294901760
    %v4674 = vsub.f32 %v4672, %v4673
    %v4675 = vand.u32 %v4674, 4294901760
    %4676 = vmatprep.mubr.f32.mxu0 %v4675
    %v4677 = vand.u32 %v4413, 4294901760
    %v4678 = vsub.f32 %v4413, %v4677
    %v4679 = vand.u32 %v4678, 4294901760
    %v4680 = vsub.f32 %v4678, %v4679
    %v4681 = vand.u32 %v4680, 4294901760
    %4682 = vmatmul.mubr.f32.gmra.mrb[0].mxu0 %v4681
    %v4683 = vpop.f32.mrb[0].mxu0
    %v4684 = vadd.f32 %v4468, %v4683
    %v4685 = vpop.f32.mrb[0].mxu0
    %v4686 = vand.u32 %v3137, 4294901760
    %v4687 = vsub.f32 %v3137, %v4686
    %v4688 = vand.u32 %v4687, 4294901760
    %v4689 = vsub.f32 %v4687, %v4688
    %v4690 = vand.u32 %v4689, 4294901760
    %4691 = vmatprep.mubr.f32.mxu0 %v4690
    %v4692 = vand.u32 %v4419, 4294901760
    %v4693 = vsub.f32 %v4419, %v4692
    %v4694 = vand.u32 %v4693, 4294901760
    %v4695 = vsub.f32 %v4693, %v4694
    %v4696 = vand.u32 %v4695, 4294901760
    %4697 = vmatmul.mubr.f32.gmra.mrb[0].mxu0 %v4696
    %v4698 = vpop.f32.mrb[0].mxu0
    %v4699 = vadd.f32 %v4468, %v4698
    %v4700 = vpop.f32.mrb[0].mxu0
    %v4701 = vand.u32 %v3138, 4294901760
    %v4702 = vsub.f32 %v3138, %v4701
    %v4703 = vand.u32 %v4702, 4294901760
    %v4704 = vsub.f32 %v4702, %v4703
    %v4705 = vand.u32 %v4704, 4294901760
    %4706 = vmatprep.mubr.f32.mxu0 %v4705
    %v4707 = vand.u32 %v4425, 4294901760
    %v4708 = vsub.f32 %v4425, %v4707
    %v4709 = vand.u32 %v4708, 4294901760
    %v4710 = vsub.f32 %v4708, %v4709
    %v4711 = vand.u32 %v4710, 4294901760
    %4712 = vmatmul.mubr.f32.gmra.mrb[0].mxu0 %v4711
    %v4713 = vpop.f32.mrb[0].mxu0
    %v4714 = vadd.f32 %v4468, %v4713
    %v4715 = vpop.f32.mrb[0].mxu0
    %v4716 = vand.u32 %v3139, 4294901760
    %v4717 = vsub.f32 %v3139, %v4716
    %v4718 = vand.u32 %v4717, 4294901760
    %v4719 = vsub.f32 %v4717, %v4718
    %v4720 = vand.u32 %v4719, 4294901760
    %4721 = vmatprep.mubr.f32.mxu0 %v4720
    %v4722 = vand.u32 %v4431, 4294901760
    %v4723 = vsub.f32 %v4431, %v4722
    %v4724 = vand.u32 %v4723, 4294901760
    %v4725 = vsub.f32 %v4723, %v4724
    %v4726 = vand.u32 %v4725, 4294901760
    %4727 = vmatmul.mubr.f32.gmra.mrb[0].mxu0 %v4726
    %v4728 = vpop.f32.mrb[0].mxu0
    %v4729 = vadd.f32 %v4468, %v4728
    %v4730 = vpop.f32.mrb[0].mxu0
    %v4731 = vand.u32 %v3140, 4294901760
    %v4732 = vsub.f32 %v3140, %v4731
    %v4733 = vand.u32 %v4732, 4294901760
    %v4734 = vsub.f32 %v4732, %v4733
    %v4735 = vand.u32 %v4734, 4294901760
    %4736 = vmatprep.mubr.f32.mxu0 %v4735
    %v4737 = vand.u32 %v4437, 4294901760
    %v4738 = vsub.f32 %v4437, %v4737
    %v4739 = vand.u32 %v4738, 4294901760
    %v4740 = vsub.f32 %v4738, %v4739
    %v4741 = vand.u32 %v4740, 4294901760
    %4742 = vmatmul.mubr.f32.gmra.mrb[0].mxu0 %v4741
    %v4743 = vpop.f32.mrb[0].mxu0
    %v4744 = vadd.f32 %v4468, %v4743
    %v4745 = vpop.f32.mrb[0].mxu0
    %v4746 = vand.u32 %v3141, 4294901760
    %v4747 = vsub.f32 %v3141, %v4746
    %v4748 = vand.u32 %v4747, 4294901760
    %v4749 = vsub.f32 %v4747, %v4748
    %v4750 = vand.u32 %v4749, 4294901760
    %4751 = vmatprep.mubr.f32.mxu0 %v4750
    %v4752 = vand.u32 %v4443, 4294901760
    %v4753 = vsub.f32 %v4443, %v4752
    %v4754 = vand.u32 %v4753, 4294901760
    %v4755 = vsub.f32 %v4753, %v4754
    %v4756 = vand.u32 %v4755, 4294901760
    %4757 = vmatmul.mubr.f32.gmra.mrb[0].mxu0 %v4756
    %v4758 = vpop.f32.mrb[0].mxu0
    %v4759 = vadd.f32 %v4468, %v4758
    %v4760 = vpop.f32.mrb[0].mxu0
    %v4761 = vand.u32 %v3142, 4294901760
    %v4762 = vsub.f32 %v3142, %v4761
    %v4763 = vand.u32 %v4762, 4294901760
    %v4764 = vsub.f32 %v4762, %v4763
    %v4765 = vand.u32 %v4764, 4294901760
    %4766 = vmatprep.mubr.f32.mxu0 %v4765
    %v4767 = vand.u32 %v4449, 4294901760
    %v4768 = vsub.f32 %v4449, %v4767
    %v4769 = vand.u32 %v4768, 4294901760
    %v4770 = vsub.f32 %v4768, %v4769
    %v4771 = vand.u32 %v4770, 4294901760
    %4772 = vmatmul.mubr.f32.gmra.mrb[0].mxu0 %v4771
    %v4773 = vpop.f32.mrb[0].mxu0
    %v4774 = vadd.f32 %v4468, %v4773
    %v4775 = vpop.f32.mrb[0].mxu0
    %v4776 = vand.u32 %v3143, 4294901760
    %v4777 = vsub.f32 %v3143, %v4776
    %v4778 = vand.u32 %v4777, 4294901760
    %v4779 = vsub.f32 %v4777, %v4778
    %v4780 = vand.u32 %v4779, 4294901760
    %4781 = vmatprep.mubr.f32.mxu0 %v4780
    %v4782 = vand.u32 %v4455, 4294901760
    %v4783 = vsub.f32 %v4455, %v4782
    %v4784 = vand.u32 %v4783, 4294901760
    %v4785 = vsub.f32 %v4783, %v4784
    %v4786 = vand.u32 %v4785, 4294901760
    %4787 = vmatmul.mubr.f32.gmra.mrb[0].mxu0 %v4786
    %v4788 = vpop.f32.mrb[0].mxu0
    %v4789 = vadd.f32 %v4468, %v4788
    %v4790 = vpop.f32.mrb[0].mxu0
    %v4791 = vand.u32 %v3144, 4294901760
    %v4792 = vsub.f32 %v3144, %v4791
    %v4793 = vand.u32 %v4792, 4294901760
    %v4794 = vsub.f32 %v4792, %v4793
    %v4795 = vand.u32 %v4794, 4294901760
    %4796 = vmatprep.mubr.f32.mxu0 %v4795
    %v4797 = vand.u32 %v4461, 4294901760
    %v4798 = vsub.f32 %v4461, %v4797
    %v4799 = vand.u32 %v4798, 4294901760
    %v4800 = vsub.f32 %v4798, %v4799
    %v4801 = vand.u32 %v4800, 4294901760
    %4802 = vmatmul.mubr.f32.gmra.mrb[0].mxu0 %v4801
    %v4803 = vpop.f32.mrb[0].mxu0
    %v4804 = vadd.f32 %v4468, %v4803
    %v4805 = vpop.f32.mrb[0].mxu0
    %4806 = vdwg.mxu0
    %4807 = vmatprep.subr.mxu0 0.0
    %v4808 = vand.u32 %v3145, 4294901760
    %v4809 = vsub.f32 %v3145, %v4808
    %v4810 = vand.u32 %v4809, 4294901760
    %v4811 = vsub.f32 %v4809, %v4810
    %v4812 = vand.u32 %v4811, 4294901760
    %4813 = vmatpush1.msra.mxu0 %v4812
    %4814 = vmatprep.subr.mxu0 0.0
    %v4815 = vand.u32 %v3146, 4294901760
    %v4816 = vsub.f32 %v3146, %v4815
    %v4817 = vand.u32 %v4816, 4294901760
    %v4818 = vsub.f32 %v4816, %v4817
    %v4819 = vand.u32 %v4818, 4294901760
    %4820 = vmatpush1.msra.mxu0 %v4819
    %4821 = vmatprep.subr.mxu0 0.0
    %v4822 = vand.u32 %v3147, 4294901760
    %v4823 = vsub.f32 %v3147, %v4822
    %v4824 = vand.u32 %v4823, 4294901760
    %v4825 = vsub.f32 %v4823, %v4824
    %v4826 = vand.u32 %v4825, 4294901760
    %4827 = vmatpush1.msra.mxu0 %v4826
    %4828 = vmatprep.subr.mxu0 0.0
    %v4829 = vand.u32 %v3148, 4294901760
    %v4830 = vsub.f32 %v3148, %v4829
    %v4831 = vand.u32 %v4830, 4294901760
    %v4832 = vsub.f32 %v4830, %v4831
    %v4833 = vand.u32 %v4832, 4294901760
    %4834 = vmatpush1.msra.mxu0 %v4833
    %4835 = vmatprep.subr.mxu0 0.0
    %v4836 = vand.u32 %v3149, 4294901760
    %v4837 = vsub.f32 %v3149, %v4836
    %v4838 = vand.u32 %v4837, 4294901760
    %v4839 = vsub.f32 %v4837, %v4838
    %v4840 = vand.u32 %v4839, 4294901760
    %4841 = vmatpush1.msra.mxu0 %v4840
    %4842 = vmatprep.subr.mxu0 0.0
    %v4843 = vand.u32 %v3150, 4294901760
    %v4844 = vsub.f32 %v3150, %v4843
    %v4845 = vand.u32 %v4844, 4294901760
    %v4846 = vsub.f32 %v4844, %v4845
    %v4847 = vand.u32 %v4846, 4294901760
    %4848 = vmatpush1.msra.mxu0 %v4847
    %4849 = vmatprep.subr.mxu0 0.0
    %v4850 = vand.u32 %v3151, 4294901760
    %v4851 = vsub.f32 %v3151, %v4850
    %v4852 = vand.u32 %v4851, 4294901760
    %v4853 = vsub.f32 %v4851, %v4852
    %v4854 = vand.u32 %v4853, 4294901760
    %4855 = vmatpush1.msra.mxu0 %v4854
    %4856 = vmatprep.subr.mxu0 0.0
    %v4857 = vand.u32 %v3152, 4294901760
    %v4858 = vsub.f32 %v3152, %v4857
    %v4859 = vand.u32 %v4858, 4294901760
    %v4860 = vsub.f32 %v4858, %v4859
    %v4861 = vand.u32 %v4860, 4294901760
    %4862 = vmatpush1.msra.mxu0 %v4861
    %4863 = vmatprep.subr.mxu0 0.0
    %v4864 = vand.u32 %v3153, 4294901760
    %v4865 = vsub.f32 %v3153, %v4864
    %v4866 = vand.u32 %v4865, 4294901760
    %v4867 = vsub.f32 %v4865, %v4866
    %v4868 = vand.u32 %v4867, 4294901760
    %4869 = vmatpush1.msra.mxu0 %v4868
    %4870 = vmatprep.subr.mxu0 0.0
    %v4871 = vand.u32 %v3154, 4294901760
    %v4872 = vsub.f32 %v3154, %v4871
    %v4873 = vand.u32 %v4872, 4294901760
    %v4874 = vsub.f32 %v4872, %v4873
    %v4875 = vand.u32 %v4874, 4294901760
    %4876 = vmatpush1.msra.mxu0 %v4875
    %4877 = vmatprep.subr.mxu0 0.0
    %v4878 = vand.u32 %v3155, 4294901760
    %v4879 = vsub.f32 %v3155, %v4878
    %v4880 = vand.u32 %v4879, 4294901760
    %v4881 = vsub.f32 %v4879, %v4880
    %v4882 = vand.u32 %v4881, 4294901760
    %4883 = vmatpush1.msra.mxu0 %v4882
    %4884 = vmatprep.subr.mxu0 0.0
    %v4885 = vand.u32 %v3156, 4294901760
    %v4886 = vsub.f32 %v3156, %v4885
    %v4887 = vand.u32 %v4886, 4294901760
    %v4888 = vsub.f32 %v4886, %v4887
    %v4889 = vand.u32 %v4888, 4294901760
    %4890 = vmatpush1.msra.mxu0 %v4889
    %4891 = vmatprep.subr.mxu0 0.0
    %v4892 = vand.u32 %v3157, 4294901760
    %v4893 = vsub.f32 %v3157, %v4892
    %v4894 = vand.u32 %v4893, 4294901760
    %v4895 = vsub.f32 %v4893, %v4894
    %v4896 = vand.u32 %v4895, 4294901760
    %4897 = vmatpush1.msra.mxu0 %v4896
    %4898 = vmatprep.subr.mxu0 0.0
    %v4899 = vand.u32 %v3158, 4294901760
    %v4900 = vsub.f32 %v3158, %v4899
    %v4901 = vand.u32 %v4900, 4294901760
    %v4902 = vsub.f32 %v4900, %v4901
    %v4903 = vand.u32 %v4902, 4294901760
    %4904 = vmatpush1.msra.mxu0 %v4903
    %4905 = vmatprep.subr.mxu0 0.0
    %v4906 = vand.u32 %v3159, 4294901760
    %v4907 = vsub.f32 %v3159, %v4906
    %v4908 = vand.u32 %v4907, 4294901760
    %v4909 = vsub.f32 %v4907, %v4908
    %v4910 = vand.u32 %v4909, 4294901760
    %4911 = vmatpush1.msra.mxu0 %v4910
    %4912 = vmatprep.subr.mxu0 0.0
    %v4913 = vand.u32 %v3160, 4294901760
    %v4914 = vsub.f32 %v3160, %v4913
    %v4915 = vand.u32 %v4914, 4294901760
    %v4916 = vsub.f32 %v4914, %v4915
    %v4917 = vand.u32 %v4916, 4294901760
    %4918 = vmatpush1.msra.mxu0 %v4917
    %4919 = vmatprep.subr.mxu0 0.0
    %v4920 = vand.u32 %v3161, 4294901760
    %v4921 = vsub.f32 %v3161, %v4920
    %v4922 = vand.u32 %v4921, 4294901760
    %v4923 = vsub.f32 %v4921, %v4922
    %v4924 = vand.u32 %v4923, 4294901760
    %4925 = vmatpush1.msra.mxu0 %v4924
    %4926 = vmatprep.subr.mxu0 0.0
    %v4927 = vand.u32 %v3162, 4294901760
    %v4928 = vsub.f32 %v3162, %v4927
    %v4929 = vand.u32 %v4928, 4294901760
    %v4930 = vsub.f32 %v4928, %v4929
    %v4931 = vand.u32 %v4930, 4294901760
    %4932 = vmatpush1.msra.mxu0 %v4931
    %4933 = vmatprep.subr.mxu0 0.0
    %v4934 = vand.u32 %v3163, 4294901760
    %v4935 = vsub.f32 %v3163, %v4934
    %v4936 = vand.u32 %v4935, 4294901760
    %v4937 = vsub.f32 %v4935, %v4936
    %v4938 = vand.u32 %v4937, 4294901760
    %4939 = vmatpush1.msra.mxu0 %v4938
    %4940 = vmatprep.subr.mxu0 0.0
    %v4941 = vand.u32 %v3164, 4294901760
    %v4942 = vsub.f32 %v3164, %v4941
    %v4943 = vand.u32 %v4942, 4294901760
    %v4944 = vsub.f32 %v4942, %v4943
    %v4945 = vand.u32 %v4944, 4294901760
    %4946 = vmatpush1.msra.mxu0 %v4945
    %4947 = vmatprep.subr.mxu0 0.0
    %v4948 = vand.u32 %v3165, 4294901760
    %v4949 = vsub.f32 %v3165, %v4948
    %v4950 = vand.u32 %v4949, 4294901760
    %v4951 = vsub.f32 %v4949, %v4950
    %v4952 = vand.u32 %v4951, 4294901760
    %4953 = vmatpush1.msra.mxu0 %v4952
    %4954 = vmatprep.subr.mxu0 0.0
    %v4955 = vand.u32 %v3166, 4294901760
    %v4956 = vsub.f32 %v3166, %v4955
    %v4957 = vand.u32 %v4956, 4294901760
    %v4958 = vsub.f32 %v4956, %v4957
    %v4959 = vand.u32 %v4958, 4294901760
    %4960 = vmatpush1.msra.mxu0 %v4959
    %4961 = vmatprep.subr.mxu0 0.0
    %v4962 = vand.u32 %v3167, 4294901760
    %v4963 = vsub.f32 %v3167, %v4962
    %v4964 = vand.u32 %v4963, 4294901760
    %v4965 = vsub.f32 %v4963, %v4964
    %v4966 = vand.u32 %v4965, 4294901760
    %4967 = vmatpush1.msra.mxu0 %v4966
    %4968 = vmatprep.subr.mxu0 0.0
    %v4969 = vand.u32 %v3168, 4294901760
    %v4970 = vsub.f32 %v3168, %v4969
    %v4971 = vand.u32 %v4970, 4294901760
    %v4972 = vsub.f32 %v4970, %v4971
    %v4973 = vand.u32 %v4972, 4294901760
    %4974 = vmatpush1.msra.mxu0 %v4973
    %4975 = vmatprep.subr.mxu0 0.0
    %v4976 = vand.u32 %v3169, 4294901760
    %v4977 = vsub.f32 %v3169, %v4976
    %v4978 = vand.u32 %v4977, 4294901760
    %v4979 = vsub.f32 %v4977, %v4978
    %v4980 = vand.u32 %v4979, 4294901760
    %4981 = vmatpush1.msra.mxu0 %v4980
    %4982 = vmatprep.subr.mxu0 0.0
    %v4983 = vand.u32 %v3170, 4294901760
    %v4984 = vsub.f32 %v3170, %v4983
    %v4985 = vand.u32 %v4984, 4294901760
    %v4986 = vsub.f32 %v4984, %v4985
    %v4987 = vand.u32 %v4986, 4294901760
    %4988 = vmatpush1.msra.mxu0 %v4987
    %4989 = vmatprep.subr.mxu0 0.0
    %v4990 = vand.u32 %v3171, 4294901760
    %v4991 = vsub.f32 %v3171, %v4990
    %v4992 = vand.u32 %v4991, 4294901760
    %v4993 = vsub.f32 %v4991, %v4992
    %v4994 = vand.u32 %v4993, 4294901760
    %4995 = vmatpush1.msra.mxu0 %v4994
    %4996 = vmatprep.subr.mxu0 0.0
    %v4997 = vand.u32 %v3172, 4294901760
    %v4998 = vsub.f32 %v3172, %v4997
    %v4999 = vand.u32 %v4998, 4294901760
    %v5000 = vsub.f32 %v4998, %v4999
    %v5001 = vand.u32 %v5000, 4294901760
    %5002 = vmatpush1.msra.mxu0 %v5001
    %5003 = vmatprep.subr.mxu0 0.0
    %v5004 = vand.u32 %v3173, 4294901760
    %v5005 = vsub.f32 %v3173, %v5004
    %v5006 = vand.u32 %v5005, 4294901760
    %v5007 = vsub.f32 %v5005, %v5006
    %v5008 = vand.u32 %v5007, 4294901760
    %5009 = vmatpush1.msra.mxu0 %v5008
    %5010 = vmatprep.subr.mxu0 0.0
    %v5011 = vand.u32 %v3174, 4294901760
    %v5012 = vsub.f32 %v3174, %v5011
    %v5013 = vand.u32 %v5012, 4294901760
    %v5014 = vsub.f32 %v5012, %v5013
    %v5015 = vand.u32 %v5014, 4294901760
    %5016 = vmatpush1.msra.mxu0 %v5015
    %5017 = vmatprep.subr.mxu0 0.0
    %v5018 = vand.u32 %v3175, 4294901760
    %v5019 = vsub.f32 %v3175, %v5018
    %v5020 = vand.u32 %v5019, 4294901760
    %v5021 = vsub.f32 %v5019, %v5020
    %v5022 = vand.u32 %v5021, 4294901760
    %5023 = vmatpush1.msra.mxu0 %v5022
    %5024 = vmatprep.subr.mxu0 0.0
    %v5025 = vand.u32 %v3176, 4294901760
    %v5026 = vsub.f32 %v3176, %v5025
    %v5027 = vand.u32 %v5026, 4294901760
    %v5028 = vsub.f32 %v5026, %v5027
    %v5029 = vand.u32 %v5028, 4294901760
    %5030 = vmatpush1.msra.mxu0 %v5029
    %v5031 = vand.u32 %v3129, 4294901760
    %5032 = vmatprep.mubr.f32.mxu0 %v5031
    %v5033 = vand.u32 %v4371, 4294901760
    %5034 = vmatmul.mubr.f32.gmra.mrb[0].mxu0 %v5033
    %v5035 = vpop.f32.mrb[0].mxu0
    %v5036 = vadd.f32 %v4579, %v5035
    %v5037 = vpop.f32.mrb[0].mxu0
    %v5038 = vand.u32 %v3130, 4294901760
    %5039 = vmatprep.mubr.f32.mxu0 %v5038
    %v5040 = vand.u32 %v4377, 4294901760
    %5041 = vmatmul.mubr.f32.gmra.mrb[0].mxu0 %v5040
    %v5042 = vpop.f32.mrb[0].mxu0
    %v5043 = vadd.f32 %v4594, %v5042
    %v5044 = vpop.f32.mrb[0].mxu0
    %v5045 = vand.u32 %v3131, 4294901760
    %5046 = vmatprep.mubr.f32.mxu0 %v5045
    %v5047 = vand.u32 %v4383, 4294901760
    %5048 = vmatmul.mubr.f32.gmra.mrb[0].mxu0 %v5047
    %v5049 = vpop.f32.mrb[0].mxu0
    %v5050 = vadd.f32 %v4609, %v5049
    %v5051 = vpop.f32.mrb[0].mxu0
    %v5052 = vand.u32 %v3132, 4294901760
    %5053 = vmatprep.mubr.f32.mxu0 %v5052
    %v5054 = vand.u32 %v4389, 4294901760
    %5055 = vmatmul.mubr.f32.gmra.mrb[0].mxu0 %v5054
    %v5056 = vpop.f32.mrb[0].mxu0
    %v5057 = vadd.f32 %v4624, %v5056
    %v5058 = vpop.f32.mrb[0].mxu0
    %v5059 = vand.u32 %v3133, 4294901760
    %5060 = vmatprep.mubr.f32.mxu0 %v5059
    %v5061 = vand.u32 %v4395, 4294901760
    %5062 = vmatmul.mubr.f32.gmra.mrb[0].mxu0 %v5061
    %v5063 = vpop.f32.mrb[0].mxu0
    %v5064 = vadd.f32 %v4639, %v5063
    %v5065 = vpop.f32.mrb[0].mxu0
    %v5066 = vand.u32 %v3134, 4294901760
    %5067 = vmatprep.mubr.f32.mxu0 %v5066
    %v5068 = vand.u32 %v4401, 4294901760
    %5069 = vmatmul.mubr.f32.gmra.mrb[0].mxu0 %v5068
    %v5070 = vpop.f32.mrb[0].mxu0
    %v5071 = vadd.f32 %v4654, %v5070
    %v5072 = vpop.f32.mrb[0].mxu0
    %v5073 = vand.u32 %v3135, 4294901760
    %5074 = vmatprep.mubr.f32.mxu0 %v5073
    %v5075 = vand.u32 %v4407, 4294901760
    %5076 = vmatmul.mubr.f32.gmra.mrb[0].mxu0 %v5075
    %v5077 = vpop.f32.mrb[0].mxu0
    %v5078 = vadd.f32 %v4669, %v5077
    %v5079 = vpop.f32.mrb[0].mxu0
    %v5080 = vand.u32 %v3136, 4294901760
    %5081 = vmatprep.mubr.f32.mxu0 %v5080
    %v5082 = vand.u32 %v4413, 4294901760
    %5083 = vmatmul.mubr.f32.gmra.mrb[0].mxu0 %v5082
    %v5084 = vpop.f32.mrb[0].mxu0
    %v5085 = vadd.f32 %v4684, %v5084
    %v5086 = vpop.f32.mrb[0].mxu0
    %v5087 = vand.u32 %v3137, 4294901760
    %5088 = vmatprep.mubr.f32.mxu0 %v5087
    %v5089 = vand.u32 %v4419, 4294901760
    %5090 = vmatmul.mubr.f32.gmra.mrb[0].mxu0 %v5089
    %v5091 = vpop.f32.mrb[0].mxu0
    %v5092 = vadd.f32 %v4699, %v5091
    %v5093 = vpop.f32.mrb[0].mxu0
    %v5094 = vand.u32 %v3138, 4294901760
    %5095 = vmatprep.mubr.f32.mxu0 %v5094
    %v5096 = vand.u32 %v4425, 4294901760
    %5097 = vmatmul.mubr.f32.gmra.mrb[0].mxu0 %v5096
    %v5098 = vpop.f32.mrb[0].mxu0
    %v5099 = vadd.f32 %v4714, %v5098
    %v5100 = vpop.f32.mrb[0].mxu0
    %v5101 = vand.u32 %v3139, 4294901760
    %5102 = vmatprep.mubr.f32.mxu0 %v5101
    %v5103 = vand.u32 %v4431, 4294901760
    %5104 = vmatmul.mubr.f32.gmra.mrb[0].mxu0 %v5103
    %v5105 = vpop.f32.mrb[0].mxu0
    %v5106 = vadd.f32 %v4729, %v5105
    %v5107 = vpop.f32.mrb[0].mxu0
    %v5108 = vand.u32 %v3140, 4294901760
    %5109 = vmatprep.mubr.f32.mxu0 %v5108
    %v5110 = vand.u32 %v4437, 4294901760
    %5111 = vmatmul.mubr.f32.gmra.mrb[0].mxu0 %v5110
    %v5112 = vpop.f32.mrb[0].mxu0
    %v5113 = vadd.f32 %v4744, %v5112
    %v5114 = vpop.f32.mrb[0].mxu0
    %v5115 = vand.u32 %v3141, 4294901760
    %5116 = vmatprep.mubr.f32.mxu0 %v5115
    %v5117 = vand.u32 %v4443, 4294901760
    %5118 = vmatmul.mubr.f32.gmra.mrb[0].mxu0 %v5117
    %v5119 = vpop.f32.mrb[0].mxu0
    %v5120 = vadd.f32 %v4759, %v5119
    %v5121 = vpop.f32.mrb[0].mxu0
    %v5122 = vand.u32 %v3142, 4294901760
    %5123 = vmatprep.mubr.f32.mxu0 %v5122
    %v5124 = vand.u32 %v4449, 4294901760
    %5125 = vmatmul.mubr.f32.gmra.mrb[0].mxu0 %v5124
    %v5126 = vpop.f32.mrb[0].mxu0
    %v5127 = vadd.f32 %v4774, %v5126
    %v5128 = vpop.f32.mrb[0].mxu0
    %v5129 = vand.u32 %v3143, 4294901760
    %5130 = vmatprep.mubr.f32.mxu0 %v5129
    %v5131 = vand.u32 %v4455, 4294901760
    %5132 = vmatmul.mubr.f32.gmra.mrb[0].mxu0 %v5131
    %v5133 = vpop.f32.mrb[0].mxu0
    %v5134 = vadd.f32 %v4789, %v5133
    %v5135 = vpop.f32.mrb[0].mxu0
    %v5136 = vand.u32 %v3144, 4294901760
    %5137 = vmatprep.mubr.f32.mxu0 %v5136
    %v5138 = vand.u32 %v4461, 4294901760
    %5139 = vmatmul.mubr.f32.gmra.mrb[0].mxu0 %v5138
    %v5140 = vpop.f32.mrb[0].mxu0
    %v5141 = vadd.f32 %v4804, %v5140
    %v5142 = vpop.f32.mrb[0].mxu0
    %5143 = vdwg.mxu0
    %5144 = vmatprep.subr.mxu0 0.0
    %v5145 = vand.u32 %v3145, 4294901760
    %v5146 = vsub.f32 %v3145, %v5145
    %5147 = vmatpush1.msra.mxu0 %v5146
    %5148 = vmatprep.subr.mxu0 0.0
    %v5149 = vand.u32 %v3146, 4294901760
    %v5150 = vsub.f32 %v3146, %v5149
    %5151 = vmatpush1.msra.mxu0 %v5150
    %5152 = vmatprep.subr.mxu0 0.0
    %v5153 = vand.u32 %v3147, 4294901760
    %v5154 = vsub.f32 %v3147, %v5153
    %5155 = vmatpush1.msra.mxu0 %v5154
    %5156 = vmatprep.subr.mxu0 0.0
    %v5157 = vand.u32 %v3148, 4294901760
    %v5158 = vsub.f32 %v3148, %v5157
    %5159 = vmatpush1.msra.mxu0 %v5158
    %5160 = vmatprep.subr.mxu0 0.0
    %v5161 = vand.u32 %v3149, 4294901760
    %v5162 = vsub.f32 %v3149, %v5161
    %5163 = vmatpush1.msra.mxu0 %v5162
    %5164 = vmatprep.subr.mxu0 0.0
    %v5165 = vand.u32 %v3150, 4294901760
    %v5166 = vsub.f32 %v3150, %v5165
    %5167 = vmatpush1.msra.mxu0 %v5166
    %5168 = vmatprep.subr.mxu0 0.0
    %v5169 = vand.u32 %v3151, 4294901760
    %v5170 = vsub.f32 %v3151, %v5169
    %5171 = vmatpush1.msra.mxu0 %v5170
    %5172 = vmatprep.subr.mxu0 0.0
    %v5173 = vand.u32 %v3152, 4294901760
    %v5174 = vsub.f32 %v3152, %v5173
    %5175 = vmatpush1.msra.mxu0 %v5174
    %5176 = vmatprep.subr.mxu0 0.0
    %v5177 = vand.u32 %v3153, 4294901760
    %v5178 = vsub.f32 %v3153, %v5177
    %5179 = vmatpush1.msra.mxu0 %v5178
    %5180 = vmatprep.subr.mxu0 0.0
    %v5181 = vand.u32 %v3154, 4294901760
    %v5182 = vsub.f32 %v3154, %v5181
    %5183 = vmatpush1.msra.mxu0 %v5182
    %5184 = vmatprep.subr.mxu0 0.0
    %v5185 = vand.u32 %v3155, 4294901760
    %v5186 = vsub.f32 %v3155, %v5185
    %5187 = vmatpush1.msra.mxu0 %v5186
    %5188 = vmatprep.subr.mxu0 0.0
    %v5189 = vand.u32 %v3156, 4294901760
    %v5190 = vsub.f32 %v3156, %v5189
    %5191 = vmatpush1.msra.mxu0 %v5190
    %5192 = vmatprep.subr.mxu0 0.0
    %v5193 = vand.u32 %v3157, 4294901760
    %v5194 = vsub.f32 %v3157, %v5193
    %5195 = vmatpush1.msra.mxu0 %v5194
    %5196 = vmatprep.subr.mxu0 0.0
    %v5197 = vand.u32 %v3158, 4294901760
    %v5198 = vsub.f32 %v3158, %v5197
    %5199 = vmatpush1.msra.mxu0 %v5198
    %5200 = vmatprep.subr.mxu0 0.0
    %v5201 = vand.u32 %v3159, 4294901760
    %v5202 = vsub.f32 %v3159, %v5201
    %5203 = vmatpush1.msra.mxu0 %v5202
    %5204 = vmatprep.subr.mxu0 0.0
    %v5205 = vand.u32 %v3160, 4294901760
    %v5206 = vsub.f32 %v3160, %v5205
    %5207 = vmatpush1.msra.mxu0 %v5206
    %5208 = vmatprep.subr.mxu0 0.0
    %v5209 = vand.u32 %v3161, 4294901760
    %v5210 = vsub.f32 %v3161, %v5209
    %5211 = vmatpush1.msra.mxu0 %v5210
    %5212 = vmatprep.subr.mxu0 0.0
    %v5213 = vand.u32 %v3162, 4294901760
    %v5214 = vsub.f32 %v3162, %v5213
    %5215 = vmatpush1.msra.mxu0 %v5214
    %5216 = vmatprep.subr.mxu0 0.0
    %v5217 = vand.u32 %v3163, 4294901760
    %v5218 = vsub.f32 %v3163, %v5217
    %5219 = vmatpush1.msra.mxu0 %v5218
    %5220 = vmatprep.subr.mxu0 0.0
    %v5221 = vand.u32 %v3164, 4294901760
    %v5222 = vsub.f32 %v3164, %v5221
    %5223 = vmatpush1.msra.mxu0 %v5222
    %5224 = vmatprep.subr.mxu0 0.0
    %v5225 = vand.u32 %v3165, 4294901760
    %v5226 = vsub.f32 %v3165, %v5225
    %5227 = vmatpush1.msra.mxu0 %v5226
    %5228 = vmatprep.subr.mxu0 0.0
    %v5229 = vand.u32 %v3166, 4294901760
    %v5230 = vsub.f32 %v3166, %v5229
    %5231 = vmatpush1.msra.mxu0 %v5230
    %5232 = vmatprep.subr.mxu0 0.0
    %v5233 = vand.u32 %v3167, 4294901760
    %v5234 = vsub.f32 %v3167, %v5233
    %5235 = vmatpush1.msra.mxu0 %v5234
    %5236 = vmatprep.subr.mxu0 0.0
    %v5237 = vand.u32 %v3168, 4294901760
    %v5238 = vsub.f32 %v3168, %v5237
    %5239 = vmatpush1.msra.mxu0 %v5238
    %5240 = vmatprep.subr.mxu0 0.0
    %v5241 = vand.u32 %v3169, 4294901760
    %v5242 = vsub.f32 %v3169, %v5241
    %5243 = vmatpush1.msra.mxu0 %v5242
    %5244 = vmatprep.subr.mxu0 0.0
    %v5245 = vand.u32 %v3170, 4294901760
    %v5246 = vsub.f32 %v3170, %v5245
    %5247 = vmatpush1.msra.mxu0 %v5246
    %5248 = vmatprep.subr.mxu0 0.0
    %v5249 = vand.u32 %v3171, 4294901760
    %v5250 = vsub.f32 %v3171, %v5249
    %5251 = vmatpush1.msra.mxu0 %v5250
    %5252 = vmatprep.subr.mxu0 0.0
    %v5253 = vand.u32 %v3172, 4294901760
    %v5254 = vsub.f32 %v3172, %v5253
    %5255 = vmatpush1.msra.mxu0 %v5254
    %5256 = vmatprep.subr.mxu0 0.0
    %v5257 = vand.u32 %v3173, 4294901760
    %v5258 = vsub.f32 %v3173, %v5257
    %5259 = vmatpush1.msra.mxu0 %v5258
    %5260 = vmatprep.subr.mxu0 0.0
    %v5261 = vand.u32 %v3174, 4294901760
    %v5262 = vsub.f32 %v3174, %v5261
    %5263 = vmatpush1.msra.mxu0 %v5262
    %5264 = vmatprep.subr.mxu0 0.0
    %v5265 = vand.u32 %v3175, 4294901760
    %v5266 = vsub.f32 %v3175, %v5265
    %5267 = vmatpush1.msra.mxu0 %v5266
    %5268 = vmatprep.subr.mxu0 0.0
    %v5269 = vand.u32 %v3176, 4294901760
    %v5270 = vsub.f32 %v3176, %v5269
    %5271 = vmatpush1.msra.mxu0 %v5270
    %v5272 = vand.u32 %v3129, 4294901760
    %v5273 = vsub.f32 %v3129, %v5272
    %5274 = vmatprep.mubr.f32.mxu0 %v5273
    %v5275 = vand.u32 %v4371, 4294901760
    %v5276 = vsub.f32 %v4371, %v5275
    %5277 = vmatmul.mubr.f32.gmra.mrb[0].mxu0 %v5276
    %v5278 = vpop.f32.mrb[0].mxu0
    %v5279 = vadd.f32 %v5036, %v5278
    %v5280 = vpop.f32.mrb[0].mxu0
    %v5281 = vand.u32 %v3130, 4294901760
    %v5282 = vsub.f32 %v3130, %v5281
    %5283 = vmatprep.mubr.f32.mxu0 %v5282
    %v5284 = vand.u32 %v4377, 4294901760
    %v5285 = vsub.f32 %v4377, %v5284
    %5286 = vmatmul.mubr.f32.gmra.mrb[0].mxu0 %v5285
    %v5287 = vpop.f32.mrb[0].mxu0
    %v5288 = vadd.f32 %v5043, %v5287
    %v5289 = vpop.f32.mrb[0].mxu0
    %v5290 = vand.u32 %v3131, 4294901760
    %v5291 = vsub.f32 %v3131, %v5290
    %5292 = vmatprep.mubr.f32.mxu0 %v5291
    %v5293 = vand.u32 %v4383, 4294901760
    %v5294 = vsub.f32 %v4383, %v5293
    %5295 = vmatmul.mubr.f32.gmra.mrb[0].mxu0 %v5294
    %v5296 = vpop.f32.mrb[0].mxu0
    %v5297 = vadd.f32 %v5050, %v5296
    %v5298 = vpop.f32.mrb[0].mxu0
    %v5299 = vand.u32 %v3132, 4294901760
    %v5300 = vsub.f32 %v3132, %v5299
    %5301 = vmatprep.mubr.f32.mxu0 %v5300
    %v5302 = vand.u32 %v4389, 4294901760
    %v5303 = vsub.f32 %v4389, %v5302
    %5304 = vmatmul.mubr.f32.gmra.mrb[0].mxu0 %v5303
    %v5305 = vpop.f32.mrb[0].mxu0
    %v5306 = vadd.f32 %v5057, %v5305
    %v5307 = vpop.f32.mrb[0].mxu0
    %v5308 = vand.u32 %v3133, 4294901760
    %v5309 = vsub.f32 %v3133, %v5308
    %5310 = vmatprep.mubr.f32.mxu0 %v5309
    %v5311 = vand.u32 %v4395, 4294901760
    %v5312 = vsub.f32 %v4395, %v5311
    %5313 = vmatmul.mubr.f32.gmra.mrb[0].mxu0 %v5312
    %v5314 = vpop.f32.mrb[0].mxu0
    %v5315 = vadd.f32 %v5064, %v5314
    %v5316 = vpop.f32.mrb[0].mxu0
    %v5317 = vand.u32 %v3134, 4294901760
    %v5318 = vsub.f32 %v3134, %v5317
    %5319 = vmatprep.mubr.f32.mxu0 %v5318
    %v5320 = vand.u32 %v4401, 4294901760
    %v5321 = vsub.f32 %v4401, %v5320
    %5322 = vmatmul.mubr.f32.gmra.mrb[0].mxu0 %v5321
    %v5323 = vpop.f32.mrb[0].mxu0
    %v5324 = vadd.f32 %v5071, %v5323
    %v5325 = vpop.f32.mrb[0].mxu0
    %v5326 = vand.u32 %v3135, 4294901760
    %v5327 = vsub.f32 %v3135, %v5326
    %5328 = vmatprep.mubr.f32.mxu0 %v5327
    %v5329 = vand.u32 %v4407, 4294901760
    %v5330 = vsub.f32 %v4407, %v5329
    %5331 = vmatmul.mubr.f32.gmra.mrb[0].mxu0 %v5330
    %v5332 = vpop.f32.mrb[0].mxu0
    %v5333 = vadd.f32 %v5078, %v5332
    %v5334 = vpop.f32.mrb[0].mxu0
    %v5335 = vand.u32 %v3136, 4294901760
    %v5336 = vsub.f32 %v3136, %v5335
    %5337 = vmatprep.mubr.f32.mxu0 %v5336
    %v5338 = vand.u32 %v4413, 4294901760
    %v5339 = vsub.f32 %v4413, %v5338
    %5340 = vmatmul.mubr.f32.gmra.mrb[0].mxu0 %v5339
    %v5341 = vpop.f32.mrb[0].mxu0
    %v5342 = vadd.f32 %v5085, %v5341
    %v5343 = vpop.f32.mrb[0].mxu0
    %v5344 = vand.u32 %v3137, 4294901760
    %v5345 = vsub.f32 %v3137, %v5344
    %5346 = vmatprep.mubr.f32.mxu0 %v5345
    %v5347 = vand.u32 %v4419, 4294901760
    %v5348 = vsub.f32 %v4419, %v5347
    %5349 = vmatmul.mubr.f32.gmra.mrb[0].mxu0 %v5348
    %v5350 = vpop.f32.mrb[0].mxu0
    %v5351 = vadd.f32 %v5092, %v5350
    %v5352 = vpop.f32.mrb[0].mxu0
    %v5353 = vand.u32 %v3138, 4294901760
    %v5354 = vsub.f32 %v3138, %v5353
    %5355 = vmatprep.mubr.f32.mxu0 %v5354
    %v5356 = vand.u32 %v4425, 4294901760
    %v5357 = vsub.f32 %v4425, %v5356
    %5358 = vmatmul.mubr.f32.gmra.mrb[0].mxu0 %v5357
    %v5359 = vpop.f32.mrb[0].mxu0
    %v5360 = vadd.f32 %v5099, %v5359
    %v5361 = vpop.f32.mrb[0].mxu0
    %v5362 = vand.u32 %v3139, 4294901760
    %v5363 = vsub.f32 %v3139, %v5362
    %5364 = vmatprep.mubr.f32.mxu0 %v5363
    %v5365 = vand.u32 %v4431, 4294901760
    %v5366 = vsub.f32 %v4431, %v5365
    %5367 = vmatmul.mubr.f32.gmra.mrb[0].mxu0 %v5366
    %v5368 = vpop.f32.mrb[0].mxu0
    %v5369 = vadd.f32 %v5106, %v5368
    %v5370 = vpop.f32.mrb[0].mxu0
    %v5371 = vand.u32 %v3140, 4294901760
    %v5372 = vsub.f32 %v3140, %v5371
    %5373 = vmatprep.mubr.f32.mxu0 %v5372
    %v5374 = vand.u32 %v4437, 4294901760
    %v5375 = vsub.f32 %v4437, %v5374
    %5376 = vmatmul.mubr.f32.gmra.mrb[0].mxu0 %v5375
    %v5377 = vpop.f32.mrb[0].mxu0
    %v5378 = vadd.f32 %v5113, %v5377
    %v5379 = vpop.f32.mrb[0].mxu0
    %v5380 = vand.u32 %v3141, 4294901760
    %v5381 = vsub.f32 %v3141, %v5380
    %5382 = vmatprep.mubr.f32.mxu0 %v5381
    %v5383 = vand.u32 %v4443, 4294901760
    %v5384 = vsub.f32 %v4443, %v5383
    %5385 = vmatmul.mubr.f32.gmra.mrb[0].mxu0 %v5384
    %v5386 = vpop.f32.mrb[0].mxu0
    %v5387 = vadd.f32 %v5120, %v5386
    %v5388 = vpop.f32.mrb[0].mxu0
    %v5389 = vand.u32 %v3142, 4294901760
    %v5390 = vsub.f32 %v3142, %v5389
    %5391 = vmatprep.mubr.f32.mxu0 %v5390
    %v5392 = vand.u32 %v4449, 4294901760
    %v5393 = vsub.f32 %v4449, %v5392
    %5394 = vmatmul.mubr.f32.gmra.mrb[0].mxu0 %v5393
    %v5395 = vpop.f32.mrb[0].mxu0
    %v5396 = vadd.f32 %v5127, %v5395
    %v5397 = vpop.f32.mrb[0].mxu0
    %v5398 = vand.u32 %v3143, 4294901760
    %v5399 = vsub.f32 %v3143, %v5398
    %5400 = vmatprep.mubr.f32.mxu0 %v5399
    %v5401 = vand.u32 %v4455, 4294901760
    %v5402 = vsub.f32 %v4455, %v5401
    %5403 = vmatmul.mubr.f32.gmra.mrb[0].mxu0 %v5402
    %v5404 = vpop.f32.mrb[0].mxu0
    %v5405 = vadd.f32 %v5134, %v5404
    %v5406 = vpop.f32.mrb[0].mxu0
    %v5407 = vand.u32 %v3144, 4294901760
    %v5408 = vsub.f32 %v3144, %v5407
    %5409 = vmatprep.mubr.f32.mxu0 %v5408
    %v5410 = vand.u32 %v4461, 4294901760
    %v5411 = vsub.f32 %v4461, %v5410
    %5412 = vmatmul.mubr.f32.gmra.mrb[0].mxu0 %v5411
    %v5413 = vpop.f32.mrb[0].mxu0
    %v5414 = vadd.f32 %v5141, %v5413
    %v5415 = vpop.f32.mrb[0].mxu0
    %5416 = vdwg.mxu0
    %5417 = vmatprep.subr.mxu0 0.0
    %v5418 = vand.u32 %v3145, 4294901760
    %5419 = vmatpush1.msra.mxu0 %v5418
    %5420 = vmatprep.subr.mxu0 0.0
    %v5421 = vand.u32 %v3146, 4294901760
    %5422 = vmatpush1.msra.mxu0 %v5421
    %5423 = vmatprep.subr.mxu0 0.0
    %v5424 = vand.u32 %v3147, 4294901760
    %5425 = vmatpush1.msra.mxu0 %v5424
    %5426 = vmatprep.subr.mxu0 0.0
    %v5427 = vand.u32 %v3148, 4294901760
    %5428 = vmatpush1.msra.mxu0 %v5427
    %5429 = vmatprep.subr.mxu0 0.0
    %v5430 = vand.u32 %v3149, 4294901760
    %5431 = vmatpush1.msra.mxu0 %v5430
    %5432 = vmatprep.subr.mxu0 0.0
    %v5433 = vand.u32 %v3150, 4294901760
    %5434 = vmatpush1.msra.mxu0 %v5433
    %5435 = vmatprep.subr.mxu0 0.0
    %v5436 = vand.u32 %v3151, 4294901760
    %5437 = vmatpush1.msra.mxu0 %v5436
    %5438 = vmatprep.subr.mxu0 0.0
    %v5439 = vand.u32 %v3152, 4294901760
    %5440 = vmatpush1.msra.mxu0 %v5439
    %5441 = vmatprep.subr.mxu0 0.0
    %v5442 = vand.u32 %v3153, 4294901760
    %5443 = vmatpush1.msra.mxu0 %v5442
    %5444 = vmatprep.subr.mxu0 0.0
    %v5445 = vand.u32 %v3154, 4294901760
    %5446 = vmatpush1.msra.mxu0 %v5445
    %5447 = vmatprep.subr.mxu0 0.0
    %v5448 = vand.u32 %v3155, 4294901760
    %5449 = vmatpush1.msra.mxu0 %v5448
    %5450 = vmatprep.subr.mxu0 0.0
    %v5451 = vand.u32 %v3156, 4294901760
    %5452 = vmatpush1.msra.mxu0 %v5451
    %5453 = vmatprep.subr.mxu0 0.0
    %v5454 = vand.u32 %v3157, 4294901760
    %5455 = vmatpush1.msra.mxu0 %v5454
    %5456 = vmatprep.subr.mxu0 0.0
    %v5457 = vand.u32 %v3158, 4294901760
    %5458 = vmatpush1.msra.mxu0 %v5457
    %5459 = vmatprep.subr.mxu0 0.0
    %v5460 = vand.u32 %v3159, 4294901760
    %5461 = vmatpush1.msra.mxu0 %v5460
    %5462 = vmatprep.subr.mxu0 0.0
    %v5463 = vand.u32 %v3160, 4294901760
    %5464 = vmatpush1.msra.mxu0 %v5463
    %5465 = vmatprep.subr.mxu0 0.0
    %v5466 = vand.u32 %v3161, 4294901760
    %5467 = vmatpush1.msra.mxu0 %v5466
    %5468 = vmatprep.subr.mxu0 0.0
    %v5469 = vand.u32 %v3162, 4294901760
    %5470 = vmatpush1.msra.mxu0 %v5469
    %5471 = vmatprep.subr.mxu0 0.0
    %v5472 = vand.u32 %v3163, 4294901760
    %5473 = vmatpush1.msra.mxu0 %v5472
    %5474 = vmatprep.subr.mxu0 0.0
    %v5475 = vand.u32 %v3164, 4294901760
    %5476 = vmatpush1.msra.mxu0 %v5475
    %5477 = vmatprep.subr.mxu0 0.0
    %v5478 = vand.u32 %v3165, 4294901760
    %5479 = vmatpush1.msra.mxu0 %v5478
    %5480 = vmatprep.subr.mxu0 0.0
    %v5481 = vand.u32 %v3166, 4294901760
    %5482 = vmatpush1.msra.mxu0 %v5481
    %5483 = vmatprep.subr.mxu0 0.0
    %v5484 = vand.u32 %v3167, 4294901760
    %5485 = vmatpush1.msra.mxu0 %v5484
    %5486 = vmatprep.subr.mxu0 0.0
    %v5487 = vand.u32 %v3168, 4294901760
    %5488 = vmatpush1.msra.mxu0 %v5487
    %5489 = vmatprep.subr.mxu0 0.0
    %v5490 = vand.u32 %v3169, 4294901760
    %5491 = vmatpush1.msra.mxu0 %v5490
    %5492 = vmatprep.subr.mxu0 0.0
    %v5493 = vand.u32 %v3170, 4294901760
    %5494 = vmatpush1.msra.mxu0 %v5493
    %5495 = vmatprep.subr.mxu0 0.0
    %v5496 = vand.u32 %v3171, 4294901760
    %5497 = vmatpush1.msra.mxu0 %v5496
    %5498 = vmatprep.subr.mxu0 0.0
    %v5499 = vand.u32 %v3172, 4294901760
    %5500 = vmatpush1.msra.mxu0 %v5499
    %5501 = vmatprep.subr.mxu0 0.0
    %v5502 = vand.u32 %v3173, 4294901760
    %5503 = vmatpush1.msra.mxu0 %v5502
    %5504 = vmatprep.subr.mxu0 0.0
    %v5505 = vand.u32 %v3174, 4294901760
    %5506 = vmatpush1.msra.mxu0 %v5505
    %5507 = vmatprep.subr.mxu0 0.0
    %v5508 = vand.u32 %v3175, 4294901760
    %5509 = vmatpush1.msra.mxu0 %v5508
    %5510 = vmatprep.subr.mxu0 0.0
    %v5511 = vand.u32 %v3176, 4294901760
    %5512 = vmatpush1.msra.mxu0 %v5511
    %v5513 = vand.u32 %v3129, 4294901760
    %v5514 = vsub.f32 %v3129, %v5513
    %v5515 = vand.u32 %v5514, 4294901760
    %5516 = vmatprep.mubr.f32.mxu0 %v5515
    %v5517 = vand.u32 %v4371, 4294901760
    %v5518 = vsub.f32 %v4371, %v5517
    %v5519 = vand.u32 %v5518, 4294901760
    %5520 = vmatmul.mubr.f32.gmra.mrb[0].mxu0 %v5519
    %v5521 = vpop.f32.mrb[0].mxu0
    %v5522 = vadd.f32 %v5279, %v5521
    %v5523 = vpop.f32.mrb[0].mxu0
    %v5524 = vand.u32 %v3130, 4294901760
    %v5525 = vsub.f32 %v3130, %v5524
    %v5526 = vand.u32 %v5525, 4294901760
    %5527 = vmatprep.mubr.f32.mxu0 %v5526
    %v5528 = vand.u32 %v4377, 4294901760
    %v5529 = vsub.f32 %v4377, %v5528
    %v5530 = vand.u32 %v5529, 4294901760
    %5531 = vmatmul.mubr.f32.gmra.mrb[0].mxu0 %v5530
    %v5532 = vpop.f32.mrb[0].mxu0
    %v5533 = vadd.f32 %v5288, %v5532
    %v5534 = vpop.f32.mrb[0].mxu0
    %v5535 = vand.u32 %v3131, 4294901760
    %v5536 = vsub.f32 %v3131, %v5535
    %v5537 = vand.u32 %v5536, 4294901760
    %5538 = vmatprep.mubr.f32.mxu0 %v5537
    %v5539 = vand.u32 %v4383, 4294901760
    %v5540 = vsub.f32 %v4383, %v5539
    %v5541 = vand.u32 %v5540, 4294901760
    %5542 = vmatmul.mubr.f32.gmra.mrb[0].mxu0 %v5541
    %v5543 = vpop.f32.mrb[0].mxu0
    %v5544 = vadd.f32 %v5297, %v5543
    %v5545 = vpop.f32.mrb[0].mxu0
    %v5546 = vand.u32 %v3132, 4294901760
    %v5547 = vsub.f32 %v3132, %v5546
    %v5548 = vand.u32 %v5547, 4294901760
    %5549 = vmatprep.mubr.f32.mxu0 %v5548
    %v5550 = vand.u32 %v4389, 4294901760
    %v5551 = vsub.f32 %v4389, %v5550
    %v5552 = vand.u32 %v5551, 4294901760
    %5553 = vmatmul.mubr.f32.gmra.mrb[0].mxu0 %v5552
    %v5554 = vpop.f32.mrb[0].mxu0
    %v5555 = vadd.f32 %v5306, %v5554
    %v5556 = vpop.f32.mrb[0].mxu0
    %v5557 = vand.u32 %v3133, 4294901760
    %v5558 = vsub.f32 %v3133, %v5557
    %v5559 = vand.u32 %v5558, 4294901760
    %5560 = vmatprep.mubr.f32.mxu0 %v5559
    %v5561 = vand.u32 %v4395, 4294901760
    %v5562 = vsub.f32 %v4395, %v5561
    %v5563 = vand.u32 %v5562, 4294901760
    %5564 = vmatmul.mubr.f32.gmra.mrb[0].mxu0 %v5563
    %v5565 = vpop.f32.mrb[0].mxu0
    %v5566 = vadd.f32 %v5315, %v5565
    %v5567 = vpop.f32.mrb[0].mxu0
    %v5568 = vand.u32 %v3134, 4294901760
    %v5569 = vsub.f32 %v3134, %v5568
    %v5570 = vand.u32 %v5569, 4294901760
    %5571 = vmatprep.mubr.f32.mxu0 %v5570
    %v5572 = vand.u32 %v4401, 4294901760
    %v5573 = vsub.f32 %v4401, %v5572
    %v5574 = vand.u32 %v5573, 4294901760
    %5575 = vmatmul.mubr.f32.gmra.mrb[0].mxu0 %v5574
    %v5576 = vpop.f32.mrb[0].mxu0
    %v5577 = vadd.f32 %v5324, %v5576
    %v5578 = vpop.f32.mrb[0].mxu0
    %v5579 = vand.u32 %v3135, 4294901760
    %v5580 = vsub.f32 %v3135, %v5579
    %v5581 = vand.u32 %v5580, 4294901760
    %5582 = vmatprep.mubr.f32.mxu0 %v5581
    %v5583 = vand.u32 %v4407, 4294901760
    %v5584 = vsub.f32 %v4407, %v5583
    %v5585 = vand.u32 %v5584, 4294901760
    %5586 = vmatmul.mubr.f32.gmra.mrb[0].mxu0 %v5585
    %v5587 = vpop.f32.mrb[0].mxu0
    %v5588 = vadd.f32 %v5333, %v5587
    %v5589 = vpop.f32.mrb[0].mxu0
    %v5590 = vand.u32 %v3136, 4294901760
    %v5591 = vsub.f32 %v3136, %v5590
    %v5592 = vand.u32 %v5591, 4294901760
    %5593 = vmatprep.mubr.f32.mxu0 %v5592
    %v5594 = vand.u32 %v4413, 4294901760
    %v5595 = vsub.f32 %v4413, %v5594
    %v5596 = vand.u32 %v5595, 4294901760
    %5597 = vmatmul.mubr.f32.gmra.mrb[0].mxu0 %v5596
    %v5598 = vpop.f32.mrb[0].mxu0
    %v5599 = vadd.f32 %v5342, %v5598
    %v5600 = vpop.f32.mrb[0].mxu0
    %v5601 = vand.u32 %v3137, 4294901760
    %v5602 = vsub.f32 %v3137, %v5601
    %v5603 = vand.u32 %v5602, 4294901760
    %5604 = vmatprep.mubr.f32.mxu0 %v5603
    %v5605 = vand.u32 %v4419, 4294901760
    %v5606 = vsub.f32 %v4419, %v5605
    %v5607 = vand.u32 %v5606, 4294901760
    %5608 = vmatmul.mubr.f32.gmra.mrb[0].mxu0 %v5607
    %v5609 = vpop.f32.mrb[0].mxu0
    %v5610 = vadd.f32 %v5351, %v5609
    %v5611 = vpop.f32.mrb[0].mxu0
    %v5612 = vand.u32 %v3138, 4294901760
    %v5613 = vsub.f32 %v3138, %v5612
    %v5614 = vand.u32 %v5613, 4294901760
    %5615 = vmatprep.mubr.f32.mxu0 %v5614
    %v5616 = vand.u32 %v4425, 4294901760
    %v5617 = vsub.f32 %v4425, %v5616
    %v5618 = vand.u32 %v5617, 4294901760
    %5619 = vmatmul.mubr.f32.gmra.mrb[0].mxu0 %v5618
    %v5620 = vpop.f32.mrb[0].mxu0
    %v5621 = vadd.f32 %v5360, %v5620
    %v5622 = vpop.f32.mrb[0].mxu0
    %v5623 = vand.u32 %v3139, 4294901760
    %v5624 = vsub.f32 %v3139, %v5623
    %v5625 = vand.u32 %v5624, 4294901760
    %5626 = vmatprep.mubr.f32.mxu0 %v5625
    %v5627 = vand.u32 %v4431, 4294901760
    %v5628 = vsub.f32 %v4431, %v5627
    %v5629 = vand.u32 %v5628, 4294901760
    %5630 = vmatmul.mubr.f32.gmra.mrb[0].mxu0 %v5629
    %v5631 = vpop.f32.mrb[0].mxu0
    %v5632 = vadd.f32 %v5369, %v5631
    %v5633 = vpop.f32.mrb[0].mxu0
    %v5634 = vand.u32 %v3140, 4294901760
    %v5635 = vsub.f32 %v3140, %v5634
    %v5636 = vand.u32 %v5635, 4294901760
    %5637 = vmatprep.mubr.f32.mxu0 %v5636
    %v5638 = vand.u32 %v4437, 4294901760
    %v5639 = vsub.f32 %v4437, %v5638
    %v5640 = vand.u32 %v5639, 4294901760
    %5641 = vmatmul.mubr.f32.gmra.mrb[0].mxu0 %v5640
    %v5642 = vpop.f32.mrb[0].mxu0
    %v5643 = vadd.f32 %v5378, %v5642
    %v5644 = vpop.f32.mrb[0].mxu0
    %v5645 = vand.u32 %v3141, 4294901760
    %v5646 = vsub.f32 %v3141, %v5645
    %v5647 = vand.u32 %v5646, 4294901760
    %5648 = vmatprep.mubr.f32.mxu0 %v5647
    %v5649 = vand.u32 %v4443, 4294901760
    %v5650 = vsub.f32 %v4443, %v5649
    %v5651 = vand.u32 %v5650, 4294901760
    %5652 = vmatmul.mubr.f32.gmra.mrb[0].mxu0 %v5651
    %v5653 = vpop.f32.mrb[0].mxu0
    %v5654 = vadd.f32 %v5387, %v5653
    %v5655 = vpop.f32.mrb[0].mxu0
    %v5656 = vand.u32 %v3142, 4294901760
    %v5657 = vsub.f32 %v3142, %v5656
    %v5658 = vand.u32 %v5657, 4294901760
    %5659 = vmatprep.mubr.f32.mxu0 %v5658
    %v5660 = vand.u32 %v4449, 4294901760
    %v5661 = vsub.f32 %v4449, %v5660
    %v5662 = vand.u32 %v5661, 4294901760
    %5663 = vmatmul.mubr.f32.gmra.mrb[0].mxu0 %v5662
    %v5664 = vpop.f32.mrb[0].mxu0
    %v5665 = vadd.f32 %v5396, %v5664
    %v5666 = vpop.f32.mrb[0].mxu0
    %v5667 = vand.u32 %v3143, 4294901760
    %v5668 = vsub.f32 %v3143, %v5667
    %v5669 = vand.u32 %v5668, 4294901760
    %5670 = vmatprep.mubr.f32.mxu0 %v5669
    %v5671 = vand.u32 %v4455, 4294901760
    %v5672 = vsub.f32 %v4455, %v5671
    %v5673 = vand.u32 %v5672, 4294901760
    %5674 = vmatmul.mubr.f32.gmra.mrb[0].mxu0 %v5673
    %v5675 = vpop.f32.mrb[0].mxu0
    %v5676 = vadd.f32 %v5405, %v5675
    %v5677 = vpop.f32.mrb[0].mxu0
    %v5678 = vand.u32 %v3144, 4294901760
    %v5679 = vsub.f32 %v3144, %v5678
    %v5680 = vand.u32 %v5679, 4294901760
    %5681 = vmatprep.mubr.f32.mxu0 %v5680
    %v5682 = vand.u32 %v4461, 4294901760
    %v5683 = vsub.f32 %v4461, %v5682
    %v5684 = vand.u32 %v5683, 4294901760
    %5685 = vmatmul.mubr.f32.gmra.mrb[0].mxu0 %v5684
    %v5686 = vpop.f32.mrb[0].mxu0
    %v5687 = vadd.f32 %v5414, %v5686
    %v5688 = vpop.f32.mrb[0].mxu0
    %5689 = vdwg.mxu0
    %5690 = vmatprep.subr.mxu0 0.0
    %v5691 = vand.u32 %v3145, 4294901760
    %v5692 = vsub.f32 %v3145, %v5691
    %v5693 = vand.u32 %v5692, 4294901760
    %5694 = vmatpush1.msra.mxu0 %v5693
    %5695 = vmatprep.subr.mxu0 0.0
    %v5696 = vand.u32 %v3146, 4294901760
    %v5697 = vsub.f32 %v3146, %v5696
    %v5698 = vand.u32 %v5697, 4294901760
    %5699 = vmatpush1.msra.mxu0 %v5698
    %5700 = vmatprep.subr.mxu0 0.0
    %v5701 = vand.u32 %v3147, 4294901760
    %v5702 = vsub.f32 %v3147, %v5701
    %v5703 = vand.u32 %v5702, 4294901760
    %5704 = vmatpush1.msra.mxu0 %v5703
    %5705 = vmatprep.subr.mxu0 0.0
    %v5706 = vand.u32 %v3148, 4294901760
    %v5707 = vsub.f32 %v3148, %v5706
    %v5708 = vand.u32 %v5707, 4294901760
    %5709 = vmatpush1.msra.mxu0 %v5708
    %5710 = vmatprep.subr.mxu0 0.0
    %v5711 = vand.u32 %v3149, 4294901760
    %v5712 = vsub.f32 %v3149, %v5711
    %v5713 = vand.u32 %v5712, 4294901760
    %5714 = vmatpush1.msra.mxu0 %v5713
    %5715 = vmatprep.subr.mxu0 0.0
    %v5716 = vand.u32 %v3150, 4294901760
    %v5717 = vsub.f32 %v3150, %v5716
    %v5718 = vand.u32 %v5717, 4294901760
    %5719 = vmatpush1.msra.mxu0 %v5718
    %5720 = vmatprep.subr.mxu0 0.0
    %v5721 = vand.u32 %v3151, 4294901760
    %v5722 = vsub.f32 %v3151, %v5721
    %v5723 = vand.u32 %v5722, 4294901760
    %5724 = vmatpush1.msra.mxu0 %v5723
    %5725 = vmatprep.subr.mxu0 0.0
    %v5726 = vand.u32 %v3152, 4294901760
    %v5727 = vsub.f32 %v3152, %v5726
    %v5728 = vand.u32 %v5727, 4294901760
    %5729 = vmatpush1.msra.mxu0 %v5728
    %5730 = vmatprep.subr.mxu0 0.0
    %v5731 = vand.u32 %v3153, 4294901760
    %v5732 = vsub.f32 %v3153, %v5731
    %v5733 = vand.u32 %v5732, 4294901760
    %5734 = vmatpush1.msra.mxu0 %v5733
    %5735 = vmatprep.subr.mxu0 0.0
    %v5736 = vand.u32 %v3154, 4294901760
    %v5737 = vsub.f32 %v3154, %v5736
    %v5738 = vand.u32 %v5737, 4294901760
    %5739 = vmatpush1.msra.mxu0 %v5738
    %5740 = vmatprep.subr.mxu0 0.0
    %v5741 = vand.u32 %v3155, 4294901760
    %v5742 = vsub.f32 %v3155, %v5741
    %v5743 = vand.u32 %v5742, 4294901760
    %5744 = vmatpush1.msra.mxu0 %v5743
    %5745 = vmatprep.subr.mxu0 0.0
    %v5746 = vand.u32 %v3156, 4294901760
    %v5747 = vsub.f32 %v3156, %v5746
    %v5748 = vand.u32 %v5747, 4294901760
    %5749 = vmatpush1.msra.mxu0 %v5748
    %5750 = vmatprep.subr.mxu0 0.0
    %v5751 = vand.u32 %v3157, 4294901760
    %v5752 = vsub.f32 %v3157, %v5751
    %v5753 = vand.u32 %v5752, 4294901760
    %5754 = vmatpush1.msra.mxu0 %v5753
    %5755 = vmatprep.subr.mxu0 0.0
    %v5756 = vand.u32 %v3158, 4294901760
    %v5757 = vsub.f32 %v3158, %v5756
    %v5758 = vand.u32 %v5757, 4294901760
    %5759 = vmatpush1.msra.mxu0 %v5758
    %5760 = vmatprep.subr.mxu0 0.0
    %v5761 = vand.u32 %v3159, 4294901760
    %v5762 = vsub.f32 %v3159, %v5761
    %v5763 = vand.u32 %v5762, 4294901760
    %5764 = vmatpush1.msra.mxu0 %v5763
    %5765 = vmatprep.subr.mxu0 0.0
    %v5766 = vand.u32 %v3160, 4294901760
    %v5767 = vsub.f32 %v3160, %v5766
    %v5768 = vand.u32 %v5767, 4294901760
    %5769 = vmatpush1.msra.mxu0 %v5768
    %5770 = vmatprep.subr.mxu0 0.0
    %v5771 = vand.u32 %v3161, 4294901760
    %v5772 = vsub.f32 %v3161, %v5771
    %v5773 = vand.u32 %v5772, 4294901760
    %5774 = vmatpush1.msra.mxu0 %v5773
    %5775 = vmatprep.subr.mxu0 0.0
    %v5776 = vand.u32 %v3162, 4294901760
    %v5777 = vsub.f32 %v3162, %v5776
    %v5778 = vand.u32 %v5777, 4294901760
    %5779 = vmatpush1.msra.mxu0 %v5778
    %5780 = vmatprep.subr.mxu0 0.0
    %v5781 = vand.u32 %v3163, 4294901760
    %v5782 = vsub.f32 %v3163, %v5781
    %v5783 = vand.u32 %v5782, 4294901760
    %5784 = vmatpush1.msra.mxu0 %v5783
    %5785 = vmatprep.subr.mxu0 0.0
    %v5786 = vand.u32 %v3164, 4294901760
    %v5787 = vsub.f32 %v3164, %v5786
    %v5788 = vand.u32 %v5787, 4294901760
    %5789 = vmatpush1.msra.mxu0 %v5788
    %5790 = vmatprep.subr.mxu0 0.0
    %v5791 = vand.u32 %v3165, 4294901760
    %v5792 = vsub.f32 %v3165, %v5791
    %v5793 = vand.u32 %v5792, 4294901760
    %5794 = vmatpush1.msra.mxu0 %v5793
    %5795 = vmatprep.subr.mxu0 0.0
    %v5796 = vand.u32 %v3166, 4294901760
    %v5797 = vsub.f32 %v3166, %v5796
    %v5798 = vand.u32 %v5797, 4294901760
    %5799 = vmatpush1.msra.mxu0 %v5798
    %5800 = vmatprep.subr.mxu0 0.0
    %v5801 = vand.u32 %v3167, 4294901760
    %v5802 = vsub.f32 %v3167, %v5801
    %v5803 = vand.u32 %v5802, 4294901760
    %5804 = vmatpush1.msra.mxu0 %v5803
    %5805 = vmatprep.subr.mxu0 0.0
    %v5806 = vand.u32 %v3168, 4294901760
    %v5807 = vsub.f32 %v3168, %v5806
    %v5808 = vand.u32 %v5807, 4294901760
    %5809 = vmatpush1.msra.mxu0 %v5808
    %5810 = vmatprep.subr.mxu0 0.0
    %v5811 = vand.u32 %v3169, 4294901760
    %v5812 = vsub.f32 %v3169, %v5811
    %v5813 = vand.u32 %v5812, 4294901760
    %5814 = vmatpush1.msra.mxu0 %v5813
    %5815 = vmatprep.subr.mxu0 0.0
    %v5816 = vand.u32 %v3170, 4294901760
    %v5817 = vsub.f32 %v3170, %v5816
    %v5818 = vand.u32 %v5817, 4294901760
    %5819 = vmatpush1.msra.mxu0 %v5818
    %5820 = vmatprep.subr.mxu0 0.0
    %v5821 = vand.u32 %v3171, 4294901760
    %v5822 = vsub.f32 %v3171, %v5821
    %v5823 = vand.u32 %v5822, 4294901760
    %5824 = vmatpush1.msra.mxu0 %v5823
    %5825 = vmatprep.subr.mxu0 0.0
    %v5826 = vand.u32 %v3172, 4294901760
    %v5827 = vsub.f32 %v3172, %v5826
    %v5828 = vand.u32 %v5827, 4294901760
    %5829 = vmatpush1.msra.mxu0 %v5828
    %5830 = vmatprep.subr.mxu0 0.0
    %v5831 = vand.u32 %v3173, 4294901760
    %v5832 = vsub.f32 %v3173, %v5831
    %v5833 = vand.u32 %v5832, 4294901760
    %5834 = vmatpush1.msra.mxu0 %v5833
    %5835 = vmatprep.subr.mxu0 0.0
    %v5836 = vand.u32 %v3174, 4294901760
    %v5837 = vsub.f32 %v3174, %v5836
    %v5838 = vand.u32 %v5837, 4294901760
    %5839 = vmatpush1.msra.mxu0 %v5838
    %5840 = vmatprep.subr.mxu0 0.0
    %v5841 = vand.u32 %v3175, 4294901760
    %v5842 = vsub.f32 %v3175, %v5841
    %v5843 = vand.u32 %v5842, 4294901760
    %5844 = vmatpush1.msra.mxu0 %v5843
    %5845 = vmatprep.subr.mxu0 0.0
    %v5846 = vand.u32 %v3176, 4294901760
    %v5847 = vsub.f32 %v3176, %v5846
    %v5848 = vand.u32 %v5847, 4294901760
    %5849 = vmatpush1.msra.mxu0 %v5848
    %v5850 = vand.u32 %v3129, 4294901760
    %5851 = vmatprep.mubr.f32.mxu0 %v5850
    %v5852 = vand.u32 %v4371, 4294901760
    %5853 = vmatmul.mubr.f32.gmra.mrb[0].mxu0 %v5852
    %v5854 = vpop.f32.mrb[0].mxu0
    %v5855 = vadd.f32 %v5522, %v5854
    %v5856 = vpop.f32.mrb[0].mxu0
    %v5857 = vand.u32 %v3130, 4294901760
    %5858 = vmatprep.mubr.f32.mxu0 %v5857
    %v5859 = vand.u32 %v4377, 4294901760
    %5860 = vmatmul.mubr.f32.gmra.mrb[0].mxu0 %v5859
    %v5861 = vpop.f32.mrb[0].mxu0
    %v5862 = vadd.f32 %v5533, %v5861
    %v5863 = vpop.f32.mrb[0].mxu0
    %v5864 = vand.u32 %v3131, 4294901760
    %5865 = vmatprep.mubr.f32.mxu0 %v5864
    %v5866 = vand.u32 %v4383, 4294901760
    %5867 = vmatmul.mubr.f32.gmra.mrb[0].mxu0 %v5866
    %v5868 = vpop.f32.mrb[0].mxu0
    %v5869 = vadd.f32 %v5544, %v5868
    %v5870 = vpop.f32.mrb[0].mxu0
    %v5871 = vand.u32 %v3132, 4294901760
    %5872 = vmatprep.mubr.f32.mxu0 %v5871
    %v5873 = vand.u32 %v4389, 4294901760
    %5874 = vmatmul.mubr.f32.gmra.mrb[0].mxu0 %v5873
    %v5875 = vpop.f32.mrb[0].mxu0
    %v5876 = vadd.f32 %v5555, %v5875
    %v5877 = vpop.f32.mrb[0].mxu0
    %v5878 = vand.u32 %v3133, 4294901760
    %5879 = vmatprep.mubr.f32.mxu0 %v5878
    %v5880 = vand.u32 %v4395, 4294901760
    %5881 = vmatmul.mubr.f32.gmra.mrb[0].mxu0 %v5880
    %v5882 = vpop.f32.mrb[0].mxu0
    %v5883 = vadd.f32 %v5566, %v5882
    %v5884 = vpop.f32.mrb[0].mxu0
    %v5885 = vand.u32 %v3134, 4294901760
    %5886 = vmatprep.mubr.f32.mxu0 %v5885
    %v5887 = vand.u32 %v4401, 4294901760
    %5888 = vmatmul.mubr.f32.gmra.mrb[0].mxu0 %v5887
    %v5889 = vpop.f32.mrb[0].mxu0
    %v5890 = vadd.f32 %v5577, %v5889
    %v5891 = vpop.f32.mrb[0].mxu0
    %v5892 = vand.u32 %v3135, 4294901760
    %5893 = vmatprep.mubr.f32.mxu0 %v5892
    %v5894 = vand.u32 %v4407, 4294901760
    %5895 = vmatmul.mubr.f32.gmra.mrb[0].mxu0 %v5894
    %v5896 = vpop.f32.mrb[0].mxu0
    %v5897 = vadd.f32 %v5588, %v5896
    %v5898 = vpop.f32.mrb[0].mxu0
    %v5899 = vand.u32 %v3136, 4294901760
    %5900 = vmatprep.mubr.f32.mxu0 %v5899
    %v5901 = vand.u32 %v4413, 4294901760
    %5902 = vmatmul.mubr.f32.gmra.mrb[0].mxu0 %v5901
    %v5903 = vpop.f32.mrb[0].mxu0
    %v5904 = vadd.f32 %v5599, %v5903
    %v5905 = vpop.f32.mrb[0].mxu0
    %v5906 = vand.u32 %v3137, 4294901760
    %5907 = vmatprep.mubr.f32.mxu0 %v5906
    %v5908 = vand.u32 %v4419, 4294901760
    %5909 = vmatmul.mubr.f32.gmra.mrb[0].mxu0 %v5908
    %v5910 = vpop.f32.mrb[0].mxu0
    %v5911 = vadd.f32 %v5610, %v5910
    %v5912 = vpop.f32.mrb[0].mxu0
    %v5913 = vand.u32 %v3138, 4294901760
    %5914 = vmatprep.mubr.f32.mxu0 %v5913
    %v5915 = vand.u32 %v4425, 4294901760
    %5916 = vmatmul.mubr.f32.gmra.mrb[0].mxu0 %v5915
    %v5917 = vpop.f32.mrb[0].mxu0
    %v5918 = vadd.f32 %v5621, %v5917
    %v5919 = vpop.f32.mrb[0].mxu0
    %v5920 = vand.u32 %v3139, 4294901760
    %5921 = vmatprep.mubr.f32.mxu0 %v5920
    %v5922 = vand.u32 %v4431, 4294901760
    %5923 = vmatmul.mubr.f32.gmra.mrb[0].mxu0 %v5922
    %v5924 = vpop.f32.mrb[0].mxu0
    %v5925 = vadd.f32 %v5632, %v5924
    %v5926 = vpop.f32.mrb[0].mxu0
    %v5927 = vand.u32 %v3140, 4294901760
    %5928 = vmatprep.mubr.f32.mxu0 %v5927
    %v5929 = vand.u32 %v4437, 4294901760
    %5930 = vmatmul.mubr.f32.gmra.mrb[0].mxu0 %v5929
    %v5931 = vpop.f32.mrb[0].mxu0
    %v5932 = vadd.f32 %v5643, %v5931
    %v5933 = vpop.f32.mrb[0].mxu0
    %v5934 = vand.u32 %v3141, 4294901760
    %5935 = vmatprep.mubr.f32.mxu0 %v5934
    %v5936 = vand.u32 %v4443, 4294901760
    %5937 = vmatmul.mubr.f32.gmra.mrb[0].mxu0 %v5936
    %v5938 = vpop.f32.mrb[0].mxu0
    %v5939 = vadd.f32 %v5654, %v5938
    %v5940 = vpop.f32.mrb[0].mxu0
    %v5941 = vand.u32 %v3142, 4294901760
    %5942 = vmatprep.mubr.f32.mxu0 %v5941
    %v5943 = vand.u32 %v4449, 4294901760
    %5944 = vmatmul.mubr.f32.gmra.mrb[0].mxu0 %v5943
    %v5945 = vpop.f32.mrb[0].mxu0
    %v5946 = vadd.f32 %v5665, %v5945
    %v5947 = vpop.f32.mrb[0].mxu0
    %v5948 = vand.u32 %v3143, 4294901760
    %5949 = vmatprep.mubr.f32.mxu0 %v5948
    %v5950 = vand.u32 %v4455, 4294901760
    %5951 = vmatmul.mubr.f32.gmra.mrb[0].mxu0 %v5950
    %v5952 = vpop.f32.mrb[0].mxu0
    %v5953 = vadd.f32 %v5676, %v5952
    %v5954 = vpop.f32.mrb[0].mxu0
    %v5955 = vand.u32 %v3144, 4294901760
    %5956 = vmatprep.mubr.f32.mxu0 %v5955
    %v5957 = vand.u32 %v4461, 4294901760
    %5958 = vmatmul.mubr.f32.gmra.mrb[0].mxu0 %v5957
    %v5959 = vpop.f32.mrb[0].mxu0
    %v5960 = vadd.f32 %v5687, %v5959
    %v5961 = vpop.f32.mrb[0].mxu0
    %5962 = vdwg.mxu0
    %5963 = vmatprep.subr.mxu0 0.0
    %v5964 = vand.u32 %v3145, 4294901760
    %5965 = vmatpush1.msra.mxu0 %v5964
    %5966 = vmatprep.subr.mxu0 0.0
    %v5967 = vand.u32 %v3146, 4294901760
    %5968 = vmatpush1.msra.mxu0 %v5967
    %5969 = vmatprep.subr.mxu0 0.0
    %v5970 = vand.u32 %v3147, 4294901760
    %5971 = vmatpush1.msra.mxu0 %v5970
    %5972 = vmatprep.subr.mxu0 0.0
    %v5973 = vand.u32 %v3148, 4294901760
    %5974 = vmatpush1.msra.mxu0 %v5973
    %5975 = vmatprep.subr.mxu0 0.0
    %v5976 = vand.u32 %v3149, 4294901760
    %5977 = vmatpush1.msra.mxu0 %v5976
    %5978 = vmatprep.subr.mxu0 0.0
    %v5979 = vand.u32 %v3150, 4294901760
    %5980 = vmatpush1.msra.mxu0 %v5979
    %5981 = vmatprep.subr.mxu0 0.0
    %v5982 = vand.u32 %v3151, 4294901760
    %5983 = vmatpush1.msra.mxu0 %v5982
    %5984 = vmatprep.subr.mxu0 0.0
    %v5985 = vand.u32 %v3152, 4294901760
    %5986 = vmatpush1.msra.mxu0 %v5985
    %5987 = vmatprep.subr.mxu0 0.0
    %v5988 = vand.u32 %v3153, 4294901760
    %5989 = vmatpush1.msra.mxu0 %v5988
    %5990 = vmatprep.subr.mxu0 0.0
    %v5991 = vand.u32 %v3154, 4294901760
    %5992 = vmatpush1.msra.mxu0 %v5991
    %5993 = vmatprep.subr.mxu0 0.0
    %v5994 = vand.u32 %v3155, 4294901760
    %5995 = vmatpush1.msra.mxu0 %v5994
    %5996 = vmatprep.subr.mxu0 0.0
    %v5997 = vand.u32 %v3156, 4294901760
    %5998 = vmatpush1.msra.mxu0 %v5997
    %5999 = vmatprep.subr.mxu0 0.0
    %v6000 = vand.u32 %v3157, 4294901760
    %6001 = vmatpush1.msra.mxu0 %v6000
    %6002 = vmatprep.subr.mxu0 0.0
    %v6003 = vand.u32 %v3158, 4294901760
    %6004 = vmatpush1.msra.mxu0 %v6003
    %6005 = vmatprep.subr.mxu0 0.0
    %v6006 = vand.u32 %v3159, 4294901760
    %6007 = vmatpush1.msra.mxu0 %v6006
    %6008 = vmatprep.subr.mxu0 0.0
    %v6009 = vand.u32 %v3160, 4294901760
    %6010 = vmatpush1.msra.mxu0 %v6009
    %6011 = vmatprep.subr.mxu0 0.0
    %v6012 = vand.u32 %v3161, 4294901760
    %6013 = vmatpush1.msra.mxu0 %v6012
    %6014 = vmatprep.subr.mxu0 0.0
    %v6015 = vand.u32 %v3162, 4294901760
    %6016 = vmatpush1.msra.mxu0 %v6015
    %6017 = vmatprep.subr.mxu0 0.0
    %v6018 = vand.u32 %v3163, 4294901760
    %6019 = vmatpush1.msra.mxu0 %v6018
    %6020 = vmatprep.subr.mxu0 0.0
    %v6021 = vand.u32 %v3164, 4294901760
    %6022 = vmatpush1.msra.mxu0 %v6021
    %6023 = vmatprep.subr.mxu0 0.0
    %v6024 = vand.u32 %v3165, 4294901760
    %6025 = vmatpush1.msra.mxu0 %v6024
    %6026 = vmatprep.subr.mxu0 0.0
    %v6027 = vand.u32 %v3166, 4294901760
    %6028 = vmatpush1.msra.mxu0 %v6027
    %6029 = vmatprep.subr.mxu0 0.0
    %v6030 = vand.u32 %v3167, 4294901760
    %6031 = vmatpush1.msra.mxu0 %v6030
    %6032 = vmatprep.subr.mxu0 0.0
    %v6033 = vand.u32 %v3168, 4294901760
    %6034 = vmatpush1.msra.mxu0 %v6033
    %6035 = vmatprep.subr.mxu0 0.0
    %v6036 = vand.u32 %v3169, 4294901760
    %6037 = vmatpush1.msra.mxu0 %v6036
    %6038 = vmatprep.subr.mxu0 0.0
    %v6039 = vand.u32 %v3170, 4294901760
    %6040 = vmatpush1.msra.mxu0 %v6039
    %6041 = vmatprep.subr.mxu0 0.0
    %v6042 = vand.u32 %v3171, 4294901760
    %6043 = vmatpush1.msra.mxu0 %v6042
    %6044 = vmatprep.subr.mxu0 0.0
    %v6045 = vand.u32 %v3172, 4294901760
    %6046 = vmatpush1.msra.mxu0 %v6045
    %6047 = vmatprep.subr.mxu0 0.0
    %v6048 = vand.u32 %v3173, 4294901760
    %6049 = vmatpush1.msra.mxu0 %v6048
    %6050 = vmatprep.subr.mxu0 0.0
    %v6051 = vand.u32 %v3174, 4294901760
    %6052 = vmatpush1.msra.mxu0 %v6051
    %6053 = vmatprep.subr.mxu0 0.0
    %v6054 = vand.u32 %v3175, 4294901760
    %6055 = vmatpush1.msra.mxu0 %v6054
    %6056 = vmatprep.subr.mxu0 0.0
    %v6057 = vand.u32 %v3176, 4294901760
    %6058 = vmatpush1.msra.mxu0 %v6057
    %v6059 = vand.u32 %v3129, 4294901760
    %6060 = vmatprep.mubr.f32.mxu0 %v6059
    %v6061 = vand.u32 %v4371, 4294901760
    %6062 = vmatmul.mubr.f32.gmra.mrb[0].mxu0 %v6061
    %v6063 = vpop.f32.mrb[0].mxu0
    %v6064 = vadd.f32 %v5855, %v6063
    %v6065 = vpop.f32.mrb[0].mxu0
    %v6066 = vand.u32 %v3130, 4294901760
    %6067 = vmatprep.mubr.f32.mxu0 %v6066
    %v6068 = vand.u32 %v4377, 4294901760
    %6069 = vmatmul.mubr.f32.gmra.mrb[0].mxu0 %v6068
    %v6070 = vpop.f32.mrb[0].mxu0
    %v6071 = vadd.f32 %v5862, %v6070
    %v6072 = vpop.f32.mrb[0].mxu0
    %v6073 = vand.u32 %v3131, 4294901760
    %6074 = vmatprep.mubr.f32.mxu0 %v6073
    %v6075 = vand.u32 %v4383, 4294901760
    %6076 = vmatmul.mubr.f32.gmra.mrb[0].mxu0 %v6075
    %v6077 = vpop.f32.mrb[0].mxu0
    %v6078 = vadd.f32 %v5869, %v6077
    %v6079 = vpop.f32.mrb[0].mxu0
    %v6080 = vand.u32 %v3132, 4294901760
    %6081 = vmatprep.mubr.f32.mxu0 %v6080
    %v6082 = vand.u32 %v4389, 4294901760
    %6083 = vmatmul.mubr.f32.gmra.mrb[0].mxu0 %v6082
    %v6084 = vpop.f32.mrb[0].mxu0
    %v6085 = vadd.f32 %v5876, %v6084
    %v6086 = vpop.f32.mrb[0].mxu0
    %v6087 = vand.u32 %v3133, 4294901760
    %6088 = vmatprep.mubr.f32.mxu0 %v6087
    %v6089 = vand.u32 %v4395, 4294901760
    %6090 = vmatmul.mubr.f32.gmra.mrb[0].mxu0 %v6089
    %v6091 = vpop.f32.mrb[0].mxu0
    %v6092 = vadd.f32 %v5883, %v6091
    %v6093 = vpop.f32.mrb[0].mxu0
    %v6094 = vand.u32 %v3134, 4294901760
    %6095 = vmatprep.mubr.f32.mxu0 %v6094
    %v6096 = vand.u32 %v4401, 4294901760
    %6097 = vmatmul.mubr.f32.gmra.mrb[0].mxu0 %v6096
    %v6098 = vpop.f32.mrb[0].mxu0
    %v6099 = vadd.f32 %v5890, %v6098
    %v6100 = vpop.f32.mrb[0].mxu0
    %v6101 = vand.u32 %v3135, 4294901760
    %6102 = vmatprep.mubr.f32.mxu0 %v6101
    %v6103 = vand.u32 %v4407, 4294901760
    %6104 = vmatmul.mubr.f32.gmra.mrb[0].mxu0 %v6103
    %v6105 = vpop.f32.mrb[0].mxu0
    %v6106 = vadd.f32 %v5897, %v6105
    %v6107 = vpop.f32.mrb[0].mxu0
    %v6108 = vand.u32 %v3136, 4294901760
    %6109 = vmatprep.mubr.f32.mxu0 %v6108
    %v6110 = vand.u32 %v4413, 4294901760
    %6111 = vmatmul.mubr.f32.gmra.mrb[0].mxu0 %v6110
    %v6112 = vpop.f32.mrb[0].mxu0
    %v6113 = vadd.f32 %v5904, %v6112
    %v6114 = vpop.f32.mrb[0].mxu0
    %v6115 = vand.u32 %v3137, 4294901760
    %6116 = vmatprep.mubr.f32.mxu0 %v6115
    %v6117 = vand.u32 %v4419, 4294901760
    %6118 = vmatmul.mubr.f32.gmra.mrb[0].mxu0 %v6117
    %v6119 = vpop.f32.mrb[0].mxu0
    %v6120 = vadd.f32 %v5911, %v6119
    %v6121 = vpop.f32.mrb[0].mxu0
    %v6122 = vand.u32 %v3138, 4294901760
    %6123 = vmatprep.mubr.f32.mxu0 %v6122
    %v6124 = vand.u32 %v4425, 4294901760
    %6125 = vmatmul.mubr.f32.gmra.mrb[0].mxu0 %v6124
    %v6126 = vpop.f32.mrb[0].mxu0
    %v6127 = vadd.f32 %v5918, %v6126
    %v6128 = vpop.f32.mrb[0].mxu0
    %v6129 = vand.u32 %v3139, 4294901760
    %6130 = vmatprep.mubr.f32.mxu0 %v6129
    %v6131 = vand.u32 %v4431, 4294901760
    %6132 = vmatmul.mubr.f32.gmra.mrb[0].mxu0 %v6131
    %v6133 = vpop.f32.mrb[0].mxu0
    %v6134 = vadd.f32 %v5925, %v6133
    %v6135 = vpop.f32.mrb[0].mxu0
    %v6136 = vand.u32 %v3140, 4294901760
    %6137 = vmatprep.mubr.f32.mxu0 %v6136
    %v6138 = vand.u32 %v4437, 4294901760
    %6139 = vmatmul.mubr.f32.gmra.mrb[0].mxu0 %v6138
    %v6140 = vpop.f32.mrb[0].mxu0
    %v6141 = vadd.f32 %v5932, %v6140
    %v6142 = vpop.f32.mrb[0].mxu0
    %v6143 = vand.u32 %v3141, 4294901760
    %6144 = vmatprep.mubr.f32.mxu0 %v6143
    %v6145 = vand.u32 %v4443, 4294901760
    %6146 = vmatmul.mubr.f32.gmra.mrb[0].mxu0 %v6145
    %v6147 = vpop.f32.mrb[0].mxu0
    %v6148 = vadd.f32 %v5939, %v6147
    %v6149 = vpop.f32.mrb[0].mxu0
    %v6150 = vand.u32 %v3142, 4294901760
    %6151 = vmatprep.mubr.f32.mxu0 %v6150
    %v6152 = vand.u32 %v4449, 4294901760
    %6153 = vmatmul.mubr.f32.gmra.mrb[0].mxu0 %v6152
    %v6154 = vpop.f32.mrb[0].mxu0
    %v6155 = vadd.f32 %v5946, %v6154
    %v6156 = vpop.f32.mrb[0].mxu0
    %v6157 = vand.u32 %v3143, 4294901760
    %6158 = vmatprep.mubr.f32.mxu0 %v6157
    %v6159 = vand.u32 %v4455, 4294901760
    %6160 = vmatmul.mubr.f32.gmra.mrb[0].mxu0 %v6159
    %v6161 = vpop.f32.mrb[0].mxu0
    %v6162 = vadd.f32 %v5953, %v6161
    %v6163 = vpop.f32.mrb[0].mxu0
    %v6164 = vand.u32 %v3144, 4294901760
    %6165 = vmatprep.mubr.f32.mxu0 %v6164
    %v6166 = vand.u32 %v4461, 4294901760
    %6167 = vmatmul.mubr.f32.gmra.mrb[0].mxu0 %v6166
    %v6168 = vpop.f32.mrb[0].mxu0
    %v6169 = vadd.f32 %v5960, %v6168
    %v6170 = vpop.f32.mrb[0].mxu0
    %6171 = vdwg.mxu0
    %v6172 = vmax.f32 %v6064, 0.0
    %v6173 = vmax.f32 %v6071, 0.0
    %v6174 = vmax.f32 %v6078, 0.0
    %v6175 = vmax.f32 %v6085, 0.0
    %v6176 = vmax.f32 %v6092, 0.0
    %v6177 = vmax.f32 %v6099, 0.0
    %v6178 = vmax.f32 %v6106, 0.0
    %v6179 = vmax.f32 %v6113, 0.0
    %v6180 = vmax.f32 %v6120, 0.0
    %v6181 = vmax.f32 %v6127, 0.0
    %v6182 = vmax.f32 %v6134, 0.0
    %v6183 = vmax.f32 %v6141, 0.0
    %v6184 = vmax.f32 %v6148, 0.0
    %v6185 = vmax.f32 %v6155, 0.0
    %v6186 = vmax.f32 %v6162, 0.0
    %v6187 = vmax.f32 %v6169, 0.0
    %v6188 = vld [vmem:[#allocation6] sm:$0xff]
    %v6189 = vld [vmem:[#allocation6 + $0x8] sm:$0xff]
    %v6190 = vld [vmem:[#allocation6 + $0x10] sm:$0xff]
    %v6191 = vld [vmem:[#allocation6 + $0x18] sm:$0xff]
    %v6192 = vld [vmem:[#allocation6 + $0x20] sm:$0xff]
    %v6193 = vld [vmem:[#allocation6 + $0x28] sm:$0xff]
    %v6194 = vld [vmem:[#allocation6 + $0x30] sm:$0xff]
    %v6195 = vld [vmem:[#allocation6 + $0x38] sm:$0xff]
    %v6196 = vld [vmem:[#allocation6 + $0x40] sm:$0xff]
    %v6197 = vld [vmem:[#allocation6 + $0x48] sm:$0xff]
    %v6198 = vld [vmem:[#allocation6 + $0x50] sm:$0xff]
    %v6199 = vld [vmem:[#allocation6 + $0x58] sm:$0xff]
    %v6200 = vld [vmem:[#allocation6 + $0x60] sm:$0xff]
    %v6201 = vld [vmem:[#allocation6 + $0x68] sm:$0xff]
    %v6202 = vld [vmem:[#allocation6 + $0x70] sm:$0xff]
    %v6203 = vld [vmem:[#allocation6 + $0x78] sm:$0xff]
    %v6204 = vld [vmem:[#allocation6 + $0x80] sm:$0xff]
    %v6205 = vld [vmem:[#allocation6 + $0x88] sm:$0xff]
    %v6206 = vld [vmem:[#allocation6 + $0x90] sm:$0xff]
    %v6207 = vld [vmem:[#allocation6 + $0x98] sm:$0xff]
    %v6208 = vld [vmem:[#allocation6 + $0xa0] sm:$0xff]
    %v6209 = vld [vmem:[#allocation6 + $0xa8] sm:$0xff]
    %v6210 = vld [vmem:[#allocation6 + $0xb0] sm:$0xff]
    %v6211 = vld [vmem:[#allocation6 + $0xb8] sm:$0xff]
    %v6212 = vld [vmem:[#allocation6 + $0xc0] sm:$0xff]
    %v6213 = vld [vmem:[#allocation6 + $0xc8] sm:$0xff]
    %v6214 = vld [vmem:[#allocation6 + $0xd0] sm:$0xff]
    %v6215 = vld [vmem:[#allocation6 + $0xd8] sm:$0xff]
    %v6216 = vld [vmem:[#allocation6 + $0xe0] sm:$0xff]
    %v6217 = vld [vmem:[#allocation6 + $0xe8] sm:$0xff]
    %v6218 = vld [vmem:[#allocation6 + $0xf0] sm:$0xff]
    %v6219 = vld [vmem:[#allocation6 + $0xf8] sm:$0xff]
    %v6220 = vld [vmem:[%s7] sm:$0x1]
    %v6221 = vand.u32 %v6189, 4294901760
    %6222 = vmatprep.subr.mxu0 %v6221
    %v6223 = vand.u32 %v6188, 4294901760
    %6224 = vmatpush1.msra.mxu0 %v6223
    %v6225 = vand.u32 %v6191, 4294901760
    %6226 = vmatprep.subr.mxu0 %v6225
    %v6227 = vand.u32 %v6190, 4294901760
    %6228 = vmatpush1.msra.mxu0 %v6227
    %v6229 = vand.u32 %v6193, 4294901760
    %6230 = vmatprep.subr.mxu0 %v6229
    %v6231 = vand.u32 %v6192, 4294901760
    %6232 = vmatpush1.msra.mxu0 %v6231
    %v6233 = vand.u32 %v6195, 4294901760
    %6234 = vmatprep.subr.mxu0 %v6233
    %v6235 = vand.u32 %v6194, 4294901760
    %6236 = vmatpush1.msra.mxu0 %v6235
    %v6237 = vand.u32 %v6197, 4294901760
    %6238 = vmatprep.subr.mxu0 %v6237
    %v6239 = vand.u32 %v6196, 4294901760
    %6240 = vmatpush1.msra.mxu0 %v6239
    %v6241 = vand.u32 %v6199, 4294901760
    %6242 = vmatprep.subr.mxu0 %v6241
    %v6243 = vand.u32 %v6198, 4294901760
    %6244 = vmatpush1.msra.mxu0 %v6243
    %v6245 = vand.u32 %v6201, 4294901760
    %6246 = vmatprep.subr.mxu0 %v6245
    %v6247 = vand.u32 %v6200, 4294901760
    %6248 = vmatpush1.msra.mxu0 %v6247
    %v6249 = vand.u32 %v6203, 4294901760
    %6250 = vmatprep.subr.mxu0 %v6249
    %v6251 = vand.u32 %v6202, 4294901760
    %6252 = vmatpush1.msra.mxu0 %v6251
    %v6253 = vand.u32 %v6205, 4294901760
    %6254 = vmatprep.subr.mxu0 %v6253
    %v6255 = vand.u32 %v6204, 4294901760
    %6256 = vmatpush1.msra.mxu0 %v6255
    %v6257 = vand.u32 %v6207, 4294901760
    %6258 = vmatprep.subr.mxu0 %v6257
    %v6259 = vand.u32 %v6206, 4294901760
    %6260 = vmatpush1.msra.mxu0 %v6259
    %v6261 = vand.u32 %v6209, 4294901760
    %6262 = vmatprep.subr.mxu0 %v6261
    %v6263 = vand.u32 %v6208, 4294901760
    %6264 = vmatpush1.msra.mxu0 %v6263
    %v6265 = vand.u32 %v6211, 4294901760
    %6266 = vmatprep.subr.mxu0 %v6265
    %v6267 = vand.u32 %v6210, 4294901760
    %6268 = vmatpush1.msra.mxu0 %v6267
    %v6269 = vand.u32 %v6213, 4294901760
    %6270 = vmatprep.subr.mxu0 %v6269
    %v6271 = vand.u32 %v6212, 4294901760
    %6272 = vmatpush1.msra.mxu0 %v6271
    %v6273 = vand.u32 %v6215, 4294901760
    %6274 = vmatprep.subr.mxu0 %v6273
    %v6275 = vand.u32 %v6214, 4294901760
    %6276 = vmatpush1.msra.mxu0 %v6275
    %v6277 = vand.u32 %v6217, 4294901760
    %6278 = vmatprep.subr.mxu0 %v6277
    %v6279 = vand.u32 %v6216, 4294901760
    %6280 = vmatpush1.msra.mxu0 %v6279
    %v6281 = vand.u32 %v6219, 4294901760
    %6282 = vmatprep.subr.mxu0 %v6281
    %v6283 = vand.u32 %v6218, 4294901760
    %6284 = vmatpush1.msra.mxu0 %v6283
    %6285 = vmatprep.subr.mxu0 0.0
    %6286 = vmatpush1.msra.mxu0 0.0
    %6287 = vmatprep.subr.mxu0 0.0
    %6288 = vmatpush1.msra.mxu0 0.0
    %6289 = vmatprep.subr.mxu0 0.0
    %6290 = vmatpush1.msra.mxu0 0.0
    %6291 = vmatprep.subr.mxu0 0.0
    %6292 = vmatpush1.msra.mxu0 0.0
    %6293 = vmatprep.subr.mxu0 0.0
    %6294 = vmatpush1.msra.mxu0 0.0
    %6295 = vmatprep.subr.mxu0 0.0
    %6296 = vmatpush1.msra.mxu0 0.0
    %6297 = vmatprep.subr.mxu0 0.0
    %6298 = vmatpush1.msra.mxu0 0.0
    %6299 = vmatprep.subr.mxu0 0.0
    %6300 = vmatpush1.msra.mxu0 0.0
    %6301 = vmatprep.subr.mxu0 0.0
    %6302 = vmatpush1.msra.mxu0 0.0
    %6303 = vmatprep.subr.mxu0 0.0
    %6304 = vmatpush1.msra.mxu0 0.0
    %6305 = vmatprep.subr.mxu0 0.0
    %6306 = vmatpush1.msra.mxu0 0.0
    %6307 = vmatprep.subr.mxu0 0.0
    %6308 = vmatpush1.msra.mxu0 0.0
    %6309 = vmatprep.subr.mxu0 0.0
    %6310 = vmatpush1.msra.mxu0 0.0
    %6311 = vmatprep.subr.mxu0 0.0
    %6312 = vmatpush1.msra.mxu0 0.0
    %6313 = vmatprep.subr.mxu0 0.0
    %6314 = vmatpush1.msra.mxu0 0.0
    %6315 = vmatprep.subr.mxu0 0.0
    %6316 = vmatpush1.msra.mxu0 0.0
    %6317 = vmatprep.mubr.f32.mxu0 0.0
    %v6318 = vand.u32 %v6172, 4294901760
    %v6319 = vsub.f32 %v6172, %v6318
    %v6320 = vand.u32 %v6319, 4294901760
    %v6321 = vsub.f32 %v6319, %v6320
    %v6322 = vand.u32 %v6321, 4294901760
    %6323 = vmatmul.mubr.f32.gmra.mrb[0].mxu0 %v6322
    %v6324 = vpop.f32.mrb[0].mxu0
    %v6325 = vadd.f32 0.0, %v6324
    %v6326 = vpop.f32.mrb[0].mxu0
    %v6327 = vadd.f32 0.0, %v6326
    %6328 = vmatprep.mubr.f32.mxu0 0.0
    %v6329 = vand.u32 %v6173, 4294901760
    %v6330 = vsub.f32 %v6173, %v6329
    %v6331 = vand.u32 %v6330, 4294901760
    %v6332 = vsub.f32 %v6330, %v6331
    %v6333 = vand.u32 %v6332, 4294901760
    %6334 = vmatmul.mubr.f32.gmra.mrb[0].mxu0 %v6333
    %v6335 = vpop.f32.mrb[0].mxu0
    %v6336 = vadd.f32 0.0, %v6335
    %v6337 = vpop.f32.mrb[0].mxu0
    %v6338 = vadd.f32 0.0, %v6337
    %6339 = vmatprep.mubr.f32.mxu0 0.0
    %v6340 = vand.u32 %v6174, 4294901760
    %v6341 = vsub.f32 %v6174, %v6340
    %v6342 = vand.u32 %v6341, 4294901760
    %v6343 = vsub.f32 %v6341, %v6342
    %v6344 = vand.u32 %v6343, 4294901760
    %6345 = vmatmul.mubr.f32.gmra.mrb[0].mxu0 %v6344
    %v6346 = vpop.f32.mrb[0].mxu0
    %v6347 = vadd.f32 0.0, %v6346
    %v6348 = vpop.f32.mrb[0].mxu0
    %v6349 = vadd.f32 0.0, %v6348
    %6350 = vmatprep.mubr.f32.mxu0 0.0
    %v6351 = vand.u32 %v6175, 4294901760
    %v6352 = vsub.f32 %v6175, %v6351
    %v6353 = vand.u32 %v6352, 4294901760
    %v6354 = vsub.f32 %v6352, %v6353
    %v6355 = vand.u32 %v6354, 4294901760
    %6356 = vmatmul.mubr.f32.gmra.mrb[0].mxu0 %v6355
    %v6357 = vpop.f32.mrb[0].mxu0
    %v6358 = vadd.f32 0.0, %v6357
    %v6359 = vpop.f32.mrb[0].mxu0
    %v6360 = vadd.f32 0.0, %v6359
    %6361 = vmatprep.mubr.f32.mxu0 0.0
    %v6362 = vand.u32 %v6176, 4294901760
    %v6363 = vsub.f32 %v6176, %v6362
    %v6364 = vand.u32 %v6363, 4294901760
    %v6365 = vsub.f32 %v6363, %v6364
    %v6366 = vand.u32 %v6365, 4294901760
    %6367 = vmatmul.mubr.f32.gmra.mrb[0].mxu0 %v6366
    %v6368 = vpop.f32.mrb[0].mxu0
    %v6369 = vadd.f32 0.0, %v6368
    %v6370 = vpop.f32.mrb[0].mxu0
    %v6371 = vadd.f32 0.0, %v6370
    %6372 = vmatprep.mubr.f32.mxu0 0.0
    %v6373 = vand.u32 %v6177, 4294901760
    %v6374 = vsub.f32 %v6177, %v6373
    %v6375 = vand.u32 %v6374, 4294901760
    %v6376 = vsub.f32 %v6374, %v6375
    %v6377 = vand.u32 %v6376, 4294901760
    %6378 = vmatmul.mubr.f32.gmra.mrb[0].mxu0 %v6377
    %v6379 = vpop.f32.mrb[0].mxu0
    %v6380 = vadd.f32 0.0, %v6379
    %v6381 = vpop.f32.mrb[0].mxu0
    %v6382 = vadd.f32 0.0, %v6381
    %6383 = vmatprep.mubr.f32.mxu0 0.0
    %v6384 = vand.u32 %v6178, 4294901760
    %v6385 = vsub.f32 %v6178, %v6384
    %v6386 = vand.u32 %v6385, 4294901760
    %v6387 = vsub.f32 %v6385, %v6386
    %v6388 = vand.u32 %v6387, 4294901760
    %6389 = vmatmul.mubr.f32.gmra.mrb[0].mxu0 %v6388
    %v6390 = vpop.f32.mrb[0].mxu0
    %v6391 = vadd.f32 0.0, %v6390
    %v6392 = vpop.f32.mrb[0].mxu0
    %v6393 = vadd.f32 0.0, %v6392
    %6394 = vmatprep.mubr.f32.mxu0 0.0
    %v6395 = vand.u32 %v6179, 4294901760
    %v6396 = vsub.f32 %v6179, %v6395
    %v6397 = vand.u32 %v6396, 4294901760
    %v6398 = vsub.f32 %v6396, %v6397
    %v6399 = vand.u32 %v6398, 4294901760
    %6400 = vmatmul.mubr.f32.gmra.mrb[0].mxu0 %v6399
    %v6401 = vpop.f32.mrb[0].mxu0
    %v6402 = vadd.f32 0.0, %v6401
    %v6403 = vpop.f32.mrb[0].mxu0
    %v6404 = vadd.f32 0.0, %v6403
    %6405 = vmatprep.mubr.f32.mxu0 0.0
    %v6406 = vand.u32 %v6180, 4294901760
    %v6407 = vsub.f32 %v6180, %v6406
    %v6408 = vand.u32 %v6407, 4294901760
    %v6409 = vsub.f32 %v6407, %v6408
    %v6410 = vand.u32 %v6409, 4294901760
    %6411 = vmatmul.mubr.f32.gmra.mrb[0].mxu0 %v6410
    %v6412 = vpop.f32.mrb[0].mxu0
    %v6413 = vadd.f32 0.0, %v6412
    %v6414 = vpop.f32.mrb[0].mxu0
    %v6415 = vadd.f32 0.0, %v6414
    %6416 = vmatprep.mubr.f32.mxu0 0.0
    %v6417 = vand.u32 %v6181, 4294901760
    %v6418 = vsub.f32 %v6181, %v6417
    %v6419 = vand.u32 %v6418, 4294901760
    %v6420 = vsub.f32 %v6418, %v6419
    %v6421 = vand.u32 %v6420, 4294901760
    %6422 = vmatmul.mubr.f32.gmra.mrb[0].mxu0 %v6421
    %v6423 = vpop.f32.mrb[0].mxu0
    %v6424 = vadd.f32 0.0, %v6423
    %v6425 = vpop.f32.mrb[0].mxu0
    %v6426 = vadd.f32 0.0, %v6425
    %6427 = vmatprep.mubr.f32.mxu0 0.0
    %v6428 = vand.u32 %v6182, 4294901760
    %v6429 = vsub.f32 %v6182, %v6428
    %v6430 = vand.u32 %v6429, 4294901760
    %v6431 = vsub.f32 %v6429, %v6430
    %v6432 = vand.u32 %v6431, 4294901760
    %6433 = vmatmul.mubr.f32.gmra.mrb[0].mxu0 %v6432
    %v6434 = vpop.f32.mrb[0].mxu0
    %v6435 = vadd.f32 0.0, %v6434
    %v6436 = vpop.f32.mrb[0].mxu0
    %v6437 = vadd.f32 0.0, %v6436
    %6438 = vmatprep.mubr.f32.mxu0 0.0
    %v6439 = vand.u32 %v6183, 4294901760
    %v6440 = vsub.f32 %v6183, %v6439
    %v6441 = vand.u32 %v6440, 4294901760
    %v6442 = vsub.f32 %v6440, %v6441
    %v6443 = vand.u32 %v6442, 4294901760
    %6444 = vmatmul.mubr.f32.gmra.mrb[0].mxu0 %v6443
    %v6445 = vpop.f32.mrb[0].mxu0
    %v6446 = vadd.f32 0.0, %v6445
    %v6447 = vpop.f32.mrb[0].mxu0
    %v6448 = vadd.f32 0.0, %v6447
    %6449 = vmatprep.mubr.f32.mxu0 0.0
    %v6450 = vand.u32 %v6184, 4294901760
    %v6451 = vsub.f32 %v6184, %v6450
    %v6452 = vand.u32 %v6451, 4294901760
    %v6453 = vsub.f32 %v6451, %v6452
    %v6454 = vand.u32 %v6453, 4294901760
    %6455 = vmatmul.mubr.f32.gmra.mrb[0].mxu0 %v6454
    %v6456 = vpop.f32.mrb[0].mxu0
    %v6457 = vadd.f32 0.0, %v6456
    %v6458 = vpop.f32.mrb[0].mxu0
    %v6459 = vadd.f32 0.0, %v6458
    %6460 = vmatprep.mubr.f32.mxu0 0.0
    %v6461 = vand.u32 %v6185, 4294901760
    %v6462 = vsub.f32 %v6185, %v6461
    %v6463 = vand.u32 %v6462, 4294901760
    %v6464 = vsub.f32 %v6462, %v6463
    %v6465 = vand.u32 %v6464, 4294901760
    %6466 = vmatmul.mubr.f32.gmra.mrb[0].mxu0 %v6465
    %v6467 = vpop.f32.mrb[0].mxu0
    %v6468 = vadd.f32 0.0, %v6467
    %v6469 = vpop.f32.mrb[0].mxu0
    %v6470 = vadd.f32 0.0, %v6469
    %6471 = vmatprep.mubr.f32.mxu0 0.0
    %v6472 = vand.u32 %v6186, 4294901760
    %v6473 = vsub.f32 %v6186, %v6472
    %v6474 = vand.u32 %v6473, 4294901760
    %v6475 = vsub.f32 %v6473, %v6474
    %v6476 = vand.u32 %v6475, 4294901760
    %6477 = vmatmul.mubr.f32.gmra.mrb[0].mxu0 %v6476
    %v6478 = vpop.f32.mrb[0].mxu0
    %v6479 = vadd.f32 0.0, %v6478
    %v6480 = vpop.f32.mrb[0].mxu0
    %v6481 = vadd.f32 0.0, %v6480
    %6482 = vmatprep.mubr.f32.mxu0 0.0
    %v6483 = vand.u32 %v6187, 4294901760
    %v6484 = vsub.f32 %v6187, %v6483
    %v6485 = vand.u32 %v6484, 4294901760
    %v6486 = vsub.f32 %v6484, %v6485
    %v6487 = vand.u32 %v6486, 4294901760
    %6488 = vmatmul.mubr.f32.gmra.mrb[0].mxu0 %v6487
    %v6489 = vpop.f32.mrb[0].mxu0
    %v6490 = vadd.f32 0.0, %v6489
    %v6491 = vpop.f32.mrb[0].mxu0
    %v6492 = vadd.f32 0.0, %v6491
    %6493 = vdwg.mxu0
    %v6494 = vand.u32 %v6189, 4294901760
    %v6495 = vsub.f32 %v6189, %v6494
    %v6496 = vand.u32 %v6495, 4294901760
    %v6497 = vsub.f32 %v6495, %v6496
    %v6498 = vand.u32 %v6497, 4294901760
    %6499 = vmatprep.subr.mxu0 %v6498
    %v6500 = vand.u32 %v6188, 4294901760
    %v6501 = vsub.f32 %v6188, %v6500
    %v6502 = vand.u32 %v6501, 4294901760
    %v6503 = vsub.f32 %v6501, %v6502
    %v6504 = vand.u32 %v6503, 4294901760
    %6505 = vmatpush1.msra.mxu0 %v6504
    %v6506 = vand.u32 %v6191, 4294901760
    %v6507 = vsub.f32 %v6191, %v6506
    %v6508 = vand.u32 %v6507, 4294901760
    %v6509 = vsub.f32 %v6507, %v6508
    %v6510 = vand.u32 %v6509, 4294901760
    %6511 = vmatprep.subr.mxu0 %v6510
    %v6512 = vand.u32 %v6190, 4294901760
    %v6513 = vsub.f32 %v6190, %v6512
    %v6514 = vand.u32 %v6513, 4294901760
    %v6515 = vsub.f32 %v6513, %v6514
    %v6516 = vand.u32 %v6515, 4294901760
    %6517 = vmatpush1.msra.mxu0 %v6516
    %v6518 = vand.u32 %v6193, 4294901760
    %v6519 = vsub.f32 %v6193, %v6518
    %v6520 = vand.u32 %v6519, 4294901760
    %v6521 = vsub.f32 %v6519, %v6520
    %v6522 = vand.u32 %v6521, 4294901760
    %6523 = vmatprep.subr.mxu0 %v6522
    %v6524 = vand.u32 %v6192, 4294901760
    %v6525 = vsub.f32 %v6192, %v6524
    %v6526 = vand.u32 %v6525, 4294901760
    %v6527 = vsub.f32 %v6525, %v6526
    %v6528 = vand.u32 %v6527, 4294901760
    %6529 = vmatpush1.msra.mxu0 %v6528
    %v6530 = vand.u32 %v6195, 4294901760
    %v6531 = vsub.f32 %v6195, %v6530
    %v6532 = vand.u32 %v6531, 4294901760
    %v6533 = vsub.f32 %v6531, %v6532
    %v6534 = vand.u32 %v6533, 4294901760
    %6535 = vmatprep.subr.mxu0 %v6534
    %v6536 = vand.u32 %v6194, 4294901760
    %v6537 = vsub.f32 %v6194, %v6536
    %v6538 = vand.u32 %v6537, 4294901760
    %v6539 = vsub.f32 %v6537, %v6538
    %v6540 = vand.u32 %v6539, 4294901760
    %6541 = vmatpush1.msra.mxu0 %v6540
    %v6542 = vand.u32 %v6197, 4294901760
    %v6543 = vsub.f32 %v6197, %v6542
    %v6544 = vand.u32 %v6543, 4294901760
    %v6545 = vsub.f32 %v6543, %v6544
    %v6546 = vand.u32 %v6545, 4294901760
    %6547 = vmatprep.subr.mxu0 %v6546
    %v6548 = vand.u32 %v6196, 4294901760
    %v6549 = vsub.f32 %v6196, %v6548
    %v6550 = vand.u32 %v6549, 4294901760
    %v6551 = vsub.f32 %v6549, %v6550
    %v6552 = vand.u32 %v6551, 4294901760
    %6553 = vmatpush1.msra.mxu0 %v6552
    %v6554 = vand.u32 %v6199, 4294901760
    %v6555 = vsub.f32 %v6199, %v6554
    %v6556 = vand.u32 %v6555, 4294901760
    %v6557 = vsub.f32 %v6555, %v6556
    %v6558 = vand.u32 %v6557, 4294901760
    %6559 = vmatprep.subr.mxu0 %v6558
    %v6560 = vand.u32 %v6198, 4294901760
    %v6561 = vsub.f32 %v6198, %v6560
    %v6562 = vand.u32 %v6561, 4294901760
    %v6563 = vsub.f32 %v6561, %v6562
    %v6564 = vand.u32 %v6563, 4294901760
    %6565 = vmatpush1.msra.mxu0 %v6564
    %v6566 = vand.u32 %v6201, 4294901760
    %v6567 = vsub.f32 %v6201, %v6566
    %v6568 = vand.u32 %v6567, 4294901760
    %v6569 = vsub.f32 %v6567, %v6568
    %v6570 = vand.u32 %v6569, 4294901760
    %6571 = vmatprep.subr.mxu0 %v6570
    %v6572 = vand.u32 %v6200, 4294901760
    %v6573 = vsub.f32 %v6200, %v6572
    %v6574 = vand.u32 %v6573, 4294901760
    %v6575 = vsub.f32 %v6573, %v6574
    %v6576 = vand.u32 %v6575, 4294901760
    %6577 = vmatpush1.msra.mxu0 %v6576
    %v6578 = vand.u32 %v6203, 4294901760
    %v6579 = vsub.f32 %v6203, %v6578
    %v6580 = vand.u32 %v6579, 4294901760
    %v6581 = vsub.f32 %v6579, %v6580
    %v6582 = vand.u32 %v6581, 4294901760
    %6583 = vmatprep.subr.mxu0 %v6582
    %v6584 = vand.u32 %v6202, 4294901760
    %v6585 = vsub.f32 %v6202, %v6584
    %v6586 = vand.u32 %v6585, 4294901760
    %v6587 = vsub.f32 %v6585, %v6586
    %v6588 = vand.u32 %v6587, 4294901760
    %6589 = vmatpush1.msra.mxu0 %v6588
    %v6590 = vand.u32 %v6205, 4294901760
    %v6591 = vsub.f32 %v6205, %v6590
    %v6592 = vand.u32 %v6591, 4294901760
    %v6593 = vsub.f32 %v6591, %v6592
    %v6594 = vand.u32 %v6593, 4294901760
    %6595 = vmatprep.subr.mxu0 %v6594
    %v6596 = vand.u32 %v6204, 4294901760
    %v6597 = vsub.f32 %v6204, %v6596
    %v6598 = vand.u32 %v6597, 4294901760
    %v6599 = vsub.f32 %v6597, %v6598
    %v6600 = vand.u32 %v6599, 4294901760
    %6601 = vmatpush1.msra.mxu0 %v6600
    %v6602 = vand.u32 %v6207, 4294901760
    %v6603 = vsub.f32 %v6207, %v6602
    %v6604 = vand.u32 %v6603, 4294901760
    %v6605 = vsub.f32 %v6603, %v6604
    %v6606 = vand.u32 %v6605, 4294901760
    %6607 = vmatprep.subr.mxu0 %v6606
    %v6608 = vand.u32 %v6206, 4294901760
    %v6609 = vsub.f32 %v6206, %v6608
    %v6610 = vand.u32 %v6609, 4294901760
    %v6611 = vsub.f32 %v6609, %v6610
    %v6612 = vand.u32 %v6611, 4294901760
    %6613 = vmatpush1.msra.mxu0 %v6612
    %v6614 = vand.u32 %v6209, 4294901760
    %v6615 = vsub.f32 %v6209, %v6614
    %v6616 = vand.u32 %v6615, 4294901760
    %v6617 = vsub.f32 %v6615, %v6616
    %v6618 = vand.u32 %v6617, 4294901760
    %6619 = vmatprep.subr.mxu0 %v6618
    %v6620 = vand.u32 %v6208, 4294901760
    %v6621 = vsub.f32 %v6208, %v6620
    %v6622 = vand.u32 %v6621, 4294901760
    %v6623 = vsub.f32 %v6621, %v6622
    %v6624 = vand.u32 %v6623, 4294901760
    %6625 = vmatpush1.msra.mxu0 %v6624
    %v6626 = vand.u32 %v6211, 4294901760
    %v6627 = vsub.f32 %v6211, %v6626
    %v6628 = vand.u32 %v6627, 4294901760
    %v6629 = vsub.f32 %v6627, %v6628
    %v6630 = vand.u32 %v6629, 4294901760
    %6631 = vmatprep.subr.mxu0 %v6630
    %v6632 = vand.u32 %v6210, 4294901760
    %v6633 = vsub.f32 %v6210, %v6632
    %v6634 = vand.u32 %v6633, 4294901760
    %v6635 = vsub.f32 %v6633, %v6634
    %v6636 = vand.u32 %v6635, 4294901760
    %6637 = vmatpush1.msra.mxu0 %v6636
    %v6638 = vand.u32 %v6213, 4294901760
    %v6639 = vsub.f32 %v6213, %v6638
    %v6640 = vand.u32 %v6639, 4294901760
    %v6641 = vsub.f32 %v6639, %v6640
    %v6642 = vand.u32 %v6641, 4294901760
    %6643 = vmatprep.subr.mxu0 %v6642
    %v6644 = vand.u32 %v6212, 4294901760
    %v6645 = vsub.f32 %v6212, %v6644
    %v6646 = vand.u32 %v6645, 4294901760
    %v6647 = vsub.f32 %v6645, %v6646
    %v6648 = vand.u32 %v6647, 4294901760
    %6649 = vmatpush1.msra.mxu0 %v6648
    %v6650 = vand.u32 %v6215, 4294901760
    %v6651 = vsub.f32 %v6215, %v6650
    %v6652 = vand.u32 %v6651, 4294901760
    %v6653 = vsub.f32 %v6651, %v6652
    %v6654 = vand.u32 %v6653, 4294901760
    %6655 = vmatprep.subr.mxu0 %v6654
    %v6656 = vand.u32 %v6214, 4294901760
    %v6657 = vsub.f32 %v6214, %v6656
    %v6658 = vand.u32 %v6657, 4294901760
    %v6659 = vsub.f32 %v6657, %v6658
    %v6660 = vand.u32 %v6659, 4294901760
    %6661 = vmatpush1.msra.mxu0 %v6660
    %v6662 = vand.u32 %v6217, 4294901760
    %v6663 = vsub.f32 %v6217, %v6662
    %v6664 = vand.u32 %v6663, 4294901760
    %v6665 = vsub.f32 %v6663, %v6664
    %v6666 = vand.u32 %v6665, 4294901760
    %6667 = vmatprep.subr.mxu0 %v6666
    %v6668 = vand.u32 %v6216, 4294901760
    %v6669 = vsub.f32 %v6216, %v6668
    %v6670 = vand.u32 %v6669, 4294901760
    %v6671 = vsub.f32 %v6669, %v6670
    %v6672 = vand.u32 %v6671, 4294901760
    %6673 = vmatpush1.msra.mxu0 %v6672
    %v6674 = vand.u32 %v6219, 4294901760
    %v6675 = vsub.f32 %v6219, %v6674
    %v6676 = vand.u32 %v6675, 4294901760
    %v6677 = vsub.f32 %v6675, %v6676
    %v6678 = vand.u32 %v6677, 4294901760
    %6679 = vmatprep.subr.mxu0 %v6678
    %v6680 = vand.u32 %v6218, 4294901760
    %v6681 = vsub.f32 %v6218, %v6680
    %v6682 = vand.u32 %v6681, 4294901760
    %v6683 = vsub.f32 %v6681, %v6682
    %v6684 = vand.u32 %v6683, 4294901760
    %6685 = vmatpush1.msra.mxu0 %v6684
    %6686 = vmatprep.subr.mxu0 0.0
    %6687 = vmatpush1.msra.mxu0 0.0
    %6688 = vmatprep.subr.mxu0 0.0
    %6689 = vmatpush1.msra.mxu0 0.0
    %6690 = vmatprep.subr.mxu0 0.0
    %6691 = vmatpush1.msra.mxu0 0.0
    %6692 = vmatprep.subr.mxu0 0.0
    %6693 = vmatpush1.msra.mxu0 0.0
    %6694 = vmatprep.subr.mxu0 0.0
    %6695 = vmatpush1.msra.mxu0 0.0
    %6696 = vmatprep.subr.mxu0 0.0
    %6697 = vmatpush1.msra.mxu0 0.0
    %6698 = vmatprep.subr.mxu0 0.0
    %6699 = vmatpush1.msra.mxu0 0.0
    %6700 = vmatprep.subr.mxu0 0.0
    %6701 = vmatpush1.msra.mxu0 0.0
    %6702 = vmatprep.subr.mxu0 0.0
    %6703 = vmatpush1.msra.mxu0 0.0
    %6704 = vmatprep.subr.mxu0 0.0
    %6705 = vmatpush1.msra.mxu0 0.0
    %6706 = vmatprep.subr.mxu0 0.0
    %6707 = vmatpush1.msra.mxu0 0.0
    %6708 = vmatprep.subr.mxu0 0.0
    %6709 = vmatpush1.msra.mxu0 0.0
    %6710 = vmatprep.subr.mxu0 0.0
    %6711 = vmatpush1.msra.mxu0 0.0
    %6712 = vmatprep.subr.mxu0 0.0
    %6713 = vmatpush1.msra.mxu0 0.0
    %6714 = vmatprep.subr.mxu0 0.0
    %6715 = vmatpush1.msra.mxu0 0.0
    %6716 = vmatprep.subr.mxu0 0.0
    %6717 = vmatpush1.msra.mxu0 0.0
    %6718 = vmatprep.mubr.f32.mxu0 0.0
    %v6719 = vand.u32 %v6172, 4294901760
    %6720 = vmatmul.mubr.f32.gmra.mrb[0].mxu0 %v6719
    %v6721 = vpop.f32.mrb[0].mxu0
    %v6722 = vadd.f32 %v6325, %v6721
    %v6723 = vpop.f32.mrb[0].mxu0
    %v6724 = vadd.f32 %v6327, %v6723
    %6725 = vmatprep.mubr.f32.mxu0 0.0
    %v6726 = vand.u32 %v6173, 4294901760
    %6727 = vmatmul.mubr.f32.gmra.mrb[0].mxu0 %v6726
    %v6728 = vpop.f32.mrb[0].mxu0
    %v6729 = vadd.f32 %v6336, %v6728
    %v6730 = vpop.f32.mrb[0].mxu0
    %v6731 = vadd.f32 %v6338, %v6730
    %6732 = vmatprep.mubr.f32.mxu0 0.0
    %v6733 = vand.u32 %v6174, 4294901760
    %6734 = vmatmul.mubr.f32.gmra.mrb[0].mxu0 %v6733
    %v6735 = vpop.f32.mrb[0].mxu0
    %v6736 = vadd.f32 %v6347, %v6735
    %v6737 = vpop.f32.mrb[0].mxu0
    %v6738 = vadd.f32 %v6349, %v6737
    %6739 = vmatprep.mubr.f32.mxu0 0.0
    %v6740 = vand.u32 %v6175, 4294901760
    %6741 = vmatmul.mubr.f32.gmra.mrb[0].mxu0 %v6740
    %v6742 = vpop.f32.mrb[0].mxu0
    %v6743 = vadd.f32 %v6358, %v6742
    %v6744 = vpop.f32.mrb[0].mxu0
    %v6745 = vadd.f32 %v6360, %v6744
    %6746 = vmatprep.mubr.f32.mxu0 0.0
    %v6747 = vand.u32 %v6176, 4294901760
    %6748 = vmatmul.mubr.f32.gmra.mrb[0].mxu0 %v6747
    %v6749 = vpop.f32.mrb[0].mxu0
    %v6750 = vadd.f32 %v6369, %v6749
    %v6751 = vpop.f32.mrb[0].mxu0
    %v6752 = vadd.f32 %v6371, %v6751
    %6753 = vmatprep.mubr.f32.mxu0 0.0
    %v6754 = vand.u32 %v6177, 4294901760
    %6755 = vmatmul.mubr.f32.gmra.mrb[0].mxu0 %v6754
    %v6756 = vpop.f32.mrb[0].mxu0
    %v6757 = vadd.f32 %v6380, %v6756
    %v6758 = vpop.f32.mrb[0].mxu0
    %v6759 = vadd.f32 %v6382, %v6758
    %6760 = vmatprep.mubr.f32.mxu0 0.0
    %v6761 = vand.u32 %v6178, 4294901760
    %6762 = vmatmul.mubr.f32.gmra.mrb[0].mxu0 %v6761
    %v6763 = vpop.f32.mrb[0].mxu0
    %v6764 = vadd.f32 %v6391, %v6763
    %v6765 = vpop.f32.mrb[0].mxu0
    %v6766 = vadd.f32 %v6393, %v6765
    %6767 = vmatprep.mubr.f32.mxu0 0.0
    %v6768 = vand.u32 %v6179, 4294901760
    %6769 = vmatmul.mubr.f32.gmra.mrb[0].mxu0 %v6768
    %v6770 = vpop.f32.mrb[0].mxu0
    %v6771 = vadd.f32 %v6402, %v6770
    %v6772 = vpop.f32.mrb[0].mxu0
    %v6773 = vadd.f32 %v6404, %v6772
    %6774 = vmatprep.mubr.f32.mxu0 0.0
    %v6775 = vand.u32 %v6180, 4294901760
    %6776 = vmatmul.mubr.f32.gmra.mrb[0].mxu0 %v6775
    %v6777 = vpop.f32.mrb[0].mxu0
    %v6778 = vadd.f32 %v6413, %v6777
    %v6779 = vpop.f32.mrb[0].mxu0
    %v6780 = vadd.f32 %v6415, %v6779
    %6781 = vmatprep.mubr.f32.mxu0 0.0
    %v6782 = vand.u32 %v6181, 4294901760
    %6783 = vmatmul.mubr.f32.gmra.mrb[0].mxu0 %v6782
    %v6784 = vpop.f32.mrb[0].mxu0
    %v6785 = vadd.f32 %v6424, %v6784
    %v6786 = vpop.f32.mrb[0].mxu0
    %v6787 = vadd.f32 %v6426, %v6786
    %6788 = vmatprep.mubr.f32.mxu0 0.0
    %v6789 = vand.u32 %v6182, 4294901760
    %6790 = vmatmul.mubr.f32.gmra.mrb[0].mxu0 %v6789
    %v6791 = vpop.f32.mrb[0].mxu0
    %v6792 = vadd.f32 %v6435, %v6791
    %v6793 = vpop.f32.mrb[0].mxu0
    %v6794 = vadd.f32 %v6437, %v6793
    %6795 = vmatprep.mubr.f32.mxu0 0.0
    %v6796 = vand.u32 %v6183, 4294901760
    %6797 = vmatmul.mubr.f32.gmra.mrb[0].mxu0 %v6796
    %v6798 = vpop.f32.mrb[0].mxu0
    %v6799 = vadd.f32 %v6446, %v6798
    %v6800 = vpop.f32.mrb[0].mxu0
    %v6801 = vadd.f32 %v6448, %v6800
    %6802 = vmatprep.mubr.f32.mxu0 0.0
    %v6803 = vand.u32 %v6184, 4294901760
    %6804 = vmatmul.mubr.f32.gmra.mrb[0].mxu0 %v6803
    %v6805 = vpop.f32.mrb[0].mxu0
    %v6806 = vadd.f32 %v6457, %v6805
    %v6807 = vpop.f32.mrb[0].mxu0
    %v6808 = vadd.f32 %v6459, %v6807
    %6809 = vmatprep.mubr.f32.mxu0 0.0
    %v6810 = vand.u32 %v6185, 4294901760
    %6811 = vmatmul.mubr.f32.gmra.mrb[0].mxu0 %v6810
    %v6812 = vpop.f32.mrb[0].mxu0
    %v6813 = vadd.f32 %v6468, %v6812
    %v6814 = vpop.f32.mrb[0].mxu0
    %v6815 = vadd.f32 %v6470, %v6814
    %6816 = vmatprep.mubr.f32.mxu0 0.0
    %v6817 = vand.u32 %v6186, 4294901760
    %6818 = vmatmul.mubr.f32.gmra.mrb[0].mxu0 %v6817
    %v6819 = vpop.f32.mrb[0].mxu0
    %v6820 = vadd.f32 %v6479, %v6819
    %v6821 = vpop.f32.mrb[0].mxu0
    %v6822 = vadd.f32 %v6481, %v6821
    %6823 = vmatprep.mubr.f32.mxu0 0.0
    %v6824 = vand.u32 %v6187, 4294901760
    %6825 = vmatmul.mubr.f32.gmra.mrb[0].mxu0 %v6824
    %v6826 = vpop.f32.mrb[0].mxu0
    %v6827 = vadd.f32 %v6490, %v6826
    %v6828 = vpop.f32.mrb[0].mxu0
    %v6829 = vadd.f32 %v6492, %v6828
    %6830 = vdwg.mxu0
    %v6831 = vand.u32 %v6189, 4294901760
    %v6832 = vsub.f32 %v6189, %v6831
    %6833 = vmatprep.subr.mxu0 %v6832
    %v6834 = vand.u32 %v6188, 4294901760
    %v6835 = vsub.f32 %v6188, %v6834
    %6836 = vmatpush1.msra.mxu0 %v6835
    %v6837 = vand.u32 %v6191, 4294901760
    %v6838 = vsub.f32 %v6191, %v6837
    %6839 = vmatprep.subr.mxu0 %v6838
    %v6840 = vand.u32 %v6190, 4294901760
    %v6841 = vsub.f32 %v6190, %v6840
    %6842 = vmatpush1.msra.mxu0 %v6841
    %v6843 = vand.u32 %v6193, 4294901760
    %v6844 = vsub.f32 %v6193, %v6843
    %6845 = vmatprep.subr.mxu0 %v6844
    %v6846 = vand.u32 %v6192, 4294901760
    %v6847 = vsub.f32 %v6192, %v6846
    %6848 = vmatpush1.msra.mxu0 %v6847
    %v6849 = vand.u32 %v6195, 4294901760
    %v6850 = vsub.f32 %v6195, %v6849
    %6851 = vmatprep.subr.mxu0 %v6850
    %v6852 = vand.u32 %v6194, 4294901760
    %v6853 = vsub.f32 %v6194, %v6852
    %6854 = vmatpush1.msra.mxu0 %v6853
    %v6855 = vand.u32 %v6197, 4294901760
    %v6856 = vsub.f32 %v6197, %v6855
    %6857 = vmatprep.subr.mxu0 %v6856
    %v6858 = vand.u32 %v6196, 4294901760
    %v6859 = vsub.f32 %v6196, %v6858
    %6860 = vmatpush1.msra.mxu0 %v6859
    %v6861 = vand.u32 %v6199, 4294901760
    %v6862 = vsub.f32 %v6199, %v6861
    %6863 = vmatprep.subr.mxu0 %v6862
    %v6864 = vand.u32 %v6198, 4294901760
    %v6865 = vsub.f32 %v6198, %v6864
    %6866 = vmatpush1.msra.mxu0 %v6865
    %v6867 = vand.u32 %v6201, 4294901760
    %v6868 = vsub.f32 %v6201, %v6867
    %6869 = vmatprep.subr.mxu0 %v6868
    %v6870 = vand.u32 %v6200, 4294901760
    %v6871 = vsub.f32 %v6200, %v6870
    %6872 = vmatpush1.msra.mxu0 %v6871
    %v6873 = vand.u32 %v6203, 4294901760
    %v6874 = vsub.f32 %v6203, %v6873
    %6875 = vmatprep.subr.mxu0 %v6874
    %v6876 = vand.u32 %v6202, 4294901760
    %v6877 = vsub.f32 %v6202, %v6876
    %6878 = vmatpush1.msra.mxu0 %v6877
    %v6879 = vand.u32 %v6205, 4294901760
    %v6880 = vsub.f32 %v6205, %v6879
    %6881 = vmatprep.subr.mxu0 %v6880
    %v6882 = vand.u32 %v6204, 4294901760
    %v6883 = vsub.f32 %v6204, %v6882
    %6884 = vmatpush1.msra.mxu0 %v6883
    %v6885 = vand.u32 %v6207, 4294901760
    %v6886 = vsub.f32 %v6207, %v6885
    %6887 = vmatprep.subr.mxu0 %v6886
    %v6888 = vand.u32 %v6206, 4294901760
    %v6889 = vsub.f32 %v6206, %v6888
    %6890 = vmatpush1.msra.mxu0 %v6889
    %v6891 = vand.u32 %v6209, 4294901760
    %v6892 = vsub.f32 %v6209, %v6891
    %6893 = vmatprep.subr.mxu0 %v6892
    %v6894 = vand.u32 %v6208, 4294901760
    %v6895 = vsub.f32 %v6208, %v6894
    %6896 = vmatpush1.msra.mxu0 %v6895
    %v6897 = vand.u32 %v6211, 4294901760
    %v6898 = vsub.f32 %v6211, %v6897
    %6899 = vmatprep.subr.mxu0 %v6898
    %v6900 = vand.u32 %v6210, 4294901760
    %v6901 = vsub.f32 %v6210, %v6900
    %6902 = vmatpush1.msra.mxu0 %v6901
    %v6903 = vand.u32 %v6213, 4294901760
    %v6904 = vsub.f32 %v6213, %v6903
    %6905 = vmatprep.subr.mxu0 %v6904
    %v6906 = vand.u32 %v6212, 4294901760
    %v6907 = vsub.f32 %v6212, %v6906
    %6908 = vmatpush1.msra.mxu0 %v6907
    %v6909 = vand.u32 %v6215, 4294901760
    %v6910 = vsub.f32 %v6215, %v6909
    %6911 = vmatprep.subr.mxu0 %v6910
    %v6912 = vand.u32 %v6214, 4294901760
    %v6913 = vsub.f32 %v6214, %v6912
    %6914 = vmatpush1.msra.mxu0 %v6913
    %v6915 = vand.u32 %v6217, 4294901760
    %v6916 = vsub.f32 %v6217, %v6915
    %6917 = vmatprep.subr.mxu0 %v6916
    %v6918 = vand.u32 %v6216, 4294901760
    %v6919 = vsub.f32 %v6216, %v6918
    %6920 = vmatpush1.msra.mxu0 %v6919
    %v6921 = vand.u32 %v6219, 4294901760
    %v6922 = vsub.f32 %v6219, %v6921
    %6923 = vmatprep.subr.mxu0 %v6922
    %v6924 = vand.u32 %v6218, 4294901760
    %v6925 = vsub.f32 %v6218, %v6924
    %6926 = vmatpush1.msra.mxu0 %v6925
    %6927 = vmatprep.subr.mxu0 0.0
    %6928 = vmatpush1.msra.mxu0 0.0
    %6929 = vmatprep.subr.mxu0 0.0
    %6930 = vmatpush1.msra.mxu0 0.0
    %6931 = vmatprep.subr.mxu0 0.0
    %6932 = vmatpush1.msra.mxu0 0.0
    %6933 = vmatprep.subr.mxu0 0.0
    %6934 = vmatpush1.msra.mxu0 0.0
    %6935 = vmatprep.subr.mxu0 0.0
    %6936 = vmatpush1.msra.mxu0 0.0
    %6937 = vmatprep.subr.mxu0 0.0
    %6938 = vmatpush1.msra.mxu0 0.0
    %6939 = vmatprep.subr.mxu0 0.0
    %6940 = vmatpush1.msra.mxu0 0.0
    %6941 = vmatprep.subr.mxu0 0.0
    %6942 = vmatpush1.msra.mxu0 0.0
    %6943 = vmatprep.subr.mxu0 0.0
    %6944 = vmatpush1.msra.mxu0 0.0
    %6945 = vmatprep.subr.mxu0 0.0
    %6946 = vmatpush1.msra.mxu0 0.0
    %6947 = vmatprep.subr.mxu0 0.0
    %6948 = vmatpush1.msra.mxu0 0.0
    %6949 = vmatprep.subr.mxu0 0.0
    %6950 = vmatpush1.msra.mxu0 0.0
    %6951 = vmatprep.subr.mxu0 0.0
    %6952 = vmatpush1.msra.mxu0 0.0
    %6953 = vmatprep.subr.mxu0 0.0
    %6954 = vmatpush1.msra.mxu0 0.0
    %6955 = vmatprep.subr.mxu0 0.0
    %6956 = vmatpush1.msra.mxu0 0.0
    %6957 = vmatprep.subr.mxu0 0.0
    %6958 = vmatpush1.msra.mxu0 0.0
    %6959 = vmatprep.mubr.f32.mxu0 0.0
    %v6960 = vand.u32 %v6172, 4294901760
    %v6961 = vsub.f32 %v6172, %v6960
    %6962 = vmatmul.mubr.f32.gmra.mrb[0].mxu0 %v6961
    %v6963 = vpop.f32.mrb[0].mxu0
    %v6964 = vadd.f32 %v6722, %v6963
    %v6965 = vpop.f32.mrb[0].mxu0
    %v6966 = vadd.f32 %v6724, %v6965
    %6967 = vmatprep.mubr.f32.mxu0 0.0
    %v6968 = vand.u32 %v6173, 4294901760
    %v6969 = vsub.f32 %v6173, %v6968
    %6970 = vmatmul.mubr.f32.gmra.mrb[0].mxu0 %v6969
    %v6971 = vpop.f32.mrb[0].mxu0
    %v6972 = vadd.f32 %v6729, %v6971
    %v6973 = vpop.f32.mrb[0].mxu0
    %v6974 = vadd.f32 %v6731, %v6973
    %6975 = vmatprep.mubr.f32.mxu0 0.0
    %v6976 = vand.u32 %v6174, 4294901760
    %v6977 = vsub.f32 %v6174, %v6976
    %6978 = vmatmul.mubr.f32.gmra.mrb[0].mxu0 %v6977
    %v6979 = vpop.f32.mrb[0].mxu0
    %v6980 = vadd.f32 %v6736, %v6979
    %v6981 = vpop.f32.mrb[0].mxu0
    %v6982 = vadd.f32 %v6738, %v6981
    %6983 = vmatprep.mubr.f32.mxu0 0.0
    %v6984 = vand.u32 %v6175, 4294901760
    %v6985 = vsub.f32 %v6175, %v6984
    %6986 = vmatmul.mubr.f32.gmra.mrb[0].mxu0 %v6985
    %v6987 = vpop.f32.mrb[0].mxu0
    %v6988 = vadd.f32 %v6743, %v6987
    %v6989 = vpop.f32.mrb[0].mxu0
    %v6990 = vadd.f32 %v6745, %v6989
    %6991 = vmatprep.mubr.f32.mxu0 0.0
    %v6992 = vand.u32 %v6176, 4294901760
    %v6993 = vsub.f32 %v6176, %v6992
    %6994 = vmatmul.mubr.f32.gmra.mrb[0].mxu0 %v6993
    %v6995 = vpop.f32.mrb[0].mxu0
    %v6996 = vadd.f32 %v6750, %v6995
    %v6997 = vpop.f32.mrb[0].mxu0
    %v6998 = vadd.f32 %v6752, %v6997
    %6999 = vmatprep.mubr.f32.mxu0 0.0
    %v7000 = vand.u32 %v6177, 4294901760
    %v7001 = vsub.f32 %v6177, %v7000
    %7002 = vmatmul.mubr.f32.gmra.mrb[0].mxu0 %v7001
    %v7003 = vpop.f32.mrb[0].mxu0
    %v7004 = vadd.f32 %v6757, %v7003
    %v7005 = vpop.f32.mrb[0].mxu0
    %v7006 = vadd.f32 %v6759, %v7005
    %7007 = vmatprep.mubr.f32.mxu0 0.0
    %v7008 = vand.u32 %v6178, 4294901760
    %v7009 = vsub.f32 %v6178, %v7008
    %7010 = vmatmul.mubr.f32.gmra.mrb[0].mxu0 %v7009
    %v7011 = vpop.f32.mrb[0].mxu0
    %v7012 = vadd.f32 %v6764, %v7011
    %v7013 = vpop.f32.mrb[0].mxu0
    %v7014 = vadd.f32 %v6766, %v7013
    %7015 = vmatprep.mubr.f32.mxu0 0.0
    %v7016 = vand.u32 %v6179, 4294901760
    %v7017 = vsub.f32 %v6179, %v7016
    %7018 = vmatmul.mubr.f32.gmra.mrb[0].mxu0 %v7017
    %v7019 = vpop.f32.mrb[0].mxu0
    %v7020 = vadd.f32 %v6771, %v7019
    %v7021 = vpop.f32.mrb[0].mxu0
    %v7022 = vadd.f32 %v6773, %v7021
    %7023 = vmatprep.mubr.f32.mxu0 0.0
    %v7024 = vand.u32 %v6180, 4294901760
    %v7025 = vsub.f32 %v6180, %v7024
    %7026 = vmatmul.mubr.f32.gmra.mrb[0].mxu0 %v7025
    %v7027 = vpop.f32.mrb[0].mxu0
    %v7028 = vadd.f32 %v6778, %v7027
    %v7029 = vpop.f32.mrb[0].mxu0
    %v7030 = vadd.f32 %v6780, %v7029
    %7031 = vmatprep.mubr.f32.mxu0 0.0
    %v7032 = vand.u32 %v6181, 4294901760
    %v7033 = vsub.f32 %v6181, %v7032
    %7034 = vmatmul.mubr.f32.gmra.mrb[0].mxu0 %v7033
    %v7035 = vpop.f32.mrb[0].mxu0
    %v7036 = vadd.f32 %v6785, %v7035
    %v7037 = vpop.f32.mrb[0].mxu0
    %v7038 = vadd.f32 %v6787, %v7037
    %7039 = vmatprep.mubr.f32.mxu0 0.0
    %v7040 = vand.u32 %v6182, 4294901760
    %v7041 = vsub.f32 %v6182, %v7040
    %7042 = vmatmul.mubr.f32.gmra.mrb[0].mxu0 %v7041
    %v7043 = vpop.f32.mrb[0].mxu0
    %v7044 = vadd.f32 %v6792, %v7043
    %v7045 = vpop.f32.mrb[0].mxu0
    %v7046 = vadd.f32 %v6794, %v7045
    %7047 = vmatprep.mubr.f32.mxu0 0.0
    %v7048 = vand.u32 %v6183, 4294901760
    %v7049 = vsub.f32 %v6183, %v7048
    %7050 = vmatmul.mubr.f32.gmra.mrb[0].mxu0 %v7049
    %v7051 = vpop.f32.mrb[0].mxu0
    %v7052 = vadd.f32 %v6799, %v7051
    %v7053 = vpop.f32.mrb[0].mxu0
    %v7054 = vadd.f32 %v6801, %v7053
    %7055 = vmatprep.mubr.f32.mxu0 0.0
    %v7056 = vand.u32 %v6184, 4294901760
    %v7057 = vsub.f32 %v6184, %v7056
    %7058 = vmatmul.mubr.f32.gmra.mrb[0].mxu0 %v7057
    %v7059 = vpop.f32.mrb[0].mxu0
    %v7060 = vadd.f32 %v6806, %v7059
    %v7061 = vpop.f32.mrb[0].mxu0
    %v7062 = vadd.f32 %v6808, %v7061
    %7063 = vmatprep.mubr.f32.mxu0 0.0
    %v7064 = vand.u32 %v6185, 4294901760
    %v7065 = vsub.f32 %v6185, %v7064
    %7066 = vmatmul.mubr.f32.gmra.mrb[0].mxu0 %v7065
    %v7067 = vpop.f32.mrb[0].mxu0
    %v7068 = vadd.f32 %v6813, %v7067
    %v7069 = vpop.f32.mrb[0].mxu0
    %v7070 = vadd.f32 %v6815, %v7069
    %7071 = vmatprep.mubr.f32.mxu0 0.0
    %v7072 = vand.u32 %v6186, 4294901760
    %v7073 = vsub.f32 %v6186, %v7072
    %7074 = vmatmul.mubr.f32.gmra.mrb[0].mxu0 %v7073
    %v7075 = vpop.f32.mrb[0].mxu0
    %v7076 = vadd.f32 %v6820, %v7075
    %v7077 = vpop.f32.mrb[0].mxu0
    %v7078 = vadd.f32 %v6822, %v7077
    %7079 = vmatprep.mubr.f32.mxu0 0.0
    %v7080 = vand.u32 %v6187, 4294901760
    %v7081 = vsub.f32 %v6187, %v7080
    %7082 = vmatmul.mubr.f32.gmra.mrb[0].mxu0 %v7081
    %v7083 = vpop.f32.mrb[0].mxu0
    %v7084 = vadd.f32 %v6827, %v7083
    %v7085 = vpop.f32.mrb[0].mxu0
    %v7086 = vadd.f32 %v6829, %v7085
    %7087 = vdwg.mxu0
    %v7088 = vand.u32 %v6189, 4294901760
    %7089 = vmatprep.subr.mxu0 %v7088
    %v7090 = vand.u32 %v6188, 4294901760
    %7091 = vmatpush1.msra.mxu0 %v7090
    %v7092 = vand.u32 %v6191, 4294901760
    %7093 = vmatprep.subr.mxu0 %v7092
    %v7094 = vand.u32 %v6190, 4294901760
    %7095 = vmatpush1.msra.mxu0 %v7094
    %v7096 = vand.u32 %v6193, 4294901760
    %7097 = vmatprep.subr.mxu0 %v7096
    %v7098 = vand.u32 %v6192, 4294901760
    %7099 = vmatpush1.msra.mxu0 %v7098
    %v7100 = vand.u32 %v6195, 4294901760
    %7101 = vmatprep.subr.mxu0 %v7100
    %v7102 = vand.u32 %v6194, 4294901760
    %7103 = vmatpush1.msra.mxu0 %v7102
    %v7104 = vand.u32 %v6197, 4294901760
    %7105 = vmatprep.subr.mxu0 %v7104
    %v7106 = vand.u32 %v6196, 4294901760
    %7107 = vmatpush1.msra.mxu0 %v7106
    %v7108 = vand.u32 %v6199, 4294901760
    %7109 = vmatprep.subr.mxu0 %v7108
    %v7110 = vand.u32 %v6198, 4294901760
    %7111 = vmatpush1.msra.mxu0 %v7110
    %v7112 = vand.u32 %v6201, 4294901760
    %7113 = vmatprep.subr.mxu0 %v7112
    %v7114 = vand.u32 %v6200, 4294901760
    %7115 = vmatpush1.msra.mxu0 %v7114
    %v7116 = vand.u32 %v6203, 4294901760
    %7117 = vmatprep.subr.mxu0 %v7116
    %v7118 = vand.u32 %v6202, 4294901760
    %7119 = vmatpush1.msra.mxu0 %v7118
    %v7120 = vand.u32 %v6205, 4294901760
    %7121 = vmatprep.subr.mxu0 %v7120
    %v7122 = vand.u32 %v6204, 4294901760
    %7123 = vmatpush1.msra.mxu0 %v7122
    %v7124 = vand.u32 %v6207, 4294901760
    %7125 = vmatprep.subr.mxu0 %v7124
    %v7126 = vand.u32 %v6206, 4294901760
    %7127 = vmatpush1.msra.mxu0 %v7126
    %v7128 = vand.u32 %v6209, 4294901760
    %7129 = vmatprep.subr.mxu0 %v7128
    %v7130 = vand.u32 %v6208, 4294901760
    %7131 = vmatpush1.msra.mxu0 %v7130
    %v7132 = vand.u32 %v6211, 4294901760
    %7133 = vmatprep.subr.mxu0 %v7132
    %v7134 = vand.u32 %v6210, 4294901760
    %7135 = vmatpush1.msra.mxu0 %v7134
    %v7136 = vand.u32 %v6213, 4294901760
    %7137 = vmatprep.subr.mxu0 %v7136
    %v7138 = vand.u32 %v6212, 4294901760
    %7139 = vmatpush1.msra.mxu0 %v7138
    %v7140 = vand.u32 %v6215, 4294901760
    %7141 = vmatprep.subr.mxu0 %v7140
    %v7142 = vand.u32 %v6214, 4294901760
    %7143 = vmatpush1.msra.mxu0 %v7142
    %v7144 = vand.u32 %v6217, 4294901760
    %7145 = vmatprep.subr.mxu0 %v7144
    %v7146 = vand.u32 %v6216, 4294901760
    %7147 = vmatpush1.msra.mxu0 %v7146
    %v7148 = vand.u32 %v6219, 4294901760
    %7149 = vmatprep.subr.mxu0 %v7148
    %v7150 = vand.u32 %v6218, 4294901760
    %7151 = vmatpush1.msra.mxu0 %v7150
    %7152 = vmatprep.subr.mxu0 0.0
    %7153 = vmatpush1.msra.mxu0 0.0
    %7154 = vmatprep.subr.mxu0 0.0
    %7155 = vmatpush1.msra.mxu0 0.0
    %7156 = vmatprep.subr.mxu0 0.0
    %7157 = vmatpush1.msra.mxu0 0.0
    %7158 = vmatprep.subr.mxu0 0.0
    %7159 = vmatpush1.msra.mxu0 0.0
    %7160 = vmatprep.subr.mxu0 0.0
    %7161 = vmatpush1.msra.mxu0 0.0
    %7162 = vmatprep.subr.mxu0 0.0
    %7163 = vmatpush1.msra.mxu0 0.0
    %7164 = vmatprep.subr.mxu0 0.0
    %7165 = vmatpush1.msra.mxu0 0.0
    %7166 = vmatprep.subr.mxu0 0.0
    %7167 = vmatpush1.msra.mxu0 0.0
    %7168 = vmatprep.subr.mxu0 0.0
    %7169 = vmatpush1.msra.mxu0 0.0
    %7170 = vmatprep.subr.mxu0 0.0
    %7171 = vmatpush1.msra.mxu0 0.0
    %7172 = vmatprep.subr.mxu0 0.0
    %7173 = vmatpush1.msra.mxu0 0.0
    %7174 = vmatprep.subr.mxu0 0.0
    %7175 = vmatpush1.msra.mxu0 0.0
    %7176 = vmatprep.subr.mxu0 0.0
    %7177 = vmatpush1.msra.mxu0 0.0
    %7178 = vmatprep.subr.mxu0 0.0
    %7179 = vmatpush1.msra.mxu0 0.0
    %7180 = vmatprep.subr.mxu0 0.0
    %7181 = vmatpush1.msra.mxu0 0.0
    %7182 = vmatprep.subr.mxu0 0.0
    %7183 = vmatpush1.msra.mxu0 0.0
    %7184 = vmatprep.mubr.f32.mxu0 0.0
    %v7185 = vand.u32 %v6172, 4294901760
    %v7186 = vsub.f32 %v6172, %v7185
    %v7187 = vand.u32 %v7186, 4294901760
    %7188 = vmatmul.mubr.f32.gmra.mrb[0].mxu0 %v7187
    %v7189 = vpop.f32.mrb[0].mxu0
    %v7190 = vadd.f32 %v6964, %v7189
    %v7191 = vpop.f32.mrb[0].mxu0
    %v7192 = vadd.f32 %v6966, %v7191
    %7193 = vmatprep.mubr.f32.mxu0 0.0
    %v7194 = vand.u32 %v6173, 4294901760
    %v7195 = vsub.f32 %v6173, %v7194
    %v7196 = vand.u32 %v7195, 4294901760
    %7197 = vmatmul.mubr.f32.gmra.mrb[0].mxu0 %v7196
    %v7198 = vpop.f32.mrb[0].mxu0
    %v7199 = vadd.f32 %v6972, %v7198
    %v7200 = vpop.f32.mrb[0].mxu0
    %v7201 = vadd.f32 %v6974, %v7200
    %7202 = vmatprep.mubr.f32.mxu0 0.0
    %v7203 = vand.u32 %v6174, 4294901760
    %v7204 = vsub.f32 %v6174, %v7203
    %v7205 = vand.u32 %v7204, 4294901760
    %7206 = vmatmul.mubr.f32.gmra.mrb[0].mxu0 %v7205
    %v7207 = vpop.f32.mrb[0].mxu0
    %v7208 = vadd.f32 %v6980, %v7207
    %v7209 = vpop.f32.mrb[0].mxu0
    %v7210 = vadd.f32 %v6982, %v7209
    %7211 = vmatprep.mubr.f32.mxu0 0.0
    %v7212 = vand.u32 %v6175, 4294901760
    %v7213 = vsub.f32 %v6175, %v7212
    %v7214 = vand.u32 %v7213, 4294901760
    %7215 = vmatmul.mubr.f32.gmra.mrb[0].mxu0 %v7214
    %v7216 = vpop.f32.mrb[0].mxu0
    %v7217 = vadd.f32 %v6988, %v7216
    %v7218 = vpop.f32.mrb[0].mxu0
    %v7219 = vadd.f32 %v6990, %v7218
    %7220 = vmatprep.mubr.f32.mxu0 0.0
    %v7221 = vand.u32 %v6176, 4294901760
    %v7222 = vsub.f32 %v6176, %v7221
    %v7223 = vand.u32 %v7222, 4294901760
    %7224 = vmatmul.mubr.f32.gmra.mrb[0].mxu0 %v7223
    %v7225 = vpop.f32.mrb[0].mxu0
    %v7226 = vadd.f32 %v6996, %v7225
    %v7227 = vpop.f32.mrb[0].mxu0
    %v7228 = vadd.f32 %v6998, %v7227
    %7229 = vmatprep.mubr.f32.mxu0 0.0
    %v7230 = vand.u32 %v6177, 4294901760
    %v7231 = vsub.f32 %v6177, %v7230
    %v7232 = vand.u32 %v7231, 4294901760
    %7233 = vmatmul.mubr.f32.gmra.mrb[0].mxu0 %v7232
    %v7234 = vpop.f32.mrb[0].mxu0
    %v7235 = vadd.f32 %v7004, %v7234
    %v7236 = vpop.f32.mrb[0].mxu0
    %v7237 = vadd.f32 %v7006, %v7236
    %7238 = vmatprep.mubr.f32.mxu0 0.0
    %v7239 = vand.u32 %v6178, 4294901760
    %v7240 = vsub.f32 %v6178, %v7239
    %v7241 = vand.u32 %v7240, 4294901760
    %7242 = vmatmul.mubr.f32.gmra.mrb[0].mxu0 %v7241
    %v7243 = vpop.f32.mrb[0].mxu0
    %v7244 = vadd.f32 %v7012, %v7243
    %v7245 = vpop.f32.mrb[0].mxu0
    %v7246 = vadd.f32 %v7014, %v7245
    %7247 = vmatprep.mubr.f32.mxu0 0.0
    %v7248 = vand.u32 %v6179, 4294901760
    %v7249 = vsub.f32 %v6179, %v7248
    %v7250 = vand.u32 %v7249, 4294901760
    %7251 = vmatmul.mubr.f32.gmra.mrb[0].mxu0 %v7250
    %v7252 = vpop.f32.mrb[0].mxu0
    %v7253 = vadd.f32 %v7020, %v7252
    %v7254 = vpop.f32.mrb[0].mxu0
    %v7255 = vadd.f32 %v7022, %v7254
    %7256 = vmatprep.mubr.f32.mxu0 0.0
    %v7257 = vand.u32 %v6180, 4294901760
    %v7258 = vsub.f32 %v6180, %v7257
    %v7259 = vand.u32 %v7258, 4294901760
    %7260 = vmatmul.mubr.f32.gmra.mrb[0].mxu0 %v7259
    %v7261 = vpop.f32.mrb[0].mxu0
    %v7262 = vadd.f32 %v7028, %v7261
    %v7263 = vpop.f32.mrb[0].mxu0
    %v7264 = vadd.f32 %v7030, %v7263
    %7265 = vmatprep.mubr.f32.mxu0 0.0
    %v7266 = vand.u32 %v6181, 4294901760
    %v7267 = vsub.f32 %v6181, %v7266
    %v7268 = vand.u32 %v7267, 4294901760
    %7269 = vmatmul.mubr.f32.gmra.mrb[0].mxu0 %v7268
    %v7270 = vpop.f32.mrb[0].mxu0
    %v7271 = vadd.f32 %v7036, %v7270
    %v7272 = vpop.f32.mrb[0].mxu0
    %v7273 = vadd.f32 %v7038, %v7272
    %7274 = vmatprep.mubr.f32.mxu0 0.0
    %v7275 = vand.u32 %v6182, 4294901760
    %v7276 = vsub.f32 %v6182, %v7275
    %v7277 = vand.u32 %v7276, 4294901760
    %7278 = vmatmul.mubr.f32.gmra.mrb[0].mxu0 %v7277
    %v7279 = vpop.f32.mrb[0].mxu0
    %v7280 = vadd.f32 %v7044, %v7279
    %v7281 = vpop.f32.mrb[0].mxu0
    %v7282 = vadd.f32 %v7046, %v7281
    %7283 = vmatprep.mubr.f32.mxu0 0.0
    %v7284 = vand.u32 %v6183, 4294901760
    %v7285 = vsub.f32 %v6183, %v7284
    %v7286 = vand.u32 %v7285, 4294901760
    %7287 = vmatmul.mubr.f32.gmra.mrb[0].mxu0 %v7286
    %v7288 = vpop.f32.mrb[0].mxu0
    %v7289 = vadd.f32 %v7052, %v7288
    %v7290 = vpop.f32.mrb[0].mxu0
    %v7291 = vadd.f32 %v7054, %v7290
    %7292 = vmatprep.mubr.f32.mxu0 0.0
    %v7293 = vand.u32 %v6184, 4294901760
    %v7294 = vsub.f32 %v6184, %v7293
    %v7295 = vand.u32 %v7294, 4294901760
    %7296 = vmatmul.mubr.f32.gmra.mrb[0].mxu0 %v7295
    %v7297 = vpop.f32.mrb[0].mxu0
    %v7298 = vadd.f32 %v7060, %v7297
    %v7299 = vpop.f32.mrb[0].mxu0
    %v7300 = vadd.f32 %v7062, %v7299
    %7301 = vmatprep.mubr.f32.mxu0 0.0
    %v7302 = vand.u32 %v6185, 4294901760
    %v7303 = vsub.f32 %v6185, %v7302
    %v7304 = vand.u32 %v7303, 4294901760
    %7305 = vmatmul.mubr.f32.gmra.mrb[0].mxu0 %v7304
    %v7306 = vpop.f32.mrb[0].mxu0
    %v7307 = vadd.f32 %v7068, %v7306
    %v7308 = vpop.f32.mrb[0].mxu0
    %v7309 = vadd.f32 %v7070, %v7308
    %7310 = vmatprep.mubr.f32.mxu0 0.0
    %v7311 = vand.u32 %v6186, 4294901760
    %v7312 = vsub.f32 %v6186, %v7311
    %v7313 = vand.u32 %v7312, 4294901760
    %7314 = vmatmul.mubr.f32.gmra.mrb[0].mxu0 %v7313
    %v7315 = vpop.f32.mrb[0].mxu0
    %v7316 = vadd.f32 %v7076, %v7315
    %v7317 = vpop.f32.mrb[0].mxu0
    %v7318 = vadd.f32 %v7078, %v7317
    %7319 = vmatprep.mubr.f32.mxu0 0.0
    %v7320 = vand.u32 %v6187, 4294901760
    %v7321 = vsub.f32 %v6187, %v7320
    %v7322 = vand.u32 %v7321, 4294901760
    %7323 = vmatmul.mubr.f32.gmra.mrb[0].mxu0 %v7322
    %v7324 = vpop.f32.mrb[0].mxu0
    %v7325 = vadd.f32 %v7084, %v7324
    %v7326 = vpop.f32.mrb[0].mxu0
    %v7327 = vadd.f32 %v7086, %v7326
    %7328 = vdwg.mxu0
    %v7329 = vand.u32 %v6189, 4294901760
    %v7330 = vsub.f32 %v6189, %v7329
    %v7331 = vand.u32 %v7330, 4294901760
    %7332 = vmatprep.subr.mxu0 %v7331
    %v7333 = vand.u32 %v6188, 4294901760
    %v7334 = vsub.f32 %v6188, %v7333
    %v7335 = vand.u32 %v7334, 4294901760
    %7336 = vmatpush1.msra.mxu0 %v7335
    %v7337 = vand.u32 %v6191, 4294901760
    %v7338 = vsub.f32 %v6191, %v7337
    %v7339 = vand.u32 %v7338, 4294901760
    %7340 = vmatprep.subr.mxu0 %v7339
    %v7341 = vand.u32 %v6190, 4294901760
    %v7342 = vsub.f32 %v6190, %v7341
    %v7343 = vand.u32 %v7342, 4294901760
    %7344 = vmatpush1.msra.mxu0 %v7343
    %v7345 = vand.u32 %v6193, 4294901760
    %v7346 = vsub.f32 %v6193, %v7345
    %v7347 = vand.u32 %v7346, 4294901760
    %7348 = vmatprep.subr.mxu0 %v7347
    %v7349 = vand.u32 %v6192, 4294901760
    %v7350 = vsub.f32 %v6192, %v7349
    %v7351 = vand.u32 %v7350, 4294901760
    %7352 = vmatpush1.msra.mxu0 %v7351
    %v7353 = vand.u32 %v6195, 4294901760
    %v7354 = vsub.f32 %v6195, %v7353
    %v7355 = vand.u32 %v7354, 4294901760
    %7356 = vmatprep.subr.mxu0 %v7355
    %v7357 = vand.u32 %v6194, 4294901760
    %v7358 = vsub.f32 %v6194, %v7357
    %v7359 = vand.u32 %v7358, 4294901760
    %7360 = vmatpush1.msra.mxu0 %v7359
    %v7361 = vand.u32 %v6197, 4294901760
    %v7362 = vsub.f32 %v6197, %v7361
    %v7363 = vand.u32 %v7362, 4294901760
    %7364 = vmatprep.subr.mxu0 %v7363
    %v7365 = vand.u32 %v6196, 4294901760
    %v7366 = vsub.f32 %v6196, %v7365
    %v7367 = vand.u32 %v7366, 4294901760
    %7368 = vmatpush1.msra.mxu0 %v7367
    %v7369 = vand.u32 %v6199, 4294901760
    %v7370 = vsub.f32 %v6199, %v7369
    %v7371 = vand.u32 %v7370, 4294901760
    %7372 = vmatprep.subr.mxu0 %v7371
    %v7373 = vand.u32 %v6198, 4294901760
    %v7374 = vsub.f32 %v6198, %v7373
    %v7375 = vand.u32 %v7374, 4294901760
    %7376 = vmatpush1.msra.mxu0 %v7375
    %v7377 = vand.u32 %v6201, 4294901760
    %v7378 = vsub.f32 %v6201, %v7377
    %v7379 = vand.u32 %v7378, 4294901760
    %7380 = vmatprep.subr.mxu0 %v7379
    %v7381 = vand.u32 %v6200, 4294901760
    %v7382 = vsub.f32 %v6200, %v7381
    %v7383 = vand.u32 %v7382, 4294901760
    %7384 = vmatpush1.msra.mxu0 %v7383
    %v7385 = vand.u32 %v6203, 4294901760
    %v7386 = vsub.f32 %v6203, %v7385
    %v7387 = vand.u32 %v7386, 4294901760
    %7388 = vmatprep.subr.mxu0 %v7387
    %v7389 = vand.u32 %v6202, 4294901760
    %v7390 = vsub.f32 %v6202, %v7389
    %v7391 = vand.u32 %v7390, 4294901760
    %7392 = vmatpush1.msra.mxu0 %v7391
    %v7393 = vand.u32 %v6205, 4294901760
    %v7394 = vsub.f32 %v6205, %v7393
    %v7395 = vand.u32 %v7394, 4294901760
    %7396 = vmatprep.subr.mxu0 %v7395
    %v7397 = vand.u32 %v6204, 4294901760
    %v7398 = vsub.f32 %v6204, %v7397
    %v7399 = vand.u32 %v7398, 4294901760
    %7400 = vmatpush1.msra.mxu0 %v7399
    %v7401 = vand.u32 %v6207, 4294901760
    %v7402 = vsub.f32 %v6207, %v7401
    %v7403 = vand.u32 %v7402, 4294901760
    %7404 = vmatprep.subr.mxu0 %v7403
    %v7405 = vand.u32 %v6206, 4294901760
    %v7406 = vsub.f32 %v6206, %v7405
    %v7407 = vand.u32 %v7406, 4294901760
    %7408 = vmatpush1.msra.mxu0 %v7407
    %v7409 = vand.u32 %v6209, 4294901760
    %v7410 = vsub.f32 %v6209, %v7409
    %v7411 = vand.u32 %v7410, 4294901760
    %7412 = vmatprep.subr.mxu0 %v7411
    %v7413 = vand.u32 %v6208, 4294901760
    %v7414 = vsub.f32 %v6208, %v7413
    %v7415 = vand.u32 %v7414, 4294901760
    %7416 = vmatpush1.msra.mxu0 %v7415
    %v7417 = vand.u32 %v6211, 4294901760
    %v7418 = vsub.f32 %v6211, %v7417
    %v7419 = vand.u32 %v7418, 4294901760
    %7420 = vmatprep.subr.mxu0 %v7419
    %v7421 = vand.u32 %v6210, 4294901760
    %v7422 = vsub.f32 %v6210, %v7421
    %v7423 = vand.u32 %v7422, 4294901760
    %7424 = vmatpush1.msra.mxu0 %v7423
    %v7425 = vand.u32 %v6213, 4294901760
    %v7426 = vsub.f32 %v6213, %v7425
    %v7427 = vand.u32 %v7426, 4294901760
    %7428 = vmatprep.subr.mxu0 %v7427
    %v7429 = vand.u32 %v6212, 4294901760
    %v7430 = vsub.f32 %v6212, %v7429
    %v7431 = vand.u32 %v7430, 4294901760
    %7432 = vmatpush1.msra.mxu0 %v7431
    %v7433 = vand.u32 %v6215, 4294901760
    %v7434 = vsub.f32 %v6215, %v7433
    %v7435 = vand.u32 %v7434, 4294901760
    %7436 = vmatprep.subr.mxu0 %v7435
    %v7437 = vand.u32 %v6214, 4294901760
    %v7438 = vsub.f32 %v6214, %v7437
    %v7439 = vand.u32 %v7438, 4294901760
    %7440 = vmatpush1.msra.mxu0 %v7439
    %v7441 = vand.u32 %v6217, 4294901760
    %v7442 = vsub.f32 %v6217, %v7441
    %v7443 = vand.u32 %v7442, 4294901760
    %7444 = vmatprep.subr.mxu0 %v7443
    %v7445 = vand.u32 %v6216, 4294901760
    %v7446 = vsub.f32 %v6216, %v7445
    %v7447 = vand.u32 %v7446, 4294901760
    %7448 = vmatpush1.msra.mxu0 %v7447
    %v7449 = vand.u32 %v6219, 4294901760
    %v7450 = vsub.f32 %v6219, %v7449
    %v7451 = vand.u32 %v7450, 4294901760
    %7452 = vmatprep.subr.mxu0 %v7451
    %v7453 = vand.u32 %v6218, 4294901760
    %v7454 = vsub.f32 %v6218, %v7453
    %v7455 = vand.u32 %v7454, 4294901760
    %7456 = vmatpush1.msra.mxu0 %v7455
    %7457 = vmatprep.subr.mxu0 0.0
    %7458 = vmatpush1.msra.mxu0 0.0
    %7459 = vmatprep.subr.mxu0 0.0
    %7460 = vmatpush1.msra.mxu0 0.0
    %7461 = vmatprep.subr.mxu0 0.0
    %7462 = vmatpush1.msra.mxu0 0.0
    %7463 = vmatprep.subr.mxu0 0.0
    %7464 = vmatpush1.msra.mxu0 0.0
    %7465 = vmatprep.subr.mxu0 0.0
    %7466 = vmatpush1.msra.mxu0 0.0
    %7467 = vmatprep.subr.mxu0 0.0
    %7468 = vmatpush1.msra.mxu0 0.0
    %7469 = vmatprep.subr.mxu0 0.0
    %7470 = vmatpush1.msra.mxu0 0.0
    %7471 = vmatprep.subr.mxu0 0.0
    %7472 = vmatpush1.msra.mxu0 0.0
    %7473 = vmatprep.subr.mxu0 0.0
    %7474 = vmatpush1.msra.mxu0 0.0
    %7475 = vmatprep.subr.mxu0 0.0
    %7476 = vmatpush1.msra.mxu0 0.0
    %7477 = vmatprep.subr.mxu0 0.0
    %7478 = vmatpush1.msra.mxu0 0.0
    %7479 = vmatprep.subr.mxu0 0.0
    %7480 = vmatpush1.msra.mxu0 0.0
    %7481 = vmatprep.subr.mxu0 0.0
    %7482 = vmatpush1.msra.mxu0 0.0
    %7483 = vmatprep.subr.mxu0 0.0
    %7484 = vmatpush1.msra.mxu0 0.0
    %7485 = vmatprep.subr.mxu0 0.0
    %7486 = vmatpush1.msra.mxu0 0.0
    %7487 = vmatprep.subr.mxu0 0.0
    %7488 = vmatpush1.msra.mxu0 0.0
    %7489 = vmatprep.mubr.f32.mxu0 0.0
    %v7490 = vand.u32 %v6172, 4294901760
    %7491 = vmatmul.mubr.f32.gmra.mrb[0].mxu0 %v7490
    %v7492 = vpop.f32.mrb[0].mxu0
    %v7493 = vadd.f32 %v7190, %v7492
    %v7494 = vpop.f32.mrb[0].mxu0
    %v7495 = vadd.f32 %v7192, %v7494
    %7496 = vmatprep.mubr.f32.mxu0 0.0
    %v7497 = vand.u32 %v6173, 4294901760
    %7498 = vmatmul.mubr.f32.gmra.mrb[0].mxu0 %v7497
    %v7499 = vpop.f32.mrb[0].mxu0
    %v7500 = vadd.f32 %v7199, %v7499
    %v7501 = vpop.f32.mrb[0].mxu0
    %v7502 = vadd.f32 %v7201, %v7501
    %7503 = vmatprep.mubr.f32.mxu0 0.0
    %v7504 = vand.u32 %v6174, 4294901760
    %7505 = vmatmul.mubr.f32.gmra.mrb[0].mxu0 %v7504
    %v7506 = vpop.f32.mrb[0].mxu0
    %v7507 = vadd.f32 %v7208, %v7506
    %v7508 = vpop.f32.mrb[0].mxu0
    %v7509 = vadd.f32 %v7210, %v7508
    %7510 = vmatprep.mubr.f32.mxu0 0.0
    %v7511 = vand.u32 %v6175, 4294901760
    %7512 = vmatmul.mubr.f32.gmra.mrb[0].mxu0 %v7511
    %v7513 = vpop.f32.mrb[0].mxu0
    %v7514 = vadd.f32 %v7217, %v7513
    %v7515 = vpop.f32.mrb[0].mxu0
    %v7516 = vadd.f32 %v7219, %v7515
    %7517 = vmatprep.mubr.f32.mxu0 0.0
    %v7518 = vand.u32 %v6176, 4294901760
    %7519 = vmatmul.mubr.f32.gmra.mrb[0].mxu0 %v7518
    %v7520 = vpop.f32.mrb[0].mxu0
    %v7521 = vadd.f32 %v7226, %v7520
    %v7522 = vpop.f32.mrb[0].mxu0
    %v7523 = vadd.f32 %v7228, %v7522
    %7524 = vmatprep.mubr.f32.mxu0 0.0
    %v7525 = vand.u32 %v6177, 4294901760
    %7526 = vmatmul.mubr.f32.gmra.mrb[0].mxu0 %v7525
    %v7527 = vpop.f32.mrb[0].mxu0
    %v7528 = vadd.f32 %v7235, %v7527
    %v7529 = vpop.f32.mrb[0].mxu0
    %v7530 = vadd.f32 %v7237, %v7529
    %7531 = vmatprep.mubr.f32.mxu0 0.0
    %v7532 = vand.u32 %v6178, 4294901760
    %7533 = vmatmul.mubr.f32.gmra.mrb[0].mxu0 %v7532
    %v7534 = vpop.f32.mrb[0].mxu0
    %v7535 = vadd.f32 %v7244, %v7534
    %v7536 = vpop.f32.mrb[0].mxu0
    %v7537 = vadd.f32 %v7246, %v7536
    %7538 = vmatprep.mubr.f32.mxu0 0.0
    %v7539 = vand.u32 %v6179, 4294901760
    %7540 = vmatmul.mubr.f32.gmra.mrb[0].mxu0 %v7539
    %v7541 = vpop.f32.mrb[0].mxu0
    %v7542 = vadd.f32 %v7253, %v7541
    %v7543 = vpop.f32.mrb[0].mxu0
    %v7544 = vadd.f32 %v7255, %v7543
    %7545 = vmatprep.mubr.f32.mxu0 0.0
    %v7546 = vand.u32 %v6180, 4294901760
    %7547 = vmatmul.mubr.f32.gmra.mrb[0].mxu0 %v7546
    %v7548 = vpop.f32.mrb[0].mxu0
    %v7549 = vadd.f32 %v7262, %v7548
    %v7550 = vpop.f32.mrb[0].mxu0
    %v7551 = vadd.f32 %v7264, %v7550
    %7552 = vmatprep.mubr.f32.mxu0 0.0
    %v7553 = vand.u32 %v6181, 4294901760
    %7554 = vmatmul.mubr.f32.gmra.mrb[0].mxu0 %v7553
    %v7555 = vpop.f32.mrb[0].mxu0
    %v7556 = vadd.f32 %v7271, %v7555
    %v7557 = vpop.f32.mrb[0].mxu0
    %v7558 = vadd.f32 %v7273, %v7557
    %7559 = vmatprep.mubr.f32.mxu0 0.0
    %v7560 = vand.u32 %v6182, 4294901760
    %7561 = vmatmul.mubr.f32.gmra.mrb[0].mxu0 %v7560
    %v7562 = vpop.f32.mrb[0].mxu0
    %v7563 = vadd.f32 %v7280, %v7562
    %v7564 = vpop.f32.mrb[0].mxu0
    %v7565 = vadd.f32 %v7282, %v7564
    %7566 = vmatprep.mubr.f32.mxu0 0.0
    %v7567 = vand.u32 %v6183, 4294901760
    %7568 = vmatmul.mubr.f32.gmra.mrb[0].mxu0 %v7567
    %v7569 = vpop.f32.mrb[0].mxu0
    %v7570 = vadd.f32 %v7289, %v7569
    %v7571 = vpop.f32.mrb[0].mxu0
    %v7572 = vadd.f32 %v7291, %v7571
    %7573 = vmatprep.mubr.f32.mxu0 0.0
    %v7574 = vand.u32 %v6184, 4294901760
    %7575 = vmatmul.mubr.f32.gmra.mrb[0].mxu0 %v7574
    %v7576 = vpop.f32.mrb[0].mxu0
    %v7577 = vadd.f32 %v7298, %v7576
    %v7578 = vpop.f32.mrb[0].mxu0
    %v7579 = vadd.f32 %v7300, %v7578
    %7580 = vmatprep.mubr.f32.mxu0 0.0
    %v7581 = vand.u32 %v6185, 4294901760
    %7582 = vmatmul.mubr.f32.gmra.mrb[0].mxu0 %v7581
    %v7583 = vpop.f32.mrb[0].mxu0
    %v7584 = vadd.f32 %v7307, %v7583
    %v7585 = vpop.f32.mrb[0].mxu0
    %v7586 = vadd.f32 %v7309, %v7585
    %7587 = vmatprep.mubr.f32.mxu0 0.0
    %v7588 = vand.u32 %v6186, 4294901760
    %7589 = vmatmul.mubr.f32.gmra.mrb[0].mxu0 %v7588
    %v7590 = vpop.f32.mrb[0].mxu0
    %v7591 = vadd.f32 %v7316, %v7590
    %v7592 = vpop.f32.mrb[0].mxu0
    %v7593 = vadd.f32 %v7318, %v7592
    %7594 = vmatprep.mubr.f32.mxu0 0.0
    %v7595 = vand.u32 %v6187, 4294901760
    %7596 = vmatmul.mubr.f32.gmra.mrb[0].mxu0 %v7595
    %v7597 = vpop.f32.mrb[0].mxu0
    %v7598 = vadd.f32 %v7325, %v7597
    %v7599 = vpop.f32.mrb[0].mxu0
    %v7600 = vadd.f32 %v7327, %v7599
    %7601 = vdwg.mxu0
    %v7602 = vand.u32 %v6189, 4294901760
    %7603 = vmatprep.subr.mxu0 %v7602
    %v7604 = vand.u32 %v6188, 4294901760
    %7605 = vmatpush1.msra.mxu0 %v7604
    %v7606 = vand.u32 %v6191, 4294901760
    %7607 = vmatprep.subr.mxu0 %v7606
    %v7608 = vand.u32 %v6190, 4294901760
    %7609 = vmatpush1.msra.mxu0 %v7608
    %v7610 = vand.u32 %v6193, 4294901760
    %7611 = vmatprep.subr.mxu0 %v7610
    %v7612 = vand.u32 %v6192, 4294901760
    %7613 = vmatpush1.msra.mxu0 %v7612
    %v7614 = vand.u32 %v6195, 4294901760
    %7615 = vmatprep.subr.mxu0 %v7614
    %v7616 = vand.u32 %v6194, 4294901760
    %7617 = vmatpush1.msra.mxu0 %v7616
    %v7618 = vand.u32 %v6197, 4294901760
    %7619 = vmatprep.subr.mxu0 %v7618
    %v7620 = vand.u32 %v6196, 4294901760
    %7621 = vmatpush1.msra.mxu0 %v7620
    %v7622 = vand.u32 %v6199, 4294901760
    %7623 = vmatprep.subr.mxu0 %v7622
    %v7624 = vand.u32 %v6198, 4294901760
    %7625 = vmatpush1.msra.mxu0 %v7624
    %v7626 = vand.u32 %v6201, 4294901760
    %7627 = vmatprep.subr.mxu0 %v7626
    %v7628 = vand.u32 %v6200, 4294901760
    %7629 = vmatpush1.msra.mxu0 %v7628
    %v7630 = vand.u32 %v6203, 4294901760
    %7631 = vmatprep.subr.mxu0 %v7630
    %v7632 = vand.u32 %v6202, 4294901760
    %7633 = vmatpush1.msra.mxu0 %v7632
    %v7634 = vand.u32 %v6205, 4294901760
    %7635 = vmatprep.subr.mxu0 %v7634
    %v7636 = vand.u32 %v6204, 4294901760
    %7637 = vmatpush1.msra.mxu0 %v7636
    %v7638 = vand.u32 %v6207, 4294901760
    %7639 = vmatprep.subr.mxu0 %v7638
    %v7640 = vand.u32 %v6206, 4294901760
    %7641 = vmatpush1.msra.mxu0 %v7640
    %v7642 = vand.u32 %v6209, 4294901760
    %7643 = vmatprep.subr.mxu0 %v7642
    %v7644 = vand.u32 %v6208, 4294901760
    %7645 = vmatpush1.msra.mxu0 %v7644
    %v7646 = vand.u32 %v6211, 4294901760
    %7647 = vmatprep.subr.mxu0 %v7646
    %v7648 = vand.u32 %v6210, 4294901760
    %7649 = vmatpush1.msra.mxu0 %v7648
    %v7650 = vand.u32 %v6213, 4294901760
    %7651 = vmatprep.subr.mxu0 %v7650
    %v7652 = vand.u32 %v6212, 4294901760
    %7653 = vmatpush1.msra.mxu0 %v7652
    %v7654 = vand.u32 %v6215, 4294901760
    %7655 = vmatprep.subr.mxu0 %v7654
    %v7656 = vand.u32 %v6214, 4294901760
    %7657 = vmatpush1.msra.mxu0 %v7656
    %v7658 = vand.u32 %v6217, 4294901760
    %7659 = vmatprep.subr.mxu0 %v7658
    %v7660 = vand.u32 %v6216, 4294901760
    %7661 = vmatpush1.msra.mxu0 %v7660
    %v7662 = vand.u32 %v6219, 4294901760
    %7663 = vmatprep.subr.mxu0 %v7662
    %v7664 = vand.u32 %v6218, 4294901760
    %7665 = vmatpush1.msra.mxu0 %v7664
    %7666 = vmatprep.subr.mxu0 0.0
    %7667 = vmatpush1.msra.mxu0 0.0
    %7668 = vmatprep.subr.mxu0 0.0
    %7669 = vmatpush1.msra.mxu0 0.0
    %7670 = vmatprep.subr.mxu0 0.0
    %7671 = vmatpush1.msra.mxu0 0.0
    %7672 = vmatprep.subr.mxu0 0.0
    %7673 = vmatpush1.msra.mxu0 0.0
    %7674 = vmatprep.subr.mxu0 0.0
    %7675 = vmatpush1.msra.mxu0 0.0
    %7676 = vmatprep.subr.mxu0 0.0
    %7677 = vmatpush1.msra.mxu0 0.0
    %7678 = vmatprep.subr.mxu0 0.0
    %7679 = vmatpush1.msra.mxu0 0.0
    %7680 = vmatprep.subr.mxu0 0.0
    %7681 = vmatpush1.msra.mxu0 0.0
    %7682 = vmatprep.subr.mxu0 0.0
    %7683 = vmatpush1.msra.mxu0 0.0
    %7684 = vmatprep.subr.mxu0 0.0
    %7685 = vmatpush1.msra.mxu0 0.0
    %7686 = vmatprep.subr.mxu0 0.0
    %7687 = vmatpush1.msra.mxu0 0.0
    %7688 = vmatprep.subr.mxu0 0.0
    %7689 = vmatpush1.msra.mxu0 0.0
    %7690 = vmatprep.subr.mxu0 0.0
    %7691 = vmatpush1.msra.mxu0 0.0
    %7692 = vmatprep.subr.mxu0 0.0
    %7693 = vmatpush1.msra.mxu0 0.0
    %7694 = vmatprep.subr.mxu0 0.0
    %7695 = vmatpush1.msra.mxu0 0.0
    %7696 = vmatprep.subr.mxu0 0.0
    %7697 = vmatpush1.msra.mxu0 0.0
    %7698 = vmatprep.mubr.f32.mxu0 0.0
    %v7699 = vand.u32 %v6172, 4294901760
    %7700 = vmatmul.mubr.f32.gmra.mrb[0].mxu0 %v7699
    %v7701 = vpop.f32.mrb[0].mxu0
    %v7702 = vadd.f32 %v7493, %v7701
    %v7703 = vpop.f32.mrb[0].mxu0
    %v7704 = vadd.f32 %v7495, %v7703
    %7705 = vmatprep.mubr.f32.mxu0 0.0
    %v7706 = vand.u32 %v6173, 4294901760
    %7707 = vmatmul.mubr.f32.gmra.mrb[0].mxu0 %v7706
    %v7708 = vpop.f32.mrb[0].mxu0
    %v7709 = vadd.f32 %v7500, %v7708
    %v7710 = vpop.f32.mrb[0].mxu0
    %v7711 = vadd.f32 %v7502, %v7710
    %7712 = vmatprep.mubr.f32.mxu0 0.0
    %v7713 = vand.u32 %v6174, 4294901760
    %7714 = vmatmul.mubr.f32.gmra.mrb[0].mxu0 %v7713
    %v7715 = vpop.f32.mrb[0].mxu0
    %v7716 = vadd.f32 %v7507, %v7715
    %v7717 = vpop.f32.mrb[0].mxu0
    %v7718 = vadd.f32 %v7509, %v7717
    %7719 = vmatprep.mubr.f32.mxu0 0.0
    %v7720 = vand.u32 %v6175, 4294901760
    %7721 = vmatmul.mubr.f32.gmra.mrb[0].mxu0 %v7720
    %v7722 = vpop.f32.mrb[0].mxu0
    %v7723 = vadd.f32 %v7514, %v7722
    %v7724 = vpop.f32.mrb[0].mxu0
    %v7725 = vadd.f32 %v7516, %v7724
    %7726 = vmatprep.mubr.f32.mxu0 0.0
    %v7727 = vand.u32 %v6176, 4294901760
    %7728 = vmatmul.mubr.f32.gmra.mrb[0].mxu0 %v7727
    %v7729 = vpop.f32.mrb[0].mxu0
    %v7730 = vadd.f32 %v7521, %v7729
    %v7731 = vpop.f32.mrb[0].mxu0
    %v7732 = vadd.f32 %v7523, %v7731
    %7733 = vmatprep.mubr.f32.mxu0 0.0
    %v7734 = vand.u32 %v6177, 4294901760
    %7735 = vmatmul.mubr.f32.gmra.mrb[0].mxu0 %v7734
    %v7736 = vpop.f32.mrb[0].mxu0
    %v7737 = vadd.f32 %v7528, %v7736
    %v7738 = vpop.f32.mrb[0].mxu0
    %v7739 = vadd.f32 %v7530, %v7738
    %7740 = vmatprep.mubr.f32.mxu0 0.0
    %v7741 = vand.u32 %v6178, 4294901760
    %7742 = vmatmul.mubr.f32.gmra.mrb[0].mxu0 %v7741
    %v7743 = vpop.f32.mrb[0].mxu0
    %v7744 = vadd.f32 %v7535, %v7743
    %v7745 = vpop.f32.mrb[0].mxu0
    %v7746 = vadd.f32 %v7537, %v7745
    %7747 = vmatprep.mubr.f32.mxu0 0.0
    %v7748 = vand.u32 %v6179, 4294901760
    %7749 = vmatmul.mubr.f32.gmra.mrb[0].mxu0 %v7748
    %v7750 = vpop.f32.mrb[0].mxu0
    %v7751 = vadd.f32 %v7542, %v7750
    %v7752 = vpop.f32.mrb[0].mxu0
    %v7753 = vadd.f32 %v7544, %v7752
    %7754 = vmatprep.mubr.f32.mxu0 0.0
    %v7755 = vand.u32 %v6180, 4294901760
    %7756 = vmatmul.mubr.f32.gmra.mrb[0].mxu0 %v7755
    %v7757 = vpop.f32.mrb[0].mxu0
    %v7758 = vadd.f32 %v7549, %v7757
    %v7759 = vpop.f32.mrb[0].mxu0
    %v7760 = vadd.f32 %v7551, %v7759
    %7761 = vmatprep.mubr.f32.mxu0 0.0
    %v7762 = vand.u32 %v6181, 4294901760
    %7763 = vmatmul.mubr.f32.gmra.mrb[0].mxu0 %v7762
    %v7764 = vpop.f32.mrb[0].mxu0
    %v7765 = vadd.f32 %v7556, %v7764
    %v7766 = vpop.f32.mrb[0].mxu0
    %v7767 = vadd.f32 %v7558, %v7766
    %7768 = vmatprep.mubr.f32.mxu0 0.0
    %v7769 = vand.u32 %v6182, 4294901760
    %7770 = vmatmul.mubr.f32.gmra.mrb[0].mxu0 %v7769
    %v7771 = vpop.f32.mrb[0].mxu0
    %v7772 = vadd.f32 %v7563, %v7771
    %v7773 = vpop.f32.mrb[0].mxu0
    %v7774 = vadd.f32 %v7565, %v7773
    %7775 = vmatprep.mubr.f32.mxu0 0.0
    %v7776 = vand.u32 %v6183, 4294901760
    %7777 = vmatmul.mubr.f32.gmra.mrb[0].mxu0 %v7776
    %v7778 = vpop.f32.mrb[0].mxu0
    %v7779 = vadd.f32 %v7570, %v7778
    %v7780 = vpop.f32.mrb[0].mxu0
    %v7781 = vadd.f32 %v7572, %v7780
    %7782 = vmatprep.mubr.f32.mxu0 0.0
    %v7783 = vand.u32 %v6184, 4294901760
    %7784 = vmatmul.mubr.f32.gmra.mrb[0].mxu0 %v7783
    %v7785 = vpop.f32.mrb[0].mxu0
    %v7786 = vadd.f32 %v7577, %v7785
    %v7787 = vpop.f32.mrb[0].mxu0
    %v7788 = vadd.f32 %v7579, %v7787
    %7789 = vmatprep.mubr.f32.mxu0 0.0
    %v7790 = vand.u32 %v6185, 4294901760
    %7791 = vmatmul.mubr.f32.gmra.mrb[0].mxu0 %v7790
    %v7792 = vpop.f32.mrb[0].mxu0
    %v7793 = vadd.f32 %v7584, %v7792
    %v7794 = vpop.f32.mrb[0].mxu0
    %v7795 = vadd.f32 %v7586, %v7794
    %7796 = vmatprep.mubr.f32.mxu0 0.0
    %v7797 = vand.u32 %v6186, 4294901760
    %7798 = vmatmul.mubr.f32.gmra.mrb[0].mxu0 %v7797
    %v7799 = vpop.f32.mrb[0].mxu0
    %v7800 = vadd.f32 %v7591, %v7799
    %v7801 = vpop.f32.mrb[0].mxu0
    %v7802 = vadd.f32 %v7593, %v7801
    %7803 = vmatprep.mubr.f32.mxu0 0.0
    %v7804 = vand.u32 %v6187, 4294901760
    %7805 = vmatmul.mubr.f32.gmra.mrb[0].mxu0 %v7804
    %v7806 = vpop.f32.mrb[0].mxu0
    %v7807 = vadd.f32 %v7598, %v7806
    %v7808 = vpop.f32.mrb[0].mxu0
    %v7809 = vadd.f32 %v7600, %v7808
    %7810 = vdwg.mxu0
    %7811 = vmatprep.subr.mxu0 0.0
    %v7812 = vand.u32 %v7702, 4294901760
    %7813 = vmatpush1.msra.mxu0 %v7812
    %7814 = vmatprep.subr.mxu0 0.0
    %v7815 = vand.u32 %v7709, 4294901760
    %7816 = vmatpush1.msra.mxu0 %v7815
    %7817 = vmatprep.subr.mxu0 0.0
    %v7818 = vand.u32 %v7716, 4294901760
    %7819 = vmatpush1.msra.mxu0 %v7818
    %7820 = vmatprep.subr.mxu0 0.0
    %v7821 = vand.u32 %v7723, 4294901760
    %7822 = vmatpush1.msra.mxu0 %v7821
    %7823 = vmatprep.subr.mxu0 0.0
    %v7824 = vand.u32 %v7730, 4294901760
    %7825 = vmatpush1.msra.mxu0 %v7824
    %7826 = vmatprep.subr.mxu0 0.0
    %v7827 = vand.u32 %v7737, 4294901760
    %7828 = vmatpush1.msra.mxu0 %v7827
    %7829 = vmatprep.subr.mxu0 0.0
    %v7830 = vand.u32 %v7744, 4294901760
    %7831 = vmatpush1.msra.mxu0 %v7830
    %7832 = vmatprep.subr.mxu0 0.0
    %v7833 = vand.u32 %v7751, 4294901760
    %7834 = vmatpush1.msra.mxu0 %v7833
    %7835 = vmatprep.subr.mxu0 0.0
    %v7836 = vand.u32 %v7758, 4294901760
    %7837 = vmatpush1.msra.mxu0 %v7836
    %7838 = vmatprep.subr.mxu0 0.0
    %v7839 = vand.u32 %v7765, 4294901760
    %7840 = vmatpush1.msra.mxu0 %v7839
    %7841 = vmatprep.subr.mxu0 0.0
    %v7842 = vand.u32 %v7772, 4294901760
    %7843 = vmatpush1.msra.mxu0 %v7842
    %7844 = vmatprep.subr.mxu0 0.0
    %v7845 = vand.u32 %v7779, 4294901760
    %7846 = vmatpush1.msra.mxu0 %v7845
    %7847 = vmatprep.subr.mxu0 0.0
    %v7848 = vand.u32 %v7786, 4294901760
    %7849 = vmatpush1.msra.mxu0 %v7848
    %7850 = vmatprep.subr.mxu0 0.0
    %v7851 = vand.u32 %v7793, 4294901760
    %7852 = vmatpush1.msra.mxu0 %v7851
    %7853 = vmatprep.subr.mxu0 0.0
    %v7854 = vand.u32 %v7800, 4294901760
    %7855 = vmatpush1.msra.mxu0 %v7854
    %7856 = vmatprep.subr.mxu0 0.0
    %v7857 = vand.u32 %v7807, 4294901760
    %7858 = vmatpush1.msra.mxu0 %v7857
    %7859 = vmatprep.subr.mxu0 0.0
    %7860 = vmatpush1.msra.mxu0 0.0
    %7861 = vmatprep.subr.mxu0 0.0
    %7862 = vmatpush1.msra.mxu0 0.0
    %7863 = vmatprep.subr.mxu0 0.0
    %7864 = vmatpush1.msra.mxu0 0.0
    %7865 = vmatprep.subr.mxu0 0.0
    %7866 = vmatpush1.msra.mxu0 0.0
    %7867 = vmatprep.subr.mxu0 0.0
    %7868 = vmatpush1.msra.mxu0 0.0
    %7869 = vmatprep.subr.mxu0 0.0
    %7870 = vmatpush1.msra.mxu0 0.0
    %7871 = vmatprep.subr.mxu0 0.0
    %7872 = vmatpush1.msra.mxu0 0.0
    %7873 = vmatprep.subr.mxu0 0.0
    %7874 = vmatpush1.msra.mxu0 0.0
    %7875 = vmatprep.subr.mxu0 0.0
    %7876 = vmatpush1.msra.mxu0 0.0
    %7877 = vmatprep.subr.mxu0 0.0
    %7878 = vmatpush1.msra.mxu0 0.0
    %7879 = vmatprep.subr.mxu0 0.0
    %7880 = vmatpush1.msra.mxu0 0.0
    %7881 = vmatprep.subr.mxu0 0.0
    %7882 = vmatpush1.msra.mxu0 0.0
    %7883 = vmatprep.subr.mxu0 0.0
    %7884 = vmatpush1.msra.mxu0 0.0
    %7885 = vmatprep.subr.mxu0 0.0
    %7886 = vmatpush1.msra.mxu0 0.0
    %7887 = vmatprep.subr.mxu0 0.0
    %7888 = vmatpush1.msra.mxu0 0.0
    %7889 = vmatprep.subr.mxu0 0.0
    %7890 = vmatpush1.msra.mxu0 0.0
    %7891 = vmatprep.mubr.f32.mxu0 0.0
    %v7892 = vand.u32 %v70, 4294901760
    %v7893 = vsub.f32 %v70, %v7892
    %v7894 = vand.u32 %v7893, 4294901760
    %v7895 = vsub.f32 %v7893, %v7894
    %v7896 = vand.u32 %v7895, 4294901760
    %7897 = vmatmul.mubr.f32.gmra.mrb[0].mxu0 %v7896
    %v7898 = vpop.f32.mrb[0].mxu0
    %v7899 = vadd.f32 %v7704, %v7898
    %v7900 = vpop.f32.mrb[0].mxu0
    %7901 = vmatprep.mubr.f32.mxu0 0.0
    %v7902 = vand.u32 %v71, 4294901760
    %v7903 = vsub.f32 %v71, %v7902
    %v7904 = vand.u32 %v7903, 4294901760
    %v7905 = vsub.f32 %v7903, %v7904
    %v7906 = vand.u32 %v7905, 4294901760
    %7907 = vmatmul.mubr.f32.gmra.mrb[0].mxu0 %v7906
    %v7908 = vpop.f32.mrb[0].mxu0
    %v7909 = vadd.f32 %v7711, %v7908
    %v7910 = vpop.f32.mrb[0].mxu0
    %7911 = vmatprep.mubr.f32.mxu0 0.0
    %v7912 = vand.u32 %v72, 4294901760
    %v7913 = vsub.f32 %v72, %v7912
    %v7914 = vand.u32 %v7913, 4294901760
    %v7915 = vsub.f32 %v7913, %v7914
    %v7916 = vand.u32 %v7915, 4294901760
    %7917 = vmatmul.mubr.f32.gmra.mrb[0].mxu0 %v7916
    %v7918 = vpop.f32.mrb[0].mxu0
    %v7919 = vadd.f32 %v7718, %v7918
    %v7920 = vpop.f32.mrb[0].mxu0
    %7921 = vmatprep.mubr.f32.mxu0 0.0
    %v7922 = vand.u32 %v73, 4294901760
    %v7923 = vsub.f32 %v73, %v7922
    %v7924 = vand.u32 %v7923, 4294901760
    %v7925 = vsub.f32 %v7923, %v7924
    %v7926 = vand.u32 %v7925, 4294901760
    %7927 = vmatmul.mubr.f32.gmra.mrb[0].mxu0 %v7926
    %v7928 = vpop.f32.mrb[0].mxu0
    %v7929 = vadd.f32 %v7725, %v7928
    %v7930 = vpop.f32.mrb[0].mxu0
    %7931 = vmatprep.mubr.f32.mxu0 0.0
    %v7932 = vand.u32 %v74, 4294901760
    %v7933 = vsub.f32 %v74, %v7932
    %v7934 = vand.u32 %v7933, 4294901760
    %v7935 = vsub.f32 %v7933, %v7934
    %v7936 = vand.u32 %v7935, 4294901760
    %7937 = vmatmul.mubr.f32.gmra.mrb[0].mxu0 %v7936
    %v7938 = vpop.f32.mrb[0].mxu0
    %v7939 = vadd.f32 %v7732, %v7938
    %v7940 = vpop.f32.mrb[0].mxu0
    %7941 = vmatprep.mubr.f32.mxu0 0.0
    %v7942 = vand.u32 %v75, 4294901760
    %v7943 = vsub.f32 %v75, %v7942
    %v7944 = vand.u32 %v7943, 4294901760
    %v7945 = vsub.f32 %v7943, %v7944
    %v7946 = vand.u32 %v7945, 4294901760
    %7947 = vmatmul.mubr.f32.gmra.mrb[0].mxu0 %v7946
    %v7948 = vpop.f32.mrb[0].mxu0
    %v7949 = vadd.f32 %v7739, %v7948
    %v7950 = vpop.f32.mrb[0].mxu0
    %7951 = vmatprep.mubr.f32.mxu0 0.0
    %v7952 = vand.u32 %v76, 4294901760
    %v7953 = vsub.f32 %v76, %v7952
    %v7954 = vand.u32 %v7953, 4294901760
    %v7955 = vsub.f32 %v7953, %v7954
    %v7956 = vand.u32 %v7955, 4294901760
    %7957 = vmatmul.mubr.f32.gmra.mrb[0].mxu0 %v7956
    %v7958 = vpop.f32.mrb[0].mxu0
    %v7959 = vadd.f32 %v7746, %v7958
    %v7960 = vpop.f32.mrb[0].mxu0
    %7961 = vmatprep.mubr.f32.mxu0 0.0
    %v7962 = vand.u32 %v77, 4294901760
    %v7963 = vsub.f32 %v77, %v7962
    %v7964 = vand.u32 %v7963, 4294901760
    %v7965 = vsub.f32 %v7963, %v7964
    %v7966 = vand.u32 %v7965, 4294901760
    %7967 = vmatmul.mubr.f32.gmra.mrb[0].mxu0 %v7966
    %v7968 = vpop.f32.mrb[0].mxu0
    %v7969 = vadd.f32 %v7753, %v7968
    %v7970 = vpop.f32.mrb[0].mxu0
    %7971 = vmatprep.mubr.f32.mxu0 0.0
    %v7972 = vand.u32 %v78, 4294901760
    %v7973 = vsub.f32 %v78, %v7972
    %v7974 = vand.u32 %v7973, 4294901760
    %v7975 = vsub.f32 %v7973, %v7974
    %v7976 = vand.u32 %v7975, 4294901760
    %7977 = vmatmul.mubr.f32.gmra.mrb[0].mxu0 %v7976
    %v7978 = vpop.f32.mrb[0].mxu0
    %v7979 = vadd.f32 %v7760, %v7978
    %v7980 = vpop.f32.mrb[0].mxu0
    %7981 = vmatprep.mubr.f32.mxu0 0.0
    %v7982 = vand.u32 %v79, 4294901760
    %v7983 = vsub.f32 %v79, %v7982
    %v7984 = vand.u32 %v7983, 4294901760
    %v7985 = vsub.f32 %v7983, %v7984
    %v7986 = vand.u32 %v7985, 4294901760
    %7987 = vmatmul.mubr.f32.gmra.mrb[0].mxu0 %v7986
    %v7988 = vpop.f32.mrb[0].mxu0
    %v7989 = vadd.f32 %v7767, %v7988
    %v7990 = vpop.f32.mrb[0].mxu0
    %7991 = vmatprep.mubr.f32.mxu0 0.0
    %v7992 = vand.u32 %v80, 4294901760
    %v7993 = vsub.f32 %v80, %v7992
    %v7994 = vand.u32 %v7993, 4294901760
    %v7995 = vsub.f32 %v7993, %v7994
    %v7996 = vand.u32 %v7995, 4294901760
    %7997 = vmatmul.mubr.f32.gmra.mrb[0].mxu0 %v7996
    %v7998 = vpop.f32.mrb[0].mxu0
    %v7999 = vadd.f32 %v7774, %v7998
    %v8000 = vpop.f32.mrb[0].mxu0
    %8001 = vmatprep.mubr.f32.mxu0 0.0
    %v8002 = vand.u32 %v81, 4294901760
    %v8003 = vsub.f32 %v81, %v8002
    %v8004 = vand.u32 %v8003, 4294901760
    %v8005 = vsub.f32 %v8003, %v8004
    %v8006 = vand.u32 %v8005, 4294901760
    %8007 = vmatmul.mubr.f32.gmra.mrb[0].mxu0 %v8006
    %v8008 = vpop.f32.mrb[0].mxu0
    %v8009 = vadd.f32 %v7781, %v8008
    %v8010 = vpop.f32.mrb[0].mxu0
    %8011 = vmatprep.mubr.f32.mxu0 0.0
    %v8012 = vand.u32 %v82, 4294901760
    %v8013 = vsub.f32 %v82, %v8012
    %v8014 = vand.u32 %v8013, 4294901760
    %v8015 = vsub.f32 %v8013, %v8014
    %v8016 = vand.u32 %v8015, 4294901760
    %8017 = vmatmul.mubr.f32.gmra.mrb[0].mxu0 %v8016
    %v8018 = vpop.f32.mrb[0].mxu0
    %v8019 = vadd.f32 %v7788, %v8018
    %v8020 = vpop.f32.mrb[0].mxu0
    %8021 = vmatprep.mubr.f32.mxu0 0.0
    %v8022 = vand.u32 %v83, 4294901760
    %v8023 = vsub.f32 %v83, %v8022
    %v8024 = vand.u32 %v8023, 4294901760
    %v8025 = vsub.f32 %v8023, %v8024
    %v8026 = vand.u32 %v8025, 4294901760
    %8027 = vmatmul.mubr.f32.gmra.mrb[0].mxu0 %v8026
    %v8028 = vpop.f32.mrb[0].mxu0
    %v8029 = vadd.f32 %v7795, %v8028
    %v8030 = vpop.f32.mrb[0].mxu0
    %8031 = vmatprep.mubr.f32.mxu0 0.0
    %v8032 = vand.u32 %v84, 4294901760
    %v8033 = vsub.f32 %v84, %v8032
    %v8034 = vand.u32 %v8033, 4294901760
    %v8035 = vsub.f32 %v8033, %v8034
    %v8036 = vand.u32 %v8035, 4294901760
    %8037 = vmatmul.mubr.f32.gmra.mrb[0].mxu0 %v8036
    %v8038 = vpop.f32.mrb[0].mxu0
    %v8039 = vadd.f32 %v7802, %v8038
    %v8040 = vpop.f32.mrb[0].mxu0
    %8041 = vmatprep.mubr.f32.mxu0 0.0
    %v8042 = vand.u32 %v85, 4294901760
    %v8043 = vsub.f32 %v85, %v8042
    %v8044 = vand.u32 %v8043, 4294901760
    %v8045 = vsub.f32 %v8043, %v8044
    %v8046 = vand.u32 %v8045, 4294901760
    %8047 = vmatmul.mubr.f32.gmra.mrb[0].mxu0 %v8046
    %v8048 = vpop.f32.mrb[0].mxu0
    %v8049 = vadd.f32 %v7809, %v8048
    %v8050 = vpop.f32.mrb[0].mxu0
    %8051 = vdwg.mxu0
    %8052 = vmatprep.subr.mxu0 0.0
    %v8053 = vand.u32 %v7702, 4294901760
    %v8054 = vsub.f32 %v7702, %v8053
    %v8055 = vand.u32 %v8054, 4294901760
    %v8056 = vsub.f32 %v8054, %v8055
    %v8057 = vand.u32 %v8056, 4294901760
    %8058 = vmatpush1.msra.mxu0 %v8057
    %8059 = vmatprep.subr.mxu0 0.0
    %v8060 = vand.u32 %v7709, 4294901760
    %v8061 = vsub.f32 %v7709, %v8060
    %v8062 = vand.u32 %v8061, 4294901760
    %v8063 = vsub.f32 %v8061, %v8062
    %v8064 = vand.u32 %v8063, 4294901760
    %8065 = vmatpush1.msra.mxu0 %v8064
    %8066 = vmatprep.subr.mxu0 0.0
    %v8067 = vand.u32 %v7716, 4294901760
    %v8068 = vsub.f32 %v7716, %v8067
    %v8069 = vand.u32 %v8068, 4294901760
    %v8070 = vsub.f32 %v8068, %v8069
    %v8071 = vand.u32 %v8070, 4294901760
    %8072 = vmatpush1.msra.mxu0 %v8071
    %8073 = vmatprep.subr.mxu0 0.0
    %v8074 = vand.u32 %v7723, 4294901760
    %v8075 = vsub.f32 %v7723, %v8074
    %v8076 = vand.u32 %v8075, 4294901760
    %v8077 = vsub.f32 %v8075, %v8076
    %v8078 = vand.u32 %v8077, 4294901760
    %8079 = vmatpush1.msra.mxu0 %v8078
    %8080 = vmatprep.subr.mxu0 0.0
    %v8081 = vand.u32 %v7730, 4294901760
    %v8082 = vsub.f32 %v7730, %v8081
    %v8083 = vand.u32 %v8082, 4294901760
    %v8084 = vsub.f32 %v8082, %v8083
    %v8085 = vand.u32 %v8084, 4294901760
    %8086 = vmatpush1.msra.mxu0 %v8085
    %8087 = vmatprep.subr.mxu0 0.0
    %v8088 = vand.u32 %v7737, 4294901760
    %v8089 = vsub.f32 %v7737, %v8088
    %v8090 = vand.u32 %v8089, 4294901760
    %v8091 = vsub.f32 %v8089, %v8090
    %v8092 = vand.u32 %v8091, 4294901760
    %8093 = vmatpush1.msra.mxu0 %v8092
    %8094 = vmatprep.subr.mxu0 0.0
    %v8095 = vand.u32 %v7744, 4294901760
    %v8096 = vsub.f32 %v7744, %v8095
    %v8097 = vand.u32 %v8096, 4294901760
    %v8098 = vsub.f32 %v8096, %v8097
    %v8099 = vand.u32 %v8098, 4294901760
    %8100 = vmatpush1.msra.mxu0 %v8099
    %8101 = vmatprep.subr.mxu0 0.0
    %v8102 = vand.u32 %v7751, 4294901760
    %v8103 = vsub.f32 %v7751, %v8102
    %v8104 = vand.u32 %v8103, 4294901760
    %v8105 = vsub.f32 %v8103, %v8104
    %v8106 = vand.u32 %v8105, 4294901760
    %8107 = vmatpush1.msra.mxu0 %v8106
    %8108 = vmatprep.subr.mxu0 0.0
    %v8109 = vand.u32 %v7758, 4294901760
    %v8110 = vsub.f32 %v7758, %v8109
    %v8111 = vand.u32 %v8110, 4294901760
    %v8112 = vsub.f32 %v8110, %v8111
    %v8113 = vand.u32 %v8112, 4294901760
    %8114 = vmatpush1.msra.mxu0 %v8113
    %8115 = vmatprep.subr.mxu0 0.0
    %v8116 = vand.u32 %v7765, 4294901760
    %v8117 = vsub.f32 %v7765, %v8116
    %v8118 = vand.u32 %v8117, 4294901760
    %v8119 = vsub.f32 %v8117, %v8118
    %v8120 = vand.u32 %v8119, 4294901760
    %8121 = vmatpush1.msra.mxu0 %v8120
    %8122 = vmatprep.subr.mxu0 0.0
    %v8123 = vand.u32 %v7772, 4294901760
    %v8124 = vsub.f32 %v7772, %v8123
    %v8125 = vand.u32 %v8124, 4294901760
    %v8126 = vsub.f32 %v8124, %v8125
    %v8127 = vand.u32 %v8126, 4294901760
    %8128 = vmatpush1.msra.mxu0 %v8127
    %8129 = vmatprep.subr.mxu0 0.0
    %v8130 = vand.u32 %v7779, 4294901760
    %v8131 = vsub.f32 %v7779, %v8130
    %v8132 = vand.u32 %v8131, 4294901760
    %v8133 = vsub.f32 %v8131, %v8132
    %v8134 = vand.u32 %v8133, 4294901760
    %8135 = vmatpush1.msra.mxu0 %v8134
    %8136 = vmatprep.subr.mxu0 0.0
    %v8137 = vand.u32 %v7786, 4294901760
    %v8138 = vsub.f32 %v7786, %v8137
    %v8139 = vand.u32 %v8138, 4294901760
    %v8140 = vsub.f32 %v8138, %v8139
    %v8141 = vand.u32 %v8140, 4294901760
    %8142 = vmatpush1.msra.mxu0 %v8141
    %8143 = vmatprep.subr.mxu0 0.0
    %v8144 = vand.u32 %v7793, 4294901760
    %v8145 = vsub.f32 %v7793, %v8144
    %v8146 = vand.u32 %v8145, 4294901760
    %v8147 = vsub.f32 %v8145, %v8146
    %v8148 = vand.u32 %v8147, 4294901760
    %8149 = vmatpush1.msra.mxu0 %v8148
    %8150 = vmatprep.subr.mxu0 0.0
    %v8151 = vand.u32 %v7800, 4294901760
    %v8152 = vsub.f32 %v7800, %v8151
    %v8153 = vand.u32 %v8152, 4294901760
    %v8154 = vsub.f32 %v8152, %v8153
    %v8155 = vand.u32 %v8154, 4294901760
    %8156 = vmatpush1.msra.mxu0 %v8155
    %8157 = vmatprep.subr.mxu0 0.0
    %v8158 = vand.u32 %v7807, 4294901760
    %v8159 = vsub.f32 %v7807, %v8158
    %v8160 = vand.u32 %v8159, 4294901760
    %v8161 = vsub.f32 %v8159, %v8160
    %v8162 = vand.u32 %v8161, 4294901760
    %8163 = vmatpush1.msra.mxu0 %v8162
    %8164 = vmatprep.subr.mxu0 0.0
    %8165 = vmatpush1.msra.mxu0 0.0
    %8166 = vmatprep.subr.mxu0 0.0
    %8167 = vmatpush1.msra.mxu0 0.0
    %8168 = vmatprep.subr.mxu0 0.0
    %8169 = vmatpush1.msra.mxu0 0.0
    %8170 = vmatprep.subr.mxu0 0.0
    %8171 = vmatpush1.msra.mxu0 0.0
    %8172 = vmatprep.subr.mxu0 0.0
    %8173 = vmatpush1.msra.mxu0 0.0
    %8174 = vmatprep.subr.mxu0 0.0
    %8175 = vmatpush1.msra.mxu0 0.0
    %8176 = vmatprep.subr.mxu0 0.0
    %8177 = vmatpush1.msra.mxu0 0.0
    %8178 = vmatprep.subr.mxu0 0.0
    %8179 = vmatpush1.msra.mxu0 0.0
    %8180 = vmatprep.subr.mxu0 0.0
    %8181 = vmatpush1.msra.mxu0 0.0
    %8182 = vmatprep.subr.mxu0 0.0
    %8183 = vmatpush1.msra.mxu0 0.0
    %8184 = vmatprep.subr.mxu0 0.0
    %8185 = vmatpush1.msra.mxu0 0.0
    %8186 = vmatprep.subr.mxu0 0.0
    %8187 = vmatpush1.msra.mxu0 0.0
    %8188 = vmatprep.subr.mxu0 0.0
    %8189 = vmatpush1.msra.mxu0 0.0
    %8190 = vmatprep.subr.mxu0 0.0
    %8191 = vmatpush1.msra.mxu0 0.0
    %8192 = vmatprep.subr.mxu0 0.0
    %8193 = vmatpush1.msra.mxu0 0.0
    %8194 = vmatprep.subr.mxu0 0.0
    %8195 = vmatpush1.msra.mxu0 0.0
    %8196 = vmatprep.mubr.f32.mxu0 0.0
    %v8197 = vand.u32 %v70, 4294901760
    %8198 = vmatmul.mubr.f32.gmra.mrb[0].mxu0 %v8197
    %v8199 = vpop.f32.mrb[0].mxu0
    %v8200 = vadd.f32 %v7899, %v8199
    %v8201 = vpop.f32.mrb[0].mxu0
    %8202 = vmatprep.mubr.f32.mxu0 0.0
    %v8203 = vand.u32 %v71, 4294901760
    %8204 = vmatmul.mubr.f32.gmra.mrb[0].mxu0 %v8203
    %v8205 = vpop.f32.mrb[0].mxu0
    %v8206 = vadd.f32 %v7909, %v8205
    %v8207 = vpop.f32.mrb[0].mxu0
    %8208 = vmatprep.mubr.f32.mxu0 0.0
    %v8209 = vand.u32 %v72, 4294901760
    %8210 = vmatmul.mubr.f32.gmra.mrb[0].mxu0 %v8209
    %v8211 = vpop.f32.mrb[0].mxu0
    %v8212 = vadd.f32 %v7919, %v8211
    %v8213 = vpop.f32.mrb[0].mxu0
    %8214 = vmatprep.mubr.f32.mxu0 0.0
    %v8215 = vand.u32 %v73, 4294901760
    %8216 = vmatmul.mubr.f32.gmra.mrb[0].mxu0 %v8215
    %v8217 = vpop.f32.mrb[0].mxu0
    %v8218 = vadd.f32 %v7929, %v8217
    %v8219 = vpop.f32.mrb[0].mxu0
    %8220 = vmatprep.mubr.f32.mxu0 0.0
    %v8221 = vand.u32 %v74, 4294901760
    %8222 = vmatmul.mubr.f32.gmra.mrb[0].mxu0 %v8221
    %v8223 = vpop.f32.mrb[0].mxu0
    %v8224 = vadd.f32 %v7939, %v8223
    %v8225 = vpop.f32.mrb[0].mxu0
    %8226 = vmatprep.mubr.f32.mxu0 0.0
    %v8227 = vand.u32 %v75, 4294901760
    %8228 = vmatmul.mubr.f32.gmra.mrb[0].mxu0 %v8227
    %v8229 = vpop.f32.mrb[0].mxu0
    %v8230 = vadd.f32 %v7949, %v8229
    %v8231 = vpop.f32.mrb[0].mxu0
    %8232 = vmatprep.mubr.f32.mxu0 0.0
    %v8233 = vand.u32 %v76, 4294901760
    %8234 = vmatmul.mubr.f32.gmra.mrb[0].mxu0 %v8233
    %v8235 = vpop.f32.mrb[0].mxu0
    %v8236 = vadd.f32 %v7959, %v8235
    %v8237 = vpop.f32.mrb[0].mxu0
    %8238 = vmatprep.mubr.f32.mxu0 0.0
    %v8239 = vand.u32 %v77, 4294901760
    %8240 = vmatmul.mubr.f32.gmra.mrb[0].mxu0 %v8239
    %v8241 = vpop.f32.mrb[0].mxu0
    %v8242 = vadd.f32 %v7969, %v8241
    %v8243 = vpop.f32.mrb[0].mxu0
    %8244 = vmatprep.mubr.f32.mxu0 0.0
    %v8245 = vand.u32 %v78, 4294901760
    %8246 = vmatmul.mubr.f32.gmra.mrb[0].mxu0 %v8245
    %v8247 = vpop.f32.mrb[0].mxu0
    %v8248 = vadd.f32 %v7979, %v8247
    %v8249 = vpop.f32.mrb[0].mxu0
    %8250 = vmatprep.mubr.f32.mxu0 0.0
    %v8251 = vand.u32 %v79, 4294901760
    %8252 = vmatmul.mubr.f32.gmra.mrb[0].mxu0 %v8251
    %v8253 = vpop.f32.mrb[0].mxu0
    %v8254 = vadd.f32 %v7989, %v8253
    %v8255 = vpop.f32.mrb[0].mxu0
    %8256 = vmatprep.mubr.f32.mxu0 0.0
    %v8257 = vand.u32 %v80, 4294901760
    %8258 = vmatmul.mubr.f32.gmra.mrb[0].mxu0 %v8257
    %v8259 = vpop.f32.mrb[0].mxu0
    %v8260 = vadd.f32 %v7999, %v8259
    %v8261 = vpop.f32.mrb[0].mxu0
    %8262 = vmatprep.mubr.f32.mxu0 0.0
    %v8263 = vand.u32 %v81, 4294901760
    %8264 = vmatmul.mubr.f32.gmra.mrb[0].mxu0 %v8263
    %v8265 = vpop.f32.mrb[0].mxu0
    %v8266 = vadd.f32 %v8009, %v8265
    %v8267 = vpop.f32.mrb[0].mxu0
    %8268 = vmatprep.mubr.f32.mxu0 0.0
    %v8269 = vand.u32 %v82, 4294901760
    %8270 = vmatmul.mubr.f32.gmra.mrb[0].mxu0 %v8269
    %v8271 = vpop.f32.mrb[0].mxu0
    %v8272 = vadd.f32 %v8019, %v8271
    %v8273 = vpop.f32.mrb[0].mxu0
    %8274 = vmatprep.mubr.f32.mxu0 0.0
    %v8275 = vand.u32 %v83, 4294901760
    %8276 = vmatmul.mubr.f32.gmra.mrb[0].mxu0 %v8275
    %v8277 = vpop.f32.mrb[0].mxu0
    %v8278 = vadd.f32 %v8029, %v8277
    %v8279 = vpop.f32.mrb[0].mxu0
    %8280 = vmatprep.mubr.f32.mxu0 0.0
    %v8281 = vand.u32 %v84, 4294901760
    %8282 = vmatmul.mubr.f32.gmra.mrb[0].mxu0 %v8281
    %v8283 = vpop.f32.mrb[0].mxu0
    %v8284 = vadd.f32 %v8039, %v8283
    %v8285 = vpop.f32.mrb[0].mxu0
    %8286 = vmatprep.mubr.f32.mxu0 0.0
    %v8287 = vand.u32 %v85, 4294901760
    %8288 = vmatmul.mubr.f32.gmra.mrb[0].mxu0 %v8287
    %v8289 = vpop.f32.mrb[0].mxu0
    %v8290 = vadd.f32 %v8049, %v8289
    %v8291 = vpop.f32.mrb[0].mxu0
    %8292 = vdwg.mxu0
    %8293 = vmatprep.subr.mxu0 0.0
    %v8294 = vand.u32 %v7702, 4294901760
    %v8295 = vsub.f32 %v7702, %v8294
    %8296 = vmatpush1.msra.mxu0 %v8295
    %8297 = vmatprep.subr.mxu0 0.0
    %v8298 = vand.u32 %v7709, 4294901760
    %v8299 = vsub.f32 %v7709, %v8298
    %8300 = vmatpush1.msra.mxu0 %v8299
    %8301 = vmatprep.subr.mxu0 0.0
    %v8302 = vand.u32 %v7716, 4294901760
    %v8303 = vsub.f32 %v7716, %v8302
    %8304 = vmatpush1.msra.mxu0 %v8303
    %8305 = vmatprep.subr.mxu0 0.0
    %v8306 = vand.u32 %v7723, 4294901760
    %v8307 = vsub.f32 %v7723, %v8306
    %8308 = vmatpush1.msra.mxu0 %v8307
    %8309 = vmatprep.subr.mxu0 0.0
    %v8310 = vand.u32 %v7730, 4294901760
    %v8311 = vsub.f32 %v7730, %v8310
    %8312 = vmatpush1.msra.mxu0 %v8311
    %8313 = vmatprep.subr.mxu0 0.0
    %v8314 = vand.u32 %v7737, 4294901760
    %v8315 = vsub.f32 %v7737, %v8314
    %8316 = vmatpush1.msra.mxu0 %v8315
    %8317 = vmatprep.subr.mxu0 0.0
    %v8318 = vand.u32 %v7744, 4294901760
    %v8319 = vsub.f32 %v7744, %v8318
    %8320 = vmatpush1.msra.mxu0 %v8319
    %8321 = vmatprep.subr.mxu0 0.0
    %v8322 = vand.u32 %v7751, 4294901760
    %v8323 = vsub.f32 %v7751, %v8322
    %8324 = vmatpush1.msra.mxu0 %v8323
    %8325 = vmatprep.subr.mxu0 0.0
    %v8326 = vand.u32 %v7758, 4294901760
    %v8327 = vsub.f32 %v7758, %v8326
    %8328 = vmatpush1.msra.mxu0 %v8327
    %8329 = vmatprep.subr.mxu0 0.0
    %v8330 = vand.u32 %v7765, 4294901760
    %v8331 = vsub.f32 %v7765, %v8330
    %8332 = vmatpush1.msra.mxu0 %v8331
    %8333 = vmatprep.subr.mxu0 0.0
    %v8334 = vand.u32 %v7772, 4294901760
    %v8335 = vsub.f32 %v7772, %v8334
    %8336 = vmatpush1.msra.mxu0 %v8335
    %8337 = vmatprep.subr.mxu0 0.0
    %v8338 = vand.u32 %v7779, 4294901760
    %v8339 = vsub.f32 %v7779, %v8338
    %8340 = vmatpush1.msra.mxu0 %v8339
    %8341 = vmatprep.subr.mxu0 0.0
    %v8342 = vand.u32 %v7786, 4294901760
    %v8343 = vsub.f32 %v7786, %v8342
    %8344 = vmatpush1.msra.mxu0 %v8343
    %8345 = vmatprep.subr.mxu0 0.0
    %v8346 = vand.u32 %v7793, 4294901760
    %v8347 = vsub.f32 %v7793, %v8346
    %8348 = vmatpush1.msra.mxu0 %v8347
    %8349 = vmatprep.subr.mxu0 0.0
    %v8350 = vand.u32 %v7800, 4294901760
    %v8351 = vsub.f32 %v7800, %v8350
    %8352 = vmatpush1.msra.mxu0 %v8351
    %8353 = vmatprep.subr.mxu0 0.0
    %v8354 = vand.u32 %v7807, 4294901760
    %v8355 = vsub.f32 %v7807, %v8354
    %8356 = vmatpush1.msra.mxu0 %v8355
    %8357 = vmatprep.subr.mxu0 0.0
    %8358 = vmatpush1.msra.mxu0 0.0
    %8359 = vmatprep.subr.mxu0 0.0
    %8360 = vmatpush1.msra.mxu0 0.0
    %8361 = vmatprep.subr.mxu0 0.0
    %8362 = vmatpush1.msra.mxu0 0.0
    %8363 = vmatprep.subr.mxu0 0.0
    %8364 = vmatpush1.msra.mxu0 0.0
    %8365 = vmatprep.subr.mxu0 0.0
    %8366 = vmatpush1.msra.mxu0 0.0
    %8367 = vmatprep.subr.mxu0 0.0
    %8368 = vmatpush1.msra.mxu0 0.0
    %8369 = vmatprep.subr.mxu0 0.0
    %8370 = vmatpush1.msra.mxu0 0.0
    %8371 = vmatprep.subr.mxu0 0.0
    %8372 = vmatpush1.msra.mxu0 0.0
    %8373 = vmatprep.subr.mxu0 0.0
    %8374 = vmatpush1.msra.mxu0 0.0
    %8375 = vmatprep.subr.mxu0 0.0
    %8376 = vmatpush1.msra.mxu0 0.0
    %8377 = vmatprep.subr.mxu0 0.0
    %8378 = vmatpush1.msra.mxu0 0.0
    %8379 = vmatprep.subr.mxu0 0.0
    %8380 = vmatpush1.msra.mxu0 0.0
    %8381 = vmatprep.subr.mxu0 0.0
    %8382 = vmatpush1.msra.mxu0 0.0
    %8383 = vmatprep.subr.mxu0 0.0
    %8384 = vmatpush1.msra.mxu0 0.0
    %8385 = vmatprep.subr.mxu0 0.0
    %8386 = vmatpush1.msra.mxu0 0.0
    %8387 = vmatprep.subr.mxu0 0.0
    %8388 = vmatpush1.msra.mxu0 0.0
    %8389 = vmatprep.mubr.f32.mxu0 0.0
    %v8390 = vand.u32 %v70, 4294901760
    %v8391 = vsub.f32 %v70, %v8390
    %8392 = vmatmul.mubr.f32.gmra.mrb[0].mxu0 %v8391
    %v8393 = vpop.f32.mrb[0].mxu0
    %v8394 = vadd.f32 %v8200, %v8393
    %v8395 = vpop.f32.mrb[0].mxu0
    %8396 = vmatprep.mubr.f32.mxu0 0.0
    %v8397 = vand.u32 %v71, 4294901760
    %v8398 = vsub.f32 %v71, %v8397
    %8399 = vmatmul.mubr.f32.gmra.mrb[0].mxu0 %v8398
    %v8400 = vpop.f32.mrb[0].mxu0
    %v8401 = vadd.f32 %v8206, %v8400
    %v8402 = vpop.f32.mrb[0].mxu0
    %8403 = vmatprep.mubr.f32.mxu0 0.0
    %v8404 = vand.u32 %v72, 4294901760
    %v8405 = vsub.f32 %v72, %v8404
    %8406 = vmatmul.mubr.f32.gmra.mrb[0].mxu0 %v8405
    %v8407 = vpop.f32.mrb[0].mxu0
    %v8408 = vadd.f32 %v8212, %v8407
    %v8409 = vpop.f32.mrb[0].mxu0
    %8410 = vmatprep.mubr.f32.mxu0 0.0
    %v8411 = vand.u32 %v73, 4294901760
    %v8412 = vsub.f32 %v73, %v8411
    %8413 = vmatmul.mubr.f32.gmra.mrb[0].mxu0 %v8412
    %v8414 = vpop.f32.mrb[0].mxu0
    %v8415 = vadd.f32 %v8218, %v8414
    %v8416 = vpop.f32.mrb[0].mxu0
    %8417 = vmatprep.mubr.f32.mxu0 0.0
    %v8418 = vand.u32 %v74, 4294901760
    %v8419 = vsub.f32 %v74, %v8418
    %8420 = vmatmul.mubr.f32.gmra.mrb[0].mxu0 %v8419
    %v8421 = vpop.f32.mrb[0].mxu0
    %v8422 = vadd.f32 %v8224, %v8421
    %v8423 = vpop.f32.mrb[0].mxu0
    %8424 = vmatprep.mubr.f32.mxu0 0.0
    %v8425 = vand.u32 %v75, 4294901760
    %v8426 = vsub.f32 %v75, %v8425
    %8427 = vmatmul.mubr.f32.gmra.mrb[0].mxu0 %v8426
    %v8428 = vpop.f32.mrb[0].mxu0
    %v8429 = vadd.f32 %v8230, %v8428
    %v8430 = vpop.f32.mrb[0].mxu0
    %8431 = vmatprep.mubr.f32.mxu0 0.0
    %v8432 = vand.u32 %v76, 4294901760
    %v8433 = vsub.f32 %v76, %v8432
    %8434 = vmatmul.mubr.f32.gmra.mrb[0].mxu0 %v8433
    %v8435 = vpop.f32.mrb[0].mxu0
    %v8436 = vadd.f32 %v8236, %v8435
    %v8437 = vpop.f32.mrb[0].mxu0
    %8438 = vmatprep.mubr.f32.mxu0 0.0
    %v8439 = vand.u32 %v77, 4294901760
    %v8440 = vsub.f32 %v77, %v8439
    %8441 = vmatmul.mubr.f32.gmra.mrb[0].mxu0 %v8440
    %v8442 = vpop.f32.mrb[0].mxu0
    %v8443 = vadd.f32 %v8242, %v8442
    %v8444 = vpop.f32.mrb[0].mxu0
    %8445 = vmatprep.mubr.f32.mxu0 0.0
    %v8446 = vand.u32 %v78, 4294901760
    %v8447 = vsub.f32 %v78, %v8446
    %8448 = vmatmul.mubr.f32.gmra.mrb[0].mxu0 %v8447
    %v8449 = vpop.f32.mrb[0].mxu0
    %v8450 = vadd.f32 %v8248, %v8449
    %v8451 = vpop.f32.mrb[0].mxu0
    %8452 = vmatprep.mubr.f32.mxu0 0.0
    %v8453 = vand.u32 %v79, 4294901760
    %v8454 = vsub.f32 %v79, %v8453
    %8455 = vmatmul.mubr.f32.gmra.mrb[0].mxu0 %v8454
    %v8456 = vpop.f32.mrb[0].mxu0
    %v8457 = vadd.f32 %v8254, %v8456
    %v8458 = vpop.f32.mrb[0].mxu0
    %8459 = vmatprep.mubr.f32.mxu0 0.0
    %v8460 = vand.u32 %v80, 4294901760
    %v8461 = vsub.f32 %v80, %v8460
    %8462 = vmatmul.mubr.f32.gmra.mrb[0].mxu0 %v8461
    %v8463 = vpop.f32.mrb[0].mxu0
    %v8464 = vadd.f32 %v8260, %v8463
    %v8465 = vpop.f32.mrb[0].mxu0
    %8466 = vmatprep.mubr.f32.mxu0 0.0
    %v8467 = vand.u32 %v81, 4294901760
    %v8468 = vsub.f32 %v81, %v8467
    %8469 = vmatmul.mubr.f32.gmra.mrb[0].mxu0 %v8468
    %v8470 = vpop.f32.mrb[0].mxu0
    %v8471 = vadd.f32 %v8266, %v8470
    %v8472 = vpop.f32.mrb[0].mxu0
    %8473 = vmatprep.mubr.f32.mxu0 0.0
    %v8474 = vand.u32 %v82, 4294901760
    %v8475 = vsub.f32 %v82, %v8474
    %8476 = vmatmul.mubr.f32.gmra.mrb[0].mxu0 %v8475
    %v8477 = vpop.f32.mrb[0].mxu0
    %v8478 = vadd.f32 %v8272, %v8477
    %v8479 = vpop.f32.mrb[0].mxu0
    %8480 = vmatprep.mubr.f32.mxu0 0.0
    %v8481 = vand.u32 %v83, 4294901760
    %v8482 = vsub.f32 %v83, %v8481
    %8483 = vmatmul.mubr.f32.gmra.mrb[0].mxu0 %v8482
    %v8484 = vpop.f32.mrb[0].mxu0
    %v8485 = vadd.f32 %v8278, %v8484
    %v8486 = vpop.f32.mrb[0].mxu0
    %8487 = vmatprep.mubr.f32.mxu0 0.0
    %v8488 = vand.u32 %v84, 4294901760
    %v8489 = vsub.f32 %v84, %v8488
    %8490 = vmatmul.mubr.f32.gmra.mrb[0].mxu0 %v8489
    %v8491 = vpop.f32.mrb[0].mxu0
    %v8492 = vadd.f32 %v8284, %v8491
    %v8493 = vpop.f32.mrb[0].mxu0
    %8494 = vmatprep.mubr.f32.mxu0 0.0
    %v8495 = vand.u32 %v85, 4294901760
    %v8496 = vsub.f32 %v85, %v8495
    %8497 = vmatmul.mubr.f32.gmra.mrb[0].mxu0 %v8496
    %v8498 = vpop.f32.mrb[0].mxu0
    %v8499 = vadd.f32 %v8290, %v8498
    %v8500 = vpop.f32.mrb[0].mxu0
    %8501 = vdwg.mxu0
    %8502 = vmatprep.subr.mxu0 0.0
    %v8503 = vand.u32 %v7702, 4294901760
    %8504 = vmatpush1.msra.mxu0 %v8503
    %8505 = vmatprep.subr.mxu0 0.0
    %v8506 = vand.u32 %v7709, 4294901760
    %8507 = vmatpush1.msra.mxu0 %v8506
    %8508 = vmatprep.subr.mxu0 0.0
    %v8509 = vand.u32 %v7716, 4294901760
    %8510 = vmatpush1.msra.mxu0 %v8509
    %8511 = vmatprep.subr.mxu0 0.0
    %v8512 = vand.u32 %v7723, 4294901760
    %8513 = vmatpush1.msra.mxu0 %v8512
    %8514 = vmatprep.subr.mxu0 0.0
    %v8515 = vand.u32 %v7730, 4294901760
    %8516 = vmatpush1.msra.mxu0 %v8515
    %8517 = vmatprep.subr.mxu0 0.0
    %v8518 = vand.u32 %v7737, 4294901760
    %8519 = vmatpush1.msra.mxu0 %v8518
    %8520 = vmatprep.subr.mxu0 0.0
    %v8521 = vand.u32 %v7744, 4294901760
    %8522 = vmatpush1.msra.mxu0 %v8521
    %8523 = vmatprep.subr.mxu0 0.0
    %v8524 = vand.u32 %v7751, 4294901760
    %8525 = vmatpush1.msra.mxu0 %v8524
    %8526 = vmatprep.subr.mxu0 0.0
    %v8527 = vand.u32 %v7758, 4294901760
    %8528 = vmatpush1.msra.mxu0 %v8527
    %8529 = vmatprep.subr.mxu0 0.0
    %v8530 = vand.u32 %v7765, 4294901760
    %8531 = vmatpush1.msra.mxu0 %v8530
    %8532 = vmatprep.subr.mxu0 0.0
    %v8533 = vand.u32 %v7772, 4294901760
    %8534 = vmatpush1.msra.mxu0 %v8533
    %8535 = vmatprep.subr.mxu0 0.0
    %v8536 = vand.u32 %v7779, 4294901760
    %8537 = vmatpush1.msra.mxu0 %v8536
    %8538 = vmatprep.subr.mxu0 0.0
    %v8539 = vand.u32 %v7786, 4294901760
    %8540 = vmatpush1.msra.mxu0 %v8539
    %8541 = vmatprep.subr.mxu0 0.0
    %v8542 = vand.u32 %v7793, 4294901760
    %8543 = vmatpush1.msra.mxu0 %v8542
    %8544 = vmatprep.subr.mxu0 0.0
    %v8545 = vand.u32 %v7800, 4294901760
    %8546 = vmatpush1.msra.mxu0 %v8545
    %8547 = vmatprep.subr.mxu0 0.0
    %v8548 = vand.u32 %v7807, 4294901760
    %8549 = vmatpush1.msra.mxu0 %v8548
    %8550 = vmatprep.subr.mxu0 0.0
    %8551 = vmatpush1.msra.mxu0 0.0
    %8552 = vmatprep.subr.mxu0 0.0
    %8553 = vmatpush1.msra.mxu0 0.0
    %8554 = vmatprep.subr.mxu0 0.0
    %8555 = vmatpush1.msra.mxu0 0.0
    %8556 = vmatprep.subr.mxu0 0.0
    %8557 = vmatpush1.msra.mxu0 0.0
    %8558 = vmatprep.subr.mxu0 0.0
    %8559 = vmatpush1.msra.mxu0 0.0
    %8560 = vmatprep.subr.mxu0 0.0
    %8561 = vmatpush1.msra.mxu0 0.0
    %8562 = vmatprep.subr.mxu0 0.0
    %8563 = vmatpush1.msra.mxu0 0.0
    %8564 = vmatprep.subr.mxu0 0.0
    %8565 = vmatpush1.msra.mxu0 0.0
    %8566 = vmatprep.subr.mxu0 0.0
    %8567 = vmatpush1.msra.mxu0 0.0
    %8568 = vmatprep.subr.mxu0 0.0
    %8569 = vmatpush1.msra.mxu0 0.0
    %8570 = vmatprep.subr.mxu0 0.0
    %8571 = vmatpush1.msra.mxu0 0.0
    %8572 = vmatprep.subr.mxu0 0.0
    %8573 = vmatpush1.msra.mxu0 0.0
    %8574 = vmatprep.subr.mxu0 0.0
    %8575 = vmatpush1.msra.mxu0 0.0
    %8576 = vmatprep.subr.mxu0 0.0
    %8577 = vmatpush1.msra.mxu0 0.0
    %8578 = vmatprep.subr.mxu0 0.0
    %8579 = vmatpush1.msra.mxu0 0.0
    %8580 = vmatprep.subr.mxu0 0.0
    %8581 = vmatpush1.msra.mxu0 0.0
    %8582 = vmatprep.mubr.f32.mxu0 0.0
    %v8583 = vand.u32 %v70, 4294901760
    %v8584 = vsub.f32 %v70, %v8583
    %v8585 = vand.u32 %v8584, 4294901760
    %8586 = vmatmul.mubr.f32.gmra.mrb[0].mxu0 %v8585
    %v8587 = vpop.f32.mrb[0].mxu0
    %v8588 = vadd.f32 %v8394, %v8587
    %v8589 = vpop.f32.mrb[0].mxu0
    %8590 = vmatprep.mubr.f32.mxu0 0.0
    %v8591 = vand.u32 %v71, 4294901760
    %v8592 = vsub.f32 %v71, %v8591
    %v8593 = vand.u32 %v8592, 4294901760
    %8594 = vmatmul.mubr.f32.gmra.mrb[0].mxu0 %v8593
    %v8595 = vpop.f32.mrb[0].mxu0
    %v8596 = vadd.f32 %v8401, %v8595
    %v8597 = vpop.f32.mrb[0].mxu0
    %8598 = vmatprep.mubr.f32.mxu0 0.0
    %v8599 = vand.u32 %v72, 4294901760
    %v8600 = vsub.f32 %v72, %v8599
    %v8601 = vand.u32 %v8600, 4294901760
    %8602 = vmatmul.mubr.f32.gmra.mrb[0].mxu0 %v8601
    %v8603 = vpop.f32.mrb[0].mxu0
    %v8604 = vadd.f32 %v8408, %v8603
    %v8605 = vpop.f32.mrb[0].mxu0
    %8606 = vmatprep.mubr.f32.mxu0 0.0
    %v8607 = vand.u32 %v73, 4294901760
    %v8608 = vsub.f32 %v73, %v8607
    %v8609 = vand.u32 %v8608, 4294901760
    %8610 = vmatmul.mubr.f32.gmra.mrb[0].mxu0 %v8609
    %v8611 = vpop.f32.mrb[0].mxu0
    %v8612 = vadd.f32 %v8415, %v8611
    %v8613 = vpop.f32.mrb[0].mxu0
    %8614 = vmatprep.mubr.f32.mxu0 0.0
    %v8615 = vand.u32 %v74, 4294901760
    %v8616 = vsub.f32 %v74, %v8615
    %v8617 = vand.u32 %v8616, 4294901760
    %8618 = vmatmul.mubr.f32.gmra.mrb[0].mxu0 %v8617
    %v8619 = vpop.f32.mrb[0].mxu0
    %v8620 = vadd.f32 %v8422, %v8619
    %v8621 = vpop.f32.mrb[0].mxu0
    %8622 = vmatprep.mubr.f32.mxu0 0.0
    %v8623 = vand.u32 %v75, 4294901760
    %v8624 = vsub.f32 %v75, %v8623
    %v8625 = vand.u32 %v8624, 4294901760
    %8626 = vmatmul.mubr.f32.gmra.mrb[0].mxu0 %v8625
    %v8627 = vpop.f32.mrb[0].mxu0
    %v8628 = vadd.f32 %v8429, %v8627
    %v8629 = vpop.f32.mrb[0].mxu0
    %8630 = vmatprep.mubr.f32.mxu0 0.0
    %v8631 = vand.u32 %v76, 4294901760
    %v8632 = vsub.f32 %v76, %v8631
    %v8633 = vand.u32 %v8632, 4294901760
    %8634 = vmatmul.mubr.f32.gmra.mrb[0].mxu0 %v8633
    %v8635 = vpop.f32.mrb[0].mxu0
    %v8636 = vadd.f32 %v8436, %v8635
    %v8637 = vpop.f32.mrb[0].mxu0
    %8638 = vmatprep.mubr.f32.mxu0 0.0
    %v8639 = vand.u32 %v77, 4294901760
    %v8640 = vsub.f32 %v77, %v8639
    %v8641 = vand.u32 %v8640, 4294901760
    %8642 = vmatmul.mubr.f32.gmra.mrb[0].mxu0 %v8641
    %v8643 = vpop.f32.mrb[0].mxu0
    %v8644 = vadd.f32 %v8443, %v8643
    %v8645 = vpop.f32.mrb[0].mxu0
    %8646 = vmatprep.mubr.f32.mxu0 0.0
    %v8647 = vand.u32 %v78, 4294901760
    %v8648 = vsub.f32 %v78, %v8647
    %v8649 = vand.u32 %v8648, 4294901760
    %8650 = vmatmul.mubr.f32.gmra.mrb[0].mxu0 %v8649
    %v8651 = vpop.f32.mrb[0].mxu0
    %v8652 = vadd.f32 %v8450, %v8651
    %v8653 = vpop.f32.mrb[0].mxu0
    %8654 = vmatprep.mubr.f32.mxu0 0.0
    %v8655 = vand.u32 %v79, 4294901760
    %v8656 = vsub.f32 %v79, %v8655
    %v8657 = vand.u32 %v8656, 4294901760
    %8658 = vmatmul.mubr.f32.gmra.mrb[0].mxu0 %v8657
    %v8659 = vpop.f32.mrb[0].mxu0
    %v8660 = vadd.f32 %v8457, %v8659
    %v8661 = vpop.f32.mrb[0].mxu0
    %8662 = vmatprep.mubr.f32.mxu0 0.0
    %v8663 = vand.u32 %v80, 4294901760
    %v8664 = vsub.f32 %v80, %v8663
    %v8665 = vand.u32 %v8664, 4294901760
    %8666 = vmatmul.mubr.f32.gmra.mrb[0].mxu0 %v8665
    %v8667 = vpop.f32.mrb[0].mxu0
    %v8668 = vadd.f32 %v8464, %v8667
    %v8669 = vpop.f32.mrb[0].mxu0
    %8670 = vmatprep.mubr.f32.mxu0 0.0
    %v8671 = vand.u32 %v81, 4294901760
    %v8672 = vsub.f32 %v81, %v8671
    %v8673 = vand.u32 %v8672, 4294901760
    %8674 = vmatmul.mubr.f32.gmra.mrb[0].mxu0 %v8673
    %v8675 = vpop.f32.mrb[0].mxu0
    %v8676 = vadd.f32 %v8471, %v8675
    %v8677 = vpop.f32.mrb[0].mxu0
    %8678 = vmatprep.mubr.f32.mxu0 0.0
    %v8679 = vand.u32 %v82, 4294901760
    %v8680 = vsub.f32 %v82, %v8679
    %v8681 = vand.u32 %v8680, 4294901760
    %8682 = vmatmul.mubr.f32.gmra.mrb[0].mxu0 %v8681
    %v8683 = vpop.f32.mrb[0].mxu0
    %v8684 = vadd.f32 %v8478, %v8683
    %v8685 = vpop.f32.mrb[0].mxu0
    %8686 = vmatprep.mubr.f32.mxu0 0.0
    %v8687 = vand.u32 %v83, 4294901760
    %v8688 = vsub.f32 %v83, %v8687
    %v8689 = vand.u32 %v8688, 4294901760
    %8690 = vmatmul.mubr.f32.gmra.mrb[0].mxu0 %v8689
    %v8691 = vpop.f32.mrb[0].mxu0
    %v8692 = vadd.f32 %v8485, %v8691
    %v8693 = vpop.f32.mrb[0].mxu0
    %8694 = vmatprep.mubr.f32.mxu0 0.0
    %v8695 = vand.u32 %v84, 4294901760
    %v8696 = vsub.f32 %v84, %v8695
    %v8697 = vand.u32 %v8696, 4294901760
    %8698 = vmatmul.mubr.f32.gmra.mrb[0].mxu0 %v8697
    %v8699 = vpop.f32.mrb[0].mxu0
    %v8700 = vadd.f32 %v8492, %v8699
    %v8701 = vpop.f32.mrb[0].mxu0
    %8702 = vmatprep.mubr.f32.mxu0 0.0
    %v8703 = vand.u32 %v85, 4294901760
    %v8704 = vsub.f32 %v85, %v8703
    %v8705 = vand.u32 %v8704, 4294901760
    %8706 = vmatmul.mubr.f32.gmra.mrb[0].mxu0 %v8705
    %v8707 = vpop.f32.mrb[0].mxu0
    %v8708 = vadd.f32 %v8499, %v8707
    %v8709 = vpop.f32.mrb[0].mxu0
    %8710 = vdwg.mxu0
    %8711 = vmatprep.subr.mxu0 0.0
    %v8712 = vand.u32 %v7702, 4294901760
    %v8713 = vsub.f32 %v7702, %v8712
    %v8714 = vand.u32 %v8713, 4294901760
    %8715 = vmatpush1.msra.mxu0 %v8714
    %8716 = vmatprep.subr.mxu0 0.0
    %v8717 = vand.u32 %v7709, 4294901760
    %v8718 = vsub.f32 %v7709, %v8717
    %v8719 = vand.u32 %v8718, 4294901760
    %8720 = vmatpush1.msra.mxu0 %v8719
    %8721 = vmatprep.subr.mxu0 0.0
    %v8722 = vand.u32 %v7716, 4294901760
    %v8723 = vsub.f32 %v7716, %v8722
    %v8724 = vand.u32 %v8723, 4294901760
    %8725 = vmatpush1.msra.mxu0 %v8724
    %8726 = vmatprep.subr.mxu0 0.0
    %v8727 = vand.u32 %v7723, 4294901760
    %v8728 = vsub.f32 %v7723, %v8727
    %v8729 = vand.u32 %v8728, 4294901760
    %8730 = vmatpush1.msra.mxu0 %v8729
    %8731 = vmatprep.subr.mxu0 0.0
    %v8732 = vand.u32 %v7730, 4294901760
    %v8733 = vsub.f32 %v7730, %v8732
    %v8734 = vand.u32 %v8733, 4294901760
    %8735 = vmatpush1.msra.mxu0 %v8734
    %8736 = vmatprep.subr.mxu0 0.0
    %v8737 = vand.u32 %v7737, 4294901760
    %v8738 = vsub.f32 %v7737, %v8737
    %v8739 = vand.u32 %v8738, 4294901760
    %8740 = vmatpush1.msra.mxu0 %v8739
    %8741 = vmatprep.subr.mxu0 0.0
    %v8742 = vand.u32 %v7744, 4294901760
    %v8743 = vsub.f32 %v7744, %v8742
    %v8744 = vand.u32 %v8743, 4294901760
    %8745 = vmatpush1.msra.mxu0 %v8744
    %8746 = vmatprep.subr.mxu0 0.0
    %v8747 = vand.u32 %v7751, 4294901760
    %v8748 = vsub.f32 %v7751, %v8747
    %v8749 = vand.u32 %v8748, 4294901760
    %8750 = vmatpush1.msra.mxu0 %v8749
    %8751 = vmatprep.subr.mxu0 0.0
    %v8752 = vand.u32 %v7758, 4294901760
    %v8753 = vsub.f32 %v7758, %v8752
    %v8754 = vand.u32 %v8753, 4294901760
    %8755 = vmatpush1.msra.mxu0 %v8754
    %8756 = vmatprep.subr.mxu0 0.0
    %v8757 = vand.u32 %v7765, 4294901760
    %v8758 = vsub.f32 %v7765, %v8757
    %v8759 = vand.u32 %v8758, 4294901760
    %8760 = vmatpush1.msra.mxu0 %v8759
    %8761 = vmatprep.subr.mxu0 0.0
    %v8762 = vand.u32 %v7772, 4294901760
    %v8763 = vsub.f32 %v7772, %v8762
    %v8764 = vand.u32 %v8763, 4294901760
    %8765 = vmatpush1.msra.mxu0 %v8764
    %8766 = vmatprep.subr.mxu0 0.0
    %v8767 = vand.u32 %v7779, 4294901760
    %v8768 = vsub.f32 %v7779, %v8767
    %v8769 = vand.u32 %v8768, 4294901760
    %8770 = vmatpush1.msra.mxu0 %v8769
    %8771 = vmatprep.subr.mxu0 0.0
    %v8772 = vand.u32 %v7786, 4294901760
    %v8773 = vsub.f32 %v7786, %v8772
    %v8774 = vand.u32 %v8773, 4294901760
    %8775 = vmatpush1.msra.mxu0 %v8774
    %8776 = vmatprep.subr.mxu0 0.0
    %v8777 = vand.u32 %v7793, 4294901760
    %v8778 = vsub.f32 %v7793, %v8777
    %v8779 = vand.u32 %v8778, 4294901760
    %8780 = vmatpush1.msra.mxu0 %v8779
    %8781 = vmatprep.subr.mxu0 0.0
    %v8782 = vand.u32 %v7800, 4294901760
    %v8783 = vsub.f32 %v7800, %v8782
    %v8784 = vand.u32 %v8783, 4294901760
    %8785 = vmatpush1.msra.mxu0 %v8784
    %8786 = vmatprep.subr.mxu0 0.0
    %v8787 = vand.u32 %v7807, 4294901760
    %v8788 = vsub.f32 %v7807, %v8787
    %v8789 = vand.u32 %v8788, 4294901760
    %8790 = vmatpush1.msra.mxu0 %v8789
    %8791 = vmatprep.subr.mxu0 0.0
    %8792 = vmatpush1.msra.mxu0 0.0
    %8793 = vmatprep.subr.mxu0 0.0
    %8794 = vmatpush1.msra.mxu0 0.0
    %8795 = vmatprep.subr.mxu0 0.0
    %8796 = vmatpush1.msra.mxu0 0.0
    %8797 = vmatprep.subr.mxu0 0.0
    %8798 = vmatpush1.msra.mxu0 0.0
    %8799 = vmatprep.subr.mxu0 0.0
    %8800 = vmatpush1.msra.mxu0 0.0
    %8801 = vmatprep.subr.mxu0 0.0
    %8802 = vmatpush1.msra.mxu0 0.0
    %8803 = vmatprep.subr.mxu0 0.0
    %8804 = vmatpush1.msra.mxu0 0.0
    %8805 = vmatprep.subr.mxu0 0.0
    %8806 = vmatpush1.msra.mxu0 0.0
    %8807 = vmatprep.subr.mxu0 0.0
    %8808 = vmatpush1.msra.mxu0 0.0
    %8809 = vmatprep.subr.mxu0 0.0
    %8810 = vmatpush1.msra.mxu0 0.0
    %8811 = vmatprep.subr.mxu0 0.0
    %8812 = vmatpush1.msra.mxu0 0.0
    %8813 = vmatprep.subr.mxu0 0.0
    %8814 = vmatpush1.msra.mxu0 0.0
    %8815 = vmatprep.subr.mxu0 0.0
    %8816 = vmatpush1.msra.mxu0 0.0
    %8817 = vmatprep.subr.mxu0 0.0
    %8818 = vmatpush1.msra.mxu0 0.0
    %8819 = vmatprep.subr.mxu0 0.0
    %8820 = vmatpush1.msra.mxu0 0.0
    %8821 = vmatprep.subr.mxu0 0.0
    %8822 = vmatpush1.msra.mxu0 0.0
    %8823 = vmatprep.mubr.f32.mxu0 0.0
    %v8824 = vand.u32 %v70, 4294901760
    %8825 = vmatmul.mubr.f32.gmra.mrb[0].mxu0 %v8824
    %v8826 = vpop.f32.mrb[0].mxu0
    %v8827 = vadd.f32 %v8588, %v8826
    %v8828 = vpop.f32.mrb[0].mxu0
    %8829 = vmatprep.mubr.f32.mxu0 0.0
    %v8830 = vand.u32 %v71, 4294901760
    %8831 = vmatmul.mubr.f32.gmra.mrb[0].mxu0 %v8830
    %v8832 = vpop.f32.mrb[0].mxu0
    %v8833 = vadd.f32 %v8596, %v8832
    %v8834 = vpop.f32.mrb[0].mxu0
    %8835 = vmatprep.mubr.f32.mxu0 0.0
    %v8836 = vand.u32 %v72, 4294901760
    %8837 = vmatmul.mubr.f32.gmra.mrb[0].mxu0 %v8836
    %v8838 = vpop.f32.mrb[0].mxu0
    %v8839 = vadd.f32 %v8604, %v8838
    %v8840 = vpop.f32.mrb[0].mxu0
    %8841 = vmatprep.mubr.f32.mxu0 0.0
    %v8842 = vand.u32 %v73, 4294901760
    %8843 = vmatmul.mubr.f32.gmra.mrb[0].mxu0 %v8842
    %v8844 = vpop.f32.mrb[0].mxu0
    %v8845 = vadd.f32 %v8612, %v8844
    %v8846 = vpop.f32.mrb[0].mxu0
    %8847 = vmatprep.mubr.f32.mxu0 0.0
    %v8848 = vand.u32 %v74, 4294901760
    %8849 = vmatmul.mubr.f32.gmra.mrb[0].mxu0 %v8848
    %v8850 = vpop.f32.mrb[0].mxu0
    %v8851 = vadd.f32 %v8620, %v8850
    %v8852 = vpop.f32.mrb[0].mxu0
    %8853 = vmatprep.mubr.f32.mxu0 0.0
    %v8854 = vand.u32 %v75, 4294901760
    %8855 = vmatmul.mubr.f32.gmra.mrb[0].mxu0 %v8854
    %v8856 = vpop.f32.mrb[0].mxu0
    %v8857 = vadd.f32 %v8628, %v8856
    %v8858 = vpop.f32.mrb[0].mxu0
    %8859 = vmatprep.mubr.f32.mxu0 0.0
    %v8860 = vand.u32 %v76, 4294901760
    %8861 = vmatmul.mubr.f32.gmra.mrb[0].mxu0 %v8860
    %v8862 = vpop.f32.mrb[0].mxu0
    %v8863 = vadd.f32 %v8636, %v8862
    %v8864 = vpop.f32.mrb[0].mxu0
    %8865 = vmatprep.mubr.f32.mxu0 0.0
    %v8866 = vand.u32 %v77, 4294901760
    %8867 = vmatmul.mubr.f32.gmra.mrb[0].mxu0 %v8866
    %v8868 = vpop.f32.mrb[0].mxu0
    %v8869 = vadd.f32 %v8644, %v8868
    %v8870 = vpop.f32.mrb[0].mxu0
    %8871 = vmatprep.mubr.f32.mxu0 0.0
    %v8872 = vand.u32 %v78, 4294901760
    %8873 = vmatmul.mubr.f32.gmra.mrb[0].mxu0 %v8872
    %v8874 = vpop.f32.mrb[0].mxu0
    %v8875 = vadd.f32 %v8652, %v8874
    %v8876 = vpop.f32.mrb[0].mxu0
    %8877 = vmatprep.mubr.f32.mxu0 0.0
    %v8878 = vand.u32 %v79, 4294901760
    %8879 = vmatmul.mubr.f32.gmra.mrb[0].mxu0 %v8878
    %v8880 = vpop.f32.mrb[0].mxu0
    %v8881 = vadd.f32 %v8660, %v8880
    %v8882 = vpop.f32.mrb[0].mxu0
    %8883 = vmatprep.mubr.f32.mxu0 0.0
    %v8884 = vand.u32 %v80, 4294901760
    %8885 = vmatmul.mubr.f32.gmra.mrb[0].mxu0 %v8884
    %v8886 = vpop.f32.mrb[0].mxu0
    %v8887 = vadd.f32 %v8668, %v8886
    %v8888 = vpop.f32.mrb[0].mxu0
    %8889 = vmatprep.mubr.f32.mxu0 0.0
    %v8890 = vand.u32 %v81, 4294901760
    %8891 = vmatmul.mubr.f32.gmra.mrb[0].mxu0 %v8890
    %v8892 = vpop.f32.mrb[0].mxu0
    %v8893 = vadd.f32 %v8676, %v8892
    %v8894 = vpop.f32.mrb[0].mxu0
    %8895 = vmatprep.mubr.f32.mxu0 0.0
    %v8896 = vand.u32 %v82, 4294901760
    %8897 = vmatmul.mubr.f32.gmra.mrb[0].mxu0 %v8896
    %v8898 = vpop.f32.mrb[0].mxu0
    %v8899 = vadd.f32 %v8684, %v8898
    %v8900 = vpop.f32.mrb[0].mxu0
    %8901 = vmatprep.mubr.f32.mxu0 0.0
    %v8902 = vand.u32 %v83, 4294901760
    %8903 = vmatmul.mubr.f32.gmra.mrb[0].mxu0 %v8902
    %v8904 = vpop.f32.mrb[0].mxu0
    %v8905 = vadd.f32 %v8692, %v8904
    %v8906 = vpop.f32.mrb[0].mxu0
    %8907 = vmatprep.mubr.f32.mxu0 0.0
    %v8908 = vand.u32 %v84, 4294901760
    %8909 = vmatmul.mubr.f32.gmra.mrb[0].mxu0 %v8908
    %v8910 = vpop.f32.mrb[0].mxu0
    %v8911 = vadd.f32 %v8700, %v8910
    %v8912 = vpop.f32.mrb[0].mxu0
    %8913 = vmatprep.mubr.f32.mxu0 0.0
    %v8914 = vand.u32 %v85, 4294901760
    %8915 = vmatmul.mubr.f32.gmra.mrb[0].mxu0 %v8914
    %v8916 = vpop.f32.mrb[0].mxu0
    %v8917 = vadd.f32 %v8708, %v8916
    %v8918 = vpop.f32.mrb[0].mxu0
    %8919 = vdwg.mxu0
    %8920 = vmatprep.subr.mxu0 0.0
    %v8921 = vand.u32 %v7702, 4294901760
    %8922 = vmatpush1.msra.mxu0 %v8921
    %8923 = vmatprep.subr.mxu0 0.0
    %v8924 = vand.u32 %v7709, 4294901760
    %8925 = vmatpush1.msra.mxu0 %v8924
    %8926 = vmatprep.subr.mxu0 0.0
    %v8927 = vand.u32 %v7716, 4294901760
    %8928 = vmatpush1.msra.mxu0 %v8927
    %8929 = vmatprep.subr.mxu0 0.0
    %v8930 = vand.u32 %v7723, 4294901760
    %8931 = vmatpush1.msra.mxu0 %v8930
    %8932 = vmatprep.subr.mxu0 0.0
    %v8933 = vand.u32 %v7730, 4294901760
    %8934 = vmatpush1.msra.mxu0 %v8933
    %8935 = vmatprep.subr.mxu0 0.0
    %v8936 = vand.u32 %v7737, 4294901760
    %8937 = vmatpush1.msra.mxu0 %v8936
    %8938 = vmatprep.subr.mxu0 0.0
    %v8939 = vand.u32 %v7744, 4294901760
    %8940 = vmatpush1.msra.mxu0 %v8939
    %8941 = vmatprep.subr.mxu0 0.0
    %v8942 = vand.u32 %v7751, 4294901760
    %8943 = vmatpush1.msra.mxu0 %v8942
    %8944 = vmatprep.subr.mxu0 0.0
    %v8945 = vand.u32 %v7758, 4294901760
    %8946 = vmatpush1.msra.mxu0 %v8945
    %8947 = vmatprep.subr.mxu0 0.0
    %v8948 = vand.u32 %v7765, 4294901760
    %8949 = vmatpush1.msra.mxu0 %v8948
    %8950 = vmatprep.subr.mxu0 0.0
    %v8951 = vand.u32 %v7772, 4294901760
    %8952 = vmatpush1.msra.mxu0 %v8951
    %8953 = vmatprep.subr.mxu0 0.0
    %v8954 = vand.u32 %v7779, 4294901760
    %8955 = vmatpush1.msra.mxu0 %v8954
    %8956 = vmatprep.subr.mxu0 0.0
    %v8957 = vand.u32 %v7786, 4294901760
    %8958 = vmatpush1.msra.mxu0 %v8957
    %8959 = vmatprep.subr.mxu0 0.0
    %v8960 = vand.u32 %v7793, 4294901760
    %8961 = vmatpush1.msra.mxu0 %v8960
    %8962 = vmatprep.subr.mxu0 0.0
    %v8963 = vand.u32 %v7800, 4294901760
    %8964 = vmatpush1.msra.mxu0 %v8963
    %8965 = vmatprep.subr.mxu0 0.0
    %v8966 = vand.u32 %v7807, 4294901760
    %8967 = vmatpush1.msra.mxu0 %v8966
    %8968 = vmatprep.subr.mxu0 0.0
    %8969 = vmatpush1.msra.mxu0 0.0
    %8970 = vmatprep.subr.mxu0 0.0
    %8971 = vmatpush1.msra.mxu0 0.0
    %8972 = vmatprep.subr.mxu0 0.0
    %8973 = vmatpush1.msra.mxu0 0.0
    %8974 = vmatprep.subr.mxu0 0.0
    %8975 = vmatpush1.msra.mxu0 0.0
    %8976 = vmatprep.subr.mxu0 0.0
    %8977 = vmatpush1.msra.mxu0 0.0
    %8978 = vmatprep.subr.mxu0 0.0
    %8979 = vmatpush1.msra.mxu0 0.0
    %8980 = vmatprep.subr.mxu0 0.0
    %8981 = vmatpush1.msra.mxu0 0.0
    %8982 = vmatprep.subr.mxu0 0.0
    %8983 = vmatpush1.msra.mxu0 0.0
    %8984 = vmatprep.subr.mxu0 0.0
    %8985 = vmatpush1.msra.mxu0 0.0
    %8986 = vmatprep.subr.mxu0 0.0
    %8987 = vmatpush1.msra.mxu0 0.0
    %8988 = vmatprep.subr.mxu0 0.0
    %8989 = vmatpush1.msra.mxu0 0.0
    %8990 = vmatprep.subr.mxu0 0.0
    %8991 = vmatpush1.msra.mxu0 0.0
    %8992 = vmatprep.subr.mxu0 0.0
    %8993 = vmatpush1.msra.mxu0 0.0
    %8994 = vmatprep.subr.mxu0 0.0
    %8995 = vmatpush1.msra.mxu0 0.0
    %8996 = vmatprep.subr.mxu0 0.0
    %8997 = vmatpush1.msra.mxu0 0.0
    %8998 = vmatprep.subr.mxu0 0.0
    %8999 = vmatpush1.msra.mxu0 0.0
    %9000 = vmatprep.mubr.f32.mxu0 0.0
    %v9001 = vand.u32 %v70, 4294901760
    %9002 = vmatmul.mubr.f32.gmra.mrb[0].mxu0 %v9001
    %v9003 = vpop.f32.mrb[0].mxu0
    %v9004 = vadd.f32 %v8827, %v9003
    %v9005 = vpop.f32.mrb[0].mxu0
    %9006 = vmatprep.mubr.f32.mxu0 0.0
    %v9007 = vand.u32 %v71, 4294901760
    %9008 = vmatmul.mubr.f32.gmra.mrb[0].mxu0 %v9007
    %v9009 = vpop.f32.mrb[0].mxu0
    %v9010 = vadd.f32 %v8833, %v9009
    %v9011 = vpop.f32.mrb[0].mxu0
    %9012 = vmatprep.mubr.f32.mxu0 0.0
    %v9013 = vand.u32 %v72, 4294901760
    %9014 = vmatmul.mubr.f32.gmra.mrb[0].mxu0 %v9013
    %v9015 = vpop.f32.mrb[0].mxu0
    %v9016 = vadd.f32 %v8839, %v9015
    %v9017 = vpop.f32.mrb[0].mxu0
    %9018 = vmatprep.mubr.f32.mxu0 0.0
    %v9019 = vand.u32 %v73, 4294901760
    %9020 = vmatmul.mubr.f32.gmra.mrb[0].mxu0 %v9019
    %v9021 = vpop.f32.mrb[0].mxu0
    %v9022 = vadd.f32 %v8845, %v9021
    %v9023 = vpop.f32.mrb[0].mxu0
    %9024 = vmatprep.mubr.f32.mxu0 0.0
    %v9025 = vand.u32 %v74, 4294901760
    %9026 = vmatmul.mubr.f32.gmra.mrb[0].mxu0 %v9025
    %v9027 = vpop.f32.mrb[0].mxu0
    %v9028 = vadd.f32 %v8851, %v9027
    %v9029 = vpop.f32.mrb[0].mxu0
    %9030 = vmatprep.mubr.f32.mxu0 0.0
    %v9031 = vand.u32 %v75, 4294901760
    %9032 = vmatmul.mubr.f32.gmra.mrb[0].mxu0 %v9031
    %v9033 = vpop.f32.mrb[0].mxu0
    %v9034 = vadd.f32 %v8857, %v9033
    %v9035 = vpop.f32.mrb[0].mxu0
    %9036 = vmatprep.mubr.f32.mxu0 0.0
    %v9037 = vand.u32 %v76, 4294901760
    %9038 = vmatmul.mubr.f32.gmra.mrb[0].mxu0 %v9037
    %v9039 = vpop.f32.mrb[0].mxu0
    %v9040 = vadd.f32 %v8863, %v9039
    %v9041 = vpop.f32.mrb[0].mxu0
    %9042 = vmatprep.mubr.f32.mxu0 0.0
    %v9043 = vand.u32 %v77, 4294901760
    %9044 = vmatmul.mubr.f32.gmra.mrb[0].mxu0 %v9043
    %v9045 = vpop.f32.mrb[0].mxu0
    %v9046 = vadd.f32 %v8869, %v9045
    %v9047 = vpop.f32.mrb[0].mxu0
    %9048 = vmatprep.mubr.f32.mxu0 0.0
    %v9049 = vand.u32 %v78, 4294901760
    %9050 = vmatmul.mubr.f32.gmra.mrb[0].mxu0 %v9049
    %v9051 = vpop.f32.mrb[0].mxu0
    %v9052 = vadd.f32 %v8875, %v9051
    %v9053 = vpop.f32.mrb[0].mxu0
    %9054 = vmatprep.mubr.f32.mxu0 0.0
    %v9055 = vand.u32 %v79, 4294901760
    %9056 = vmatmul.mubr.f32.gmra.mrb[0].mxu0 %v9055
    %v9057 = vpop.f32.mrb[0].mxu0
    %v9058 = vadd.f32 %v8881, %v9057
    %v9059 = vpop.f32.mrb[0].mxu0
    %9060 = vmatprep.mubr.f32.mxu0 0.0
    %v9061 = vand.u32 %v80, 4294901760
    %9062 = vmatmul.mubr.f32.gmra.mrb[0].mxu0 %v9061
    %v9063 = vpop.f32.mrb[0].mxu0
    %v9064 = vadd.f32 %v8887, %v9063
    %v9065 = vpop.f32.mrb[0].mxu0
    %9066 = vmatprep.mubr.f32.mxu0 0.0
    %v9067 = vand.u32 %v81, 4294901760
    %9068 = vmatmul.mubr.f32.gmra.mrb[0].mxu0 %v9067
    %v9069 = vpop.f32.mrb[0].mxu0
    %v9070 = vadd.f32 %v8893, %v9069
    %v9071 = vpop.f32.mrb[0].mxu0
    %9072 = vmatprep.mubr.f32.mxu0 0.0
    %v9073 = vand.u32 %v82, 4294901760
    %9074 = vmatmul.mubr.f32.gmra.mrb[0].mxu0 %v9073
    %v9075 = vpop.f32.mrb[0].mxu0
    %v9076 = vadd.f32 %v8899, %v9075
    %v9077 = vpop.f32.mrb[0].mxu0
    %9078 = vmatprep.mubr.f32.mxu0 0.0
    %v9079 = vand.u32 %v83, 4294901760
    %9080 = vmatmul.mubr.f32.gmra.mrb[0].mxu0 %v9079
    %v9081 = vpop.f32.mrb[0].mxu0
    %v9082 = vadd.f32 %v8905, %v9081
    %v9083 = vpop.f32.mrb[0].mxu0
    %9084 = vmatprep.mubr.f32.mxu0 0.0
    %v9085 = vand.u32 %v84, 4294901760
    %9086 = vmatmul.mubr.f32.gmra.mrb[0].mxu0 %v9085
    %v9087 = vpop.f32.mrb[0].mxu0
    %v9088 = vadd.f32 %v8911, %v9087
    %v9089 = vpop.f32.mrb[0].mxu0
    %9090 = vmatprep.mubr.f32.mxu0 0.0
    %v9091 = vand.u32 %v85, 4294901760
    %9092 = vmatmul.mubr.f32.gmra.mrb[0].mxu0 %v9091
    %v9093 = vpop.f32.mrb[0].mxu0
    %v9094 = vadd.f32 %v8917, %v9093
    %v9095 = vpop.f32.mrb[0].mxu0
    %9096 = vdwg.mxu0
    %v9098 = vlaneseq
    %v9099 = vshrl.u32 %v9098, 7
    %v9100 = vsub.s32 0, %v9099
    %v9101 = vrot.slane %v6220, %v9100
    %v9103 = vadd.f32 %v9004, %v9101
    %v9104 = vadd.f32 %v9010, %v9101
    %v9105 = vadd.f32 %v9016, %v9101
    %v9106 = vadd.f32 %v9022, %v9101
    %v9107 = vadd.f32 %v9028, %v9101
    %v9108 = vadd.f32 %v9034, %v9101
    %v9109 = vadd.f32 %v9040, %v9101
    %v9110 = vadd.f32 %v9046, %v9101
    %v9111 = vadd.f32 %v9052, %v9101
    %v9112 = vadd.f32 %v9058, %v9101
    %v9113 = vadd.f32 %v9064, %v9101
    %v9114 = vadd.f32 %v9070, %v9101
    %v9115 = vadd.f32 %v9076, %v9101
    %v9116 = vadd.f32 %v9082, %v9101
    %v9117 = vadd.f32 %v9088, %v9101
    %v9118 = vadd.f32 %v9094, %v9101
    %9119 = vst [vmem:[%s8] sm:$0xff] %v9103
    %9120 = vst [vmem:[%s8 + $0x8] sm:$0xff] %v9104
    %9121 = vst [vmem:[%s8 + $0x10] sm:$0xff] %v9105
    %9122 = vst [vmem:[%s8 + $0x18] sm:$0xff] %v9106
    %9123 = vst [vmem:[%s8 + $0x20] sm:$0xff] %v9107
    %9124 = vst [vmem:[%s8 + $0x28] sm:$0xff] %v9108
    %9125 = vst [vmem:[%s8 + $0x30] sm:$0xff] %v9109
    %9126 = vst [vmem:[%s8 + $0x38] sm:$0xff] %v9110
    %9127 = vst [vmem:[%s8 + $0x40] sm:$0xff] %v9111
    %9128 = vst [vmem:[%s8 + $0x48] sm:$0xff] %v9112
    %9129 = vst [vmem:[%s8 + $0x50] sm:$0xff] %v9113
    %9130 = vst [vmem:[%s8 + $0x58] sm:$0xff] %v9114
    %9131 = vst [vmem:[%s8 + $0x60] sm:$0xff] %v9115
    %9132 = vst [vmem:[%s8 + $0x68] sm:$0xff] %v9116
    %9133 = vst [vmem:[%s8 + $0x70] sm:$0xff] %v9117
    %9134 = vst [vmem:[%s8 + $0x78] sm:$0xff] %v9118
    // Predicated region
    $region46: #{graph_forward.1} parent=1 // pred_check
      _
    $region47: #{graph_forward.1} parent=1 // pred_check_branch
      %9136 = sbr.rel (0) target = $region49
    $region48: #{graph_forward.1} parent=1 // pred_region
      _
    $region49: #{graph_forward.1} parent=1 // pred_fallthru
      _
    // Predicated region
    $region50: #{graph_forward.1} parent=1 // pred_check
      _
    $region51: #{graph_forward.1} parent=1 // pred_check_branch
      %9138 = sbr.rel (0) target = $region53
    $region52: #{graph_forward.1} parent=1 // pred_region
      _
    $region53: #{graph_forward.1} parent=1 // pred_fallthru
      _
    %9139 = vsyncpa [#allocation3], 1
    %9140 = vsyncpa [#allocation5], 1

</llo_original>
